<compile_context>
chip_gen: v7x
topology: tpu7x:2x2x1
jax: 0.10.0
libtpu: 0.0.40
codegen_flags: <defaults>
</compile_context>

<pallas_src>
import functools

import numpy as np
import jax
import jax.numpy as jnp
from jax import lax
from jax.experimental import pallas as pl
from jax.experimental.pallas import tpu as pltpu

LN_EPS = 1e-5  # nn.LayerNorm default
OUT_PAD = 128  # lane-dense padded output width


def _layer_norm(x, g, b):
    mu = jnp.mean(x, axis=-1, keepdims=True)
    var = jnp.mean((x - mu) ** 2, axis=-1, keepdims=True)
    return (x - mu) * lax.rsqrt(var + LN_EPS) * g + b


# ------------------------------ fused kernel --------------------------------


def fused_transformer_kernel(
    x_ref, emb_w_ref, emb_b_ref,
    wqkv_ref, bqkv_ref, wo_ref, bo_ref,
    g1_ref, be1_ref, w1_ref, b1_ref, w2_ref, b2_ref, g2_ref, be2_ref,
    fc_w_ref, fc_b_ref,
    o_ref,
    attn_scratch,
    *, num_heads, num_layers, seq,
):
    # ---- embedding: (B*S, Din) @ (Din, D) + b ----
    x = x_ref[...]
    h = jnp.dot(x, emb_w_ref[...], preferred_element_type=jnp.float32) + emb_b_ref[...]
    n, d_model = h.shape
    batch = n // seq
    hd = d_model // num_heads
    scale = 1.0 / float(np.sqrt(hd))

    # ---- encoder layers (post-norm, ReLU FFN); unrolled static loop ----
    for l in range(num_layers):
        # fused QKV projection on the flattened (B*S, D) activation
        qkv = (jnp.dot(h, wqkv_ref[l], preferred_element_type=jnp.float32)
               + bqkv_ref[l])
        q = qkv[:, :d_model] * scale
        k = qkv[:, d_model:2 * d_model]
        v = qkv[:, 2 * d_model:]

        # per-(batch, head) attention; head outputs written to scratch at
        # static offsets (avoids lane-wise concatenate)
        for b in range(batch):
            r0 = b * seq
            for hh in range(num_heads):
                c0 = hh * hd
                qh = q[r0:r0 + seq, c0:c0 + hd]
                kh = k[r0:r0 + seq, c0:c0 + hd]
                vh = v[r0:r0 + seq, c0:c0 + hd]
                s = lax.dot_general(qh, kh, (((1,), (1,)), ((), ())),
                                    preferred_element_type=jnp.float32)   # (S, S)
                s = s - jnp.max(s, axis=-1, keepdims=True)
                p = jnp.exp(s)
                p = p / jnp.sum(p, axis=-1, keepdims=True)
                attn_scratch[pl.ds(r0, seq), pl.ds(c0, hd)] = jnp.dot(
                    p, vh, preferred_element_type=jnp.float32)

        # output projection + residual + LayerNorm
        attn = (jnp.dot(attn_scratch[...], wo_ref[l],
                        preferred_element_type=jnp.float32) + bo_ref[l])
        h1 = _layer_norm(h + attn, g1_ref[l], be1_ref[l])

        # feed-forward: Linear -> ReLU -> Linear, residual + LayerNorm
        ffh = jnp.maximum(
            jnp.dot(h1, w1_ref[l], preferred_element_type=jnp.float32) + b1_ref[l],
            0.0)
        ff = jnp.dot(ffh, w2_ref[l], preferred_element_type=jnp.float32) + b2_ref[l]
        h = _layer_norm(h1 + ff, g2_ref[l], be2_ref[l])

    # ---- final fc (zero-padded to 128 output lanes) + sigmoid, lane-dense store ----
    y = jnp.dot(h, fc_w_ref[...], preferred_element_type=jnp.float32) + fc_b_ref[...]
    o_ref[...] = 1.0 / (1.0 + jnp.exp(-y))


# ------------------------------- wrapper ------------------------------------


@functools.partial(jax.jit, static_argnames=("num_heads", "output_dim"))
def transformer_forward(x, packed, *, num_heads, output_dim):
    B, S, Din = x.shape
    num_layers = packed["wqkv"].shape[0]
    d_model = packed["emb_w"].shape[1]
    out_pad = packed["fc_w"].shape[1]

    kern = functools.partial(fused_transformer_kernel,
                             num_heads=num_heads, num_layers=num_layers, seq=S)
    vmem = pl.BlockSpec(memory_space=pltpu.MemorySpace.VMEM)

    y = pl.pallas_call(
        kern,
        out_shape=jax.ShapeDtypeStruct((B * S, out_pad), jnp.float32),
        in_specs=[vmem] * 17,
        out_specs=vmem,
        scratch_shapes=[pltpu.VMEM((B * S, d_model), jnp.float32)],
    )(
        x.reshape(B * S, Din),
        packed["emb_w"], packed["emb_b"],
        packed["wqkv"], packed["bqkv"], packed["wo"], packed["bo"],
        packed["ln1_g"], packed["ln1_b"],
        packed["w1"], packed["b1"], packed["w2"], packed["b2"],
        packed["ln2_g"], packed["ln2_b"],
        packed["fc_w"], packed["fc_b"],
    )
    # rows b*S + (S-1) hold the last-token predictions; drop the lane padding
    return y.reshape(B, S, out_pad)[:, -1, :output_dim]


# ----------------- parameter init (PyTorch convention) + packing ------------


def init_params(key, input_dim, d_model, num_layers, output_dim, d_ff):
    keys = jax.random.split(key, 2 + num_layers)

    def lin(k, out_d, in_d, scale=0.1):
        kw, kb = jax.random.split(k)
        return (
            scale * jax.random.normal(kw, (out_d, in_d), jnp.float32),
            scale * jax.random.normal(kb, (out_d,), jnp.float32),
        )

    emb_w, emb_b = lin(keys[0], d_model, input_dim)
    fc_w, fc_b = lin(keys[1], output_dim, d_model)
    layers = []
    for i in range(num_layers):
        ks = jax.random.split(keys[2 + i], 5)
        wqkv = 0.1 * jax.random.normal(ks[0], (3 * d_model, d_model), jnp.float32)
        bqkv = 0.1 * jax.random.normal(ks[1], (3 * d_model,), jnp.float32)
        wo, bo = lin(ks[2], d_model, d_model)
        w1, b1 = lin(ks[3], d_ff, d_model)
        w2, b2 = lin(ks[4], d_model, d_ff)
        layers.append(dict(
            wqkv=wqkv, bqkv=bqkv, wo=wo, bo=bo,
            ln1_g=jnp.ones((d_model,), jnp.float32),
            ln1_b=jnp.zeros((d_model,), jnp.float32),
            w1=w1, b1=b1, w2=w2, b2=b2,
            ln2_g=jnp.ones((d_model,), jnp.float32),
            ln2_b=jnp.zeros((d_model,), jnp.float32),
        ))
    return dict(emb_w=emb_w, emb_b=emb_b, fc_w=fc_w, fc_b=fc_b, layers=layers)


def pack_params(params, out_pad=OUT_PAD):
    """One-time transpose/stack/pad so the kernel never transposes per forward."""
    layers = params["layers"]

    def t(w):
        return w.T

    def row(b):
        return b.reshape(1, -1)

    def stack(name, f):
        return jnp.stack([f(lp[name]) for lp in layers])

    fc_w_t = params["fc_w"].T                        # (D, out_dim)
    d_model, out_dim = fc_w_t.shape
    fc_w_p = jnp.zeros((d_model, out_pad), jnp.float32).at[:, :out_dim].set(fc_w_t)
    fc_b_p = jnp.zeros((1, out_pad), jnp.float32).at[0, :out_dim].set(params["fc_b"])

    return dict(
        emb_w=params["emb_w"].T, emb_b=row(params["emb_b"]),
        fc_w=fc_w_p, fc_b=fc_b_p,
        wqkv=stack("wqkv", t), bqkv=stack("bqkv", row),
        wo=stack("wo", t), bo=stack("bo", row),
        ln1_g=stack("ln1_g", row), ln1_b=stack("ln1_b", row),
        w1=stack("w1", t), b1=stack("b1", row),
        w2=stack("w2", t), b2=stack("b2", row),
        ln2_g=stack("ln2_g", row), ln2_b=stack("ln2_b", row),
    )


# ---------------------------- pure-JAX reference -----------------------------


def reference_forward(x, params, num_heads):
    def linear(t, w, b):
        return t @ w.T + b

    h = linear(x, params["emb_w"], params["emb_b"])
    B, S, D = h.shape
    hd = D // num_heads
    for lp in params["layers"]:
        qkv = linear(h, lp["wqkv"], lp["bqkv"])
        q, k, v = jnp.split(qkv, 3, axis=-1)
        q = q.reshape(B, S, num_heads, hd).transpose(0, 2, 1, 3)
        k = k.reshape(B, S, num_heads, hd).transpose(0, 2, 1, 3)
        v = v.reshape(B, S, num_heads, hd).transpose(0, 2, 1, 3)
        s = jnp.einsum("bhqd,bhkd->bhqk", q, k) / np.sqrt(hd)
        p = jax.nn.softmax(s, axis=-1)
        a = jnp.einsum("bhqk,bhkd->bhqd", p, v).transpose(0, 2, 1, 3).reshape(B, S, D)
        a = linear(a, lp["wo"], lp["bo"])
        h = _layer_norm(h + a, lp["ln1_g"], lp["ln1_b"])
        ff = linear(jnp.maximum(linear(h, lp["w1"], lp["b1"]), 0.0), lp["w2"], lp["b2"])
        h = _layer_norm(h + ff, lp["ln2_g"], lp["ln2_b"])
    return jax.nn.sigmoid(linear(h[:, -1, :], params["fc_w"], params["fc_b"]))


# ---------------------------------- main -------------------------------------

if __name__ == "__main__":
    input_dim, d_model, num_heads, num_layers, output_dim = 16, 32, 4, 2, 4
    d_ff = 2048  # nn.TransformerEncoderLayer default dim_feedforward
    B, S = 2, 8

    key = jax.random.PRNGKey(0)
    kx, kp = jax.random.split(key)
    x = jax.random.normal(kx, (B, S, input_dim), jnp.float32)
    params = init_params(kp, input_dim, d_model, num_layers, output_dim, d_ff)
    packed = pack_params(params)  # one-time transpose/stack/pad

    out = jax.block_until_ready(
        transformer_forward(x, packed, num_heads=num_heads, output_dim=output_dim))
    ref = jax.block_until_ready(reference_forward(x, params, num_heads))
    np.testing.assert_allclose(np.asarray(out), np.asarray(ref), atol=1e-3, rtol=1e-3)
    print("KERNEL_OK")
</pallas_src>

<mosaic_0001>
module attributes {stable_mosaic.version = 11 : i64} {
  func.func @fused_transformer_kernel(%arg0: memref<16x16xf32, #tpu.memory_space<vmem>>, %arg1: memref<16x32xf32, #tpu.memory_space<vmem>>, %arg2: memref<1x32xf32, #tpu.memory_space<vmem>>, %arg3: memref<2x32x96xf32, #tpu.memory_space<vmem>>, %arg4: memref<2x1x96xf32, #tpu.memory_space<vmem>>, %arg5: memref<2x32x32xf32, #tpu.memory_space<vmem>>, %arg6: memref<2x1x32xf32, #tpu.memory_space<vmem>>, %arg7: memref<2x1x32xf32, #tpu.memory_space<vmem>>, %arg8: memref<2x1x32xf32, #tpu.memory_space<vmem>>, %arg9: memref<2x32x2048xf32, #tpu.memory_space<vmem>>, %arg10: memref<2x1x2048xf32, #tpu.memory_space<vmem>>, %arg11: memref<2x2048x32xf32, #tpu.memory_space<vmem>>, %arg12: memref<2x1x32xf32, #tpu.memory_space<vmem>>, %arg13: memref<2x1x32xf32, #tpu.memory_space<vmem>>, %arg14: memref<2x1x32xf32, #tpu.memory_space<vmem>>, %arg15: memref<32x128xf32, #tpu.memory_space<vmem>>, %arg16: memref<1x128xf32, #tpu.memory_space<vmem>>, %arg17: memref<16x128xf32, #tpu.memory_space<vmem>>, %arg18: memref<16x32xf32, #tpu.memory_space<vmem>>) attributes {dimension_semantics = [], scalar_prefetch = 0 : i64, scratch_operands = 1 : i64, tpu.core_type = #tpu.core_type<tc>} {
    %c0 = arith.constant 0 : index
    %c0_0 = arith.constant 0 : index
    %0 = vector.load %arg0[%c0, %c0_0] : memref<16x16xf32, #tpu.memory_space<vmem>>, vector<16x16xf32>
    %c0_1 = arith.constant 0 : index
    %c0_2 = arith.constant 0 : index
    %1 = vector.load %arg1[%c0_1, %c0_2] : memref<16x32xf32, #tpu.memory_space<vmem>>, vector<16x32xf32>
    %cst = arith.constant dense<0.000000e+00> : vector<16x32xf32>
    %2 = tpu.matmul %0, %1, %cst {dimension_numbers = #tpu.dot_dimension_numbers<[1], [0], [0], [1], [0, 0, 1, 1], [], []>} : vector<16x16xf32>, vector<16x32xf32>, vector<16x32xf32> -> vector<16x32xf32>
    %c0_3 = arith.constant 0 : index
    %c0_4 = arith.constant 0 : index
    %3 = vector.load %arg2[%c0_3, %c0_4] : memref<1x32xf32, #tpu.memory_space<vmem>>, vector<1x32xf32>
    %4 = vector.broadcast %3 : vector<1x32xf32> to vector<16x32xf32>
    %5 = arith.addf %2, %4 : vector<16x32xf32>
    %c0_5 = arith.constant 0 : index
    %c0_6 = arith.constant 0 : index
    %c0_7 = arith.constant 0 : index
    %6 = vector.load %arg3[%c0_5, %c0_6, %c0_7] : memref<2x32x96xf32, #tpu.memory_space<vmem>>, vector<1x32x96xf32>
    %7 = vector.shape_cast %6 : vector<1x32x96xf32> to vector<32x96xf32>
    %cst_8 = arith.constant dense<0.000000e+00> : vector<16x96xf32>
    %8 = tpu.matmul %5, %7, %cst_8 {dimension_numbers = #tpu.dot_dimension_numbers<[1], [0], [0], [1], [0, 0, 1, 1], [], []>} : vector<16x32xf32>, vector<32x96xf32>, vector<16x96xf32> -> vector<16x96xf32>
    %c0_9 = arith.constant 0 : index
    %c0_10 = arith.constant 0 : index
    %c0_11 = arith.constant 0 : index
    %9 = vector.load %arg4[%c0_9, %c0_10, %c0_11] : memref<2x1x96xf32, #tpu.memory_space<vmem>>, vector<1x1x96xf32>
    %10 = vector.shape_cast %9 : vector<1x1x96xf32> to vector<1x96xf32>
    %11 = vector.broadcast %10 : vector<1x96xf32> to vector<16x96xf32>
    %12 = arith.addf %8, %11 : vector<16x96xf32>
    %13 = vector.extract_strided_slice %12 {offsets = [0, 0], sizes = [16, 32], strides = [1, 1]} : vector<16x96xf32> to vector<16x32xf32>
    %cst_12 = arith.constant 0.353553385 : f32
    %14 = vector.broadcast %cst_12 : f32 to vector<16x32xf32>
    %15 = arith.mulf %13, %14 : vector<16x32xf32>
    %16 = vector.extract_strided_slice %12 {offsets = [0, 32], sizes = [16, 32], strides = [1, 1]} : vector<16x96xf32> to vector<16x32xf32>
    %17 = vector.extract_strided_slice %12 {offsets = [0, 64], sizes = [16, 32], strides = [1, 1]} : vector<16x96xf32> to vector<16x32xf32>
    %18 = vector.extract_strided_slice %15 {offsets = [0, 0], sizes = [8, 8], strides = [1, 1]} : vector<16x32xf32> to vector<8x8xf32>
    %19 = vector.extract_strided_slice %16 {offsets = [0, 0], sizes = [8, 8], strides = [1, 1]} : vector<16x32xf32> to vector<8x8xf32>
    %20 = vector.extract_strided_slice %17 {offsets = [0, 0], sizes = [8, 8], strides = [1, 1]} : vector<16x32xf32> to vector<8x8xf32>
    %cst_13 = arith.constant dense<0.000000e+00> : vector<8x8xf32>
    %21 = tpu.matmul %18, %19, %cst_13 {dimension_numbers = #tpu.dot_dimension_numbers<[1], [1], [0], [0], [0, 0, 1, 0], [], []>} : vector<8x8xf32>, vector<8x8xf32>, vector<8x8xf32> -> vector<8x8xf32>
    %cst_14 = arith.constant dense<0xFF800000> : vector<8xf32>
    %22 = vector.multi_reduction <maximumf>, %21, %cst_14 [1] : vector<8x8xf32> to vector<8xf32>
    %23 = vector.shape_cast %22 : vector<8xf32> to vector<8x1xf32>
    %24 = vector.broadcast %23 : vector<8x1xf32> to vector<8x8xf32>
    %25 = arith.subf %21, %24 : vector<8x8xf32>
    %26 = math.exp %25 : vector<8x8xf32>
    %cst_15 = arith.constant dense<0.000000e+00> : vector<8xf32>
    %27 = vector.multi_reduction <add>, %26, %cst_15 [1] : vector<8x8xf32> to vector<8xf32>
    %28 = vector.shape_cast %27 : vector<8xf32> to vector<8x1xf32>
    %29 = vector.broadcast %28 : vector<8x1xf32> to vector<8x8xf32>
    %30 = arith.divf %26, %29 : vector<8x8xf32>
    %cst_16 = arith.constant dense<0.000000e+00> : vector<8x8xf32>
    %31 = tpu.matmul %30, %20, %cst_16 {dimension_numbers = #tpu.dot_dimension_numbers<[1], [0], [0], [1], [0, 0, 1, 1], [], []>} : vector<8x8xf32>, vector<8x8xf32>, vector<8x8xf32> -> vector<8x8xf32>
    %c0_17 = arith.constant 0 : index
    %c0_18 = arith.constant 0 : index
    %32 = vector.load %arg18[%c0_17, %c0_18] : memref<16x32xf32, #tpu.memory_space<vmem>>, vector<8x8xf32>
    tpu.vector_store %arg18[%c0_17, %c0_18], %31 {strides = array<i32>} : memref<16x32xf32, #tpu.memory_space<vmem>>, vector<8x8xf32>,
    %33 = vector.extract_strided_slice %15 {offsets = [0, 8], sizes = [8, 8], strides = [1, 1]} : vector<16x32xf32> to vector<8x8xf32>
    %34 = vector.extract_strided_slice %16 {offsets = [0, 8], sizes = [8, 8], strides = [1, 1]} : vector<16x32xf32> to vector<8x8xf32>
    %35 = vector.extract_strided_slice %17 {offsets = [0, 8], sizes = [8, 8], strides = [1, 1]} : vector<16x32xf32> to vector<8x8xf32>
    %cst_19 = arith.constant dense<0.000000e+00> : vector<8x8xf32>
    %36 = tpu.matmul %33, %34, %cst_19 {dimension_numbers = #tpu.dot_dimension_numbers<[1], [1], [0], [0], [0, 0, 1, 0], [], []>} : vector<8x8xf32>, vector<8x8xf32>, vector<8x8xf32> -> vector<8x8xf32>
    %cst_20 = arith.constant dense<0xFF800000> : vector<8xf32>
    %37 = vector.multi_reduction <maximumf>, %36, %cst_20 [1] : vector<8x8xf32> to vector<8xf32>
    %38 = vector.shape_cast %37 : vector<8xf32> to vector<8x1xf32>
    %39 = vector.broadcast %38 : vector<8x1xf32> to vector<8x8xf32>
    %40 = arith.subf %36, %39 : vector<8x8xf32>
    %41 = math.exp %40 : vector<8x8xf32>
    %cst_21 = arith.constant dense<0.000000e+00> : vector<8xf32>
    %42 = vector.multi_reduction <add>, %41, %cst_21 [1] : vector<8x8xf32> to vector<8xf32>
    %43 = vector.shape_cast %42 : vector<8xf32> to vector<8x1xf32>
    %44 = vector.broadcast %43 : vector<8x1xf32> to vector<8x8xf32>
    %45 = arith.divf %41, %44 : vector<8x8xf32>
    %cst_22 = arith.constant dense<0.000000e+00> : vector<8x8xf32>
    %46 = tpu.matmul %45, %35, %cst_22 {dimension_numbers = #tpu.dot_dimension_numbers<[1], [0], [0], [1], [0, 0, 1, 1], [], []>} : vector<8x8xf32>, vector<8x8xf32>, vector<8x8xf32> -> vector<8x8xf32>
    %c0_23 = arith.constant 0 : index
    %c8 = arith.constant 8 : index
    %47 = vector.load %arg18[%c0_23, %c8] : memref<16x32xf32, #tpu.memory_space<vmem>>, vector<8x8xf32>
    tpu.vector_store %arg18[%c0_23, %c8], %46 {strides = array<i32>} : memref<16x32xf32, #tpu.memory_space<vmem>>, vector<8x8xf32>,
    %48 = vector.extract_strided_slice %15 {offsets = [0, 16], sizes = [8, 8], strides = [1, 1]} : vector<16x32xf32> to vector<8x8xf32>
    %49 = vector.extract_strided_slice %16 {offsets = [0, 16], sizes = [8, 8], strides = [1, 1]} : vector<16x32xf32> to vector<8x8xf32>
    %50 = vector.extract_strided_slice %17 {offsets = [0, 16], sizes = [8, 8], strides = [1, 1]} : vector<16x32xf32> to vector<8x8xf32>
    %cst_24 = arith.constant dense<0.000000e+00> : vector<8x8xf32>
    %51 = tpu.matmul %48, %49, %cst_24 {dimension_numbers = #tpu.dot_dimension_numbers<[1], [1], [0], [0], [0, 0, 1, 0], [], []>} : vector<8x8xf32>, vector<8x8xf32>, vector<8x8xf32> -> vector<8x8xf32>
    %cst_25 = arith.constant dense<0xFF800000> : vector<8xf32>
    %52 = vector.multi_reduction <maximumf>, %51, %cst_25 [1] : vector<8x8xf32> to vector<8xf32>
    %53 = vector.shape_cast %52 : vector<8xf32> to vector<8x1xf32>
    %54 = vector.broadcast %53 : vector<8x1xf32> to vector<8x8xf32>
    %55 = arith.subf %51, %54 : vector<8x8xf32>
    %56 = math.exp %55 : vector<8x8xf32>
    %cst_26 = arith.constant dense<0.000000e+00> : vector<8xf32>
    %57 = vector.multi_reduction <add>, %56, %cst_26 [1] : vector<8x8xf32> to vector<8xf32>
    %58 = vector.shape_cast %57 : vector<8xf32> to vector<8x1xf32>
    %59 = vector.broadcast %58 : vector<8x1xf32> to vector<8x8xf32>
    %60 = arith.divf %56, %59 : vector<8x8xf32>
    %cst_27 = arith.constant dense<0.000000e+00> : vector<8x8xf32>
    %61 = tpu.matmul %60, %50, %cst_27 {dimension_numbers = #tpu.dot_dimension_numbers<[1], [0], [0], [1], [0, 0, 1, 1], [], []>} : vector<8x8xf32>, vector<8x8xf32>, vector<8x8xf32> -> vector<8x8xf32>
    %c0_28 = arith.constant 0 : index
    %c16 = arith.constant 16 : index
    %62 = vector.load %arg18[%c0_28, %c16] : memref<16x32xf32, #tpu.memory_space<vmem>>, vector<8x8xf32>
    tpu.vector_store %arg18[%c0_28, %c16], %61 {strides = array<i32>} : memref<16x32xf32, #tpu.memory_space<vmem>>, vector<8x8xf32>,
    %63 = vector.extract_strided_slice %15 {offsets = [0, 24], sizes = [8, 8], strides = [1, 1]} : vector<16x32xf32> to vector<8x8xf32>
    %64 = vector.extract_strided_slice %16 {offsets = [0, 24], sizes = [8, 8], strides = [1, 1]} : vector<16x32xf32> to vector<8x8xf32>
    %65 = vector.extract_strided_slice %17 {offsets = [0, 24], sizes = [8, 8], strides = [1, 1]} : vector<16x32xf32> to vector<8x8xf32>
    %cst_29 = arith.constant dense<0.000000e+00> : vector<8x8xf32>
    %66 = tpu.matmul %63, %64, %cst_29 {dimension_numbers = #tpu.dot_dimension_numbers<[1], [1], [0], [0], [0, 0, 1, 0], [], []>} : vector<8x8xf32>, vector<8x8xf32>, vector<8x8xf32> -> vector<8x8xf32>
    %cst_30 = arith.constant dense<0xFF800000> : vector<8xf32>
    %67 = vector.multi_reduction <maximumf>, %66, %cst_30 [1] : vector<8x8xf32> to vector<8xf32>
    %68 = vector.shape_cast %67 : vector<8xf32> to vector<8x1xf32>
    %69 = vector.broadcast %68 : vector<8x1xf32> to vector<8x8xf32>
    %70 = arith.subf %66, %69 : vector<8x8xf32>
    %71 = math.exp %70 : vector<8x8xf32>
    %cst_31 = arith.constant dense<0.000000e+00> : vector<8xf32>
    %72 = vector.multi_reduction <add>, %71, %cst_31 [1] : vector<8x8xf32> to vector<8xf32>
    %73 = vector.shape_cast %72 : vector<8xf32> to vector<8x1xf32>
    %74 = vector.broadcast %73 : vector<8x1xf32> to vector<8x8xf32>
    %75 = arith.divf %71, %74 : vector<8x8xf32>
    %cst_32 = arith.constant dense<0.000000e+00> : vector<8x8xf32>
    %76 = tpu.matmul %75, %65, %cst_32 {dimension_numbers = #tpu.dot_dimension_numbers<[1], [0], [0], [1], [0, 0, 1, 1], [], []>} : vector<8x8xf32>, vector<8x8xf32>, vector<8x8xf32> -> vector<8x8xf32>
    %c0_33 = arith.constant 0 : index
    %c24 = arith.constant 24 : index
    %77 = vector.load %arg18[%c0_33, %c24] : memref<16x32xf32, #tpu.memory_space<vmem>>, vector<8x8xf32>
    tpu.vector_store %arg18[%c0_33, %c24], %76 {strides = array<i32>} : memref<16x32xf32, #tpu.memory_space<vmem>>, vector<8x8xf32>,
    %78 = vector.extract_strided_slice %15 {offsets = [8, 0], sizes = [8, 8], strides = [1, 1]} : vector<16x32xf32> to vector<8x8xf32>
    %79 = vector.extract_strided_slice %16 {offsets = [8, 0], sizes = [8, 8], strides = [1, 1]} : vector<16x32xf32> to vector<8x8xf32>
    %80 = vector.extract_strided_slice %17 {offsets = [8, 0], sizes = [8, 8], strides = [1, 1]} : vector<16x32xf32> to vector<8x8xf32>
    %cst_34 = arith.constant dense<0.000000e+00> : vector<8x8xf32>
    %81 = tpu.matmul %78, %79, %cst_34 {dimension_numbers = #tpu.dot_dimension_numbers<[1], [1], [0], [0], [0, 0, 1, 0], [], []>} : vector<8x8xf32>, vector<8x8xf32>, vector<8x8xf32> -> vector<8x8xf32>
    %cst_35 = arith.constant dense<0xFF800000> : vector<8xf32>
    %82 = vector.multi_reduction <maximumf>, %81, %cst_35 [1] : vector<8x8xf32> to vector<8xf32>
    %83 = vector.shape_cast %82 : vector<8xf32> to vector<8x1xf32>
    %84 = vector.broadcast %83 : vector<8x1xf32> to vector<8x8xf32>
    %85 = arith.subf %81, %84 : vector<8x8xf32>
    %86 = math.exp %85 : vector<8x8xf32>
    %cst_36 = arith.constant dense<0.000000e+00> : vector<8xf32>
    %87 = vector.multi_reduction <add>, %86, %cst_36 [1] : vector<8x8xf32> to vector<8xf32>
    %88 = vector.shape_cast %87 : vector<8xf32> to vector<8x1xf32>
    %89 = vector.broadcast %88 : vector<8x1xf32> to vector<8x8xf32>
    %90 = arith.divf %86, %89 : vector<8x8xf32>
    %cst_37 = arith.constant dense<0.000000e+00> : vector<8x8xf32>
    %91 = tpu.matmul %90, %80, %cst_37 {dimension_numbers = #tpu.dot_dimension_numbers<[1], [0], [0], [1], [0, 0, 1, 1], [], []>} : vector<8x8xf32>, vector<8x8xf32>, vector<8x8xf32> -> vector<8x8xf32>
    %c8_38 = arith.constant 8 : index
    %c0_39 = arith.constant 0 : index
    %92 = vector.load %arg18[%c8_38, %c0_39] : memref<16x32xf32, #tpu.memory_space<vmem>>, vector<8x8xf32>
    tpu.vector_store %arg18[%c8_38, %c0_39], %91 {strides = array<i32>} : memref<16x32xf32, #tpu.memory_space<vmem>>, vector<8x8xf32>,
    %93 = vector.extract_strided_slice %15 {offsets = [8, 8], sizes = [8, 8], strides = [1, 1]} : vector<16x32xf32> to vector<8x8xf32>
    %94 = vector.extract_strided_slice %16 {offsets = [8, 8], sizes = [8, 8], strides = [1, 1]} : vector<16x32xf32> to vector<8x8xf32>
    %95 = vector.extract_strided_slice %17 {offsets = [8, 8], sizes = [8, 8], strides = [1, 1]} : vector<16x32xf32> to vector<8x8xf32>
    %cst_40 = arith.constant dense<0.000000e+00> : vector<8x8xf32>
    %96 = tpu.matmul %93, %94, %cst_40 {dimension_numbers = #tpu.dot_dimension_numbers<[1], [1], [0], [0], [0, 0, 1, 0], [], []>} : vector<8x8xf32>, vector<8x8xf32>, vector<8x8xf32> -> vector<8x8xf32>
    %cst_41 = arith.constant dense<0xFF800000> : vector<8xf32>
    %97 = vector.multi_reduction <maximumf>, %96, %cst_41 [1] : vector<8x8xf32> to vector<8xf32>
    %98 = vector.shape_cast %97 : vector<8xf32> to vector<8x1xf32>
    %99 = vector.broadcast %98 : vector<8x1xf32> to vector<8x8xf32>
    %100 = arith.subf %96, %99 : vector<8x8xf32>
    %101 = math.exp %100 : vector<8x8xf32>
    %cst_42 = arith.constant dense<0.000000e+00> : vector<8xf32>
    %102 = vector.multi_reduction <add>, %101, %cst_42 [1] : vector<8x8xf32> to vector<8xf32>
    %103 = vector.shape_cast %102 : vector<8xf32> to vector<8x1xf32>
    %104 = vector.broadcast %103 : vector<8x1xf32> to vector<8x8xf32>
    %105 = arith.divf %101, %104 : vector<8x8xf32>
    %cst_43 = arith.constant dense<0.000000e+00> : vector<8x8xf32>
    %106 = tpu.matmul %105, %95, %cst_43 {dimension_numbers = #tpu.dot_dimension_numbers<[1], [0], [0], [1], [0, 0, 1, 1], [], []>} : vector<8x8xf32>, vector<8x8xf32>, vector<8x8xf32> -> vector<8x8xf32>
    %c8_44 = arith.constant 8 : index
    %c8_45 = arith.constant 8 : index
    %107 = vector.load %arg18[%c8_44, %c8_45] : memref<16x32xf32, #tpu.memory_space<vmem>>, vector<8x8xf32>
    tpu.vector_store %arg18[%c8_44, %c8_45], %106 {strides = array<i32>} : memref<16x32xf32, #tpu.memory_space<vmem>>, vector<8x8xf32>,
    %108 = vector.extract_strided_slice %15 {offsets = [8, 16], sizes = [8, 8], strides = [1, 1]} : vector<16x32xf32> to vector<8x8xf32>
    %109 = vector.extract_strided_slice %16 {offsets = [8, 16], sizes = [8, 8], strides = [1, 1]} : vector<16x32xf32> to vector<8x8xf32>
    %110 = vector.extract_strided_slice %17 {offsets = [8, 16], sizes = [8, 8], strides = [1, 1]} : vector<16x32xf32> to vector<8x8xf32>
    %cst_46 = arith.constant dense<0.000000e+00> : vector<8x8xf32>
    %111 = tpu.matmul %108, %109, %cst_46 {dimension_numbers = #tpu.dot_dimension_numbers<[1], [1], [0], [0], [0, 0, 1, 0], [], []>} : vector<8x8xf32>, vector<8x8xf32>, vector<8x8xf32> -> vector<8x8xf32>
    %cst_47 = arith.constant dense<0xFF800000> : vector<8xf32>
    %112 = vector.multi_reduction <maximumf>, %111, %cst_47 [1] : vector<8x8xf32> to vector<8xf32>
    %113 = vector.shape_cast %112 : vector<8xf32> to vector<8x1xf32>
    %114 = vector.broadcast %113 : vector<8x1xf32> to vector<8x8xf32>
    %115 = arith.subf %111, %114 : vector<8x8xf32>
    %116 = math.exp %115 : vector<8x8xf32>
    %cst_48 = arith.constant dense<0.000000e+00> : vector<8xf32>
    %117 = vector.multi_reduction <add>, %116, %cst_48 [1] : vector<8x8xf32> to vector<8xf32>
    %118 = vector.shape_cast %117 : vector<8xf32> to vector<8x1xf32>
    %119 = vector.broadcast %118 : vector<8x1xf32> to vector<8x8xf32>
    %120 = arith.divf %116, %119 : vector<8x8xf32>
    %cst_49 = arith.constant dense<0.000000e+00> : vector<8x8xf32>
    %121 = tpu.matmul %120, %110, %cst_49 {dimension_numbers = #tpu.dot_dimension_numbers<[1], [0], [0], [1], [0, 0, 1, 1], [], []>} : vector<8x8xf32>, vector<8x8xf32>, vector<8x8xf32> -> vector<8x8xf32>
    %c8_50 = arith.constant 8 : index
    %c16_51 = arith.constant 16 : index
    %122 = vector.load %arg18[%c8_50, %c16_51] : memref<16x32xf32, #tpu.memory_space<vmem>>, vector<8x8xf32>
    tpu.vector_store %arg18[%c8_50, %c16_51], %121 {strides = array<i32>} : memref<16x32xf32, #tpu.memory_space<vmem>>, vector<8x8xf32>,
    %123 = vector.extract_strided_slice %15 {offsets = [8, 24], sizes = [8, 8], strides = [1, 1]} : vector<16x32xf32> to vector<8x8xf32>
    %124 = vector.extract_strided_slice %16 {offsets = [8, 24], sizes = [8, 8], strides = [1, 1]} : vector<16x32xf32> to vector<8x8xf32>
    %125 = vector.extract_strided_slice %17 {offsets = [8, 24], sizes = [8, 8], strides = [1, 1]} : vector<16x32xf32> to vector<8x8xf32>
    %cst_52 = arith.constant dense<0.000000e+00> : vector<8x8xf32>
    %126 = tpu.matmul %123, %124, %cst_52 {dimension_numbers = #tpu.dot_dimension_numbers<[1], [1], [0], [0], [0, 0, 1, 0], [], []>} : vector<8x8xf32>, vector<8x8xf32>, vector<8x8xf32> -> vector<8x8xf32>
    %cst_53 = arith.constant dense<0xFF800000> : vector<8xf32>
    %127 = vector.multi_reduction <maximumf>, %126, %cst_53 [1] : vector<8x8xf32> to vector<8xf32>
    %128 = vector.shape_cast %127 : vector<8xf32> to vector<8x1xf32>
    %129 = vector.broadcast %128 : vector<8x1xf32> to vector<8x8xf32>
    %130 = arith.subf %126, %129 : vector<8x8xf32>
    %131 = math.exp %130 : vector<8x8xf32>
    %cst_54 = arith.constant dense<0.000000e+00> : vector<8xf32>
    %132 = vector.multi_reduction <add>, %131, %cst_54 [1] : vector<8x8xf32> to vector<8xf32>
    %133 = vector.shape_cast %132 : vector<8xf32> to vector<8x1xf32>
    %134 = vector.broadcast %133 : vector<8x1xf32> to vector<8x8xf32>
    %135 = arith.divf %131, %134 : vector<8x8xf32>
    %cst_55 = arith.constant dense<0.000000e+00> : vector<8x8xf32>
    %136 = tpu.matmul %135, %125, %cst_55 {dimension_numbers = #tpu.dot_dimension_numbers<[1], [0], [0], [1], [0, 0, 1, 1], [], []>} : vector<8x8xf32>, vector<8x8xf32>, vector<8x8xf32> -> vector<8x8xf32>
    %c8_56 = arith.constant 8 : index
    %c24_57 = arith.constant 24 : index
    %137 = vector.load %arg18[%c8_56, %c24_57] : memref<16x32xf32, #tpu.memory_space<vmem>>, vector<8x8xf32>
    tpu.vector_store %arg18[%c8_56, %c24_57], %136 {strides = array<i32>} : memref<16x32xf32, #tpu.memory_space<vmem>>, vector<8x8xf32>,
    %c0_58 = arith.constant 0 : index
    %c0_59 = arith.constant 0 : index
    %138 = vector.load %arg18[%c0_58, %c0_59] : memref<16x32xf32, #tpu.memory_space<vmem>>, vector<16x32xf32>
    %c0_60 = arith.constant 0 : index
    %c0_61 = arith.constant 0 : index
    %c0_62 = arith.constant 0 : index
    %139 = vector.load %arg5[%c0_60, %c0_61, %c0_62] : memref<2x32x32xf32, #tpu.memory_space<vmem>>, vector<1x32x32xf32>
    %140 = vector.shape_cast %139 : vector<1x32x32xf32> to vector<32x32xf32>
    %cst_63 = arith.constant dense<0.000000e+00> : vector<16x32xf32>
    %141 = tpu.matmul %138, %140, %cst_63 {dimension_numbers = #tpu.dot_dimension_numbers<[1], [0], [0], [1], [0, 0, 1, 1], [], []>} : vector<16x32xf32>, vector<32x32xf32>, vector<16x32xf32> -> vector<16x32xf32>
    %c0_64 = arith.constant 0 : index
    %c0_65 = arith.constant 0 : index
    %c0_66 = arith.constant 0 : index
    %142 = vector.load %arg6[%c0_64, %c0_65, %c0_66] : memref<2x1x32xf32, #tpu.memory_space<vmem>>, vector<1x1x32xf32>
    %143 = vector.shape_cast %142 : vector<1x1x32xf32> to vector<1x32xf32>
    %144 = vector.broadcast %143 : vector<1x32xf32> to vector<16x32xf32>
    %145 = arith.addf %141, %144 : vector<16x32xf32>
    %146 = arith.addf %5, %145 : vector<16x32xf32>
    %c0_67 = arith.constant 0 : index
    %c0_68 = arith.constant 0 : index
    %c0_69 = arith.constant 0 : index
    %147 = vector.load %arg7[%c0_67, %c0_68, %c0_69] : memref<2x1x32xf32, #tpu.memory_space<vmem>>, vector<1x1x32xf32>
    %148 = vector.shape_cast %147 : vector<1x1x32xf32> to vector<1x32xf32>
    %c0_70 = arith.constant 0 : index
    %c0_71 = arith.constant 0 : index
    %c0_72 = arith.constant 0 : index
    %149 = vector.load %arg8[%c0_70, %c0_71, %c0_72] : memref<2x1x32xf32, #tpu.memory_space<vmem>>, vector<1x1x32xf32>
    %150 = vector.shape_cast %149 : vector<1x1x32xf32> to vector<1x32xf32>
    %cst_73 = arith.constant dense<0.000000e+00> : vector<16xf32>
    %151 = vector.multi_reduction <add>, %146, %cst_73 [1] : vector<16x32xf32> to vector<16xf32>
    %152 = vector.shape_cast %151 : vector<16xf32> to vector<16x1xf32>
    %cst_74 = arith.constant 3.200000e+01 : f32
    %153 = vector.broadcast %cst_74 : f32 to vector<16x1xf32>
    %154 = arith.divf %152, %153 : vector<16x1xf32>
    %155 = vector.broadcast %154 : vector<16x1xf32> to vector<16x32xf32>
    %156 = arith.subf %146, %155 : vector<16x32xf32>
    %157 = arith.mulf %156, %156 : vector<16x32xf32>
    %cst_75 = arith.constant dense<0.000000e+00> : vector<16xf32>
    %158 = vector.multi_reduction <add>, %157, %cst_75 [1] : vector<16x32xf32> to vector<16xf32>
    %159 = vector.shape_cast %158 : vector<16xf32> to vector<16x1xf32>
    %cst_76 = arith.constant 3.200000e+01 : f32
    %160 = vector.broadcast %cst_76 : f32 to vector<16x1xf32>
    %161 = arith.divf %159, %160 : vector<16x1xf32>
    %162 = vector.broadcast %154 : vector<16x1xf32> to vector<16x32xf32>
    %163 = arith.subf %146, %162 : vector<16x32xf32>
    %cst_77 = arith.constant 9.99999974E-6 : f32
    %164 = vector.broadcast %cst_77 : f32 to vector<16x1xf32>
    %165 = arith.addf %161, %164 : vector<16x1xf32>
    %166 = math.rsqrt %165 : vector<16x1xf32>
    %167 = vector.broadcast %166 : vector<16x1xf32> to vector<16x32xf32>
    %168 = arith.mulf %163, %167 : vector<16x32xf32>
    %169 = vector.broadcast %148 : vector<1x32xf32> to vector<16x32xf32>
    %170 = arith.mulf %168, %169 : vector<16x32xf32>
    %171 = vector.broadcast %150 : vector<1x32xf32> to vector<16x32xf32>
    %172 = arith.addf %170, %171 : vector<16x32xf32>
    %c0_78 = arith.constant 0 : index
    %c0_79 = arith.constant 0 : index
    %c0_80 = arith.constant 0 : index
    %173 = vector.load %arg9[%c0_78, %c0_79, %c0_80] : memref<2x32x2048xf32, #tpu.memory_space<vmem>>, vector<1x32x2048xf32>
    %174 = vector.shape_cast %173 : vector<1x32x2048xf32> to vector<32x2048xf32>
    %cst_81 = arith.constant dense<0.000000e+00> : vector<16x2048xf32>
    %175 = tpu.matmul %172, %174, %cst_81 {dimension_numbers = #tpu.dot_dimension_numbers<[1], [0], [0], [1], [0, 0, 1, 1], [], []>} : vector<16x32xf32>, vector<32x2048xf32>, vector<16x2048xf32> -> vector<16x2048xf32>
    %c0_82 = arith.constant 0 : index
    %c0_83 = arith.constant 0 : index
    %c0_84 = arith.constant 0 : index
    %176 = vector.load %arg10[%c0_82, %c0_83, %c0_84] : memref<2x1x2048xf32, #tpu.memory_space<vmem>>, vector<1x1x2048xf32>
    %177 = vector.shape_cast %176 : vector<1x1x2048xf32> to vector<1x2048xf32>
    %178 = vector.broadcast %177 : vector<1x2048xf32> to vector<16x2048xf32>
    %179 = arith.addf %175, %178 : vector<16x2048xf32>
    %cst_85 = arith.constant 0.000000e+00 : f32
    %180 = vector.broadcast %cst_85 : f32 to vector<16x2048xf32>
    %181 = arith.maximumf %179, %180 : vector<16x2048xf32>
    %c0_86 = arith.constant 0 : index
    %c0_87 = arith.constant 0 : index
    %c0_88 = arith.constant 0 : index
    %182 = vector.load %arg11[%c0_86, %c0_87, %c0_88] : memref<2x2048x32xf32, #tpu.memory_space<vmem>>, vector<1x2048x32xf32>
    %183 = vector.shape_cast %182 : vector<1x2048x32xf32> to vector<2048x32xf32>
    %cst_89 = arith.constant dense<0.000000e+00> : vector<16x32xf32>
    %184 = tpu.matmul %181, %183, %cst_89 {dimension_numbers = #tpu.dot_dimension_numbers<[1], [0], [0], [1], [0, 0, 1, 1], [], []>} : vector<16x2048xf32>, vector<2048x32xf32>, vector<16x32xf32> -> vector<16x32xf32>
    %c0_90 = arith.constant 0 : index
    %c0_91 = arith.constant 0 : index
    %c0_92 = arith.constant 0 : index
    %185 = vector.load %arg12[%c0_90, %c0_91, %c0_92] : memref<2x1x32xf32, #tpu.memory_space<vmem>>, vector<1x1x32xf32>
    %186 = vector.shape_cast %185 : vector<1x1x32xf32> to vector<1x32xf32>
    %187 = vector.broadcast %186 : vector<1x32xf32> to vector<16x32xf32>
    %188 = arith.addf %184, %187 : vector<16x32xf32>
    %189 = arith.addf %172, %188 : vector<16x32xf32>
    %c0_93 = arith.constant 0 : index
    %c0_94 = arith.constant 0 : index
    %c0_95 = arith.constant 0 : index
    %190 = vector.load %arg13[%c0_93, %c0_94, %c0_95] : memref<2x1x32xf32, #tpu.memory_space<vmem>>, vector<1x1x32xf32>
    %191 = vector.shape_cast %190 : vector<1x1x32xf32> to vector<1x32xf32>
    %c0_96 = arith.constant 0 : index
    %c0_97 = arith.constant 0 : index
    %c0_98 = arith.constant 0 : index
    %192 = vector.load %arg14[%c0_96, %c0_97, %c0_98] : memref<2x1x32xf32, #tpu.memory_space<vmem>>, vector<1x1x32xf32>
    %193 = vector.shape_cast %192 : vector<1x1x32xf32> to vector<1x32xf32>
    %cst_99 = arith.constant dense<0.000000e+00> : vector<16xf32>
    %194 = vector.multi_reduction <add>, %189, %cst_99 [1] : vector<16x32xf32> to vector<16xf32>
    %195 = vector.shape_cast %194 : vector<16xf32> to vector<16x1xf32>
    %cst_100 = arith.constant 3.200000e+01 : f32
    %196 = vector.broadcast %cst_100 : f32 to vector<16x1xf32>
    %197 = arith.divf %195, %196 : vector<16x1xf32>
    %198 = vector.broadcast %197 : vector<16x1xf32> to vector<16x32xf32>
    %199 = arith.subf %189, %198 : vector<16x32xf32>
    %200 = arith.mulf %199, %199 : vector<16x32xf32>
    %cst_101 = arith.constant dense<0.000000e+00> : vector<16xf32>
    %201 = vector.multi_reduction <add>, %200, %cst_101 [1] : vector<16x32xf32> to vector<16xf32>
    %202 = vector.shape_cast %201 : vector<16xf32> to vector<16x1xf32>
    %cst_102 = arith.constant 3.200000e+01 : f32
    %203 = vector.broadcast %cst_102 : f32 to vector<16x1xf32>
    %204 = arith.divf %202, %203 : vector<16x1xf32>
    %205 = vector.broadcast %197 : vector<16x1xf32> to vector<16x32xf32>
    %206 = arith.subf %189, %205 : vector<16x32xf32>
    %cst_103 = arith.constant 9.99999974E-6 : f32
    %207 = vector.broadcast %cst_103 : f32 to vector<16x1xf32>
    %208 = arith.addf %204, %207 : vector<16x1xf32>
    %209 = math.rsqrt %208 : vector<16x1xf32>
    %210 = vector.broadcast %209 : vector<16x1xf32> to vector<16x32xf32>
    %211 = arith.mulf %206, %210 : vector<16x32xf32>
    %212 = vector.broadcast %191 : vector<1x32xf32> to vector<16x32xf32>
    %213 = arith.mulf %211, %212 : vector<16x32xf32>
    %214 = vector.broadcast %193 : vector<1x32xf32> to vector<16x32xf32>
    %215 = arith.addf %213, %214 : vector<16x32xf32>
    %c1 = arith.constant 1 : index
    %c0_104 = arith.constant 0 : index
    %c0_105 = arith.constant 0 : index
    %216 = vector.load %arg3[%c1, %c0_104, %c0_105] : memref<2x32x96xf32, #tpu.memory_space<vmem>>, vector<1x32x96xf32>
    %217 = vector.shape_cast %216 : vector<1x32x96xf32> to vector<32x96xf32>
    %cst_106 = arith.constant dense<0.000000e+00> : vector<16x96xf32>
    %218 = tpu.matmul %215, %217, %cst_106 {dimension_numbers = #tpu.dot_dimension_numbers<[1], [0], [0], [1], [0, 0, 1, 1], [], []>} : vector<16x32xf32>, vector<32x96xf32>, vector<16x96xf32> -> vector<16x96xf32>
    %c1_107 = arith.constant 1 : index
    %c0_108 = arith.constant 0 : index
    %c0_109 = arith.constant 0 : index
    %219 = vector.load %arg4[%c1_107, %c0_108, %c0_109] : memref<2x1x96xf32, #tpu.memory_space<vmem>>, vector<1x1x96xf32>
    %220 = vector.shape_cast %219 : vector<1x1x96xf32> to vector<1x96xf32>
    %221 = vector.broadcast %220 : vector<1x96xf32> to vector<16x96xf32>
    %222 = arith.addf %218, %221 : vector<16x96xf32>
    %223 = vector.extract_strided_slice %222 {offsets = [0, 0], sizes = [16, 32], strides = [1, 1]} : vector<16x96xf32> to vector<16x32xf32>
    %cst_110 = arith.constant 0.353553385 : f32
    %224 = vector.broadcast %cst_110 : f32 to vector<16x32xf32>
    %225 = arith.mulf %223, %224 : vector<16x32xf32>
    %226 = vector.extract_strided_slice %222 {offsets = [0, 32], sizes = [16, 32], strides = [1, 1]} : vector<16x96xf32> to vector<16x32xf32>
    %227 = vector.extract_strided_slice %222 {offsets = [0, 64], sizes = [16, 32], strides = [1, 1]} : vector<16x96xf32> to vector<16x32xf32>
    %228 = vector.extract_strided_slice %225 {offsets = [0, 0], sizes = [8, 8], strides = [1, 1]} : vector<16x32xf32> to vector<8x8xf32>
    %229 = vector.extract_strided_slice %226 {offsets = [0, 0], sizes = [8, 8], strides = [1, 1]} : vector<16x32xf32> to vector<8x8xf32>
    %230 = vector.extract_strided_slice %227 {offsets = [0, 0], sizes = [8, 8], strides = [1, 1]} : vector<16x32xf32> to vector<8x8xf32>
    %cst_111 = arith.constant dense<0.000000e+00> : vector<8x8xf32>
    %231 = tpu.matmul %228, %229, %cst_111 {dimension_numbers = #tpu.dot_dimension_numbers<[1], [1], [0], [0], [0, 0, 1, 0], [], []>} : vector<8x8xf32>, vector<8x8xf32>, vector<8x8xf32> -> vector<8x8xf32>
    %cst_112 = arith.constant dense<0xFF800000> : vector<8xf32>
    %232 = vector.multi_reduction <maximumf>, %231, %cst_112 [1] : vector<8x8xf32> to vector<8xf32>
    %233 = vector.shape_cast %232 : vector<8xf32> to vector<8x1xf32>
    %234 = vector.broadcast %233 : vector<8x1xf32> to vector<8x8xf32>
    %235 = arith.subf %231, %234 : vector<8x8xf32>
    %236 = math.exp %235 : vector<8x8xf32>
    %cst_113 = arith.constant dense<0.000000e+00> : vector<8xf32>
    %237 = vector.multi_reduction <add>, %236, %cst_113 [1] : vector<8x8xf32> to vector<8xf32>
    %238 = vector.shape_cast %237 : vector<8xf32> to vector<8x1xf32>
    %239 = vector.broadcast %238 : vector<8x1xf32> to vector<8x8xf32>
    %240 = arith.divf %236, %239 : vector<8x8xf32>
    %cst_114 = arith.constant dense<0.000000e+00> : vector<8x8xf32>
    %241 = tpu.matmul %240, %230, %cst_114 {dimension_numbers = #tpu.dot_dimension_numbers<[1], [0], [0], [1], [0, 0, 1, 1], [], []>} : vector<8x8xf32>, vector<8x8xf32>, vector<8x8xf32> -> vector<8x8xf32>
    %c0_115 = arith.constant 0 : index
    %c0_116 = arith.constant 0 : index
    %242 = vector.load %arg18[%c0_115, %c0_116] : memref<16x32xf32, #tpu.memory_space<vmem>>, vector<8x8xf32>
    tpu.vector_store %arg18[%c0_115, %c0_116], %241 {strides = array<i32>} : memref<16x32xf32, #tpu.memory_space<vmem>>, vector<8x8xf32>,
    %243 = vector.extract_strided_slice %225 {offsets = [0, 8], sizes = [8, 8], strides = [1, 1]} : vector<16x32xf32> to vector<8x8xf32>
    %244 = vector.extract_strided_slice %226 {offsets = [0, 8], sizes = [8, 8], strides = [1, 1]} : vector<16x32xf32> to vector<8x8xf32>
    %245 = vector.extract_strided_slice %227 {offsets = [0, 8], sizes = [8, 8], strides = [1, 1]} : vector<16x32xf32> to vector<8x8xf32>
    %cst_117 = arith.constant dense<0.000000e+00> : vector<8x8xf32>
    %246 = tpu.matmul %243, %244, %cst_117 {dimension_numbers = #tpu.dot_dimension_numbers<[1], [1], [0], [0], [0, 0, 1, 0], [], []>} : vector<8x8xf32>, vector<8x8xf32>, vector<8x8xf32> -> vector<8x8xf32>
    %cst_118 = arith.constant dense<0xFF800000> : vector<8xf32>
    %247 = vector.multi_reduction <maximumf>, %246, %cst_118 [1] : vector<8x8xf32> to vector<8xf32>
    %248 = vector.shape_cast %247 : vector<8xf32> to vector<8x1xf32>
    %249 = vector.broadcast %248 : vector<8x1xf32> to vector<8x8xf32>
    %250 = arith.subf %246, %249 : vector<8x8xf32>
    %251 = math.exp %250 : vector<8x8xf32>
    %cst_119 = arith.constant dense<0.000000e+00> : vector<8xf32>
    %252 = vector.multi_reduction <add>, %251, %cst_119 [1] : vector<8x8xf32> to vector<8xf32>
    %253 = vector.shape_cast %252 : vector<8xf32> to vector<8x1xf32>
    %254 = vector.broadcast %253 : vector<8x1xf32> to vector<8x8xf32>
    %255 = arith.divf %251, %254 : vector<8x8xf32>
    %cst_120 = arith.constant dense<0.000000e+00> : vector<8x8xf32>
    %256 = tpu.matmul %255, %245, %cst_120 {dimension_numbers = #tpu.dot_dimension_numbers<[1], [0], [0], [1], [0, 0, 1, 1], [], []>} : vector<8x8xf32>, vector<8x8xf32>, vector<8x8xf32> -> vector<8x8xf32>
    %c0_121 = arith.constant 0 : index
    %c8_122 = arith.constant 8 : index
    %257 = vector.load %arg18[%c0_121, %c8_122] : memref<16x32xf32, #tpu.memory_space<vmem>>, vector<8x8xf32>
    tpu.vector_store %arg18[%c0_121, %c8_122], %256 {strides = array<i32>} : memref<16x32xf32, #tpu.memory_space<vmem>>, vector<8x8xf32>,
    %258 = vector.extract_strided_slice %225 {offsets = [0, 16], sizes = [8, 8], strides = [1, 1]} : vector<16x32xf32> to vector<8x8xf32>
    %259 = vector.extract_strided_slice %226 {offsets = [0, 16], sizes = [8, 8], strides = [1, 1]} : vector<16x32xf32> to vector<8x8xf32>
    %260 = vector.extract_strided_slice %227 {offsets = [0, 16], sizes = [8, 8], strides = [1, 1]} : vector<16x32xf32> to vector<8x8xf32>
    %cst_123 = arith.constant dense<0.000000e+00> : vector<8x8xf32>
    %261 = tpu.matmul %258, %259, %cst_123 {dimension_numbers = #tpu.dot_dimension_numbers<[1], [1], [0], [0], [0, 0, 1, 0], [], []>} : vector<8x8xf32>, vector<8x8xf32>, vector<8x8xf32> -> vector<8x8xf32>
    %cst_124 = arith.constant dense<0xFF800000> : vector<8xf32>
    %262 = vector.multi_reduction <maximumf>, %261, %cst_124 [1] : vector<8x8xf32> to vector<8xf32>
    %263 = vector.shape_cast %262 : vector<8xf32> to vector<8x1xf32>
    %264 = vector.broadcast %263 : vector<8x1xf32> to vector<8x8xf32>
    %265 = arith.subf %261, %264 : vector<8x8xf32>
    %266 = math.exp %265 : vector<8x8xf32>
    %cst_125 = arith.constant dense<0.000000e+00> : vector<8xf32>
    %267 = vector.multi_reduction <add>, %266, %cst_125 [1] : vector<8x8xf32> to vector<8xf32>
    %268 = vector.shape_cast %267 : vector<8xf32> to vector<8x1xf32>
    %269 = vector.broadcast %268 : vector<8x1xf32> to vector<8x8xf32>
    %270 = arith.divf %266, %269 : vector<8x8xf32>
    %cst_126 = arith.constant dense<0.000000e+00> : vector<8x8xf32>
    %271 = tpu.matmul %270, %260, %cst_126 {dimension_numbers = #tpu.dot_dimension_numbers<[1], [0], [0], [1], [0, 0, 1, 1], [], []>} : vector<8x8xf32>, vector<8x8xf32>, vector<8x8xf32> -> vector<8x8xf32>
    %c0_127 = arith.constant 0 : index
    %c16_128 = arith.constant 16 : index
    %272 = vector.load %arg18[%c0_127, %c16_128] : memref<16x32xf32, #tpu.memory_space<vmem>>, vector<8x8xf32>
    tpu.vector_store %arg18[%c0_127, %c16_128], %271 {strides = array<i32>} : memref<16x32xf32, #tpu.memory_space<vmem>>, vector<8x8xf32>,
    %273 = vector.extract_strided_slice %225 {offsets = [0, 24], sizes = [8, 8], strides = [1, 1]} : vector<16x32xf32> to vector<8x8xf32>
    %274 = vector.extract_strided_slice %226 {offsets = [0, 24], sizes = [8, 8], strides = [1, 1]} : vector<16x32xf32> to vector<8x8xf32>
    %275 = vector.extract_strided_slice %227 {offsets = [0, 24], sizes = [8, 8], strides = [1, 1]} : vector<16x32xf32> to vector<8x8xf32>
    %cst_129 = arith.constant dense<0.000000e+00> : vector<8x8xf32>
    %276 = tpu.matmul %273, %274, %cst_129 {dimension_numbers = #tpu.dot_dimension_numbers<[1], [1], [0], [0], [0, 0, 1, 0], [], []>} : vector<8x8xf32>, vector<8x8xf32>, vector<8x8xf32> -> vector<8x8xf32>
    %cst_130 = arith.constant dense<0xFF800000> : vector<8xf32>
    %277 = vector.multi_reduction <maximumf>, %276, %cst_130 [1] : vector<8x8xf32> to vector<8xf32>
    %278 = vector.shape_cast %277 : vector<8xf32> to vector<8x1xf32>
    %279 = vector.broadcast %278 : vector<8x1xf32> to vector<8x8xf32>
    %280 = arith.subf %276, %279 : vector<8x8xf32>
    %281 = math.exp %280 : vector<8x8xf32>
    %cst_131 = arith.constant dense<0.000000e+00> : vector<8xf32>
    %282 = vector.multi_reduction <add>, %281, %cst_131 [1] : vector<8x8xf32> to vector<8xf32>
    %283 = vector.shape_cast %282 : vector<8xf32> to vector<8x1xf32>
    %284 = vector.broadcast %283 : vector<8x1xf32> to vector<8x8xf32>
    %285 = arith.divf %281, %284 : vector<8x8xf32>
    %cst_132 = arith.constant dense<0.000000e+00> : vector<8x8xf32>
    %286 = tpu.matmul %285, %275, %cst_132 {dimension_numbers = #tpu.dot_dimension_numbers<[1], [0], [0], [1], [0, 0, 1, 1], [], []>} : vector<8x8xf32>, vector<8x8xf32>, vector<8x8xf32> -> vector<8x8xf32>
    %c0_133 = arith.constant 0 : index
    %c24_134 = arith.constant 24 : index
    %287 = vector.load %arg18[%c0_133, %c24_134] : memref<16x32xf32, #tpu.memory_space<vmem>>, vector<8x8xf32>
    tpu.vector_store %arg18[%c0_133, %c24_134], %286 {strides = array<i32>} : memref<16x32xf32, #tpu.memory_space<vmem>>, vector<8x8xf32>,
    %288 = vector.extract_strided_slice %225 {offsets = [8, 0], sizes = [8, 8], strides = [1, 1]} : vector<16x32xf32> to vector<8x8xf32>
    %289 = vector.extract_strided_slice %226 {offsets = [8, 0], sizes = [8, 8], strides = [1, 1]} : vector<16x32xf32> to vector<8x8xf32>
    %290 = vector.extract_strided_slice %227 {offsets = [8, 0], sizes = [8, 8], strides = [1, 1]} : vector<16x32xf32> to vector<8x8xf32>
    %cst_135 = arith.constant dense<0.000000e+00> : vector<8x8xf32>
    %291 = tpu.matmul %288, %289, %cst_135 {dimension_numbers = #tpu.dot_dimension_numbers<[1], [1], [0], [0], [0, 0, 1, 0], [], []>} : vector<8x8xf32>, vector<8x8xf32>, vector<8x8xf32> -> vector<8x8xf32>
    %cst_136 = arith.constant dense<0xFF800000> : vector<8xf32>
    %292 = vector.multi_reduction <maximumf>, %291, %cst_136 [1] : vector<8x8xf32> to vector<8xf32>
    %293 = vector.shape_cast %292 : vector<8xf32> to vector<8x1xf32>
    %294 = vector.broadcast %293 : vector<8x1xf32> to vector<8x8xf32>
    %295 = arith.subf %291, %294 : vector<8x8xf32>
    %296 = math.exp %295 : vector<8x8xf32>
    %cst_137 = arith.constant dense<0.000000e+00> : vector<8xf32>
    %297 = vector.multi_reduction <add>, %296, %cst_137 [1] : vector<8x8xf32> to vector<8xf32>
    %298 = vector.shape_cast %297 : vector<8xf32> to vector<8x1xf32>
    %299 = vector.broadcast %298 : vector<8x1xf32> to vector<8x8xf32>
    %300 = arith.divf %296, %299 : vector<8x8xf32>
    %cst_138 = arith.constant dense<0.000000e+00> : vector<8x8xf32>
    %301 = tpu.matmul %300, %290, %cst_138 {dimension_numbers = #tpu.dot_dimension_numbers<[1], [0], [0], [1], [0, 0, 1, 1], [], []>} : vector<8x8xf32>, vector<8x8xf32>, vector<8x8xf32> -> vector<8x8xf32>
    %c8_139 = arith.constant 8 : index
    %c0_140 = arith.constant 0 : index
    %302 = vector.load %arg18[%c8_139, %c0_140] : memref<16x32xf32, #tpu.memory_space<vmem>>, vector<8x8xf32>
    tpu.vector_store %arg18[%c8_139, %c0_140], %301 {strides = array<i32>} : memref<16x32xf32, #tpu.memory_space<vmem>>, vector<8x8xf32>,
    %303 = vector.extract_strided_slice %225 {offsets = [8, 8], sizes = [8, 8], strides = [1, 1]} : vector<16x32xf32> to vector<8x8xf32>
    %304 = vector.extract_strided_slice %226 {offsets = [8, 8], sizes = [8, 8], strides = [1, 1]} : vector<16x32xf32> to vector<8x8xf32>
    %305 = vector.extract_strided_slice %227 {offsets = [8, 8], sizes = [8, 8], strides = [1, 1]} : vector<16x32xf32> to vector<8x8xf32>
    %cst_141 = arith.constant dense<0.000000e+00> : vector<8x8xf32>
    %306 = tpu.matmul %303, %304, %cst_141 {dimension_numbers = #tpu.dot_dimension_numbers<[1], [1], [0], [0], [0, 0, 1, 0], [], []>} : vector<8x8xf32>, vector<8x8xf32>, vector<8x8xf32> -> vector<8x8xf32>
    %cst_142 = arith.constant dense<0xFF800000> : vector<8xf32>
    %307 = vector.multi_reduction <maximumf>, %306, %cst_142 [1] : vector<8x8xf32> to vector<8xf32>
    %308 = vector.shape_cast %307 : vector<8xf32> to vector<8x1xf32>
    %309 = vector.broadcast %308 : vector<8x1xf32> to vector<8x8xf32>
    %310 = arith.subf %306, %309 : vector<8x8xf32>
    %311 = math.exp %310 : vector<8x8xf32>
    %cst_143 = arith.constant dense<0.000000e+00> : vector<8xf32>
    %312 = vector.multi_reduction <add>, %311, %cst_143 [1] : vector<8x8xf32> to vector<8xf32>
    %313 = vector.shape_cast %312 : vector<8xf32> to vector<8x1xf32>
    %314 = vector.broadcast %313 : vector<8x1xf32> to vector<8x8xf32>
    %315 = arith.divf %311, %314 : vector<8x8xf32>
    %cst_144 = arith.constant dense<0.000000e+00> : vector<8x8xf32>
    %316 = tpu.matmul %315, %305, %cst_144 {dimension_numbers = #tpu.dot_dimension_numbers<[1], [0], [0], [1], [0, 0, 1, 1], [], []>} : vector<8x8xf32>, vector<8x8xf32>, vector<8x8xf32> -> vector<8x8xf32>
    %c8_145 = arith.constant 8 : index
    %c8_146 = arith.constant 8 : index
    %317 = vector.load %arg18[%c8_145, %c8_146] : memref<16x32xf32, #tpu.memory_space<vmem>>, vector<8x8xf32>
    tpu.vector_store %arg18[%c8_145, %c8_146], %316 {strides = array<i32>} : memref<16x32xf32, #tpu.memory_space<vmem>>, vector<8x8xf32>,
    %318 = vector.extract_strided_slice %225 {offsets = [8, 16], sizes = [8, 8], strides = [1, 1]} : vector<16x32xf32> to vector<8x8xf32>
    %319 = vector.extract_strided_slice %226 {offsets = [8, 16], sizes = [8, 8], strides = [1, 1]} : vector<16x32xf32> to vector<8x8xf32>
    %320 = vector.extract_strided_slice %227 {offsets = [8, 16], sizes = [8, 8], strides = [1, 1]} : vector<16x32xf32> to vector<8x8xf32>
    %cst_147 = arith.constant dense<0.000000e+00> : vector<8x8xf32>
    %321 = tpu.matmul %318, %319, %cst_147 {dimension_numbers = #tpu.dot_dimension_numbers<[1], [1], [0], [0], [0, 0, 1, 0], [], []>} : vector<8x8xf32>, vector<8x8xf32>, vector<8x8xf32> -> vector<8x8xf32>
    %cst_148 = arith.constant dense<0xFF800000> : vector<8xf32>
    %322 = vector.multi_reduction <maximumf>, %321, %cst_148 [1] : vector<8x8xf32> to vector<8xf32>
    %323 = vector.shape_cast %322 : vector<8xf32> to vector<8x1xf32>
    %324 = vector.broadcast %323 : vector<8x1xf32> to vector<8x8xf32>
    %325 = arith.subf %321, %324 : vector<8x8xf32>
    %326 = math.exp %325 : vector<8x8xf32>
    %cst_149 = arith.constant dense<0.000000e+00> : vector<8xf32>
    %327 = vector.multi_reduction <add>, %326, %cst_149 [1] : vector<8x8xf32> to vector<8xf32>
    %328 = vector.shape_cast %327 : vector<8xf32> to vector<8x1xf32>
    %329 = vector.broadcast %328 : vector<8x1xf32> to vector<8x8xf32>
    %330 = arith.divf %326, %329 : vector<8x8xf32>
    %cst_150 = arith.constant dense<0.000000e+00> : vector<8x8xf32>
    %331 = tpu.matmul %330, %320, %cst_150 {dimension_numbers = #tpu.dot_dimension_numbers<[1], [0], [0], [1], [0, 0, 1, 1], [], []>} : vector<8x8xf32>, vector<8x8xf32>, vector<8x8xf32> -> vector<8x8xf32>
    %c8_151 = arith.constant 8 : index
    %c16_152 = arith.constant 16 : index
    %332 = vector.load %arg18[%c8_151, %c16_152] : memref<16x32xf32, #tpu.memory_space<vmem>>, vector<8x8xf32>
    tpu.vector_store %arg18[%c8_151, %c16_152], %331 {strides = array<i32>} : memref<16x32xf32, #tpu.memory_space<vmem>>, vector<8x8xf32>,
    %333 = vector.extract_strided_slice %225 {offsets = [8, 24], sizes = [8, 8], strides = [1, 1]} : vector<16x32xf32> to vector<8x8xf32>
    %334 = vector.extract_strided_slice %226 {offsets = [8, 24], sizes = [8, 8], strides = [1, 1]} : vector<16x32xf32> to vector<8x8xf32>
    %335 = vector.extract_strided_slice %227 {offsets = [8, 24], sizes = [8, 8], strides = [1, 1]} : vector<16x32xf32> to vector<8x8xf32>
    %cst_153 = arith.constant dense<0.000000e+00> : vector<8x8xf32>
    %336 = tpu.matmul %333, %334, %cst_153 {dimension_numbers = #tpu.dot_dimension_numbers<[1], [1], [0], [0], [0, 0, 1, 0], [], []>} : vector<8x8xf32>, vector<8x8xf32>, vector<8x8xf32> -> vector<8x8xf32>
    %cst_154 = arith.constant dense<0xFF800000> : vector<8xf32>
    %337 = vector.multi_reduction <maximumf>, %336, %cst_154 [1] : vector<8x8xf32> to vector<8xf32>
    %338 = vector.shape_cast %337 : vector<8xf32> to vector<8x1xf32>
    %339 = vector.broadcast %338 : vector<8x1xf32> to vector<8x8xf32>
    %340 = arith.subf %336, %339 : vector<8x8xf32>
    %341 = math.exp %340 : vector<8x8xf32>
    %cst_155 = arith.constant dense<0.000000e+00> : vector<8xf32>
    %342 = vector.multi_reduction <add>, %341, %cst_155 [1] : vector<8x8xf32> to vector<8xf32>
    %343 = vector.shape_cast %342 : vector<8xf32> to vector<8x1xf32>
    %344 = vector.broadcast %343 : vector<8x1xf32> to vector<8x8xf32>
    %345 = arith.divf %341, %344 : vector<8x8xf32>
    %cst_156 = arith.constant dense<0.000000e+00> : vector<8x8xf32>
    %346 = tpu.matmul %345, %335, %cst_156 {dimension_numbers = #tpu.dot_dimension_numbers<[1], [0], [0], [1], [0, 0, 1, 1], [], []>} : vector<8x8xf32>, vector<8x8xf32>, vector<8x8xf32> -> vector<8x8xf32>
    %c8_157 = arith.constant 8 : index
    %c24_158 = arith.constant 24 : index
    %347 = vector.load %arg18[%c8_157, %c24_158] : memref<16x32xf32, #tpu.memory_space<vmem>>, vector<8x8xf32>
    tpu.vector_store %arg18[%c8_157, %c24_158], %346 {strides = array<i32>} : memref<16x32xf32, #tpu.memory_space<vmem>>, vector<8x8xf32>,
    %c0_159 = arith.constant 0 : index
    %c0_160 = arith.constant 0 : index
    %348 = vector.load %arg18[%c0_159, %c0_160] : memref<16x32xf32, #tpu.memory_space<vmem>>, vector<16x32xf32>
    %c1_161 = arith.constant 1 : index
    %c0_162 = arith.constant 0 : index
    %c0_163 = arith.constant 0 : index
    %349 = vector.load %arg5[%c1_161, %c0_162, %c0_163] : memref<2x32x32xf32, #tpu.memory_space<vmem>>, vector<1x32x32xf32>
    %350 = vector.shape_cast %349 : vector<1x32x32xf32> to vector<32x32xf32>
    %cst_164 = arith.constant dense<0.000000e+00> : vector<16x32xf32>
    %351 = tpu.matmul %348, %350, %cst_164 {dimension_numbers = #tpu.dot_dimension_numbers<[1], [0], [0], [1], [0, 0, 1, 1], [], []>} : vector<16x32xf32>, vector<32x32xf32>, vector<16x32xf32> -> vector<16x32xf32>
    %c1_165 = arith.constant 1 : index
    %c0_166 = arith.constant 0 : index
    %c0_167 = arith.constant 0 : index
    %352 = vector.load %arg6[%c1_165, %c0_166, %c0_167] : memref<2x1x32xf32, #tpu.memory_space<vmem>>, vector<1x1x32xf32>
    %353 = vector.shape_cast %352 : vector<1x1x32xf32> to vector<1x32xf32>
    %354 = vector.broadcast %353 : vector<1x32xf32> to vector<16x32xf32>
    %355 = arith.addf %351, %354 : vector<16x32xf32>
    %356 = arith.addf %215, %355 : vector<16x32xf32>
    %c1_168 = arith.constant 1 : index
    %c0_169 = arith.constant 0 : index
    %c0_170 = arith.constant 0 : index
    %357 = vector.load %arg7[%c1_168, %c0_169, %c0_170] : memref<2x1x32xf32, #tpu.memory_space<vmem>>, vector<1x1x32xf32>
    %358 = vector.shape_cast %357 : vector<1x1x32xf32> to vector<1x32xf32>
    %c1_171 = arith.constant 1 : index
    %c0_172 = arith.constant 0 : index
    %c0_173 = arith.constant 0 : index
    %359 = vector.load %arg8[%c1_171, %c0_172, %c0_173] : memref<2x1x32xf32, #tpu.memory_space<vmem>>, vector<1x1x32xf32>
    %360 = vector.shape_cast %359 : vector<1x1x32xf32> to vector<1x32xf32>
    %cst_174 = arith.constant dense<0.000000e+00> : vector<16xf32>
    %361 = vector.multi_reduction <add>, %356, %cst_174 [1] : vector<16x32xf32> to vector<16xf32>
    %362 = vector.shape_cast %361 : vector<16xf32> to vector<16x1xf32>
    %cst_175 = arith.constant 3.200000e+01 : f32
    %363 = vector.broadcast %cst_175 : f32 to vector<16x1xf32>
    %364 = arith.divf %362, %363 : vector<16x1xf32>
    %365 = vector.broadcast %364 : vector<16x1xf32> to vector<16x32xf32>
    %366 = arith.subf %356, %365 : vector<16x32xf32>
    %367 = arith.mulf %366, %366 : vector<16x32xf32>
    %cst_176 = arith.constant dense<0.000000e+00> : vector<16xf32>
    %368 = vector.multi_reduction <add>, %367, %cst_176 [1] : vector<16x32xf32> to vector<16xf32>
    %369 = vector.shape_cast %368 : vector<16xf32> to vector<16x1xf32>
    %cst_177 = arith.constant 3.200000e+01 : f32
    %370 = vector.broadcast %cst_177 : f32 to vector<16x1xf32>
    %371 = arith.divf %369, %370 : vector<16x1xf32>
    %372 = vector.broadcast %364 : vector<16x1xf32> to vector<16x32xf32>
    %373 = arith.subf %356, %372 : vector<16x32xf32>
    %cst_178 = arith.constant 9.99999974E-6 : f32
    %374 = vector.broadcast %cst_178 : f32 to vector<16x1xf32>
    %375 = arith.addf %371, %374 : vector<16x1xf32>
    %376 = math.rsqrt %375 : vector<16x1xf32>
    %377 = vector.broadcast %376 : vector<16x1xf32> to vector<16x32xf32>
    %378 = arith.mulf %373, %377 : vector<16x32xf32>
    %379 = vector.broadcast %358 : vector<1x32xf32> to vector<16x32xf32>
    %380 = arith.mulf %378, %379 : vector<16x32xf32>
    %381 = vector.broadcast %360 : vector<1x32xf32> to vector<16x32xf32>
    %382 = arith.addf %380, %381 : vector<16x32xf32>
    %c1_179 = arith.constant 1 : index
    %c0_180 = arith.constant 0 : index
    %c0_181 = arith.constant 0 : index
    %383 = vector.load %arg9[%c1_179, %c0_180, %c0_181] : memref<2x32x2048xf32, #tpu.memory_space<vmem>>, vector<1x32x2048xf32>
    %384 = vector.shape_cast %383 : vector<1x32x2048xf32> to vector<32x2048xf32>
    %cst_182 = arith.constant dense<0.000000e+00> : vector<16x2048xf32>
    %385 = tpu.matmul %382, %384, %cst_182 {dimension_numbers = #tpu.dot_dimension_numbers<[1], [0], [0], [1], [0, 0, 1, 1], [], []>} : vector<16x32xf32>, vector<32x2048xf32>, vector<16x2048xf32> -> vector<16x2048xf32>
    %c1_183 = arith.constant 1 : index
    %c0_184 = arith.constant 0 : index
    %c0_185 = arith.constant 0 : index
    %386 = vector.load %arg10[%c1_183, %c0_184, %c0_185] : memref<2x1x2048xf32, #tpu.memory_space<vmem>>, vector<1x1x2048xf32>
    %387 = vector.shape_cast %386 : vector<1x1x2048xf32> to vector<1x2048xf32>
    %388 = vector.broadcast %387 : vector<1x2048xf32> to vector<16x2048xf32>
    %389 = arith.addf %385, %388 : vector<16x2048xf32>
    %cst_186 = arith.constant 0.000000e+00 : f32
    %390 = vector.broadcast %cst_186 : f32 to vector<16x2048xf32>
    %391 = arith.maximumf %389, %390 : vector<16x2048xf32>
    %c1_187 = arith.constant 1 : index
    %c0_188 = arith.constant 0 : index
    %c0_189 = arith.constant 0 : index
    %392 = vector.load %arg11[%c1_187, %c0_188, %c0_189] : memref<2x2048x32xf32, #tpu.memory_space<vmem>>, vector<1x2048x32xf32>
    %393 = vector.shape_cast %392 : vector<1x2048x32xf32> to vector<2048x32xf32>
    %cst_190 = arith.constant dense<0.000000e+00> : vector<16x32xf32>
    %394 = tpu.matmul %391, %393, %cst_190 {dimension_numbers = #tpu.dot_dimension_numbers<[1], [0], [0], [1], [0, 0, 1, 1], [], []>} : vector<16x2048xf32>, vector<2048x32xf32>, vector<16x32xf32> -> vector<16x32xf32>
    %c1_191 = arith.constant 1 : index
    %c0_192 = arith.constant 0 : index
    %c0_193 = arith.constant 0 : index
    %395 = vector.load %arg12[%c1_191, %c0_192, %c0_193] : memref<2x1x32xf32, #tpu.memory_space<vmem>>, vector<1x1x32xf32>
    %396 = vector.shape_cast %395 : vector<1x1x32xf32> to vector<1x32xf32>
    %397 = vector.broadcast %396 : vector<1x32xf32> to vector<16x32xf32>
    %398 = arith.addf %394, %397 : vector<16x32xf32>
    %399 = arith.addf %382, %398 : vector<16x32xf32>
    %c1_194 = arith.constant 1 : index
    %c0_195 = arith.constant 0 : index
    %c0_196 = arith.constant 0 : index
    %400 = vector.load %arg13[%c1_194, %c0_195, %c0_196] : memref<2x1x32xf32, #tpu.memory_space<vmem>>, vector<1x1x32xf32>
    %401 = vector.shape_cast %400 : vector<1x1x32xf32> to vector<1x32xf32>
    %c1_197 = arith.constant 1 : index
    %c0_198 = arith.constant 0 : index
    %c0_199 = arith.constant 0 : index
    %402 = vector.load %arg14[%c1_197, %c0_198, %c0_199] : memref<2x1x32xf32, #tpu.memory_space<vmem>>, vector<1x1x32xf32>
    %403 = vector.shape_cast %402 : vector<1x1x32xf32> to vector<1x32xf32>
    %cst_200 = arith.constant dense<0.000000e+00> : vector<16xf32>
    %404 = vector.multi_reduction <add>, %399, %cst_200 [1] : vector<16x32xf32> to vector<16xf32>
    %405 = vector.shape_cast %404 : vector<16xf32> to vector<16x1xf32>
    %cst_201 = arith.constant 3.200000e+01 : f32
    %406 = vector.broadcast %cst_201 : f32 to vector<16x1xf32>
    %407 = arith.divf %405, %406 : vector<16x1xf32>
    %408 = vector.broadcast %407 : vector<16x1xf32> to vector<16x32xf32>
    %409 = arith.subf %399, %408 : vector<16x32xf32>
    %410 = arith.mulf %409, %409 : vector<16x32xf32>
    %cst_202 = arith.constant dense<0.000000e+00> : vector<16xf32>
    %411 = vector.multi_reduction <add>, %410, %cst_202 [1] : vector<16x32xf32> to vector<16xf32>
    %412 = vector.shape_cast %411 : vector<16xf32> to vector<16x1xf32>
    %cst_203 = arith.constant 3.200000e+01 : f32
    %413 = vector.broadcast %cst_203 : f32 to vector<16x1xf32>
    %414 = arith.divf %412, %413 : vector<16x1xf32>
    %415 = vector.broadcast %407 : vector<16x1xf32> to vector<16x32xf32>
    %416 = arith.subf %399, %415 : vector<16x32xf32>
    %cst_204 = arith.constant 9.99999974E-6 : f32
    %417 = vector.broadcast %cst_204 : f32 to vector<16x1xf32>
    %418 = arith.addf %414, %417 : vector<16x1xf32>
    %419 = math.rsqrt %418 : vector<16x1xf32>
    %420 = vector.broadcast %419 : vector<16x1xf32> to vector<16x32xf32>
    %421 = arith.mulf %416, %420 : vector<16x32xf32>
    %422 = vector.broadcast %401 : vector<1x32xf32> to vector<16x32xf32>
    %423 = arith.mulf %421, %422 : vector<16x32xf32>
    %424 = vector.broadcast %403 : vector<1x32xf32> to vector<16x32xf32>
    %425 = arith.addf %423, %424 : vector<16x32xf32>
    %c0_205 = arith.constant 0 : index
    %c0_206 = arith.constant 0 : index
    %426 = vector.load %arg15[%c0_205, %c0_206] : memref<32x128xf32, #tpu.memory_space<vmem>>, vector<32x128xf32>
    %cst_207 = arith.constant dense<0.000000e+00> : vector<16x128xf32>
    %427 = tpu.matmul %425, %426, %cst_207 {dimension_numbers = #tpu.dot_dimension_numbers<[1], [0], [0], [1], [0, 0, 1, 1], [], []>} : vector<16x32xf32>, vector<32x128xf32>, vector<16x128xf32> -> vector<16x128xf32>
    %c0_208 = arith.constant 0 : index
    %c0_209 = arith.constant 0 : index
    %428 = vector.load %arg16[%c0_208, %c0_209] : memref<1x128xf32, #tpu.memory_space<vmem>>, vector<1x128xf32>
    %429 = vector.broadcast %428 : vector<1x128xf32> to vector<16x128xf32>
    %430 = arith.addf %427, %429 : vector<16x128xf32>
    %cst_210 = arith.constant 0.000000e+00 : f32
    %431 = vector.broadcast %cst_210 : f32 to vector<16x128xf32>
    %432 = arith.subf %431, %430 : vector<16x128xf32>
    %433 = math.exp %432 : vector<16x128xf32>
    %cst_211 = arith.constant 1.000000e+00 : f32
    %434 = vector.broadcast %cst_211 : f32 to vector<16x128xf32>
    %435 = arith.addf %434, %433 : vector<16x128xf32>
    %cst_212 = arith.constant 1.000000e+00 : f32
    %436 = vector.broadcast %cst_212 : f32 to vector<16x128xf32>
    %437 = arith.divf %436, %435 : vector<16x128xf32>
    %c0_213 = arith.constant 0 : index
    %c0_214 = arith.constant 0 : index
    %438 = vector.load %arg17[%c0_213, %c0_214] : memref<16x128xf32, #tpu.memory_space<vmem>>, vector<16x128xf32>
    tpu.vector_store %arg17[%c0_213, %c0_214], %437 {strides = array<i32>} : memref<16x128xf32, #tpu.memory_space<vmem>>, vector<16x128xf32>,
    return
  }
}

</mosaic_0001>

<llo_original>
// kernel: transformer_forward.1
$region0: #{transformer_forward.1}
  #allocation0 [shape = 'u32[]', space=smem, size = 0x4, offset = 0x4, fixed_abs, tag = 'smem constant byte address 0x4 - core index']
  #allocation1 [shape = 'u32[144,128]{1,0:T(1,128)}', space=vmem, size = 0x12000, scoped, tag = 'internal scratch']
  #allocation2 [shape = 'f32[16,32]{1,0:T(8,128)}', space=vmem, size = 0x2000, scoped, tag = 'scratch operand']
  %s0 = inlined_call_operand.vmem [shape: f32[16,16], index: 0, kind: input, shape index: {}]
  %s1 = inlined_call_operand.vmem [shape: f32[16,32], index: 1, kind: input, shape index: {}]
  %s2 = inlined_call_operand.vmem [shape: f32[1,32], index: 2, kind: input, shape index: {}]
  %s3 = inlined_call_operand.vmem [shape: f32[2,32,96], index: 3, kind: input, shape index: {}]
  %s4 = inlined_call_operand.vmem [shape: f32[2,1,96], index: 4, kind: input, shape index: {}]
  %s5 = inlined_call_operand.vmem [shape: f32[2,32,32], index: 5, kind: input, shape index: {}]
  %s6 = inlined_call_operand.vmem [shape: f32[2,1,32], index: 6, kind: input, shape index: {}]
  %s7 = inlined_call_operand.vmem [shape: f32[2,1,32], index: 7, kind: input, shape index: {}]
  %s8 = inlined_call_operand.vmem [shape: f32[2,1,32], index: 8, kind: input, shape index: {}]
  %s9 = inlined_call_operand.vmem [shape: f32[2,32,2048], index: 9, kind: input, shape index: {}]
  %s10 = inlined_call_operand.vmem [shape: f32[2,1,2048], index: 10, kind: input, shape index: {}]
  %s11 = inlined_call_operand.vmem [shape: f32[2,2048,32], index: 11, kind: input, shape index: {}]
  %s12 = inlined_call_operand.vmem [shape: f32[2,1,32], index: 12, kind: input, shape index: {}]
  %s13 = inlined_call_operand.vmem [shape: f32[2,1,32], index: 13, kind: input, shape index: {}]
  %s14 = inlined_call_operand.vmem [shape: f32[2,1,32], index: 14, kind: input, shape index: {}]
  %s15 = inlined_call_operand.vmem [shape: f32[32,128], index: 15, kind: input, shape index: {}]
  %s16 = inlined_call_operand.vmem [shape: f32[1,128], index: 16, kind: input, shape index: {}]
  %s17 = inlined_call_operand.vmem [shape: f32[16,128], index: 17, kind: output, shape index: {}]
  %s18 = sld [smem:[#allocation0]]
  $region78: #{transformer_forward.1} parent=0
    _
  %s20 = ssub.s32 1, %s18
  %s21 = scalar_select 0, %s20, %s18
  // Predicated region
  $region2: #{transformer_forward.1} parent=0 // pred_check
    _
  $region3: #{transformer_forward.1} parent=0 // pred_check_branch
    %23 = sbr.rel (0) target = $region5
  $region4: #{transformer_forward.1} parent=0 // pred_region
    _
  $region5: #{transformer_forward.1} parent=0 // pred_fallthru
    _
  // Predicated region
  $region6: #{transformer_forward.1} parent=0 // pred_check
    _
  $region7: #{transformer_forward.1} parent=0 // pred_check_branch
    %25 = sbr.rel (0) target = $region9
  $region8: #{transformer_forward.1} parent=0 // pred_region
    _
  $region9: #{transformer_forward.1} parent=0 // pred_fallthru
    _
  // Predicated region
  $region10: #{transformer_forward.1} parent=0 // pred_check
    _
  $region11: #{transformer_forward.1} parent=0 // pred_check_branch
    %27 = sbr.rel (0) target = $region13
  $region12: #{transformer_forward.1} parent=0 // pred_region
    _
  $region13: #{transformer_forward.1} parent=0 // pred_fallthru
    _
  // Predicated region
  $region14: #{transformer_forward.1} parent=0 // pred_check
    _
  $region15: #{transformer_forward.1} parent=0 // pred_check_branch
    %29 = sbr.rel (0) target = $region17
  $region16: #{transformer_forward.1} parent=0 // pred_region
    _
  $region17: #{transformer_forward.1} parent=0 // pred_fallthru
    _
  // Predicated region
  $region18: #{transformer_forward.1} parent=0 // pred_check
    _
  $region19: #{transformer_forward.1} parent=0 // pred_check_branch
    %31 = sbr.rel (0) target = $region21
  $region20: #{transformer_forward.1} parent=0 // pred_region
    _
  $region21: #{transformer_forward.1} parent=0 // pred_fallthru
    _
  // Predicated region
  $region22: #{transformer_forward.1} parent=0 // pred_check
    _
  $region23: #{transformer_forward.1} parent=0 // pred_check_branch
    %33 = sbr.rel (0) target = $region25
  $region24: #{transformer_forward.1} parent=0 // pred_region
    _
  $region25: #{transformer_forward.1} parent=0 // pred_fallthru
    _
  // Predicated region
  $region26: #{transformer_forward.1} parent=0 // pred_check
    _
  $region27: #{transformer_forward.1} parent=0 // pred_check_branch
    %35 = sbr.rel (0) target = $region29
  $region28: #{transformer_forward.1} parent=0 // pred_region
    _
  $region29: #{transformer_forward.1} parent=0 // pred_fallthru
    _
  // Predicated region
  $region30: #{transformer_forward.1} parent=0 // pred_check
    _
  $region31: #{transformer_forward.1} parent=0 // pred_check_branch
    %37 = sbr.rel (0) target = $region33
  $region32: #{transformer_forward.1} parent=0 // pred_region
    _
  $region33: #{transformer_forward.1} parent=0 // pred_fallthru
    _
  // Predicated region
  $region34: #{transformer_forward.1} parent=0 // pred_check
    _
  $region35: #{transformer_forward.1} parent=0 // pred_check_branch
    %39 = sbr.rel (0) target = $region37
  $region36: #{transformer_forward.1} parent=0 // pred_region
    _
  $region37: #{transformer_forward.1} parent=0 // pred_fallthru
    _
  // Predicated region
  $region38: #{transformer_forward.1} parent=0 // pred_check
    _
  $region39: #{transformer_forward.1} parent=0 // pred_check_branch
    %41 = sbr.rel (0) target = $region41
  $region40: #{transformer_forward.1} parent=0 // pred_region
    _
  $region41: #{transformer_forward.1} parent=0 // pred_fallthru
    _
  // Predicated region
  $region42: #{transformer_forward.1} parent=0 // pred_check
    _
  $region43: #{transformer_forward.1} parent=0 // pred_check_branch
    %43 = sbr.rel (0) target = $region45
  $region44: #{transformer_forward.1} parent=0 // pred_region
    _
  $region45: #{transformer_forward.1} parent=0 // pred_fallthru
    _
  // Predicated region
  $region46: #{transformer_forward.1} parent=0 // pred_check
    _
  $region47: #{transformer_forward.1} parent=0 // pred_check_branch
    %45 = sbr.rel (0) target = $region49
  $region48: #{transformer_forward.1} parent=0 // pred_region
    _
  $region49: #{transformer_forward.1} parent=0 // pred_fallthru
    _
  // Predicated region
  $region50: #{transformer_forward.1} parent=0 // pred_check
    _
  $region51: #{transformer_forward.1} parent=0 // pred_check_branch
    %47 = sbr.rel (0) target = $region53
  $region52: #{transformer_forward.1} parent=0 // pred_region
    _
  $region53: #{transformer_forward.1} parent=0 // pred_fallthru
    _
  // Predicated region
  $region54: #{transformer_forward.1} parent=0 // pred_check
    _
  $region55: #{transformer_forward.1} parent=0 // pred_check_branch
    %49 = sbr.rel (0) target = $region57
  $region56: #{transformer_forward.1} parent=0 // pred_region
    _
  $region57: #{transformer_forward.1} parent=0 // pred_fallthru
    _
  // Predicated region
  $region58: #{transformer_forward.1} parent=0 // pred_check
    _
  $region59: #{transformer_forward.1} parent=0 // pred_check_branch
    %51 = sbr.rel (0) target = $region61
  $region60: #{transformer_forward.1} parent=0 // pred_region
    _
  $region61: #{transformer_forward.1} parent=0 // pred_fallthru
    _
  // Predicated region
  $region62: #{transformer_forward.1} parent=0 // pred_check
    _
  $region63: #{transformer_forward.1} parent=0 // pred_check_branch
    %53 = sbr.rel (0) target = $region65
  $region64: #{transformer_forward.1} parent=0 // pred_region
    _
  $region65: #{transformer_forward.1} parent=0 // pred_fallthru
    _
  // Predicated region
  $region66: #{transformer_forward.1} parent=0 // pred_check
    _
  $region67: #{transformer_forward.1} parent=0 // pred_check_branch
    %55 = sbr.rel (0) target = $region69
  $region68: #{transformer_forward.1} parent=0 // pred_region
    _
  $region69: #{transformer_forward.1} parent=0 // pred_fallthru
    _
  %v56 = vld [vmem:[%s0] sm:$0xff]
  %v57 = vld [vmem:[%s0 + $0x8] sm:$0xff]
  %v58 = vld [vmem:[%s1] sm:$0xff]
  %v59 = vld [vmem:[%s1 + $0x8] sm:$0xff]
  %v60 = vld [vmem:[%s2] sm:$0x1]
  %v62 = vlaneseq
  %v63 = vshrl.u32 %v62, 7
  %v64 = vsub.s32 0, %v63
  %v65 = vrot.slane %v60, %v64
  %vm67 = vcmask 130048
  %v69 = vsel %vm67, %v56, 0
  %v72 = vsel %vm67, %v57, 0
  %74 = vmatprep.subr.mxu0 0.0
  %75 = vmatpush1.msra.mxu0 %v58
  %76 = vmatprep.subr.mxu0 0.0
  %77 = vmatpush1.msra.mxu0 %v59
  %78 = vmatprep.subr.mxu0 0.0
  %79 = vmatpush1.msra.mxu0 0.0
  %80 = vmatprep.subr.mxu0 0.0
  %81 = vmatpush1.msra.mxu0 0.0
  %82 = vmatprep.subr.mxu0 0.0
  %83 = vmatpush1.msra.mxu0 0.0
  %84 = vmatprep.subr.mxu0 0.0
  %85 = vmatpush1.msra.mxu0 0.0
  %86 = vmatprep.subr.mxu0 0.0
  %87 = vmatpush1.msra.mxu0 0.0
  %88 = vmatprep.subr.mxu0 0.0
  %89 = vmatpush1.msra.mxu0 0.0
  %90 = vmatprep.subr.mxu0 0.0
  %91 = vmatpush1.msra.mxu0 0.0
  %92 = vmatprep.subr.mxu0 0.0
  %93 = vmatpush1.msra.mxu0 0.0
  %94 = vmatprep.subr.mxu0 0.0
  %95 = vmatpush1.msra.mxu0 0.0
  %96 = vmatprep.subr.mxu0 0.0
  %97 = vmatpush1.msra.mxu0 0.0
  %98 = vmatprep.subr.mxu0 0.0
  %99 = vmatpush1.msra.mxu0 0.0
  %100 = vmatprep.subr.mxu0 0.0
  %101 = vmatpush1.msra.mxu0 0.0
  %102 = vmatprep.subr.mxu0 0.0
  %103 = vmatpush1.msra.mxu0 0.0
  %104 = vmatprep.subr.mxu0 0.0
  %105 = vmatpush1.msra.mxu0 0.0
  %106 = vmatprep.subr.mxu0 0.0
  %107 = vmatpush1.msra.mxu0 0.0
  %108 = vmatprep.subr.mxu0 0.0
  %109 = vmatpush1.msra.mxu0 0.0
  %110 = vmatprep.subr.mxu0 0.0
  %111 = vmatpush1.msra.mxu0 0.0
  %112 = vmatprep.subr.mxu0 0.0
  %113 = vmatpush1.msra.mxu0 0.0
  %114 = vmatprep.subr.mxu0 0.0
  %115 = vmatpush1.msra.mxu0 0.0
  %116 = vmatprep.subr.mxu0 0.0
  %117 = vmatpush1.msra.mxu0 0.0
  %118 = vmatprep.subr.mxu0 0.0
  %119 = vmatpush1.msra.mxu0 0.0
  %120 = vmatprep.subr.mxu0 0.0
  %121 = vmatpush1.msra.mxu0 0.0
  %122 = vmatprep.subr.mxu0 0.0
  %123 = vmatpush1.msra.mxu0 0.0
  %124 = vmatprep.subr.mxu0 0.0
  %125 = vmatpush1.msra.mxu0 0.0
  %126 = vmatprep.subr.mxu0 0.0
  %127 = vmatpush1.msra.mxu0 0.0
  %128 = vmatprep.subr.mxu0 0.0
  %129 = vmatpush1.msra.mxu0 0.0
  %130 = vmatprep.subr.mxu0 0.0
  %131 = vmatpush1.msra.mxu0 0.0
  %132 = vmatprep.subr.mxu0 0.0
  %133 = vmatpush1.msra.mxu0 0.0
  %134 = vmatprep.subr.mxu0 0.0
  %135 = vmatpush1.msra.mxu0 0.0
  %136 = vmatprep.subr.mxu0 0.0
  %137 = vmatpush1.msra.mxu0 0.0
  %138 = vmatprep.mubr.f32.mxu0 0.0
  %139 = vmatmul.mubr.f32.gmra.mrb[0].mxu0 %v69
  %v140 = vpop.f32.mrb[0].mxu0
  %v141 = vadd.f32 %v65, %v140
  %v142 = vpop.f32.mrb[0].mxu0
  %143 = vmatprep.mubr.f32.mxu0 0.0
  %144 = vmatmul.mubr.f32.gmra.mrb[0].mxu0 %v72
  %v145 = vpop.f32.mrb[0].mxu0
  %v146 = vadd.f32 %v65, %v145
  %v147 = vpop.f32.mrb[0].mxu0
  %148 = vdwg.mxu0
  %v149 = vld [vmem:[%s3] sm:$0xff]
  %v150 = vld [vmem:[%s3 + $0x8] sm:$0xff]
  %v151 = vld [vmem:[%s3 + $0x10] sm:$0xff]
  %v152 = vld [vmem:[%s3 + $0x18] sm:$0xff]
  %v153 = vld [vmem:[%s4] sm:$0x1]
  %v155 = vlaneseq
  %v156 = vshrl.u32 %v155, 7
  %v157 = vsub.s32 0, %v156
  %v158 = vrot.slane %v153, %v157
  %vm160 = vcmask 261120
  %v162 = vsel %vm160, %v141, 0
  %v165 = vsel %vm160, %v146, 0
  %167 = vmatprep.subr.mxu0 0.0
  %168 = vmatpush1.msra.mxu0 %v149
  %169 = vmatprep.subr.mxu0 0.0
  %170 = vmatpush1.msra.mxu0 %v150
  %171 = vmatprep.subr.mxu0 0.0
  %172 = vmatpush1.msra.mxu0 %v151
  %173 = vmatprep.subr.mxu0 0.0
  %174 = vmatpush1.msra.mxu0 %v152
  %175 = vmatprep.subr.mxu0 0.0
  %176 = vmatpush1.msra.mxu0 0.0
  %177 = vmatprep.subr.mxu0 0.0
  %178 = vmatpush1.msra.mxu0 0.0
  %179 = vmatprep.subr.mxu0 0.0
  %180 = vmatpush1.msra.mxu0 0.0
  %181 = vmatprep.subr.mxu0 0.0
  %182 = vmatpush1.msra.mxu0 0.0
  %183 = vmatprep.subr.mxu0 0.0
  %184 = vmatpush1.msra.mxu0 0.0
  %185 = vmatprep.subr.mxu0 0.0
  %186 = vmatpush1.msra.mxu0 0.0
  %187 = vmatprep.subr.mxu0 0.0
  %188 = vmatpush1.msra.mxu0 0.0
  %189 = vmatprep.subr.mxu0 0.0
  %190 = vmatpush1.msra.mxu0 0.0
  %191 = vmatprep.subr.mxu0 0.0
  %192 = vmatpush1.msra.mxu0 0.0
  %193 = vmatprep.subr.mxu0 0.0
  %194 = vmatpush1.msra.mxu0 0.0
  %195 = vmatprep.subr.mxu0 0.0
  %196 = vmatpush1.msra.mxu0 0.0
  %197 = vmatprep.subr.mxu0 0.0
  %198 = vmatpush1.msra.mxu0 0.0
  %199 = vmatprep.subr.mxu0 0.0
  %200 = vmatpush1.msra.mxu0 0.0
  %201 = vmatprep.subr.mxu0 0.0
  %202 = vmatpush1.msra.mxu0 0.0
  %203 = vmatprep.subr.mxu0 0.0
  %204 = vmatpush1.msra.mxu0 0.0
  %205 = vmatprep.subr.mxu0 0.0
  %206 = vmatpush1.msra.mxu0 0.0
  %207 = vmatprep.subr.mxu0 0.0
  %208 = vmatpush1.msra.mxu0 0.0
  %209 = vmatprep.subr.mxu0 0.0
  %210 = vmatpush1.msra.mxu0 0.0
  %211 = vmatprep.subr.mxu0 0.0
  %212 = vmatpush1.msra.mxu0 0.0
  %213 = vmatprep.subr.mxu0 0.0
  %214 = vmatpush1.msra.mxu0 0.0
  %215 = vmatprep.subr.mxu0 0.0
  %216 = vmatpush1.msra.mxu0 0.0
  %217 = vmatprep.subr.mxu0 0.0
  %218 = vmatpush1.msra.mxu0 0.0
  %219 = vmatprep.subr.mxu0 0.0
  %220 = vmatpush1.msra.mxu0 0.0
  %221 = vmatprep.subr.mxu0 0.0
  %222 = vmatpush1.msra.mxu0 0.0
  %223 = vmatprep.subr.mxu0 0.0
  %224 = vmatpush1.msra.mxu0 0.0
  %225 = vmatprep.subr.mxu0 0.0
  %226 = vmatpush1.msra.mxu0 0.0
  %227 = vmatprep.subr.mxu0 0.0
  %228 = vmatpush1.msra.mxu0 0.0
  %229 = vmatprep.subr.mxu0 0.0
  %230 = vmatpush1.msra.mxu0 0.0
  %231 = vmatprep.mubr.f32.mxu0 0.0
  %232 = vmatmul.mubr.f32.gmra.mrb[0].mxu0 %v162
  %v233 = vpop.f32.mrb[0].mxu0
  %v234 = vadd.f32 %v158, %v233
  %v235 = vpop.f32.mrb[0].mxu0
  %236 = vmatprep.mubr.f32.mxu0 0.0
  %237 = vmatmul.mubr.f32.gmra.mrb[0].mxu0 %v165
  %v238 = vpop.f32.mrb[0].mxu0
  %v239 = vadd.f32 %v158, %v238
  %v240 = vpop.f32.mrb[0].mxu0
  %241 = vdwg.mxu0
  %v242 = vmul.f32 %v234, 0.35355338
  %v243 = vmul.f32 %v239, 0.35355338
  %245 = vrot.lane.b32.xlu0 %v234, 96
  %v246 = vpop.permute.xlu0 %245
  %vm247 = vcmask 64512
  %v249 = vsel %vm247, %v242, 0
  %v251 = vsel %vm247, %v246, 0
  %253 = vmatprep.subr.mxu0 0.0
  %254 = vmatpush1.xpose.msra.mxu0 %v251
  %255 = vmatprep.subr.mxu0 0.0
  %256 = vmatpush1.xpose.msra.mxu0 0.0
  %257 = vmatprep.subr.mxu0 0.0
  %258 = vmatpush1.xpose.msra.mxu0 0.0
  %259 = vmatprep.subr.mxu0 0.0
  %260 = vmatpush1.xpose.msra.mxu0 0.0
  %261 = vmatprep.subr.mxu0 0.0
  %262 = vmatpush1.xpose.msra.mxu0 0.0
  %263 = vmatprep.subr.mxu0 0.0
  %264 = vmatpush1.xpose.msra.mxu0 0.0
  %265 = vmatprep.subr.mxu0 0.0
  %266 = vmatpush1.xpose.msra.mxu0 0.0
  %267 = vmatprep.subr.mxu0 0.0
  %268 = vmatpush1.xpose.msra.mxu0 0.0
  %269 = vmatprep.subr.mxu0 0.0
  %270 = vmatpush1.xpose.msra.mxu0 0.0
  %271 = vmatprep.subr.mxu0 0.0
  %272 = vmatpush1.xpose.msra.mxu0 0.0
  %273 = vmatprep.subr.mxu0 0.0
  %274 = vmatpush1.xpose.msra.mxu0 0.0
  %275 = vmatprep.subr.mxu0 0.0
  %276 = vmatpush1.xpose.msra.mxu0 0.0
  %277 = vmatprep.subr.mxu0 0.0
  %278 = vmatpush1.xpose.msra.mxu0 0.0
  %279 = vmatprep.subr.mxu0 0.0
  %280 = vmatpush1.xpose.msra.mxu0 0.0
  %281 = vmatprep.subr.mxu0 0.0
  %282 = vmatpush1.xpose.msra.mxu0 0.0
  %283 = vmatprep.subr.mxu0 0.0
  %284 = vmatpush1.xpose.msra.mxu0 0.0
  %285 = vmatprep.subr.mxu0 0.0
  %286 = vmatpush1.xpose.msra.mxu0 0.0
  %287 = vmatprep.subr.mxu0 0.0
  %288 = vmatpush1.xpose.msra.mxu0 0.0
  %289 = vmatprep.subr.mxu0 0.0
  %290 = vmatpush1.xpose.msra.mxu0 0.0
  %291 = vmatprep.subr.mxu0 0.0
  %292 = vmatpush1.xpose.msra.mxu0 0.0
  %293 = vmatprep.subr.mxu0 0.0
  %294 = vmatpush1.xpose.msra.mxu0 0.0
  %295 = vmatprep.subr.mxu0 0.0
  %296 = vmatpush1.xpose.msra.mxu0 0.0
  %297 = vmatprep.subr.mxu0 0.0
  %298 = vmatpush1.xpose.msra.mxu0 0.0
  %299 = vmatprep.subr.mxu0 0.0
  %300 = vmatpush1.xpose.msra.mxu0 0.0
  %301 = vmatprep.subr.mxu0 0.0
  %302 = vmatpush1.xpose.msra.mxu0 0.0
  %303 = vmatprep.subr.mxu0 0.0
  %304 = vmatpush1.xpose.msra.mxu0 0.0
  %305 = vmatprep.subr.mxu0 0.0
  %306 = vmatpush1.xpose.msra.mxu0 0.0
  %307 = vmatprep.subr.mxu0 0.0
  %308 = vmatpush1.xpose.msra.mxu0 0.0
  %309 = vmatprep.subr.mxu0 0.0
  %310 = vmatpush1.xpose.msra.mxu0 0.0
  %311 = vmatprep.subr.mxu0 0.0
  %312 = vmatpush1.xpose.msra.mxu0 0.0
  %313 = vmatprep.subr.mxu0 0.0
  %314 = vmatpush1.xpose.msra.mxu0 0.0
  %315 = vmatprep.subr.mxu0 0.0
  %316 = vmatpush1.xpose.msra.mxu0 0.0
  %317 = vmatprep.mubr.f32.mxu0 0.0
  %318 = vmatmul.mubr.f32.gmra.mrb[0].mxu0 %v249
  %v319 = vpop.f32.mrb[0].mxu0
  %v320 = vadd.f32 0.0, %v319
  %v321 = vpop.f32.mrb[0].mxu0
  %322 = vdwg.mxu0
  %v323 = vsel %vm247, %v320, -inf
  %324 = vmax.xlane.f32.xlu0 %v323
  %v325 = vpop.xlane.xlu0 %324
  %v326 = vsub.f32 %v320, %v325
  %v327 = vmul.f32 %v326, 1.442695
  %v328 = vpow.pop %v327
  %v329 = vsel %vm247, %v328, 0.0
  %330 = vadd.xlane.f32.xlu0 %v329
  %v331 = vpop.xlane.xlu0 %330
  %v332 = vrcp.pop %v331
  %v333 = vmul.f32 %v328, %v332
  %334 = vrot.lane.b32.xlu0 %v234, 64
  %v335 = vpop.permute.xlu0 %334
  %v338 = vsel %vm247, %v333, 0
  %340 = vmatprep.subr.mxu0 0.0
  %341 = vmatpush1.msra.mxu0 %v335
  %342 = vmatprep.subr.mxu0 0.0
  %343 = vmatpush1.msra.mxu0 0.0
  %344 = vmatprep.subr.mxu0 0.0
  %345 = vmatpush1.msra.mxu0 0.0
  %346 = vmatprep.subr.mxu0 0.0
  %347 = vmatpush1.msra.mxu0 0.0
  %348 = vmatprep.subr.mxu0 0.0
  %349 = vmatpush1.msra.mxu0 0.0
  %350 = vmatprep.subr.mxu0 0.0
  %351 = vmatpush1.msra.mxu0 0.0
  %352 = vmatprep.subr.mxu0 0.0
  %353 = vmatpush1.msra.mxu0 0.0
  %354 = vmatprep.subr.mxu0 0.0
  %355 = vmatpush1.msra.mxu0 0.0
  %356 = vmatprep.subr.mxu0 0.0
  %357 = vmatpush1.msra.mxu0 0.0
  %358 = vmatprep.subr.mxu0 0.0
  %359 = vmatpush1.msra.mxu0 0.0
  %360 = vmatprep.subr.mxu0 0.0
  %361 = vmatpush1.msra.mxu0 0.0
  %362 = vmatprep.subr.mxu0 0.0
  %363 = vmatpush1.msra.mxu0 0.0
  %364 = vmatprep.subr.mxu0 0.0
  %365 = vmatpush1.msra.mxu0 0.0
  %366 = vmatprep.subr.mxu0 0.0
  %367 = vmatpush1.msra.mxu0 0.0
  %368 = vmatprep.subr.mxu0 0.0
  %369 = vmatpush1.msra.mxu0 0.0
  %370 = vmatprep.subr.mxu0 0.0
  %371 = vmatpush1.msra.mxu0 0.0
  %372 = vmatprep.subr.mxu0 0.0
  %373 = vmatpush1.msra.mxu0 0.0
  %374 = vmatprep.subr.mxu0 0.0
  %375 = vmatpush1.msra.mxu0 0.0
  %376 = vmatprep.subr.mxu0 0.0
  %377 = vmatpush1.msra.mxu0 0.0
  %378 = vmatprep.subr.mxu0 0.0
  %379 = vmatpush1.msra.mxu0 0.0
  %380 = vmatprep.subr.mxu0 0.0
  %381 = vmatpush1.msra.mxu0 0.0
  %382 = vmatprep.subr.mxu0 0.0
  %383 = vmatpush1.msra.mxu0 0.0
  %384 = vmatprep.subr.mxu0 0.0
  %385 = vmatpush1.msra.mxu0 0.0
  %386 = vmatprep.subr.mxu0 0.0
  %387 = vmatpush1.msra.mxu0 0.0
  %388 = vmatprep.subr.mxu0 0.0
  %389 = vmatpush1.msra.mxu0 0.0
  %390 = vmatprep.subr.mxu0 0.0
  %391 = vmatpush1.msra.mxu0 0.0
  %392 = vmatprep.subr.mxu0 0.0
  %393 = vmatpush1.msra.mxu0 0.0
  %394 = vmatprep.subr.mxu0 0.0
  %395 = vmatpush1.msra.mxu0 0.0
  %396 = vmatprep.subr.mxu0 0.0
  %397 = vmatpush1.msra.mxu0 0.0
  %398 = vmatprep.subr.mxu0 0.0
  %399 = vmatpush1.msra.mxu0 0.0
  %400 = vmatprep.subr.mxu0 0.0
  %401 = vmatpush1.msra.mxu0 0.0
  %402 = vmatprep.subr.mxu0 0.0
  %403 = vmatpush1.msra.mxu0 0.0
  %404 = vmatprep.mubr.f32.mxu0 0.0
  %405 = vmatmul.mubr.f32.gmra.mrb[0].mxu0 %v338
  %v406 = vpop.f32.mrb[0].mxu0
  %v407 = vadd.f32 0.0, %v406
  %v408 = vpop.f32.mrb[0].mxu0
  %409 = vdwg.mxu0
  %410 = vst.msk [vmem:[#allocation2] sm:$0xff] %vm247, %v407
  %411 = vrot.lane.b32.xlu0 %v242, 120
  %v412 = vpop.permute.xlu0 %411
  %413 = vrot.lane.b32.xlu0 %v234, 88
  %v414 = vpop.permute.xlu0 %413
  %v415 = vsel %vm247, %v412, 0
  %v417 = vsel %vm247, %v414, 0
  %419 = vmatprep.subr.mxu0 0.0
  %420 = vmatpush1.xpose.msra.mxu0 %v417
  %421 = vmatprep.subr.mxu0 0.0
  %422 = vmatpush1.xpose.msra.mxu0 0.0
  %423 = vmatprep.subr.mxu0 0.0
  %424 = vmatpush1.xpose.msra.mxu0 0.0
  %425 = vmatprep.subr.mxu0 0.0
  %426 = vmatpush1.xpose.msra.mxu0 0.0
  %427 = vmatprep.subr.mxu0 0.0
  %428 = vmatpush1.xpose.msra.mxu0 0.0
  %429 = vmatprep.subr.mxu0 0.0
  %430 = vmatpush1.xpose.msra.mxu0 0.0
  %431 = vmatprep.subr.mxu0 0.0
  %432 = vmatpush1.xpose.msra.mxu0 0.0
  %433 = vmatprep.subr.mxu0 0.0
  %434 = vmatpush1.xpose.msra.mxu0 0.0
  %435 = vmatprep.subr.mxu0 0.0
  %436 = vmatpush1.xpose.msra.mxu0 0.0
  %437 = vmatprep.subr.mxu0 0.0
  %438 = vmatpush1.xpose.msra.mxu0 0.0
  %439 = vmatprep.subr.mxu0 0.0
  %440 = vmatpush1.xpose.msra.mxu0 0.0
  %441 = vmatprep.subr.mxu0 0.0
  %442 = vmatpush1.xpose.msra.mxu0 0.0
  %443 = vmatprep.subr.mxu0 0.0
  %444 = vmatpush1.xpose.msra.mxu0 0.0
  %445 = vmatprep.subr.mxu0 0.0
  %446 = vmatpush1.xpose.msra.mxu0 0.0
  %447 = vmatprep.subr.mxu0 0.0
  %448 = vmatpush1.xpose.msra.mxu0 0.0
  %449 = vmatprep.subr.mxu0 0.0
  %450 = vmatpush1.xpose.msra.mxu0 0.0
  %451 = vmatprep.subr.mxu0 0.0
  %452 = vmatpush1.xpose.msra.mxu0 0.0
  %453 = vmatprep.subr.mxu0 0.0
  %454 = vmatpush1.xpose.msra.mxu0 0.0
  %455 = vmatprep.subr.mxu0 0.0
  %456 = vmatpush1.xpose.msra.mxu0 0.0
  %457 = vmatprep.subr.mxu0 0.0
  %458 = vmatpush1.xpose.msra.mxu0 0.0
  %459 = vmatprep.subr.mxu0 0.0
  %460 = vmatpush1.xpose.msra.mxu0 0.0
  %461 = vmatprep.subr.mxu0 0.0
  %462 = vmatpush1.xpose.msra.mxu0 0.0
  %463 = vmatprep.subr.mxu0 0.0
  %464 = vmatpush1.xpose.msra.mxu0 0.0
  %465 = vmatprep.subr.mxu0 0.0
  %466 = vmatpush1.xpose.msra.mxu0 0.0
  %467 = vmatprep.subr.mxu0 0.0
  %468 = vmatpush1.xpose.msra.mxu0 0.0
  %469 = vmatprep.subr.mxu0 0.0
  %470 = vmatpush1.xpose.msra.mxu0 0.0
  %471 = vmatprep.subr.mxu0 0.0
  %472 = vmatpush1.xpose.msra.mxu0 0.0
  %473 = vmatprep.subr.mxu0 0.0
  %474 = vmatpush1.xpose.msra.mxu0 0.0
  %475 = vmatprep.subr.mxu0 0.0
  %476 = vmatpush1.xpose.msra.mxu0 0.0
  %477 = vmatprep.subr.mxu0 0.0
  %478 = vmatpush1.xpose.msra.mxu0 0.0
  %479 = vmatprep.subr.mxu0 0.0
  %480 = vmatpush1.xpose.msra.mxu0 0.0
  %481 = vmatprep.subr.mxu0 0.0
  %482 = vmatpush1.xpose.msra.mxu0 0.0
  %483 = vmatprep.mubr.f32.mxu0 0.0
  %484 = vmatmul.mubr.f32.gmra.mrb[0].mxu0 %v415
  %v485 = vpop.f32.mrb[0].mxu0
  %v486 = vadd.f32 0.0, %v485
  %v487 = vpop.f32.mrb[0].mxu0
  %488 = vdwg.mxu0
  %v489 = vsel %vm247, %v486, -inf
  %490 = vmax.xlane.f32.xlu0 %v489
  %v491 = vpop.xlane.xlu0 %490
  %v492 = vsub.f32 %v486, %v491
  %v493 = vmul.f32 %v492, 1.442695
  %v494 = vpow.pop %v493
  %v495 = vsel %vm247, %v494, 0.0
  %496 = vadd.xlane.f32.xlu0 %v495
  %v497 = vpop.xlane.xlu0 %496
  %v498 = vrcp.pop %v497
  %v499 = vmul.f32 %v494, %v498
  %500 = vrot.lane.b32.xlu0 %v234, 56
  %v501 = vpop.permute.xlu0 %500
  %v504 = vsel %vm247, %v499, 0
  %506 = vmatprep.subr.mxu0 0.0
  %507 = vmatpush1.msra.mxu0 %v501
  %508 = vmatprep.subr.mxu0 0.0
  %509 = vmatpush1.msra.mxu0 0.0
  %510 = vmatprep.subr.mxu0 0.0
  %511 = vmatpush1.msra.mxu0 0.0
  %512 = vmatprep.subr.mxu0 0.0
  %513 = vmatpush1.msra.mxu0 0.0
  %514 = vmatprep.subr.mxu0 0.0
  %515 = vmatpush1.msra.mxu0 0.0
  %516 = vmatprep.subr.mxu0 0.0
  %517 = vmatpush1.msra.mxu0 0.0
  %518 = vmatprep.subr.mxu0 0.0
  %519 = vmatpush1.msra.mxu0 0.0
  %520 = vmatprep.subr.mxu0 0.0
  %521 = vmatpush1.msra.mxu0 0.0
  %522 = vmatprep.subr.mxu0 0.0
  %523 = vmatpush1.msra.mxu0 0.0
  %524 = vmatprep.subr.mxu0 0.0
  %525 = vmatpush1.msra.mxu0 0.0
  %526 = vmatprep.subr.mxu0 0.0
  %527 = vmatpush1.msra.mxu0 0.0
  %528 = vmatprep.subr.mxu0 0.0
  %529 = vmatpush1.msra.mxu0 0.0
  %530 = vmatprep.subr.mxu0 0.0
  %531 = vmatpush1.msra.mxu0 0.0
  %532 = vmatprep.subr.mxu0 0.0
  %533 = vmatpush1.msra.mxu0 0.0
  %534 = vmatprep.subr.mxu0 0.0
  %535 = vmatpush1.msra.mxu0 0.0
  %536 = vmatprep.subr.mxu0 0.0
  %537 = vmatpush1.msra.mxu0 0.0
  %538 = vmatprep.subr.mxu0 0.0
  %539 = vmatpush1.msra.mxu0 0.0
  %540 = vmatprep.subr.mxu0 0.0
  %541 = vmatpush1.msra.mxu0 0.0
  %542 = vmatprep.subr.mxu0 0.0
  %543 = vmatpush1.msra.mxu0 0.0
  %544 = vmatprep.subr.mxu0 0.0
  %545 = vmatpush1.msra.mxu0 0.0
  %546 = vmatprep.subr.mxu0 0.0
  %547 = vmatpush1.msra.mxu0 0.0
  %548 = vmatprep.subr.mxu0 0.0
  %549 = vmatpush1.msra.mxu0 0.0
  %550 = vmatprep.subr.mxu0 0.0
  %551 = vmatpush1.msra.mxu0 0.0
  %552 = vmatprep.subr.mxu0 0.0
  %553 = vmatpush1.msra.mxu0 0.0
  %554 = vmatprep.subr.mxu0 0.0
  %555 = vmatpush1.msra.mxu0 0.0
  %556 = vmatprep.subr.mxu0 0.0
  %557 = vmatpush1.msra.mxu0 0.0
  %558 = vmatprep.subr.mxu0 0.0
  %559 = vmatpush1.msra.mxu0 0.0
  %560 = vmatprep.subr.mxu0 0.0
  %561 = vmatpush1.msra.mxu0 0.0
  %562 = vmatprep.subr.mxu0 0.0
  %563 = vmatpush1.msra.mxu0 0.0
  %564 = vmatprep.subr.mxu0 0.0
  %565 = vmatpush1.msra.mxu0 0.0
  %566 = vmatprep.subr.mxu0 0.0
  %567 = vmatpush1.msra.mxu0 0.0
  %568 = vmatprep.subr.mxu0 0.0
  %569 = vmatpush1.msra.mxu0 0.0
  %570 = vmatprep.mubr.f32.mxu0 0.0
  %571 = vmatmul.mubr.f32.gmra.mrb[0].mxu0 %v504
  %v572 = vpop.f32.mrb[0].mxu0
  %v573 = vadd.f32 0.0, %v572
  %v574 = vpop.f32.mrb[0].mxu0
  %575 = vdwg.mxu0
  %577 = vrot.lane.b32.xlu0 %v573, 8
  %v578 = vpop.permute.xlu0 %577
  %vm580 = vcmask 130112
  %581 = vst.msk [vmem:[#allocation2] sm:$0xff] %vm580, %v578
  %582 = vrot.lane.b32.xlu0 %v242, 112
  %v583 = vpop.permute.xlu0 %582
  %584 = vrot.lane.b32.xlu0 %v234, 80
  %v585 = vpop.permute.xlu0 %584
  %v586 = vsel %vm247, %v583, 0
  %v588 = vsel %vm247, %v585, 0
  %590 = vmatprep.subr.mxu0 0.0
  %591 = vmatpush1.xpose.msra.mxu0 %v588
  %592 = vmatprep.subr.mxu0 0.0
  %593 = vmatpush1.xpose.msra.mxu0 0.0
  %594 = vmatprep.subr.mxu0 0.0
  %595 = vmatpush1.xpose.msra.mxu0 0.0
  %596 = vmatprep.subr.mxu0 0.0
  %597 = vmatpush1.xpose.msra.mxu0 0.0
  %598 = vmatprep.subr.mxu0 0.0
  %599 = vmatpush1.xpose.msra.mxu0 0.0
  %600 = vmatprep.subr.mxu0 0.0
  %601 = vmatpush1.xpose.msra.mxu0 0.0
  %602 = vmatprep.subr.mxu0 0.0
  %603 = vmatpush1.xpose.msra.mxu0 0.0
  %604 = vmatprep.subr.mxu0 0.0
  %605 = vmatpush1.xpose.msra.mxu0 0.0
  %606 = vmatprep.subr.mxu0 0.0
  %607 = vmatpush1.xpose.msra.mxu0 0.0
  %608 = vmatprep.subr.mxu0 0.0
  %609 = vmatpush1.xpose.msra.mxu0 0.0
  %610 = vmatprep.subr.mxu0 0.0
  %611 = vmatpush1.xpose.msra.mxu0 0.0
  %612 = vmatprep.subr.mxu0 0.0
  %613 = vmatpush1.xpose.msra.mxu0 0.0
  %614 = vmatprep.subr.mxu0 0.0
  %615 = vmatpush1.xpose.msra.mxu0 0.0
  %616 = vmatprep.subr.mxu0 0.0
  %617 = vmatpush1.xpose.msra.mxu0 0.0
  %618 = vmatprep.subr.mxu0 0.0
  %619 = vmatpush1.xpose.msra.mxu0 0.0
  %620 = vmatprep.subr.mxu0 0.0
  %621 = vmatpush1.xpose.msra.mxu0 0.0
  %622 = vmatprep.subr.mxu0 0.0
  %623 = vmatpush1.xpose.msra.mxu0 0.0
  %624 = vmatprep.subr.mxu0 0.0
  %625 = vmatpush1.xpose.msra.mxu0 0.0
  %626 = vmatprep.subr.mxu0 0.0
  %627 = vmatpush1.xpose.msra.mxu0 0.0
  %628 = vmatprep.subr.mxu0 0.0
  %629 = vmatpush1.xpose.msra.mxu0 0.0
  %630 = vmatprep.subr.mxu0 0.0
  %631 = vmatpush1.xpose.msra.mxu0 0.0
  %632 = vmatprep.subr.mxu0 0.0
  %633 = vmatpush1.xpose.msra.mxu0 0.0
  %634 = vmatprep.subr.mxu0 0.0
  %635 = vmatpush1.xpose.msra.mxu0 0.0
  %636 = vmatprep.subr.mxu0 0.0
  %637 = vmatpush1.xpose.msra.mxu0 0.0
  %638 = vmatprep.subr.mxu0 0.0
  %639 = vmatpush1.xpose.msra.mxu0 0.0
  %640 = vmatprep.subr.mxu0 0.0
  %641 = vmatpush1.xpose.msra.mxu0 0.0
  %642 = vmatprep.subr.mxu0 0.0
  %643 = vmatpush1.xpose.msra.mxu0 0.0
  %644 = vmatprep.subr.mxu0 0.0
  %645 = vmatpush1.xpose.msra.mxu0 0.0
  %646 = vmatprep.subr.mxu0 0.0
  %647 = vmatpush1.xpose.msra.mxu0 0.0
  %648 = vmatprep.subr.mxu0 0.0
  %649 = vmatpush1.xpose.msra.mxu0 0.0
  %650 = vmatprep.subr.mxu0 0.0
  %651 = vmatpush1.xpose.msra.mxu0 0.0
  %652 = vmatprep.subr.mxu0 0.0
  %653 = vmatpush1.xpose.msra.mxu0 0.0
  %654 = vmatprep.mubr.f32.mxu0 0.0
  %655 = vmatmul.mubr.f32.gmra.mrb[0].mxu0 %v586
  %v656 = vpop.f32.mrb[0].mxu0
  %v657 = vadd.f32 0.0, %v656
  %v658 = vpop.f32.mrb[0].mxu0
  %659 = vdwg.mxu0
  %v660 = vsel %vm247, %v657, -inf
  %661 = vmax.xlane.f32.xlu0 %v660
  %v662 = vpop.xlane.xlu0 %661
  %v663 = vsub.f32 %v657, %v662
  %v664 = vmul.f32 %v663, 1.442695
  %v665 = vpow.pop %v664
  %v666 = vsel %vm247, %v665, 0.0
  %667 = vadd.xlane.f32.xlu0 %v666
  %v668 = vpop.xlane.xlu0 %667
  %v669 = vrcp.pop %v668
  %v670 = vmul.f32 %v665, %v669
  %671 = vrot.lane.b32.xlu0 %v234, 48
  %v672 = vpop.permute.xlu0 %671
  %v675 = vsel %vm247, %v670, 0
  %677 = vmatprep.subr.mxu0 0.0
  %678 = vmatpush1.msra.mxu0 %v672
  %679 = vmatprep.subr.mxu0 0.0
  %680 = vmatpush1.msra.mxu0 0.0
  %681 = vmatprep.subr.mxu0 0.0
  %682 = vmatpush1.msra.mxu0 0.0
  %683 = vmatprep.subr.mxu0 0.0
  %684 = vmatpush1.msra.mxu0 0.0
  %685 = vmatprep.subr.mxu0 0.0
  %686 = vmatpush1.msra.mxu0 0.0
  %687 = vmatprep.subr.mxu0 0.0
  %688 = vmatpush1.msra.mxu0 0.0
  %689 = vmatprep.subr.mxu0 0.0
  %690 = vmatpush1.msra.mxu0 0.0
  %691 = vmatprep.subr.mxu0 0.0
  %692 = vmatpush1.msra.mxu0 0.0
  %693 = vmatprep.subr.mxu0 0.0
  %694 = vmatpush1.msra.mxu0 0.0
  %695 = vmatprep.subr.mxu0 0.0
  %696 = vmatpush1.msra.mxu0 0.0
  %697 = vmatprep.subr.mxu0 0.0
  %698 = vmatpush1.msra.mxu0 0.0
  %699 = vmatprep.subr.mxu0 0.0
  %700 = vmatpush1.msra.mxu0 0.0
  %701 = vmatprep.subr.mxu0 0.0
  %702 = vmatpush1.msra.mxu0 0.0
  %703 = vmatprep.subr.mxu0 0.0
  %704 = vmatpush1.msra.mxu0 0.0
  %705 = vmatprep.subr.mxu0 0.0
  %706 = vmatpush1.msra.mxu0 0.0
  %707 = vmatprep.subr.mxu0 0.0
  %708 = vmatpush1.msra.mxu0 0.0
  %709 = vmatprep.subr.mxu0 0.0
  %710 = vmatpush1.msra.mxu0 0.0
  %711 = vmatprep.subr.mxu0 0.0
  %712 = vmatpush1.msra.mxu0 0.0
  %713 = vmatprep.subr.mxu0 0.0
  %714 = vmatpush1.msra.mxu0 0.0
  %715 = vmatprep.subr.mxu0 0.0
  %716 = vmatpush1.msra.mxu0 0.0
  %717 = vmatprep.subr.mxu0 0.0
  %718 = vmatpush1.msra.mxu0 0.0
  %719 = vmatprep.subr.mxu0 0.0
  %720 = vmatpush1.msra.mxu0 0.0
  %721 = vmatprep.subr.mxu0 0.0
  %722 = vmatpush1.msra.mxu0 0.0
  %723 = vmatprep.subr.mxu0 0.0
  %724 = vmatpush1.msra.mxu0 0.0
  %725 = vmatprep.subr.mxu0 0.0
  %726 = vmatpush1.msra.mxu0 0.0
  %727 = vmatprep.subr.mxu0 0.0
  %728 = vmatpush1.msra.mxu0 0.0
  %729 = vmatprep.subr.mxu0 0.0
  %730 = vmatpush1.msra.mxu0 0.0
  %731 = vmatprep.subr.mxu0 0.0
  %732 = vmatpush1.msra.mxu0 0.0
  %733 = vmatprep.subr.mxu0 0.0
  %734 = vmatpush1.msra.mxu0 0.0
  %735 = vmatprep.subr.mxu0 0.0
  %736 = vmatpush1.msra.mxu0 0.0
  %737 = vmatprep.subr.mxu0 0.0
  %738 = vmatpush1.msra.mxu0 0.0
  %739 = vmatprep.subr.mxu0 0.0
  %740 = vmatpush1.msra.mxu0 0.0
  %741 = vmatprep.mubr.f32.mxu0 0.0
  %742 = vmatmul.mubr.f32.gmra.mrb[0].mxu0 %v675
  %v743 = vpop.f32.mrb[0].mxu0
  %v744 = vadd.f32 0.0, %v743
  %v745 = vpop.f32.mrb[0].mxu0
  %746 = vdwg.mxu0
  %748 = vrot.lane.b32.xlu0 %v744, 16
  %v749 = vpop.permute.xlu0 %748
  %vm751 = vcmask 195712
  %752 = vst.msk [vmem:[#allocation2] sm:$0xff] %vm751, %v749
  %753 = vrot.lane.b32.xlu0 %v242, 104
  %v754 = vpop.permute.xlu0 %753
  %755 = vrot.lane.b32.xlu0 %v234, 72
  %v756 = vpop.permute.xlu0 %755
  %v757 = vsel %vm247, %v754, 0
  %v759 = vsel %vm247, %v756, 0
  %761 = vmatprep.subr.mxu0 0.0
  %762 = vmatpush1.xpose.msra.mxu0 %v759
  %763 = vmatprep.subr.mxu0 0.0
  %764 = vmatpush1.xpose.msra.mxu0 0.0
  %765 = vmatprep.subr.mxu0 0.0
  %766 = vmatpush1.xpose.msra.mxu0 0.0
  %767 = vmatprep.subr.mxu0 0.0
  %768 = vmatpush1.xpose.msra.mxu0 0.0
  %769 = vmatprep.subr.mxu0 0.0
  %770 = vmatpush1.xpose.msra.mxu0 0.0
  %771 = vmatprep.subr.mxu0 0.0
  %772 = vmatpush1.xpose.msra.mxu0 0.0
  %773 = vmatprep.subr.mxu0 0.0
  %774 = vmatpush1.xpose.msra.mxu0 0.0
  %775 = vmatprep.subr.mxu0 0.0
  %776 = vmatpush1.xpose.msra.mxu0 0.0
  %777 = vmatprep.subr.mxu0 0.0
  %778 = vmatpush1.xpose.msra.mxu0 0.0
  %779 = vmatprep.subr.mxu0 0.0
  %780 = vmatpush1.xpose.msra.mxu0 0.0
  %781 = vmatprep.subr.mxu0 0.0
  %782 = vmatpush1.xpose.msra.mxu0 0.0
  %783 = vmatprep.subr.mxu0 0.0
  %784 = vmatpush1.xpose.msra.mxu0 0.0
  %785 = vmatprep.subr.mxu0 0.0
  %786 = vmatpush1.xpose.msra.mxu0 0.0
  %787 = vmatprep.subr.mxu0 0.0
  %788 = vmatpush1.xpose.msra.mxu0 0.0
  %789 = vmatprep.subr.mxu0 0.0
  %790 = vmatpush1.xpose.msra.mxu0 0.0
  %791 = vmatprep.subr.mxu0 0.0
  %792 = vmatpush1.xpose.msra.mxu0 0.0
  %793 = vmatprep.subr.mxu0 0.0
  %794 = vmatpush1.xpose.msra.mxu0 0.0
  %795 = vmatprep.subr.mxu0 0.0
  %796 = vmatpush1.xpose.msra.mxu0 0.0
  %797 = vmatprep.subr.mxu0 0.0
  %798 = vmatpush1.xpose.msra.mxu0 0.0
  %799 = vmatprep.subr.mxu0 0.0
  %800 = vmatpush1.xpose.msra.mxu0 0.0
  %801 = vmatprep.subr.mxu0 0.0
  %802 = vmatpush1.xpose.msra.mxu0 0.0
  %803 = vmatprep.subr.mxu0 0.0
  %804 = vmatpush1.xpose.msra.mxu0 0.0
  %805 = vmatprep.subr.mxu0 0.0
  %806 = vmatpush1.xpose.msra.mxu0 0.0
  %807 = vmatprep.subr.mxu0 0.0
  %808 = vmatpush1.xpose.msra.mxu0 0.0
  %809 = vmatprep.subr.mxu0 0.0
  %810 = vmatpush1.xpose.msra.mxu0 0.0
  %811 = vmatprep.subr.mxu0 0.0
  %812 = vmatpush1.xpose.msra.mxu0 0.0
  %813 = vmatprep.subr.mxu0 0.0
  %814 = vmatpush1.xpose.msra.mxu0 0.0
  %815 = vmatprep.subr.mxu0 0.0
  %816 = vmatpush1.xpose.msra.mxu0 0.0
  %817 = vmatprep.subr.mxu0 0.0
  %818 = vmatpush1.xpose.msra.mxu0 0.0
  %819 = vmatprep.subr.mxu0 0.0
  %820 = vmatpush1.xpose.msra.mxu0 0.0
  %821 = vmatprep.subr.mxu0 0.0
  %822 = vmatpush1.xpose.msra.mxu0 0.0
  %823 = vmatprep.subr.mxu0 0.0
  %824 = vmatpush1.xpose.msra.mxu0 0.0
  %825 = vmatprep.mubr.f32.mxu0 0.0
  %826 = vmatmul.mubr.f32.gmra.mrb[0].mxu0 %v757
  %v827 = vpop.f32.mrb[0].mxu0
  %v828 = vadd.f32 0.0, %v827
  %v829 = vpop.f32.mrb[0].mxu0
  %830 = vdwg.mxu0
  %v831 = vsel %vm247, %v828, -inf
  %832 = vmax.xlane.f32.xlu0 %v831
  %v833 = vpop.xlane.xlu0 %832
  %v834 = vsub.f32 %v828, %v833
  %v835 = vmul.f32 %v834, 1.442695
  %v836 = vpow.pop %v835
  %v837 = vsel %vm247, %v836, 0.0
  %838 = vadd.xlane.f32.xlu0 %v837
  %v839 = vpop.xlane.xlu0 %838
  %v840 = vrcp.pop %v839
  %v841 = vmul.f32 %v836, %v840
  %842 = vrot.lane.b32.xlu0 %v234, 40
  %v843 = vpop.permute.xlu0 %842
  %v846 = vsel %vm247, %v841, 0
  %848 = vmatprep.subr.mxu0 0.0
  %849 = vmatpush1.msra.mxu0 %v843
  %850 = vmatprep.subr.mxu0 0.0
  %851 = vmatpush1.msra.mxu0 0.0
  %852 = vmatprep.subr.mxu0 0.0
  %853 = vmatpush1.msra.mxu0 0.0
  %854 = vmatprep.subr.mxu0 0.0
  %855 = vmatpush1.msra.mxu0 0.0
  %856 = vmatprep.subr.mxu0 0.0
  %857 = vmatpush1.msra.mxu0 0.0
  %858 = vmatprep.subr.mxu0 0.0
  %859 = vmatpush1.msra.mxu0 0.0
  %860 = vmatprep.subr.mxu0 0.0
  %861 = vmatpush1.msra.mxu0 0.0
  %862 = vmatprep.subr.mxu0 0.0
  %863 = vmatpush1.msra.mxu0 0.0
  %864 = vmatprep.subr.mxu0 0.0
  %865 = vmatpush1.msra.mxu0 0.0
  %866 = vmatprep.subr.mxu0 0.0
  %867 = vmatpush1.msra.mxu0 0.0
  %868 = vmatprep.subr.mxu0 0.0
  %869 = vmatpush1.msra.mxu0 0.0
  %870 = vmatprep.subr.mxu0 0.0
  %871 = vmatpush1.msra.mxu0 0.0
  %872 = vmatprep.subr.mxu0 0.0
  %873 = vmatpush1.msra.mxu0 0.0
  %874 = vmatprep.subr.mxu0 0.0
  %875 = vmatpush1.msra.mxu0 0.0
  %876 = vmatprep.subr.mxu0 0.0
  %877 = vmatpush1.msra.mxu0 0.0
  %878 = vmatprep.subr.mxu0 0.0
  %879 = vmatpush1.msra.mxu0 0.0
  %880 = vmatprep.subr.mxu0 0.0
  %881 = vmatpush1.msra.mxu0 0.0
  %882 = vmatprep.subr.mxu0 0.0
  %883 = vmatpush1.msra.mxu0 0.0
  %884 = vmatprep.subr.mxu0 0.0
  %885 = vmatpush1.msra.mxu0 0.0
  %886 = vmatprep.subr.mxu0 0.0
  %887 = vmatpush1.msra.mxu0 0.0
  %888 = vmatprep.subr.mxu0 0.0
  %889 = vmatpush1.msra.mxu0 0.0
  %890 = vmatprep.subr.mxu0 0.0
  %891 = vmatpush1.msra.mxu0 0.0
  %892 = vmatprep.subr.mxu0 0.0
  %893 = vmatpush1.msra.mxu0 0.0
  %894 = vmatprep.subr.mxu0 0.0
  %895 = vmatpush1.msra.mxu0 0.0
  %896 = vmatprep.subr.mxu0 0.0
  %897 = vmatpush1.msra.mxu0 0.0
  %898 = vmatprep.subr.mxu0 0.0
  %899 = vmatpush1.msra.mxu0 0.0
  %900 = vmatprep.subr.mxu0 0.0
  %901 = vmatpush1.msra.mxu0 0.0
  %902 = vmatprep.subr.mxu0 0.0
  %903 = vmatpush1.msra.mxu0 0.0
  %904 = vmatprep.subr.mxu0 0.0
  %905 = vmatpush1.msra.mxu0 0.0
  %906 = vmatprep.subr.mxu0 0.0
  %907 = vmatpush1.msra.mxu0 0.0
  %908 = vmatprep.subr.mxu0 0.0
  %909 = vmatpush1.msra.mxu0 0.0
  %910 = vmatprep.subr.mxu0 0.0
  %911 = vmatpush1.msra.mxu0 0.0
  %912 = vmatprep.mubr.f32.mxu0 0.0
  %913 = vmatmul.mubr.f32.gmra.mrb[0].mxu0 %v846
  %v914 = vpop.f32.mrb[0].mxu0
  %v915 = vadd.f32 0.0, %v914
  %v916 = vpop.f32.mrb[0].mxu0
  %917 = vdwg.mxu0
  %919 = vrot.lane.b32.xlu0 %v915, 24
  %v920 = vpop.permute.xlu0 %919
  %vm922 = vcmask 261312
  %923 = vst.msk [vmem:[#allocation2] sm:$0xff] %vm922, %v920
  %925 = vrot.lane.b32.xlu0 %v239, 96
  %v926 = vpop.permute.xlu0 %925
  %v928 = vsel %vm247, %v243, 0
  %v930 = vsel %vm247, %v926, 0
  %932 = vmatprep.subr.mxu0 0.0
  %933 = vmatpush1.xpose.msra.mxu0 %v930
  %934 = vmatprep.subr.mxu0 0.0
  %935 = vmatpush1.xpose.msra.mxu0 0.0
  %936 = vmatprep.subr.mxu0 0.0
  %937 = vmatpush1.xpose.msra.mxu0 0.0
  %938 = vmatprep.subr.mxu0 0.0
  %939 = vmatpush1.xpose.msra.mxu0 0.0
  %940 = vmatprep.subr.mxu0 0.0
  %941 = vmatpush1.xpose.msra.mxu0 0.0
  %942 = vmatprep.subr.mxu0 0.0
  %943 = vmatpush1.xpose.msra.mxu0 0.0
  %944 = vmatprep.subr.mxu0 0.0
  %945 = vmatpush1.xpose.msra.mxu0 0.0
  %946 = vmatprep.subr.mxu0 0.0
  %947 = vmatpush1.xpose.msra.mxu0 0.0
  %948 = vmatprep.subr.mxu0 0.0
  %949 = vmatpush1.xpose.msra.mxu0 0.0
  %950 = vmatprep.subr.mxu0 0.0
  %951 = vmatpush1.xpose.msra.mxu0 0.0
  %952 = vmatprep.subr.mxu0 0.0
  %953 = vmatpush1.xpose.msra.mxu0 0.0
  %954 = vmatprep.subr.mxu0 0.0
  %955 = vmatpush1.xpose.msra.mxu0 0.0
  %956 = vmatprep.subr.mxu0 0.0
  %957 = vmatpush1.xpose.msra.mxu0 0.0
  %958 = vmatprep.subr.mxu0 0.0
  %959 = vmatpush1.xpose.msra.mxu0 0.0
  %960 = vmatprep.subr.mxu0 0.0
  %961 = vmatpush1.xpose.msra.mxu0 0.0
  %962 = vmatprep.subr.mxu0 0.0
  %963 = vmatpush1.xpose.msra.mxu0 0.0
  %964 = vmatprep.subr.mxu0 0.0
  %965 = vmatpush1.xpose.msra.mxu0 0.0
  %966 = vmatprep.subr.mxu0 0.0
  %967 = vmatpush1.xpose.msra.mxu0 0.0
  %968 = vmatprep.subr.mxu0 0.0
  %969 = vmatpush1.xpose.msra.mxu0 0.0
  %970 = vmatprep.subr.mxu0 0.0
  %971 = vmatpush1.xpose.msra.mxu0 0.0
  %972 = vmatprep.subr.mxu0 0.0
  %973 = vmatpush1.xpose.msra.mxu0 0.0
  %974 = vmatprep.subr.mxu0 0.0
  %975 = vmatpush1.xpose.msra.mxu0 0.0
  %976 = vmatprep.subr.mxu0 0.0
  %977 = vmatpush1.xpose.msra.mxu0 0.0
  %978 = vmatprep.subr.mxu0 0.0
  %979 = vmatpush1.xpose.msra.mxu0 0.0
  %980 = vmatprep.subr.mxu0 0.0
  %981 = vmatpush1.xpose.msra.mxu0 0.0
  %982 = vmatprep.subr.mxu0 0.0
  %983 = vmatpush1.xpose.msra.mxu0 0.0
  %984 = vmatprep.subr.mxu0 0.0
  %985 = vmatpush1.xpose.msra.mxu0 0.0
  %986 = vmatprep.subr.mxu0 0.0
  %987 = vmatpush1.xpose.msra.mxu0 0.0
  %988 = vmatprep.subr.mxu0 0.0
  %989 = vmatpush1.xpose.msra.mxu0 0.0
  %990 = vmatprep.subr.mxu0 0.0
  %991 = vmatpush1.xpose.msra.mxu0 0.0
  %992 = vmatprep.subr.mxu0 0.0
  %993 = vmatpush1.xpose.msra.mxu0 0.0
  %994 = vmatprep.subr.mxu0 0.0
  %995 = vmatpush1.xpose.msra.mxu0 0.0
  %996 = vmatprep.mubr.f32.mxu0 0.0
  %997 = vmatmul.mubr.f32.gmra.mrb[0].mxu0 %v928
  %v998 = vpop.f32.mrb[0].mxu0
  %v999 = vadd.f32 0.0, %v998
  %v1000 = vpop.f32.mrb[0].mxu0
  %1001 = vdwg.mxu0
  %v1002 = vsel %vm247, %v999, -inf
  %1003 = vmax.xlane.f32.xlu0 %v1002
  %v1004 = vpop.xlane.xlu0 %1003
  %v1005 = vsub.f32 %v999, %v1004
  %v1006 = vmul.f32 %v1005, 1.442695
  %v1007 = vpow.pop %v1006
  %v1008 = vsel %vm247, %v1007, 0.0
  %1009 = vadd.xlane.f32.xlu0 %v1008
  %v1010 = vpop.xlane.xlu0 %1009
  %v1011 = vrcp.pop %v1010
  %v1012 = vmul.f32 %v1007, %v1011
  %1013 = vrot.lane.b32.xlu0 %v239, 64
  %v1014 = vpop.permute.xlu0 %1013
  %v1017 = vsel %vm247, %v1012, 0
  %1019 = vmatprep.subr.mxu0 0.0
  %1020 = vmatpush1.msra.mxu0 %v1014
  %1021 = vmatprep.subr.mxu0 0.0
  %1022 = vmatpush1.msra.mxu0 0.0
  %1023 = vmatprep.subr.mxu0 0.0
  %1024 = vmatpush1.msra.mxu0 0.0
  %1025 = vmatprep.subr.mxu0 0.0
  %1026 = vmatpush1.msra.mxu0 0.0
  %1027 = vmatprep.subr.mxu0 0.0
  %1028 = vmatpush1.msra.mxu0 0.0
  %1029 = vmatprep.subr.mxu0 0.0
  %1030 = vmatpush1.msra.mxu0 0.0
  %1031 = vmatprep.subr.mxu0 0.0
  %1032 = vmatpush1.msra.mxu0 0.0
  %1033 = vmatprep.subr.mxu0 0.0
  %1034 = vmatpush1.msra.mxu0 0.0
  %1035 = vmatprep.subr.mxu0 0.0
  %1036 = vmatpush1.msra.mxu0 0.0
  %1037 = vmatprep.subr.mxu0 0.0
  %1038 = vmatpush1.msra.mxu0 0.0
  %1039 = vmatprep.subr.mxu0 0.0
  %1040 = vmatpush1.msra.mxu0 0.0
  %1041 = vmatprep.subr.mxu0 0.0
  %1042 = vmatpush1.msra.mxu0 0.0
  %1043 = vmatprep.subr.mxu0 0.0
  %1044 = vmatpush1.msra.mxu0 0.0
  %1045 = vmatprep.subr.mxu0 0.0
  %1046 = vmatpush1.msra.mxu0 0.0
  %1047 = vmatprep.subr.mxu0 0.0
  %1048 = vmatpush1.msra.mxu0 0.0
  %1049 = vmatprep.subr.mxu0 0.0
  %1050 = vmatpush1.msra.mxu0 0.0
  %1051 = vmatprep.subr.mxu0 0.0
  %1052 = vmatpush1.msra.mxu0 0.0
  %1053 = vmatprep.subr.mxu0 0.0
  %1054 = vmatpush1.msra.mxu0 0.0
  %1055 = vmatprep.subr.mxu0 0.0
  %1056 = vmatpush1.msra.mxu0 0.0
  %1057 = vmatprep.subr.mxu0 0.0
  %1058 = vmatpush1.msra.mxu0 0.0
  %1059 = vmatprep.subr.mxu0 0.0
  %1060 = vmatpush1.msra.mxu0 0.0
  %1061 = vmatprep.subr.mxu0 0.0
  %1062 = vmatpush1.msra.mxu0 0.0
  %1063 = vmatprep.subr.mxu0 0.0
  %1064 = vmatpush1.msra.mxu0 0.0
  %1065 = vmatprep.subr.mxu0 0.0
  %1066 = vmatpush1.msra.mxu0 0.0
  %1067 = vmatprep.subr.mxu0 0.0
  %1068 = vmatpush1.msra.mxu0 0.0
  %1069 = vmatprep.subr.mxu0 0.0
  %1070 = vmatpush1.msra.mxu0 0.0
  %1071 = vmatprep.subr.mxu0 0.0
  %1072 = vmatpush1.msra.mxu0 0.0
  %1073 = vmatprep.subr.mxu0 0.0
  %1074 = vmatpush1.msra.mxu0 0.0
  %1075 = vmatprep.subr.mxu0 0.0
  %1076 = vmatpush1.msra.mxu0 0.0
  %1077 = vmatprep.subr.mxu0 0.0
  %1078 = vmatpush1.msra.mxu0 0.0
  %1079 = vmatprep.subr.mxu0 0.0
  %1080 = vmatpush1.msra.mxu0 0.0
  %1081 = vmatprep.subr.mxu0 0.0
  %1082 = vmatpush1.msra.mxu0 0.0
  %1083 = vmatprep.mubr.f32.mxu0 0.0
  %1084 = vmatmul.mubr.f32.gmra.mrb[0].mxu0 %v1017
  %v1085 = vpop.f32.mrb[0].mxu0
  %v1086 = vadd.f32 0.0, %v1085
  %v1087 = vpop.f32.mrb[0].mxu0
  %1088 = vdwg.mxu0
  %1089 = vst.msk [vmem:[#allocation2 + $0x8] sm:$0xff] %vm247, %v1086
  %1090 = vrot.lane.b32.xlu0 %v243, 120
  %v1091 = vpop.permute.xlu0 %1090
  %1092 = vrot.lane.b32.xlu0 %v239, 88
  %v1093 = vpop.permute.xlu0 %1092
  %v1094 = vsel %vm247, %v1091, 0
  %v1096 = vsel %vm247, %v1093, 0
  %1098 = vmatprep.subr.mxu0 0.0
  %1099 = vmatpush1.xpose.msra.mxu0 %v1096
  %1100 = vmatprep.subr.mxu0 0.0
  %1101 = vmatpush1.xpose.msra.mxu0 0.0
  %1102 = vmatprep.subr.mxu0 0.0
  %1103 = vmatpush1.xpose.msra.mxu0 0.0
  %1104 = vmatprep.subr.mxu0 0.0
  %1105 = vmatpush1.xpose.msra.mxu0 0.0
  %1106 = vmatprep.subr.mxu0 0.0
  %1107 = vmatpush1.xpose.msra.mxu0 0.0
  %1108 = vmatprep.subr.mxu0 0.0
  %1109 = vmatpush1.xpose.msra.mxu0 0.0
  %1110 = vmatprep.subr.mxu0 0.0
  %1111 = vmatpush1.xpose.msra.mxu0 0.0
  %1112 = vmatprep.subr.mxu0 0.0
  %1113 = vmatpush1.xpose.msra.mxu0 0.0
  %1114 = vmatprep.subr.mxu0 0.0
  %1115 = vmatpush1.xpose.msra.mxu0 0.0
  %1116 = vmatprep.subr.mxu0 0.0
  %1117 = vmatpush1.xpose.msra.mxu0 0.0
  %1118 = vmatprep.subr.mxu0 0.0
  %1119 = vmatpush1.xpose.msra.mxu0 0.0
  %1120 = vmatprep.subr.mxu0 0.0
  %1121 = vmatpush1.xpose.msra.mxu0 0.0
  %1122 = vmatprep.subr.mxu0 0.0
  %1123 = vmatpush1.xpose.msra.mxu0 0.0
  %1124 = vmatprep.subr.mxu0 0.0
  %1125 = vmatpush1.xpose.msra.mxu0 0.0
  %1126 = vmatprep.subr.mxu0 0.0
  %1127 = vmatpush1.xpose.msra.mxu0 0.0
  %1128 = vmatprep.subr.mxu0 0.0
  %1129 = vmatpush1.xpose.msra.mxu0 0.0
  %1130 = vmatprep.subr.mxu0 0.0
  %1131 = vmatpush1.xpose.msra.mxu0 0.0
  %1132 = vmatprep.subr.mxu0 0.0
  %1133 = vmatpush1.xpose.msra.mxu0 0.0
  %1134 = vmatprep.subr.mxu0 0.0
  %1135 = vmatpush1.xpose.msra.mxu0 0.0
  %1136 = vmatprep.subr.mxu0 0.0
  %1137 = vmatpush1.xpose.msra.mxu0 0.0
  %1138 = vmatprep.subr.mxu0 0.0
  %1139 = vmatpush1.xpose.msra.mxu0 0.0
  %1140 = vmatprep.subr.mxu0 0.0
  %1141 = vmatpush1.xpose.msra.mxu0 0.0
  %1142 = vmatprep.subr.mxu0 0.0
  %1143 = vmatpush1.xpose.msra.mxu0 0.0
  %1144 = vmatprep.subr.mxu0 0.0
  %1145 = vmatpush1.xpose.msra.mxu0 0.0
  %1146 = vmatprep.subr.mxu0 0.0
  %1147 = vmatpush1.xpose.msra.mxu0 0.0
  %1148 = vmatprep.subr.mxu0 0.0
  %1149 = vmatpush1.xpose.msra.mxu0 0.0
  %1150 = vmatprep.subr.mxu0 0.0
  %1151 = vmatpush1.xpose.msra.mxu0 0.0
  %1152 = vmatprep.subr.mxu0 0.0
  %1153 = vmatpush1.xpose.msra.mxu0 0.0
  %1154 = vmatprep.subr.mxu0 0.0
  %1155 = vmatpush1.xpose.msra.mxu0 0.0
  %1156 = vmatprep.subr.mxu0 0.0
  %1157 = vmatpush1.xpose.msra.mxu0 0.0
  %1158 = vmatprep.subr.mxu0 0.0
  %1159 = vmatpush1.xpose.msra.mxu0 0.0
  %1160 = vmatprep.subr.mxu0 0.0
  %1161 = vmatpush1.xpose.msra.mxu0 0.0
  %1162 = vmatprep.mubr.f32.mxu0 0.0
  %1163 = vmatmul.mubr.f32.gmra.mrb[0].mxu0 %v1094
  %v1164 = vpop.f32.mrb[0].mxu0
  %v1165 = vadd.f32 0.0, %v1164
  %v1166 = vpop.f32.mrb[0].mxu0
  %1167 = vdwg.mxu0
  %v1168 = vsel %vm247, %v1165, -inf
  %1169 = vmax.xlane.f32.xlu0 %v1168
  %v1170 = vpop.xlane.xlu0 %1169
  %v1171 = vsub.f32 %v1165, %v1170
  %v1172 = vmul.f32 %v1171, 1.442695
  %v1173 = vpow.pop %v1172
  %v1174 = vsel %vm247, %v1173, 0.0
  %1175 = vadd.xlane.f32.xlu0 %v1174
  %v1176 = vpop.xlane.xlu0 %1175
  %v1177 = vrcp.pop %v1176
  %v1178 = vmul.f32 %v1173, %v1177
  %1179 = vrot.lane.b32.xlu0 %v239, 56
  %v1180 = vpop.permute.xlu0 %1179
  %v1183 = vsel %vm247, %v1178, 0
  %1185 = vmatprep.subr.mxu0 0.0
  %1186 = vmatpush1.msra.mxu0 %v1180
  %1187 = vmatprep.subr.mxu0 0.0
  %1188 = vmatpush1.msra.mxu0 0.0
  %1189 = vmatprep.subr.mxu0 0.0
  %1190 = vmatpush1.msra.mxu0 0.0
  %1191 = vmatprep.subr.mxu0 0.0
  %1192 = vmatpush1.msra.mxu0 0.0
  %1193 = vmatprep.subr.mxu0 0.0
  %1194 = vmatpush1.msra.mxu0 0.0
  %1195 = vmatprep.subr.mxu0 0.0
  %1196 = vmatpush1.msra.mxu0 0.0
  %1197 = vmatprep.subr.mxu0 0.0
  %1198 = vmatpush1.msra.mxu0 0.0
  %1199 = vmatprep.subr.mxu0 0.0
  %1200 = vmatpush1.msra.mxu0 0.0
  %1201 = vmatprep.subr.mxu0 0.0
  %1202 = vmatpush1.msra.mxu0 0.0
  %1203 = vmatprep.subr.mxu0 0.0
  %1204 = vmatpush1.msra.mxu0 0.0
  %1205 = vmatprep.subr.mxu0 0.0
  %1206 = vmatpush1.msra.mxu0 0.0
  %1207 = vmatprep.subr.mxu0 0.0
  %1208 = vmatpush1.msra.mxu0 0.0
  %1209 = vmatprep.subr.mxu0 0.0
  %1210 = vmatpush1.msra.mxu0 0.0
  %1211 = vmatprep.subr.mxu0 0.0
  %1212 = vmatpush1.msra.mxu0 0.0
  %1213 = vmatprep.subr.mxu0 0.0
  %1214 = vmatpush1.msra.mxu0 0.0
  %1215 = vmatprep.subr.mxu0 0.0
  %1216 = vmatpush1.msra.mxu0 0.0
  %1217 = vmatprep.subr.mxu0 0.0
  %1218 = vmatpush1.msra.mxu0 0.0
  %1219 = vmatprep.subr.mxu0 0.0
  %1220 = vmatpush1.msra.mxu0 0.0
  %1221 = vmatprep.subr.mxu0 0.0
  %1222 = vmatpush1.msra.mxu0 0.0
  %1223 = vmatprep.subr.mxu0 0.0
  %1224 = vmatpush1.msra.mxu0 0.0
  %1225 = vmatprep.subr.mxu0 0.0
  %1226 = vmatpush1.msra.mxu0 0.0
  %1227 = vmatprep.subr.mxu0 0.0
  %1228 = vmatpush1.msra.mxu0 0.0
  %1229 = vmatprep.subr.mxu0 0.0
  %1230 = vmatpush1.msra.mxu0 0.0
  %1231 = vmatprep.subr.mxu0 0.0
  %1232 = vmatpush1.msra.mxu0 0.0
  %1233 = vmatprep.subr.mxu0 0.0
  %1234 = vmatpush1.msra.mxu0 0.0
  %1235 = vmatprep.subr.mxu0 0.0
  %1236 = vmatpush1.msra.mxu0 0.0
  %1237 = vmatprep.subr.mxu0 0.0
  %1238 = vmatpush1.msra.mxu0 0.0
  %1239 = vmatprep.subr.mxu0 0.0
  %1240 = vmatpush1.msra.mxu0 0.0
  %1241 = vmatprep.subr.mxu0 0.0
  %1242 = vmatpush1.msra.mxu0 0.0
  %1243 = vmatprep.subr.mxu0 0.0
  %1244 = vmatpush1.msra.mxu0 0.0
  %1245 = vmatprep.subr.mxu0 0.0
  %1246 = vmatpush1.msra.mxu0 0.0
  %1247 = vmatprep.subr.mxu0 0.0
  %1248 = vmatpush1.msra.mxu0 0.0
  %1249 = vmatprep.mubr.f32.mxu0 0.0
  %1250 = vmatmul.mubr.f32.gmra.mrb[0].mxu0 %v1183
  %v1251 = vpop.f32.mrb[0].mxu0
  %v1252 = vadd.f32 0.0, %v1251
  %v1253 = vpop.f32.mrb[0].mxu0
  %1254 = vdwg.mxu0
  %1256 = vrot.lane.b32.xlu0 %v1252, 8
  %v1257 = vpop.permute.xlu0 %1256
  %1259 = vst.msk [vmem:[#allocation2 + $0x8] sm:$0xff] %vm580, %v1257
  %1260 = vrot.lane.b32.xlu0 %v243, 112
  %v1261 = vpop.permute.xlu0 %1260
  %1262 = vrot.lane.b32.xlu0 %v239, 80
  %v1263 = vpop.permute.xlu0 %1262
  %v1264 = vsel %vm247, %v1261, 0
  %v1266 = vsel %vm247, %v1263, 0
  %1268 = vmatprep.subr.mxu0 0.0
  %1269 = vmatpush1.xpose.msra.mxu0 %v1266
  %1270 = vmatprep.subr.mxu0 0.0
  %1271 = vmatpush1.xpose.msra.mxu0 0.0
  %1272 = vmatprep.subr.mxu0 0.0
  %1273 = vmatpush1.xpose.msra.mxu0 0.0
  %1274 = vmatprep.subr.mxu0 0.0
  %1275 = vmatpush1.xpose.msra.mxu0 0.0
  %1276 = vmatprep.subr.mxu0 0.0
  %1277 = vmatpush1.xpose.msra.mxu0 0.0
  %1278 = vmatprep.subr.mxu0 0.0
  %1279 = vmatpush1.xpose.msra.mxu0 0.0
  %1280 = vmatprep.subr.mxu0 0.0
  %1281 = vmatpush1.xpose.msra.mxu0 0.0
  %1282 = vmatprep.subr.mxu0 0.0
  %1283 = vmatpush1.xpose.msra.mxu0 0.0
  %1284 = vmatprep.subr.mxu0 0.0
  %1285 = vmatpush1.xpose.msra.mxu0 0.0
  %1286 = vmatprep.subr.mxu0 0.0
  %1287 = vmatpush1.xpose.msra.mxu0 0.0
  %1288 = vmatprep.subr.mxu0 0.0
  %1289 = vmatpush1.xpose.msra.mxu0 0.0
  %1290 = vmatprep.subr.mxu0 0.0
  %1291 = vmatpush1.xpose.msra.mxu0 0.0
  %1292 = vmatprep.subr.mxu0 0.0
  %1293 = vmatpush1.xpose.msra.mxu0 0.0
  %1294 = vmatprep.subr.mxu0 0.0
  %1295 = vmatpush1.xpose.msra.mxu0 0.0
  %1296 = vmatprep.subr.mxu0 0.0
  %1297 = vmatpush1.xpose.msra.mxu0 0.0
  %1298 = vmatprep.subr.mxu0 0.0
  %1299 = vmatpush1.xpose.msra.mxu0 0.0
  %1300 = vmatprep.subr.mxu0 0.0
  %1301 = vmatpush1.xpose.msra.mxu0 0.0
  %1302 = vmatprep.subr.mxu0 0.0
  %1303 = vmatpush1.xpose.msra.mxu0 0.0
  %1304 = vmatprep.subr.mxu0 0.0
  %1305 = vmatpush1.xpose.msra.mxu0 0.0
  %1306 = vmatprep.subr.mxu0 0.0
  %1307 = vmatpush1.xpose.msra.mxu0 0.0
  %1308 = vmatprep.subr.mxu0 0.0
  %1309 = vmatpush1.xpose.msra.mxu0 0.0
  %1310 = vmatprep.subr.mxu0 0.0
  %1311 = vmatpush1.xpose.msra.mxu0 0.0
  %1312 = vmatprep.subr.mxu0 0.0
  %1313 = vmatpush1.xpose.msra.mxu0 0.0
  %1314 = vmatprep.subr.mxu0 0.0
  %1315 = vmatpush1.xpose.msra.mxu0 0.0
  %1316 = vmatprep.subr.mxu0 0.0
  %1317 = vmatpush1.xpose.msra.mxu0 0.0
  %1318 = vmatprep.subr.mxu0 0.0
  %1319 = vmatpush1.xpose.msra.mxu0 0.0
  %1320 = vmatprep.subr.mxu0 0.0
  %1321 = vmatpush1.xpose.msra.mxu0 0.0
  %1322 = vmatprep.subr.mxu0 0.0
  %1323 = vmatpush1.xpose.msra.mxu0 0.0
  %1324 = vmatprep.subr.mxu0 0.0
  %1325 = vmatpush1.xpose.msra.mxu0 0.0
  %1326 = vmatprep.subr.mxu0 0.0
  %1327 = vmatpush1.xpose.msra.mxu0 0.0
  %1328 = vmatprep.subr.mxu0 0.0
  %1329 = vmatpush1.xpose.msra.mxu0 0.0
  %1330 = vmatprep.subr.mxu0 0.0
  %1331 = vmatpush1.xpose.msra.mxu0 0.0
  %1332 = vmatprep.mubr.f32.mxu0 0.0
  %1333 = vmatmul.mubr.f32.gmra.mrb[0].mxu0 %v1264
  %v1334 = vpop.f32.mrb[0].mxu0
  %v1335 = vadd.f32 0.0, %v1334
  %v1336 = vpop.f32.mrb[0].mxu0
  %1337 = vdwg.mxu0
  %v1338 = vsel %vm247, %v1335, -inf
  %1339 = vmax.xlane.f32.xlu0 %v1338
  %v1340 = vpop.xlane.xlu0 %1339
  %v1341 = vsub.f32 %v1335, %v1340
  %v1342 = vmul.f32 %v1341, 1.442695
  %v1343 = vpow.pop %v1342
  %v1344 = vsel %vm247, %v1343, 0.0
  %1345 = vadd.xlane.f32.xlu0 %v1344
  %v1346 = vpop.xlane.xlu0 %1345
  %v1347 = vrcp.pop %v1346
  %v1348 = vmul.f32 %v1343, %v1347
  %1349 = vrot.lane.b32.xlu0 %v239, 48
  %v1350 = vpop.permute.xlu0 %1349
  %v1353 = vsel %vm247, %v1348, 0
  %1355 = vmatprep.subr.mxu0 0.0
  %1356 = vmatpush1.msra.mxu0 %v1350
  %1357 = vmatprep.subr.mxu0 0.0
  %1358 = vmatpush1.msra.mxu0 0.0
  %1359 = vmatprep.subr.mxu0 0.0
  %1360 = vmatpush1.msra.mxu0 0.0
  %1361 = vmatprep.subr.mxu0 0.0
  %1362 = vmatpush1.msra.mxu0 0.0
  %1363 = vmatprep.subr.mxu0 0.0
  %1364 = vmatpush1.msra.mxu0 0.0
  %1365 = vmatprep.subr.mxu0 0.0
  %1366 = vmatpush1.msra.mxu0 0.0
  %1367 = vmatprep.subr.mxu0 0.0
  %1368 = vmatpush1.msra.mxu0 0.0
  %1369 = vmatprep.subr.mxu0 0.0
  %1370 = vmatpush1.msra.mxu0 0.0
  %1371 = vmatprep.subr.mxu0 0.0
  %1372 = vmatpush1.msra.mxu0 0.0
  %1373 = vmatprep.subr.mxu0 0.0
  %1374 = vmatpush1.msra.mxu0 0.0
  %1375 = vmatprep.subr.mxu0 0.0
  %1376 = vmatpush1.msra.mxu0 0.0
  %1377 = vmatprep.subr.mxu0 0.0
  %1378 = vmatpush1.msra.mxu0 0.0
  %1379 = vmatprep.subr.mxu0 0.0
  %1380 = vmatpush1.msra.mxu0 0.0
  %1381 = vmatprep.subr.mxu0 0.0
  %1382 = vmatpush1.msra.mxu0 0.0
  %1383 = vmatprep.subr.mxu0 0.0
  %1384 = vmatpush1.msra.mxu0 0.0
  %1385 = vmatprep.subr.mxu0 0.0
  %1386 = vmatpush1.msra.mxu0 0.0
  %1387 = vmatprep.subr.mxu0 0.0
  %1388 = vmatpush1.msra.mxu0 0.0
  %1389 = vmatprep.subr.mxu0 0.0
  %1390 = vmatpush1.msra.mxu0 0.0
  %1391 = vmatprep.subr.mxu0 0.0
  %1392 = vmatpush1.msra.mxu0 0.0
  %1393 = vmatprep.subr.mxu0 0.0
  %1394 = vmatpush1.msra.mxu0 0.0
  %1395 = vmatprep.subr.mxu0 0.0
  %1396 = vmatpush1.msra.mxu0 0.0
  %1397 = vmatprep.subr.mxu0 0.0
  %1398 = vmatpush1.msra.mxu0 0.0
  %1399 = vmatprep.subr.mxu0 0.0
  %1400 = vmatpush1.msra.mxu0 0.0
  %1401 = vmatprep.subr.mxu0 0.0
  %1402 = vmatpush1.msra.mxu0 0.0
  %1403 = vmatprep.subr.mxu0 0.0
  %1404 = vmatpush1.msra.mxu0 0.0
  %1405 = vmatprep.subr.mxu0 0.0
  %1406 = vmatpush1.msra.mxu0 0.0
  %1407 = vmatprep.subr.mxu0 0.0
  %1408 = vmatpush1.msra.mxu0 0.0
  %1409 = vmatprep.subr.mxu0 0.0
  %1410 = vmatpush1.msra.mxu0 0.0
  %1411 = vmatprep.subr.mxu0 0.0
  %1412 = vmatpush1.msra.mxu0 0.0
  %1413 = vmatprep.subr.mxu0 0.0
  %1414 = vmatpush1.msra.mxu0 0.0
  %1415 = vmatprep.subr.mxu0 0.0
  %1416 = vmatpush1.msra.mxu0 0.0
  %1417 = vmatprep.subr.mxu0 0.0
  %1418 = vmatpush1.msra.mxu0 0.0
  %1419 = vmatprep.mubr.f32.mxu0 0.0
  %1420 = vmatmul.mubr.f32.gmra.mrb[0].mxu0 %v1353
  %v1421 = vpop.f32.mrb[0].mxu0
  %v1422 = vadd.f32 0.0, %v1421
  %v1423 = vpop.f32.mrb[0].mxu0
  %1424 = vdwg.mxu0
  %1426 = vrot.lane.b32.xlu0 %v1422, 16
  %v1427 = vpop.permute.xlu0 %1426
  %1429 = vst.msk [vmem:[#allocation2 + $0x8] sm:$0xff] %vm751, %v1427
  %1430 = vrot.lane.b32.xlu0 %v243, 104
  %v1431 = vpop.permute.xlu0 %1430
  %1432 = vrot.lane.b32.xlu0 %v239, 72
  %v1433 = vpop.permute.xlu0 %1432
  %v1434 = vsel %vm247, %v1431, 0
  %v1436 = vsel %vm247, %v1433, 0
  %1438 = vmatprep.subr.mxu0 0.0
  %1439 = vmatpush1.xpose.msra.mxu0 %v1436
  %1440 = vmatprep.subr.mxu0 0.0
  %1441 = vmatpush1.xpose.msra.mxu0 0.0
  %1442 = vmatprep.subr.mxu0 0.0
  %1443 = vmatpush1.xpose.msra.mxu0 0.0
  %1444 = vmatprep.subr.mxu0 0.0
  %1445 = vmatpush1.xpose.msra.mxu0 0.0
  %1446 = vmatprep.subr.mxu0 0.0
  %1447 = vmatpush1.xpose.msra.mxu0 0.0
  %1448 = vmatprep.subr.mxu0 0.0
  %1449 = vmatpush1.xpose.msra.mxu0 0.0
  %1450 = vmatprep.subr.mxu0 0.0
  %1451 = vmatpush1.xpose.msra.mxu0 0.0
  %1452 = vmatprep.subr.mxu0 0.0
  %1453 = vmatpush1.xpose.msra.mxu0 0.0
  %1454 = vmatprep.subr.mxu0 0.0
  %1455 = vmatpush1.xpose.msra.mxu0 0.0
  %1456 = vmatprep.subr.mxu0 0.0
  %1457 = vmatpush1.xpose.msra.mxu0 0.0
  %1458 = vmatprep.subr.mxu0 0.0
  %1459 = vmatpush1.xpose.msra.mxu0 0.0
  %1460 = vmatprep.subr.mxu0 0.0
  %1461 = vmatpush1.xpose.msra.mxu0 0.0
  %1462 = vmatprep.subr.mxu0 0.0
  %1463 = vmatpush1.xpose.msra.mxu0 0.0
  %1464 = vmatprep.subr.mxu0 0.0
  %1465 = vmatpush1.xpose.msra.mxu0 0.0
  %1466 = vmatprep.subr.mxu0 0.0
  %1467 = vmatpush1.xpose.msra.mxu0 0.0
  %1468 = vmatprep.subr.mxu0 0.0
  %1469 = vmatpush1.xpose.msra.mxu0 0.0
  %1470 = vmatprep.subr.mxu0 0.0
  %1471 = vmatpush1.xpose.msra.mxu0 0.0
  %1472 = vmatprep.subr.mxu0 0.0
  %1473 = vmatpush1.xpose.msra.mxu0 0.0
  %1474 = vmatprep.subr.mxu0 0.0
  %1475 = vmatpush1.xpose.msra.mxu0 0.0
  %1476 = vmatprep.subr.mxu0 0.0
  %1477 = vmatpush1.xpose.msra.mxu0 0.0
  %1478 = vmatprep.subr.mxu0 0.0
  %1479 = vmatpush1.xpose.msra.mxu0 0.0
  %1480 = vmatprep.subr.mxu0 0.0
  %1481 = vmatpush1.xpose.msra.mxu0 0.0
  %1482 = vmatprep.subr.mxu0 0.0
  %1483 = vmatpush1.xpose.msra.mxu0 0.0
  %1484 = vmatprep.subr.mxu0 0.0
  %1485 = vmatpush1.xpose.msra.mxu0 0.0
  %1486 = vmatprep.subr.mxu0 0.0
  %1487 = vmatpush1.xpose.msra.mxu0 0.0
  %1488 = vmatprep.subr.mxu0 0.0
  %1489 = vmatpush1.xpose.msra.mxu0 0.0
  %1490 = vmatprep.subr.mxu0 0.0
  %1491 = vmatpush1.xpose.msra.mxu0 0.0
  %1492 = vmatprep.subr.mxu0 0.0
  %1493 = vmatpush1.xpose.msra.mxu0 0.0
  %1494 = vmatprep.subr.mxu0 0.0
  %1495 = vmatpush1.xpose.msra.mxu0 0.0
  %1496 = vmatprep.subr.mxu0 0.0
  %1497 = vmatpush1.xpose.msra.mxu0 0.0
  %1498 = vmatprep.subr.mxu0 0.0
  %1499 = vmatpush1.xpose.msra.mxu0 0.0
  %1500 = vmatprep.subr.mxu0 0.0
  %1501 = vmatpush1.xpose.msra.mxu0 0.0
  %1502 = vmatprep.mubr.f32.mxu0 0.0
  %1503 = vmatmul.mubr.f32.gmra.mrb[0].mxu0 %v1434
  %v1504 = vpop.f32.mrb[0].mxu0
  %v1505 = vadd.f32 0.0, %v1504
  %v1506 = vpop.f32.mrb[0].mxu0
  %1507 = vdwg.mxu0
  %v1508 = vsel %vm247, %v1505, -inf
  %1509 = vmax.xlane.f32.xlu0 %v1508
  %v1510 = vpop.xlane.xlu0 %1509
  %v1511 = vsub.f32 %v1505, %v1510
  %v1512 = vmul.f32 %v1511, 1.442695
  %v1513 = vpow.pop %v1512
  %v1514 = vsel %vm247, %v1513, 0.0
  %1515 = vadd.xlane.f32.xlu0 %v1514
  %v1516 = vpop.xlane.xlu0 %1515
  %v1517 = vrcp.pop %v1516
  %v1518 = vmul.f32 %v1513, %v1517
  %1519 = vrot.lane.b32.xlu0 %v239, 40
  %v1520 = vpop.permute.xlu0 %1519
  %v1523 = vsel %vm247, %v1518, 0
  %1525 = vmatprep.subr.mxu0 0.0
  %1526 = vmatpush1.msra.mxu0 %v1520
  %1527 = vmatprep.subr.mxu0 0.0
  %1528 = vmatpush1.msra.mxu0 0.0
  %1529 = vmatprep.subr.mxu0 0.0
  %1530 = vmatpush1.msra.mxu0 0.0
  %1531 = vmatprep.subr.mxu0 0.0
  %1532 = vmatpush1.msra.mxu0 0.0
  %1533 = vmatprep.subr.mxu0 0.0
  %1534 = vmatpush1.msra.mxu0 0.0
  %1535 = vmatprep.subr.mxu0 0.0
  %1536 = vmatpush1.msra.mxu0 0.0
  %1537 = vmatprep.subr.mxu0 0.0
  %1538 = vmatpush1.msra.mxu0 0.0
  %1539 = vmatprep.subr.mxu0 0.0
  %1540 = vmatpush1.msra.mxu0 0.0
  %1541 = vmatprep.subr.mxu0 0.0
  %1542 = vmatpush1.msra.mxu0 0.0
  %1543 = vmatprep.subr.mxu0 0.0
  %1544 = vmatpush1.msra.mxu0 0.0
  %1545 = vmatprep.subr.mxu0 0.0
  %1546 = vmatpush1.msra.mxu0 0.0
  %1547 = vmatprep.subr.mxu0 0.0
  %1548 = vmatpush1.msra.mxu0 0.0
  %1549 = vmatprep.subr.mxu0 0.0
  %1550 = vmatpush1.msra.mxu0 0.0
  %1551 = vmatprep.subr.mxu0 0.0
  %1552 = vmatpush1.msra.mxu0 0.0
  %1553 = vmatprep.subr.mxu0 0.0
  %1554 = vmatpush1.msra.mxu0 0.0
  %1555 = vmatprep.subr.mxu0 0.0
  %1556 = vmatpush1.msra.mxu0 0.0
  %1557 = vmatprep.subr.mxu0 0.0
  %1558 = vmatpush1.msra.mxu0 0.0
  %1559 = vmatprep.subr.mxu0 0.0
  %1560 = vmatpush1.msra.mxu0 0.0
  %1561 = vmatprep.subr.mxu0 0.0
  %1562 = vmatpush1.msra.mxu0 0.0
  %1563 = vmatprep.subr.mxu0 0.0
  %1564 = vmatpush1.msra.mxu0 0.0
  %1565 = vmatprep.subr.mxu0 0.0
  %1566 = vmatpush1.msra.mxu0 0.0
  %1567 = vmatprep.subr.mxu0 0.0
  %1568 = vmatpush1.msra.mxu0 0.0
  %1569 = vmatprep.subr.mxu0 0.0
  %1570 = vmatpush1.msra.mxu0 0.0
  %1571 = vmatprep.subr.mxu0 0.0
  %1572 = vmatpush1.msra.mxu0 0.0
  %1573 = vmatprep.subr.mxu0 0.0
  %1574 = vmatpush1.msra.mxu0 0.0
  %1575 = vmatprep.subr.mxu0 0.0
  %1576 = vmatpush1.msra.mxu0 0.0
  %1577 = vmatprep.subr.mxu0 0.0
  %1578 = vmatpush1.msra.mxu0 0.0
  %1579 = vmatprep.subr.mxu0 0.0
  %1580 = vmatpush1.msra.mxu0 0.0
  %1581 = vmatprep.subr.mxu0 0.0
  %1582 = vmatpush1.msra.mxu0 0.0
  %1583 = vmatprep.subr.mxu0 0.0
  %1584 = vmatpush1.msra.mxu0 0.0
  %1585 = vmatprep.subr.mxu0 0.0
  %1586 = vmatpush1.msra.mxu0 0.0
  %1587 = vmatprep.subr.mxu0 0.0
  %1588 = vmatpush1.msra.mxu0 0.0
  %1589 = vmatprep.mubr.f32.mxu0 0.0
  %1590 = vmatmul.mubr.f32.gmra.mrb[0].mxu0 %v1523
  %v1591 = vpop.f32.mrb[0].mxu0
  %v1592 = vadd.f32 0.0, %v1591
  %v1593 = vpop.f32.mrb[0].mxu0
  %1594 = vdwg.mxu0
  %1596 = vrot.lane.b32.xlu0 %v1592, 24
  %v1597 = vpop.permute.xlu0 %1596
  %1599 = vst.msk [vmem:[#allocation2 + $0x8] sm:$0xff] %vm922, %v1597
  %v1600 = vld [vmem:[#allocation2] sm:$0xff]
  %v1601 = vld [vmem:[#allocation2 + $0x8] sm:$0xff]
  %v1602 = vld [vmem:[%s5] sm:$0xff]
  %v1603 = vld [vmem:[%s5 + $0x8] sm:$0xff]
  %v1604 = vld [vmem:[%s5 + $0x10] sm:$0xff]
  %v1605 = vld [vmem:[%s5 + $0x18] sm:$0xff]
  %v1606 = vld [vmem:[%s6] sm:$0x1]
  %v1608 = vlaneseq
  %v1609 = vshrl.u32 %v1608, 7
  %v1610 = vsub.s32 0, %v1609
  %v1611 = vrot.slane %v1606, %v1610
  %v1614 = vsel %vm160, %v1600, 0
  %v1617 = vsel %vm160, %v1601, 0
  %1619 = vmatprep.subr.mxu0 0.0
  %1620 = vmatpush1.msra.mxu0 %v1602
  %1621 = vmatprep.subr.mxu0 0.0
  %1622 = vmatpush1.msra.mxu0 %v1603
  %1623 = vmatprep.subr.mxu0 0.0
  %1624 = vmatpush1.msra.mxu0 %v1604
  %1625 = vmatprep.subr.mxu0 0.0
  %1626 = vmatpush1.msra.mxu0 %v1605
  %1627 = vmatprep.subr.mxu0 0.0
  %1628 = vmatpush1.msra.mxu0 0.0
  %1629 = vmatprep.subr.mxu0 0.0
  %1630 = vmatpush1.msra.mxu0 0.0
  %1631 = vmatprep.subr.mxu0 0.0
  %1632 = vmatpush1.msra.mxu0 0.0
  %1633 = vmatprep.subr.mxu0 0.0
  %1634 = vmatpush1.msra.mxu0 0.0
  %1635 = vmatprep.subr.mxu0 0.0
  %1636 = vmatpush1.msra.mxu0 0.0
  %1637 = vmatprep.subr.mxu0 0.0
  %1638 = vmatpush1.msra.mxu0 0.0
  %1639 = vmatprep.subr.mxu0 0.0
  %1640 = vmatpush1.msra.mxu0 0.0
  %1641 = vmatprep.subr.mxu0 0.0
  %1642 = vmatpush1.msra.mxu0 0.0
  %1643 = vmatprep.subr.mxu0 0.0
  %1644 = vmatpush1.msra.mxu0 0.0
  %1645 = vmatprep.subr.mxu0 0.0
  %1646 = vmatpush1.msra.mxu0 0.0
  %1647 = vmatprep.subr.mxu0 0.0
  %1648 = vmatpush1.msra.mxu0 0.0
  %1649 = vmatprep.subr.mxu0 0.0
  %1650 = vmatpush1.msra.mxu0 0.0
  %1651 = vmatprep.subr.mxu0 0.0
  %1652 = vmatpush1.msra.mxu0 0.0
  %1653 = vmatprep.subr.mxu0 0.0
  %1654 = vmatpush1.msra.mxu0 0.0
  %1655 = vmatprep.subr.mxu0 0.0
  %1656 = vmatpush1.msra.mxu0 0.0
  %1657 = vmatprep.subr.mxu0 0.0
  %1658 = vmatpush1.msra.mxu0 0.0
  %1659 = vmatprep.subr.mxu0 0.0
  %1660 = vmatpush1.msra.mxu0 0.0
  %1661 = vmatprep.subr.mxu0 0.0
  %1662 = vmatpush1.msra.mxu0 0.0
  %1663 = vmatprep.subr.mxu0 0.0
  %1664 = vmatpush1.msra.mxu0 0.0
  %1665 = vmatprep.subr.mxu0 0.0
  %1666 = vmatpush1.msra.mxu0 0.0
  %1667 = vmatprep.subr.mxu0 0.0
  %1668 = vmatpush1.msra.mxu0 0.0
  %1669 = vmatprep.subr.mxu0 0.0
  %1670 = vmatpush1.msra.mxu0 0.0
  %1671 = vmatprep.subr.mxu0 0.0
  %1672 = vmatpush1.msra.mxu0 0.0
  %1673 = vmatprep.subr.mxu0 0.0
  %1674 = vmatpush1.msra.mxu0 0.0
  %1675 = vmatprep.subr.mxu0 0.0
  %1676 = vmatpush1.msra.mxu0 0.0
  %1677 = vmatprep.subr.mxu0 0.0
  %1678 = vmatpush1.msra.mxu0 0.0
  %1679 = vmatprep.subr.mxu0 0.0
  %1680 = vmatpush1.msra.mxu0 0.0
  %1681 = vmatprep.subr.mxu0 0.0
  %1682 = vmatpush1.msra.mxu0 0.0
  %1683 = vmatprep.mubr.f32.mxu0 0.0
  %1684 = vmatmul.mubr.f32.gmra.mrb[0].mxu0 %v1614
  %v1685 = vpop.f32.mrb[0].mxu0
  %v1686 = vadd.f32 %v1611, %v1685
  %v1687 = vpop.f32.mrb[0].mxu0
  %1688 = vmatprep.mubr.f32.mxu0 0.0
  %1689 = vmatmul.mubr.f32.gmra.mrb[0].mxu0 %v1617
  %v1690 = vpop.f32.mrb[0].mxu0
  %v1691 = vadd.f32 %v1611, %v1690
  %v1692 = vpop.f32.mrb[0].mxu0
  %1693 = vdwg.mxu0
  %v1694 = vadd.f32 %v141, %v1686
  %v1695 = vadd.f32 %v146, %v1691
  %v1696 = vld [vmem:[%s7] sm:$0x1]
  %v1697 = vld [vmem:[%s8] sm:$0x1]
  %v1698 = vsel %vm160, %v1694, 0.0
  %1699 = vadd.xlane.f32.xlu0 %v1698
  %v1700 = vpop.xlane.xlu0 %1699
  %v1701 = vsel %vm160, %v1695, 0.0
  %1702 = vadd.xlane.f32.xlu0 %v1701
  %v1703 = vpop.xlane.xlu0 %1702
  %v1704 = vrcp.pop 32.0
  %v1705 = vmul.f32 %v1700, %v1704
  %v1706 = vmul.f32 %v1703, %v1704
  %v1707 = vsub.f32 %v1694, %v1705
  %v1708 = vsub.f32 %v1695, %v1706
  %v1709 = vmul.f32 %v1707, %v1707
  %v1710 = vmul.f32 %v1708, %v1708
  %v1711 = vsel %vm160, %v1709, 0.0
  %1712 = vadd.xlane.f32.xlu0 %v1711
  %v1713 = vpop.xlane.xlu0 %1712
  %v1714 = vsel %vm160, %v1710, 0.0
  %1715 = vadd.xlane.f32.xlu0 %v1714
  %v1716 = vpop.xlane.xlu0 %1715
  %v1717 = vmul.f32 %v1713, %v1704
  %v1718 = vmul.f32 %v1716, %v1704
  %v1719 = vadd.f32 %v1717, 1e-05
  %v1720 = vadd.f32 %v1718, 1e-05
  %v1721 = vrsqrt.pop %v1719
  %v1722 = vrsqrt.pop %v1720
  %v1723 = vmul.f32 %v1707, %v1721
  %v1724 = vmul.f32 %v1708, %v1722
  %v1726 = vlaneseq
  %v1727 = vshrl.u32 %v1726, 7
  %v1728 = vsub.s32 0, %v1727
  %v1729 = vrot.slane %v1696, %v1728
  %v1731 = vmul.f32 %v1723, %v1729
  %v1732 = vmul.f32 %v1724, %v1729
  %v1734 = vlaneseq
  %v1735 = vshrl.u32 %v1734, 7
  %v1736 = vsub.s32 0, %v1735
  %v1737 = vrot.slane %v1697, %v1736
  %v1739 = vadd.f32 %v1731, %v1737
  %v1740 = vadd.f32 %v1732, %v1737
  %v1741 = vld [vmem:[%s9] sm:$0xff]
  %v1742 = vld [vmem:[%s9 + $0x8] sm:$0xff]
  %v1743 = vld [vmem:[%s9 + $0x10] sm:$0xff]
  %v1744 = vld [vmem:[%s9 + $0x18] sm:$0xff]
  %v1745 = vld [vmem:[%s9 + $0x20] sm:$0xff]
  %v1746 = vld [vmem:[%s9 + $0x28] sm:$0xff]
  %v1747 = vld [vmem:[%s9 + $0x30] sm:$0xff]
  %v1748 = vld [vmem:[%s9 + $0x38] sm:$0xff]
  %v1749 = vld [vmem:[%s9 + $0x40] sm:$0xff]
  %v1750 = vld [vmem:[%s9 + $0x48] sm:$0xff]
  %v1751 = vld [vmem:[%s9 + $0x50] sm:$0xff]
  %v1752 = vld [vmem:[%s9 + $0x58] sm:$0xff]
  %v1753 = vld [vmem:[%s9 + $0x60] sm:$0xff]
  %v1754 = vld [vmem:[%s9 + $0x68] sm:$0xff]
  %v1755 = vld [vmem:[%s9 + $0x70] sm:$0xff]
  %v1756 = vld [vmem:[%s9 + $0x78] sm:$0xff]
  %v1757 = vld [vmem:[%s9 + $0x80] sm:$0xff]
  %v1758 = vld [vmem:[%s9 + $0x88] sm:$0xff]
  %v1759 = vld [vmem:[%s9 + $0x90] sm:$0xff]
  %v1760 = vld [vmem:[%s9 + $0x98] sm:$0xff]
  %v1761 = vld [vmem:[%s9 + $0xa0] sm:$0xff]
  %v1762 = vld [vmem:[%s9 + $0xa8] sm:$0xff]
  %v1763 = vld [vmem:[%s9 + $0xb0] sm:$0xff]
  %v1764 = vld [vmem:[%s9 + $0xb8] sm:$0xff]
  %v1765 = vld [vmem:[%s9 + $0xc0] sm:$0xff]
  %v1766 = vld [vmem:[%s9 + $0xc8] sm:$0xff]
  %v1767 = vld [vmem:[%s9 + $0xd0] sm:$0xff]
  %v1768 = vld [vmem:[%s9 + $0xd8] sm:$0xff]
  %v1769 = vld [vmem:[%s9 + $0xe0] sm:$0xff]
  %v1770 = vld [vmem:[%s9 + $0xe8] sm:$0xff]
  %v1771 = vld [vmem:[%s9 + $0xf0] sm:$0xff]
  %v1772 = vld [vmem:[%s9 + $0xf8] sm:$0xff]
  %v1773 = vld [vmem:[%s9 + $0x100] sm:$0xff]
  %v1774 = vld [vmem:[%s9 + $0x108] sm:$0xff]
  %v1775 = vld [vmem:[%s9 + $0x110] sm:$0xff]
  %v1776 = vld [vmem:[%s9 + $0x118] sm:$0xff]
  %v1777 = vld [vmem:[%s9 + $0x120] sm:$0xff]
  %v1778 = vld [vmem:[%s9 + $0x128] sm:$0xff]
  %v1779 = vld [vmem:[%s9 + $0x130] sm:$0xff]
  %v1780 = vld [vmem:[%s9 + $0x138] sm:$0xff]
  %v1781 = vld [vmem:[%s9 + $0x140] sm:$0xff]
  %v1782 = vld [vmem:[%s9 + $0x148] sm:$0xff]
  %v1783 = vld [vmem:[%s9 + $0x150] sm:$0xff]
  %v1784 = vld [vmem:[%s9 + $0x158] sm:$0xff]
  %v1785 = vld [vmem:[%s9 + $0x160] sm:$0xff]
  %v1786 = vld [vmem:[%s9 + $0x168] sm:$0xff]
  %v1787 = vld [vmem:[%s9 + $0x170] sm:$0xff]
  %v1788 = vld [vmem:[%s9 + $0x178] sm:$0xff]
  %v1789 = vld [vmem:[%s9 + $0x180] sm:$0xff]
  %v1790 = vld [vmem:[%s9 + $0x188] sm:$0xff]
  %v1791 = vld [vmem:[%s9 + $0x190] sm:$0xff]
  %v1792 = vld [vmem:[%s9 + $0x198] sm:$0xff]
  %v1793 = vld [vmem:[%s9 + $0x1a0] sm:$0xff]
  %v1794 = vld [vmem:[%s9 + $0x1a8] sm:$0xff]
  %v1795 = vld [vmem:[%s9 + $0x1b0] sm:$0xff]
  %v1796 = vld [vmem:[%s9 + $0x1b8] sm:$0xff]
  %v1797 = vld [vmem:[%s9 + $0x1c0] sm:$0xff]
  %v1798 = vld [vmem:[%s9 + $0x1c8] sm:$0xff]
  %v1799 = vld [vmem:[%s9 + $0x1d0] sm:$0xff]
  %v1800 = vld [vmem:[%s9 + $0x1d8] sm:$0xff]
  %v1801 = vld [vmem:[%s9 + $0x1e0] sm:$0xff]
  %v1802 = vld [vmem:[%s9 + $0x1e8] sm:$0xff]
  %v1803 = vld [vmem:[%s9 + $0x1f0] sm:$0xff]
  %v1804 = vld [vmem:[%s9 + $0x1f8] sm:$0xff]
  %v1805 = vld [vmem:[%s10] sm:$0xff]
  %v1806 = vld [vmem:[%s10 + $0x8] sm:$0xff]
  %v1809 = vlaneseq
  %v1810 = vshrl.u32 %v1809, 7
  %v1811 = vsub.s32 0, %v1810
  %v1812 = vrot.slane %v1805, %v1811
  %v1813 = vlaneseq
  %v1814 = vshrl.u32 %v1813, 7
  %v1815 = vsub.s32 1, %v1814
  %v1816 = vrot.slane %v1805, %v1815
  %v1817 = vlaneseq
  %v1818 = vshrl.u32 %v1817, 7
  %v1819 = vsub.s32 2, %v1818
  %v1820 = vrot.slane %v1805, %v1819
  %v1821 = vlaneseq
  %v1822 = vshrl.u32 %v1821, 7
  %v1823 = vsub.s32 3, %v1822
  %v1824 = vrot.slane %v1805, %v1823
  %v1825 = vlaneseq
  %v1826 = vshrl.u32 %v1825, 7
  %v1827 = vsub.s32 4, %v1826
  %v1828 = vrot.slane %v1805, %v1827
  %v1829 = vlaneseq
  %v1830 = vshrl.u32 %v1829, 7
  %v1831 = vsub.s32 5, %v1830
  %v1832 = vrot.slane %v1805, %v1831
  %v1833 = vlaneseq
  %v1834 = vshrl.u32 %v1833, 7
  %v1835 = vsub.s32 6, %v1834
  %v1836 = vrot.slane %v1805, %v1835
  %v1837 = vlaneseq
  %v1838 = vshrl.u32 %v1837, 7
  %v1839 = vsub.s32 7, %v1838
  %v1840 = vrot.slane %v1805, %v1839
  %v1841 = vlaneseq
  %v1842 = vshrl.u32 %v1841, 7
  %v1843 = vsub.s32 0, %v1842
  %v1844 = vrot.slane %v1806, %v1843
  %v1845 = vlaneseq
  %v1846 = vshrl.u32 %v1845, 7
  %v1847 = vsub.s32 1, %v1846
  %v1848 = vrot.slane %v1806, %v1847
  %v1849 = vlaneseq
  %v1850 = vshrl.u32 %v1849, 7
  %v1851 = vsub.s32 2, %v1850
  %v1852 = vrot.slane %v1806, %v1851
  %v1853 = vlaneseq
  %v1854 = vshrl.u32 %v1853, 7
  %v1855 = vsub.s32 3, %v1854
  %v1856 = vrot.slane %v1806, %v1855
  %v1857 = vlaneseq
  %v1858 = vshrl.u32 %v1857, 7
  %v1859 = vsub.s32 4, %v1858
  %v1860 = vrot.slane %v1806, %v1859
  %v1861 = vlaneseq
  %v1862 = vshrl.u32 %v1861, 7
  %v1863 = vsub.s32 5, %v1862
  %v1864 = vrot.slane %v1806, %v1863
  %v1865 = vlaneseq
  %v1866 = vshrl.u32 %v1865, 7
  %v1867 = vsub.s32 6, %v1866
  %v1868 = vrot.slane %v1806, %v1867
  %v1869 = vlaneseq
  %v1870 = vshrl.u32 %v1869, 7
  %v1871 = vsub.s32 7, %v1870
  %v1872 = vrot.slane %v1806, %v1871
  %v1890 = vsel %vm160, %v1739, 0
  %v1893 = vsel %vm160, %v1740, 0
  %1895 = vmatprep.subr.mxu0 %v1742
  %1896 = vmatpush1.msra.mxu0 %v1741
  %1897 = vmatprep.subr.mxu0 %v1758
  %1898 = vmatpush1.msra.mxu0 %v1757
  %1899 = vmatprep.subr.mxu0 %v1774
  %1900 = vmatpush1.msra.mxu0 %v1773
  %1901 = vmatprep.subr.mxu0 %v1790
  %1902 = vmatpush1.msra.mxu0 %v1789
  %1903 = vmatprep.subr.mxu0 0.0
  %1904 = vmatpush1.msra.mxu0 0.0
  %1905 = vmatprep.subr.mxu0 0.0
  %1906 = vmatpush1.msra.mxu0 0.0
  %1907 = vmatprep.subr.mxu0 0.0
  %1908 = vmatpush1.msra.mxu0 0.0
  %1909 = vmatprep.subr.mxu0 0.0
  %1910 = vmatpush1.msra.mxu0 0.0
  %1911 = vmatprep.subr.mxu0 0.0
  %1912 = vmatpush1.msra.mxu0 0.0
  %1913 = vmatprep.subr.mxu0 0.0
  %1914 = vmatpush1.msra.mxu0 0.0
  %1915 = vmatprep.subr.mxu0 0.0
  %1916 = vmatpush1.msra.mxu0 0.0
  %1917 = vmatprep.subr.mxu0 0.0
  %1918 = vmatpush1.msra.mxu0 0.0
  %1919 = vmatprep.subr.mxu0 0.0
  %1920 = vmatpush1.msra.mxu0 0.0
  %1921 = vmatprep.subr.mxu0 0.0
  %1922 = vmatpush1.msra.mxu0 0.0
  %1923 = vmatprep.subr.mxu0 0.0
  %1924 = vmatpush1.msra.mxu0 0.0
  %1925 = vmatprep.subr.mxu0 0.0
  %1926 = vmatpush1.msra.mxu0 0.0
  %1927 = vmatprep.subr.mxu0 0.0
  %1928 = vmatpush1.msra.mxu0 0.0
  %1929 = vmatprep.subr.mxu0 0.0
  %1930 = vmatpush1.msra.mxu0 0.0
  %1931 = vmatprep.subr.mxu0 0.0
  %1932 = vmatpush1.msra.mxu0 0.0
  %1933 = vmatprep.subr.mxu0 0.0
  %1934 = vmatpush1.msra.mxu0 0.0
  %1935 = vmatprep.subr.mxu0 0.0
  %1936 = vmatpush1.msra.mxu0 0.0
  %1937 = vmatprep.subr.mxu0 0.0
  %1938 = vmatpush1.msra.mxu0 0.0
  %1939 = vmatprep.subr.mxu0 0.0
  %1940 = vmatpush1.msra.mxu0 0.0
  %1941 = vmatprep.subr.mxu0 0.0
  %1942 = vmatpush1.msra.mxu0 0.0
  %1943 = vmatprep.subr.mxu0 0.0
  %1944 = vmatpush1.msra.mxu0 0.0
  %1945 = vmatprep.subr.mxu0 0.0
  %1946 = vmatpush1.msra.mxu0 0.0
  %1947 = vmatprep.subr.mxu0 0.0
  %1948 = vmatpush1.msra.mxu0 0.0
  %1949 = vmatprep.subr.mxu0 0.0
  %1950 = vmatpush1.msra.mxu0 0.0
  %1951 = vmatprep.subr.mxu0 0.0
  %1952 = vmatpush1.msra.mxu0 0.0
  %1953 = vmatprep.subr.mxu0 0.0
  %1954 = vmatpush1.msra.mxu0 0.0
  %1955 = vmatprep.subr.mxu0 0.0
  %1956 = vmatpush1.msra.mxu0 0.0
  %1957 = vmatprep.subr.mxu0 0.0
  %1958 = vmatpush1.msra.mxu0 0.0
  %1959 = vmatprep.mubr.f32.mxu0 0.0
  %1960 = vmatmul.mubr.f32.gmra.mrb[0].mxu0 %v1890
  %v1961 = vpop.f32.mrb[0].mxu0
  %v1962 = vadd.f32 %v1812, %v1961
  %v1963 = vpop.f32.mrb[0].mxu0
  %v1964 = vadd.f32 %v1816, %v1963
  %1965 = vmatprep.mubr.f32.mxu0 0.0
  %1966 = vmatmul.mubr.f32.gmra.mrb[0].mxu0 %v1893
  %v1967 = vpop.f32.mrb[0].mxu0
  %v1968 = vadd.f32 %v1812, %v1967
  %v1969 = vpop.f32.mrb[0].mxu0
  %v1970 = vadd.f32 %v1816, %v1969
  %1971 = vdwg.mxu0
  %1972 = vmatprep.subr.mxu0 %v1744
  %1973 = vmatpush1.msra.mxu0 %v1743
  %1974 = vmatprep.subr.mxu0 %v1760
  %1975 = vmatpush1.msra.mxu0 %v1759
  %1976 = vmatprep.subr.mxu0 %v1776
  %1977 = vmatpush1.msra.mxu0 %v1775
  %1978 = vmatprep.subr.mxu0 %v1792
  %1979 = vmatpush1.msra.mxu0 %v1791
  %1980 = vmatprep.subr.mxu0 0.0
  %1981 = vmatpush1.msra.mxu0 0.0
  %1982 = vmatprep.subr.mxu0 0.0
  %1983 = vmatpush1.msra.mxu0 0.0
  %1984 = vmatprep.subr.mxu0 0.0
  %1985 = vmatpush1.msra.mxu0 0.0
  %1986 = vmatprep.subr.mxu0 0.0
  %1987 = vmatpush1.msra.mxu0 0.0
  %1988 = vmatprep.subr.mxu0 0.0
  %1989 = vmatpush1.msra.mxu0 0.0
  %1990 = vmatprep.subr.mxu0 0.0
  %1991 = vmatpush1.msra.mxu0 0.0
  %1992 = vmatprep.subr.mxu0 0.0
  %1993 = vmatpush1.msra.mxu0 0.0
  %1994 = vmatprep.subr.mxu0 0.0
  %1995 = vmatpush1.msra.mxu0 0.0
  %1996 = vmatprep.subr.mxu0 0.0
  %1997 = vmatpush1.msra.mxu0 0.0
  %1998 = vmatprep.subr.mxu0 0.0
  %1999 = vmatpush1.msra.mxu0 0.0
  %2000 = vmatprep.subr.mxu0 0.0
  %2001 = vmatpush1.msra.mxu0 0.0
  %2002 = vmatprep.subr.mxu0 0.0
  %2003 = vmatpush1.msra.mxu0 0.0
  %2004 = vmatprep.subr.mxu0 0.0
  %2005 = vmatpush1.msra.mxu0 0.0
  %2006 = vmatprep.subr.mxu0 0.0
  %2007 = vmatpush1.msra.mxu0 0.0
  %2008 = vmatprep.subr.mxu0 0.0
  %2009 = vmatpush1.msra.mxu0 0.0
  %2010 = vmatprep.subr.mxu0 0.0
  %2011 = vmatpush1.msra.mxu0 0.0
  %2012 = vmatprep.subr.mxu0 0.0
  %2013 = vmatpush1.msra.mxu0 0.0
  %2014 = vmatprep.subr.mxu0 0.0
  %2015 = vmatpush1.msra.mxu0 0.0
  %2016 = vmatprep.subr.mxu0 0.0
  %2017 = vmatpush1.msra.mxu0 0.0
  %2018 = vmatprep.subr.mxu0 0.0
  %2019 = vmatpush1.msra.mxu0 0.0
  %2020 = vmatprep.subr.mxu0 0.0
  %2021 = vmatpush1.msra.mxu0 0.0
  %2022 = vmatprep.subr.mxu0 0.0
  %2023 = vmatpush1.msra.mxu0 0.0
  %2024 = vmatprep.subr.mxu0 0.0
  %2025 = vmatpush1.msra.mxu0 0.0
  %2026 = vmatprep.subr.mxu0 0.0
  %2027 = vmatpush1.msra.mxu0 0.0
  %2028 = vmatprep.subr.mxu0 0.0
  %2029 = vmatpush1.msra.mxu0 0.0
  %2030 = vmatprep.subr.mxu0 0.0
  %2031 = vmatpush1.msra.mxu0 0.0
  %2032 = vmatprep.subr.mxu0 0.0
  %2033 = vmatpush1.msra.mxu0 0.0
  %2034 = vmatprep.subr.mxu0 0.0
  %2035 = vmatpush1.msra.mxu0 0.0
  %2036 = vmatprep.mubr.f32.mxu0 0.0
  %2037 = vmatmul.mubr.f32.gmra.mrb[0].mxu0 %v1890
  %v2038 = vpop.f32.mrb[0].mxu0
  %v2039 = vadd.f32 %v1820, %v2038
  %v2040 = vpop.f32.mrb[0].mxu0
  %v2041 = vadd.f32 %v1824, %v2040
  %2042 = vmatprep.mubr.f32.mxu0 0.0
  %2043 = vmatmul.mubr.f32.gmra.mrb[0].mxu0 %v1893
  %v2044 = vpop.f32.mrb[0].mxu0
  %v2045 = vadd.f32 %v1820, %v2044
  %v2046 = vpop.f32.mrb[0].mxu0
  %v2047 = vadd.f32 %v1824, %v2046
  %2048 = vdwg.mxu0
  %2049 = vmatprep.subr.mxu0 %v1746
  %2050 = vmatpush1.msra.mxu0 %v1745
  %2051 = vmatprep.subr.mxu0 %v1762
  %2052 = vmatpush1.msra.mxu0 %v1761
  %2053 = vmatprep.subr.mxu0 %v1778
  %2054 = vmatpush1.msra.mxu0 %v1777
  %2055 = vmatprep.subr.mxu0 %v1794
  %2056 = vmatpush1.msra.mxu0 %v1793
  %2057 = vmatprep.subr.mxu0 0.0
  %2058 = vmatpush1.msra.mxu0 0.0
  %2059 = vmatprep.subr.mxu0 0.0
  %2060 = vmatpush1.msra.mxu0 0.0
  %2061 = vmatprep.subr.mxu0 0.0
  %2062 = vmatpush1.msra.mxu0 0.0
  %2063 = vmatprep.subr.mxu0 0.0
  %2064 = vmatpush1.msra.mxu0 0.0
  %2065 = vmatprep.subr.mxu0 0.0
  %2066 = vmatpush1.msra.mxu0 0.0
  %2067 = vmatprep.subr.mxu0 0.0
  %2068 = vmatpush1.msra.mxu0 0.0
  %2069 = vmatprep.subr.mxu0 0.0
  %2070 = vmatpush1.msra.mxu0 0.0
  %2071 = vmatprep.subr.mxu0 0.0
  %2072 = vmatpush1.msra.mxu0 0.0
  %2073 = vmatprep.subr.mxu0 0.0
  %2074 = vmatpush1.msra.mxu0 0.0
  %2075 = vmatprep.subr.mxu0 0.0
  %2076 = vmatpush1.msra.mxu0 0.0
  %2077 = vmatprep.subr.mxu0 0.0
  %2078 = vmatpush1.msra.mxu0 0.0
  %2079 = vmatprep.subr.mxu0 0.0
  %2080 = vmatpush1.msra.mxu0 0.0
  %2081 = vmatprep.subr.mxu0 0.0
  %2082 = vmatpush1.msra.mxu0 0.0
  %2083 = vmatprep.subr.mxu0 0.0
  %2084 = vmatpush1.msra.mxu0 0.0
  %2085 = vmatprep.subr.mxu0 0.0
  %2086 = vmatpush1.msra.mxu0 0.0
  %2087 = vmatprep.subr.mxu0 0.0
  %2088 = vmatpush1.msra.mxu0 0.0
  %2089 = vmatprep.subr.mxu0 0.0
  %2090 = vmatpush1.msra.mxu0 0.0
  %2091 = vmatprep.subr.mxu0 0.0
  %2092 = vmatpush1.msra.mxu0 0.0
  %2093 = vmatprep.subr.mxu0 0.0
  %2094 = vmatpush1.msra.mxu0 0.0
  %2095 = vmatprep.subr.mxu0 0.0
  %2096 = vmatpush1.msra.mxu0 0.0
  %2097 = vmatprep.subr.mxu0 0.0
  %2098 = vmatpush1.msra.mxu0 0.0
  %2099 = vmatprep.subr.mxu0 0.0
  %2100 = vmatpush1.msra.mxu0 0.0
  %2101 = vmatprep.subr.mxu0 0.0
  %2102 = vmatpush1.msra.mxu0 0.0
  %2103 = vmatprep.subr.mxu0 0.0
  %2104 = vmatpush1.msra.mxu0 0.0
  %2105 = vmatprep.subr.mxu0 0.0
  %2106 = vmatpush1.msra.mxu0 0.0
  %2107 = vmatprep.subr.mxu0 0.0
  %2108 = vmatpush1.msra.mxu0 0.0
  %2109 = vmatprep.subr.mxu0 0.0
  %2110 = vmatpush1.msra.mxu0 0.0
  %2111 = vmatprep.subr.mxu0 0.0
  %2112 = vmatpush1.msra.mxu0 0.0
  %2113 = vmatprep.mubr.f32.mxu0 0.0
  %2114 = vmatmul.mubr.f32.gmra.mrb[0].mxu0 %v1890
  %v2115 = vpop.f32.mrb[0].mxu0
  %v2116 = vadd.f32 %v1828, %v2115
  %v2117 = vpop.f32.mrb[0].mxu0
  %v2118 = vadd.f32 %v1832, %v2117
  %2119 = vmatprep.mubr.f32.mxu0 0.0
  %2120 = vmatmul.mubr.f32.gmra.mrb[0].mxu0 %v1893
  %v2121 = vpop.f32.mrb[0].mxu0
  %v2122 = vadd.f32 %v1828, %v2121
  %v2123 = vpop.f32.mrb[0].mxu0
  %v2124 = vadd.f32 %v1832, %v2123
  %2125 = vdwg.mxu0
  %2126 = vmatprep.subr.mxu0 %v1748
  %2127 = vmatpush1.msra.mxu0 %v1747
  %2128 = vmatprep.subr.mxu0 %v1764
  %2129 = vmatpush1.msra.mxu0 %v1763
  %2130 = vmatprep.subr.mxu0 %v1780
  %2131 = vmatpush1.msra.mxu0 %v1779
  %2132 = vmatprep.subr.mxu0 %v1796
  %2133 = vmatpush1.msra.mxu0 %v1795
  %2134 = vmatprep.subr.mxu0 0.0
  %2135 = vmatpush1.msra.mxu0 0.0
  %2136 = vmatprep.subr.mxu0 0.0
  %2137 = vmatpush1.msra.mxu0 0.0
  %2138 = vmatprep.subr.mxu0 0.0
  %2139 = vmatpush1.msra.mxu0 0.0
  %2140 = vmatprep.subr.mxu0 0.0
  %2141 = vmatpush1.msra.mxu0 0.0
  %2142 = vmatprep.subr.mxu0 0.0
  %2143 = vmatpush1.msra.mxu0 0.0
  %2144 = vmatprep.subr.mxu0 0.0
  %2145 = vmatpush1.msra.mxu0 0.0
  %2146 = vmatprep.subr.mxu0 0.0
  %2147 = vmatpush1.msra.mxu0 0.0
  %2148 = vmatprep.subr.mxu0 0.0
  %2149 = vmatpush1.msra.mxu0 0.0
  %2150 = vmatprep.subr.mxu0 0.0
  %2151 = vmatpush1.msra.mxu0 0.0
  %2152 = vmatprep.subr.mxu0 0.0
  %2153 = vmatpush1.msra.mxu0 0.0
  %2154 = vmatprep.subr.mxu0 0.0
  %2155 = vmatpush1.msra.mxu0 0.0
  %2156 = vmatprep.subr.mxu0 0.0
  %2157 = vmatpush1.msra.mxu0 0.0
  %2158 = vmatprep.subr.mxu0 0.0
  %2159 = vmatpush1.msra.mxu0 0.0
  %2160 = vmatprep.subr.mxu0 0.0
  %2161 = vmatpush1.msra.mxu0 0.0
  %2162 = vmatprep.subr.mxu0 0.0
  %2163 = vmatpush1.msra.mxu0 0.0
  %2164 = vmatprep.subr.mxu0 0.0
  %2165 = vmatpush1.msra.mxu0 0.0
  %2166 = vmatprep.subr.mxu0 0.0
  %2167 = vmatpush1.msra.mxu0 0.0
  %2168 = vmatprep.subr.mxu0 0.0
  %2169 = vmatpush1.msra.mxu0 0.0
  %2170 = vmatprep.subr.mxu0 0.0
  %2171 = vmatpush1.msra.mxu0 0.0
  %2172 = vmatprep.subr.mxu0 0.0
  %2173 = vmatpush1.msra.mxu0 0.0
  %2174 = vmatprep.subr.mxu0 0.0
  %2175 = vmatpush1.msra.mxu0 0.0
  %2176 = vmatprep.subr.mxu0 0.0
  %2177 = vmatpush1.msra.mxu0 0.0
  %2178 = vmatprep.subr.mxu0 0.0
  %2179 = vmatpush1.msra.mxu0 0.0
  %2180 = vmatprep.subr.mxu0 0.0
  %2181 = vmatpush1.msra.mxu0 0.0
  %2182 = vmatprep.subr.mxu0 0.0
  %2183 = vmatpush1.msra.mxu0 0.0
  %2184 = vmatprep.subr.mxu0 0.0
  %2185 = vmatpush1.msra.mxu0 0.0
  %2186 = vmatprep.subr.mxu0 0.0
  %2187 = vmatpush1.msra.mxu0 0.0
  %2188 = vmatprep.subr.mxu0 0.0
  %2189 = vmatpush1.msra.mxu0 0.0
  %2190 = vmatprep.mubr.f32.mxu0 0.0
  %2191 = vmatmul.mubr.f32.gmra.mrb[0].mxu0 %v1890
  %v2192 = vpop.f32.mrb[0].mxu0
  %v2193 = vadd.f32 %v1836, %v2192
  %v2194 = vpop.f32.mrb[0].mxu0
  %v2195 = vadd.f32 %v1840, %v2194
  %2196 = vmatprep.mubr.f32.mxu0 0.0
  %2197 = vmatmul.mubr.f32.gmra.mrb[0].mxu0 %v1893
  %v2198 = vpop.f32.mrb[0].mxu0
  %v2199 = vadd.f32 %v1836, %v2198
  %v2200 = vpop.f32.mrb[0].mxu0
  %v2201 = vadd.f32 %v1840, %v2200
  %2202 = vdwg.mxu0
  %2203 = vmatprep.subr.mxu0 %v1750
  %2204 = vmatpush1.msra.mxu0 %v1749
  %2205 = vmatprep.subr.mxu0 %v1766
  %2206 = vmatpush1.msra.mxu0 %v1765
  %2207 = vmatprep.subr.mxu0 %v1782
  %2208 = vmatpush1.msra.mxu0 %v1781
  %2209 = vmatprep.subr.mxu0 %v1798
  %2210 = vmatpush1.msra.mxu0 %v1797
  %2211 = vmatprep.subr.mxu0 0.0
  %2212 = vmatpush1.msra.mxu0 0.0
  %2213 = vmatprep.subr.mxu0 0.0
  %2214 = vmatpush1.msra.mxu0 0.0
  %2215 = vmatprep.subr.mxu0 0.0
  %2216 = vmatpush1.msra.mxu0 0.0
  %2217 = vmatprep.subr.mxu0 0.0
  %2218 = vmatpush1.msra.mxu0 0.0
  %2219 = vmatprep.subr.mxu0 0.0
  %2220 = vmatpush1.msra.mxu0 0.0
  %2221 = vmatprep.subr.mxu0 0.0
  %2222 = vmatpush1.msra.mxu0 0.0
  %2223 = vmatprep.subr.mxu0 0.0
  %2224 = vmatpush1.msra.mxu0 0.0
  %2225 = vmatprep.subr.mxu0 0.0
  %2226 = vmatpush1.msra.mxu0 0.0
  %2227 = vmatprep.subr.mxu0 0.0
  %2228 = vmatpush1.msra.mxu0 0.0
  %2229 = vmatprep.subr.mxu0 0.0
  %2230 = vmatpush1.msra.mxu0 0.0
  %2231 = vmatprep.subr.mxu0 0.0
  %2232 = vmatpush1.msra.mxu0 0.0
  %2233 = vmatprep.subr.mxu0 0.0
  %2234 = vmatpush1.msra.mxu0 0.0
  %2235 = vmatprep.subr.mxu0 0.0
  %2236 = vmatpush1.msra.mxu0 0.0
  %2237 = vmatprep.subr.mxu0 0.0
  %2238 = vmatpush1.msra.mxu0 0.0
  %2239 = vmatprep.subr.mxu0 0.0
  %2240 = vmatpush1.msra.mxu0 0.0
  %2241 = vmatprep.subr.mxu0 0.0
  %2242 = vmatpush1.msra.mxu0 0.0
  %2243 = vmatprep.subr.mxu0 0.0
  %2244 = vmatpush1.msra.mxu0 0.0
  %2245 = vmatprep.subr.mxu0 0.0
  %2246 = vmatpush1.msra.mxu0 0.0
  %2247 = vmatprep.subr.mxu0 0.0
  %2248 = vmatpush1.msra.mxu0 0.0
  %2249 = vmatprep.subr.mxu0 0.0
  %2250 = vmatpush1.msra.mxu0 0.0
  %2251 = vmatprep.subr.mxu0 0.0
  %2252 = vmatpush1.msra.mxu0 0.0
  %2253 = vmatprep.subr.mxu0 0.0
  %2254 = vmatpush1.msra.mxu0 0.0
  %2255 = vmatprep.subr.mxu0 0.0
  %2256 = vmatpush1.msra.mxu0 0.0
  %2257 = vmatprep.subr.mxu0 0.0
  %2258 = vmatpush1.msra.mxu0 0.0
  %2259 = vmatprep.subr.mxu0 0.0
  %2260 = vmatpush1.msra.mxu0 0.0
  %2261 = vmatprep.subr.mxu0 0.0
  %2262 = vmatpush1.msra.mxu0 0.0
  %2263 = vmatprep.subr.mxu0 0.0
  %2264 = vmatpush1.msra.mxu0 0.0
  %2265 = vmatprep.subr.mxu0 0.0
  %2266 = vmatpush1.msra.mxu0 0.0
  %2267 = vmatprep.mubr.f32.mxu0 0.0
  %2268 = vmatmul.mubr.f32.gmra.mrb[0].mxu0 %v1890
  %v2269 = vpop.f32.mrb[0].mxu0
  %v2270 = vadd.f32 %v1844, %v2269
  %v2271 = vpop.f32.mrb[0].mxu0
  %v2272 = vadd.f32 %v1848, %v2271
  %2273 = vmatprep.mubr.f32.mxu0 0.0
  %2274 = vmatmul.mubr.f32.gmra.mrb[0].mxu0 %v1893
  %v2275 = vpop.f32.mrb[0].mxu0
  %v2276 = vadd.f32 %v1844, %v2275
  %v2277 = vpop.f32.mrb[0].mxu0
  %v2278 = vadd.f32 %v1848, %v2277
  %2279 = vdwg.mxu0
  %2280 = vmatprep.subr.mxu0 %v1752
  %2281 = vmatpush1.msra.mxu0 %v1751
  %2282 = vmatprep.subr.mxu0 %v1768
  %2283 = vmatpush1.msra.mxu0 %v1767
  %2284 = vmatprep.subr.mxu0 %v1784
  %2285 = vmatpush1.msra.mxu0 %v1783
  %2286 = vmatprep.subr.mxu0 %v1800
  %2287 = vmatpush1.msra.mxu0 %v1799
  %2288 = vmatprep.subr.mxu0 0.0
  %2289 = vmatpush1.msra.mxu0 0.0
  %2290 = vmatprep.subr.mxu0 0.0
  %2291 = vmatpush1.msra.mxu0 0.0
  %2292 = vmatprep.subr.mxu0 0.0
  %2293 = vmatpush1.msra.mxu0 0.0
  %2294 = vmatprep.subr.mxu0 0.0
  %2295 = vmatpush1.msra.mxu0 0.0
  %2296 = vmatprep.subr.mxu0 0.0
  %2297 = vmatpush1.msra.mxu0 0.0
  %2298 = vmatprep.subr.mxu0 0.0
  %2299 = vmatpush1.msra.mxu0 0.0
  %2300 = vmatprep.subr.mxu0 0.0
  %2301 = vmatpush1.msra.mxu0 0.0
  %2302 = vmatprep.subr.mxu0 0.0
  %2303 = vmatpush1.msra.mxu0 0.0
  %2304 = vmatprep.subr.mxu0 0.0
  %2305 = vmatpush1.msra.mxu0 0.0
  %2306 = vmatprep.subr.mxu0 0.0
  %2307 = vmatpush1.msra.mxu0 0.0
  %2308 = vmatprep.subr.mxu0 0.0
  %2309 = vmatpush1.msra.mxu0 0.0
  %2310 = vmatprep.subr.mxu0 0.0
  %2311 = vmatpush1.msra.mxu0 0.0
  %2312 = vmatprep.subr.mxu0 0.0
  %2313 = vmatpush1.msra.mxu0 0.0
  %2314 = vmatprep.subr.mxu0 0.0
  %2315 = vmatpush1.msra.mxu0 0.0
  %2316 = vmatprep.subr.mxu0 0.0
  %2317 = vmatpush1.msra.mxu0 0.0
  %2318 = vmatprep.subr.mxu0 0.0
  %2319 = vmatpush1.msra.mxu0 0.0
  %2320 = vmatprep.subr.mxu0 0.0
  %2321 = vmatpush1.msra.mxu0 0.0
  %2322 = vmatprep.subr.mxu0 0.0
  %2323 = vmatpush1.msra.mxu0 0.0
  %2324 = vmatprep.subr.mxu0 0.0
  %2325 = vmatpush1.msra.mxu0 0.0
  %2326 = vmatprep.subr.mxu0 0.0
  %2327 = vmatpush1.msra.mxu0 0.0
  %2328 = vmatprep.subr.mxu0 0.0
  %2329 = vmatpush1.msra.mxu0 0.0
  %2330 = vmatprep.subr.mxu0 0.0
  %2331 = vmatpush1.msra.mxu0 0.0
  %2332 = vmatprep.subr.mxu0 0.0
  %2333 = vmatpush1.msra.mxu0 0.0
  %2334 = vmatprep.subr.mxu0 0.0
  %2335 = vmatpush1.msra.mxu0 0.0
  %2336 = vmatprep.subr.mxu0 0.0
  %2337 = vmatpush1.msra.mxu0 0.0
  %2338 = vmatprep.subr.mxu0 0.0
  %2339 = vmatpush1.msra.mxu0 0.0
  %2340 = vmatprep.subr.mxu0 0.0
  %2341 = vmatpush1.msra.mxu0 0.0
  %2342 = vmatprep.subr.mxu0 0.0
  %2343 = vmatpush1.msra.mxu0 0.0
  %2344 = vmatprep.mubr.f32.mxu0 0.0
  %2345 = vmatmul.mubr.f32.gmra.mrb[0].mxu0 %v1890
  %v2346 = vpop.f32.mrb[0].mxu0
  %v2347 = vadd.f32 %v1852, %v2346
  %v2348 = vpop.f32.mrb[0].mxu0
  %v2349 = vadd.f32 %v1856, %v2348
  %2350 = vmatprep.mubr.f32.mxu0 0.0
  %2351 = vmatmul.mubr.f32.gmra.mrb[0].mxu0 %v1893
  %v2352 = vpop.f32.mrb[0].mxu0
  %v2353 = vadd.f32 %v1852, %v2352
  %v2354 = vpop.f32.mrb[0].mxu0
  %v2355 = vadd.f32 %v1856, %v2354
  %2356 = vdwg.mxu0
  %2357 = vmatprep.subr.mxu0 %v1754
  %2358 = vmatpush1.msra.mxu0 %v1753
  %2359 = vmatprep.subr.mxu0 %v1770
  %2360 = vmatpush1.msra.mxu0 %v1769
  %2361 = vmatprep.subr.mxu0 %v1786
  %2362 = vmatpush1.msra.mxu0 %v1785
  %2363 = vmatprep.subr.mxu0 %v1802
  %2364 = vmatpush1.msra.mxu0 %v1801
  %2365 = vmatprep.subr.mxu0 0.0
  %2366 = vmatpush1.msra.mxu0 0.0
  %2367 = vmatprep.subr.mxu0 0.0
  %2368 = vmatpush1.msra.mxu0 0.0
  %2369 = vmatprep.subr.mxu0 0.0
  %2370 = vmatpush1.msra.mxu0 0.0
  %2371 = vmatprep.subr.mxu0 0.0
  %2372 = vmatpush1.msra.mxu0 0.0
  %2373 = vmatprep.subr.mxu0 0.0
  %2374 = vmatpush1.msra.mxu0 0.0
  %2375 = vmatprep.subr.mxu0 0.0
  %2376 = vmatpush1.msra.mxu0 0.0
  %2377 = vmatprep.subr.mxu0 0.0
  %2378 = vmatpush1.msra.mxu0 0.0
  %2379 = vmatprep.subr.mxu0 0.0
  %2380 = vmatpush1.msra.mxu0 0.0
  %2381 = vmatprep.subr.mxu0 0.0
  %2382 = vmatpush1.msra.mxu0 0.0
  %2383 = vmatprep.subr.mxu0 0.0
  %2384 = vmatpush1.msra.mxu0 0.0
  %2385 = vmatprep.subr.mxu0 0.0
  %2386 = vmatpush1.msra.mxu0 0.0
  %2387 = vmatprep.subr.mxu0 0.0
  %2388 = vmatpush1.msra.mxu0 0.0
  %2389 = vmatprep.subr.mxu0 0.0
  %2390 = vmatpush1.msra.mxu0 0.0
  %2391 = vmatprep.subr.mxu0 0.0
  %2392 = vmatpush1.msra.mxu0 0.0
  %2393 = vmatprep.subr.mxu0 0.0
  %2394 = vmatpush1.msra.mxu0 0.0
  %2395 = vmatprep.subr.mxu0 0.0
  %2396 = vmatpush1.msra.mxu0 0.0
  %2397 = vmatprep.subr.mxu0 0.0
  %2398 = vmatpush1.msra.mxu0 0.0
  %2399 = vmatprep.subr.mxu0 0.0
  %2400 = vmatpush1.msra.mxu0 0.0
  %2401 = vmatprep.subr.mxu0 0.0
  %2402 = vmatpush1.msra.mxu0 0.0
  %2403 = vmatprep.subr.mxu0 0.0
  %2404 = vmatpush1.msra.mxu0 0.0
  %2405 = vmatprep.subr.mxu0 0.0
  %2406 = vmatpush1.msra.mxu0 0.0
  %2407 = vmatprep.subr.mxu0 0.0
  %2408 = vmatpush1.msra.mxu0 0.0
  %2409 = vmatprep.subr.mxu0 0.0
  %2410 = vmatpush1.msra.mxu0 0.0
  %2411 = vmatprep.subr.mxu0 0.0
  %2412 = vmatpush1.msra.mxu0 0.0
  %2413 = vmatprep.subr.mxu0 0.0
  %2414 = vmatpush1.msra.mxu0 0.0
  %2415 = vmatprep.subr.mxu0 0.0
  %2416 = vmatpush1.msra.mxu0 0.0
  %2417 = vmatprep.subr.mxu0 0.0
  %2418 = vmatpush1.msra.mxu0 0.0
  %2419 = vmatprep.subr.mxu0 0.0
  %2420 = vmatpush1.msra.mxu0 0.0
  %2421 = vmatprep.mubr.f32.mxu0 0.0
  %2422 = vmatmul.mubr.f32.gmra.mrb[0].mxu0 %v1890
  %v2423 = vpop.f32.mrb[0].mxu0
  %v2424 = vadd.f32 %v1860, %v2423
  %v2425 = vpop.f32.mrb[0].mxu0
  %v2426 = vadd.f32 %v1864, %v2425
  %2427 = vmatprep.mubr.f32.mxu0 0.0
  %2428 = vmatmul.mubr.f32.gmra.mrb[0].mxu0 %v1893
  %v2429 = vpop.f32.mrb[0].mxu0
  %v2430 = vadd.f32 %v1860, %v2429
  %v2431 = vpop.f32.mrb[0].mxu0
  %v2432 = vadd.f32 %v1864, %v2431
  %2433 = vdwg.mxu0
  %2434 = vmatprep.subr.mxu0 %v1756
  %2435 = vmatpush1.msra.mxu0 %v1755
  %2436 = vmatprep.subr.mxu0 %v1772
  %2437 = vmatpush1.msra.mxu0 %v1771
  %2438 = vmatprep.subr.mxu0 %v1788
  %2439 = vmatpush1.msra.mxu0 %v1787
  %2440 = vmatprep.subr.mxu0 %v1804
  %2441 = vmatpush1.msra.mxu0 %v1803
  %2442 = vmatprep.subr.mxu0 0.0
  %2443 = vmatpush1.msra.mxu0 0.0
  %2444 = vmatprep.subr.mxu0 0.0
  %2445 = vmatpush1.msra.mxu0 0.0
  %2446 = vmatprep.subr.mxu0 0.0
  %2447 = vmatpush1.msra.mxu0 0.0
  %2448 = vmatprep.subr.mxu0 0.0
  %2449 = vmatpush1.msra.mxu0 0.0
  %2450 = vmatprep.subr.mxu0 0.0
  %2451 = vmatpush1.msra.mxu0 0.0
  %2452 = vmatprep.subr.mxu0 0.0
  %2453 = vmatpush1.msra.mxu0 0.0
  %2454 = vmatprep.subr.mxu0 0.0
  %2455 = vmatpush1.msra.mxu0 0.0
  %2456 = vmatprep.subr.mxu0 0.0
  %2457 = vmatpush1.msra.mxu0 0.0
  %2458 = vmatprep.subr.mxu0 0.0
  %2459 = vmatpush1.msra.mxu0 0.0
  %2460 = vmatprep.subr.mxu0 0.0
  %2461 = vmatpush1.msra.mxu0 0.0
  %2462 = vmatprep.subr.mxu0 0.0
  %2463 = vmatpush1.msra.mxu0 0.0
  %2464 = vmatprep.subr.mxu0 0.0
  %2465 = vmatpush1.msra.mxu0 0.0
  %2466 = vmatprep.subr.mxu0 0.0
  %2467 = vmatpush1.msra.mxu0 0.0
  %2468 = vmatprep.subr.mxu0 0.0
  %2469 = vmatpush1.msra.mxu0 0.0
  %2470 = vmatprep.subr.mxu0 0.0
  %2471 = vmatpush1.msra.mxu0 0.0
  %2472 = vmatprep.subr.mxu0 0.0
  %2473 = vmatpush1.msra.mxu0 0.0
  %2474 = vmatprep.subr.mxu0 0.0
  %2475 = vmatpush1.msra.mxu0 0.0
  %2476 = vmatprep.subr.mxu0 0.0
  %2477 = vmatpush1.msra.mxu0 0.0
  %2478 = vmatprep.subr.mxu0 0.0
  %2479 = vmatpush1.msra.mxu0 0.0
  %2480 = vmatprep.subr.mxu0 0.0
  %2481 = vmatpush1.msra.mxu0 0.0
  %2482 = vmatprep.subr.mxu0 0.0
  %2483 = vmatpush1.msra.mxu0 0.0
  %2484 = vmatprep.subr.mxu0 0.0
  %2485 = vmatpush1.msra.mxu0 0.0
  %2486 = vmatprep.subr.mxu0 0.0
  %2487 = vmatpush1.msra.mxu0 0.0
  %2488 = vmatprep.subr.mxu0 0.0
  %2489 = vmatpush1.msra.mxu0 0.0
  %2490 = vmatprep.subr.mxu0 0.0
  %2491 = vmatpush1.msra.mxu0 0.0
  %2492 = vmatprep.subr.mxu0 0.0
  %2493 = vmatpush1.msra.mxu0 0.0
  %2494 = vmatprep.subr.mxu0 0.0
  %2495 = vmatpush1.msra.mxu0 0.0
  %2496 = vmatprep.subr.mxu0 0.0
  %2497 = vmatpush1.msra.mxu0 0.0
  %2498 = vmatprep.mubr.f32.mxu0 0.0
  %2499 = vmatmul.mubr.f32.gmra.mrb[0].mxu0 %v1890
  %v2500 = vpop.f32.mrb[0].mxu0
  %v2501 = vadd.f32 %v1868, %v2500
  %v2502 = vpop.f32.mrb[0].mxu0
  %v2503 = vadd.f32 %v1872, %v2502
  %2504 = vmatprep.mubr.f32.mxu0 0.0
  %2505 = vmatmul.mubr.f32.gmra.mrb[0].mxu0 %v1893
  %v2506 = vpop.f32.mrb[0].mxu0
  %v2507 = vadd.f32 %v1868, %v2506
  %v2508 = vpop.f32.mrb[0].mxu0
  %v2509 = vadd.f32 %v1872, %v2508
  %2510 = vdwg.mxu0
  %v2511 = vmax.f32 %v1962, 0.0
  %v2512 = vmax.f32 %v1964, 0.0
  %v2513 = vmax.f32 %v2039, 0.0
  %v2514 = vmax.f32 %v2041, 0.0
  %v2515 = vmax.f32 %v2116, 0.0
  %v2516 = vmax.f32 %v2118, 0.0
  %v2517 = vmax.f32 %v2193, 0.0
  %v2518 = vmax.f32 %v2195, 0.0
  %v2519 = vmax.f32 %v2270, 0.0
  %v2520 = vmax.f32 %v2272, 0.0
  %v2521 = vmax.f32 %v2347, 0.0
  %v2522 = vmax.f32 %v2349, 0.0
  %v2523 = vmax.f32 %v2424, 0.0
  %v2524 = vmax.f32 %v2426, 0.0
  %v2525 = vmax.f32 %v2501, 0.0
  %v2526 = vmax.f32 %v2503, 0.0
  %v2527 = vmax.f32 %v1968, 0.0
  %v2528 = vmax.f32 %v1970, 0.0
  %v2529 = vmax.f32 %v2045, 0.0
  %v2530 = vmax.f32 %v2047, 0.0
  %v2531 = vmax.f32 %v2122, 0.0
  %v2532 = vmax.f32 %v2124, 0.0
  %v2533 = vmax.f32 %v2199, 0.0
  %v2534 = vmax.f32 %v2201, 0.0
  %v2535 = vmax.f32 %v2276, 0.0
  %v2536 = vmax.f32 %v2278, 0.0
  %v2537 = vmax.f32 %v2353, 0.0
  %v2538 = vmax.f32 %v2355, 0.0
  %v2539 = vmax.f32 %v2430, 0.0
  %v2540 = vmax.f32 %v2432, 0.0
  %v2541 = vmax.f32 %v2507, 0.0
  %v2542 = vmax.f32 %v2509, 0.0
  %v2543 = vld [vmem:[%s11] sm:$0xff]
  %v2544 = vld [vmem:[%s11 + $0x8] sm:$0xff]
  %v2545 = vld [vmem:[%s11 + $0x10] sm:$0xff]
  %v2546 = vld [vmem:[%s11 + $0x18] sm:$0xff]
  %v2547 = vld [vmem:[%s11 + $0x20] sm:$0xff]
  %v2548 = vld [vmem:[%s11 + $0x28] sm:$0xff]
  %v2549 = vld [vmem:[%s11 + $0x30] sm:$0xff]
  %v2550 = vld [vmem:[%s11 + $0x38] sm:$0xff]
  %v2551 = vld [vmem:[%s11 + $0x40] sm:$0xff]
  %v2552 = vld [vmem:[%s11 + $0x48] sm:$0xff]
  %v2553 = vld [vmem:[%s11 + $0x50] sm:$0xff]
  %v2554 = vld [vmem:[%s11 + $0x58] sm:$0xff]
  %v2555 = vld [vmem:[%s11 + $0x60] sm:$0xff]
  %v2556 = vld [vmem:[%s11 + $0x68] sm:$0xff]
  %v2557 = vld [vmem:[%s11 + $0x70] sm:$0xff]
  %v2558 = vld [vmem:[%s11 + $0x78] sm:$0xff]
  %v2559 = vld [vmem:[%s11 + $0x80] sm:$0xff]
  %v2560 = vld [vmem:[%s11 + $0x88] sm:$0xff]
  %v2561 = vld [vmem:[%s11 + $0x90] sm:$0xff]
  %v2562 = vld [vmem:[%s11 + $0x98] sm:$0xff]
  %v2563 = vld [vmem:[%s11 + $0xa0] sm:$0xff]
  %v2564 = vld [vmem:[%s11 + $0xa8] sm:$0xff]
  %v2565 = vld [vmem:[%s11 + $0xb0] sm:$0xff]
  %v2566 = vld [vmem:[%s11 + $0xb8] sm:$0xff]
  %v2567 = vld [vmem:[%s11 + $0xc0] sm:$0xff]
  %v2568 = vld [vmem:[%s11 + $0xc8] sm:$0xff]
  %v2569 = vld [vmem:[%s11 + $0xd0] sm:$0xff]
  %v2570 = vld [vmem:[%s11 + $0xd8] sm:$0xff]
  %v2571 = vld [vmem:[%s11 + $0xe0] sm:$0xff]
  %v2572 = vld [vmem:[%s11 + $0xe8] sm:$0xff]
  %v2573 = vld [vmem:[%s11 + $0xf0] sm:$0xff]
  %v2574 = vld [vmem:[%s11 + $0xf8] sm:$0xff]
  %v2575 = vld [vmem:[%s11 + $0x100] sm:$0xff]
  %v2576 = vld [vmem:[%s11 + $0x108] sm:$0xff]
  %v2577 = vld [vmem:[%s11 + $0x110] sm:$0xff]
  %v2578 = vld [vmem:[%s11 + $0x118] sm:$0xff]
  %v2579 = vld [vmem:[%s11 + $0x120] sm:$0xff]
  %v2580 = vld [vmem:[%s11 + $0x128] sm:$0xff]
  %v2581 = vld [vmem:[%s11 + $0x130] sm:$0xff]
  %v2582 = vld [vmem:[%s11 + $0x138] sm:$0xff]
  %v2583 = vld [vmem:[%s11 + $0x140] sm:$0xff]
  %v2584 = vld [vmem:[%s11 + $0x148] sm:$0xff]
  %v2585 = vld [vmem:[%s11 + $0x150] sm:$0xff]
  %v2586 = vld [vmem:[%s11 + $0x158] sm:$0xff]
  %v2587 = vld [vmem:[%s11 + $0x160] sm:$0xff]
  %v2588 = vld [vmem:[%s11 + $0x168] sm:$0xff]
  %v2589 = vld [vmem:[%s11 + $0x170] sm:$0xff]
  %v2590 = vld [vmem:[%s11 + $0x178] sm:$0xff]
  %v2591 = vld [vmem:[%s11 + $0x180] sm:$0xff]
  %v2592 = vld [vmem:[%s11 + $0x188] sm:$0xff]
  %v2593 = vld [vmem:[%s11 + $0x190] sm:$0xff]
  %v2594 = vld [vmem:[%s11 + $0x198] sm:$0xff]
  %v2595 = vld [vmem:[%s11 + $0x1a0] sm:$0xff]
  %v2596 = vld [vmem:[%s11 + $0x1a8] sm:$0xff]
  %v2597 = vld [vmem:[%s11 + $0x1b0] sm:$0xff]
  %v2598 = vld [vmem:[%s11 + $0x1b8] sm:$0xff]
  %v2599 = vld [vmem:[%s11 + $0x1c0] sm:$0xff]
  %v2600 = vld [vmem:[%s11 + $0x1c8] sm:$0xff]
  %v2601 = vld [vmem:[%s11 + $0x1d0] sm:$0xff]
  %v2602 = vld [vmem:[%s11 + $0x1d8] sm:$0xff]
  %v2603 = vld [vmem:[%s11 + $0x1e0] sm:$0xff]
  %v2604 = vld [vmem:[%s11 + $0x1e8] sm:$0xff]
  %v2605 = vld [vmem:[%s11 + $0x1f0] sm:$0xff]
  %v2606 = vld [vmem:[%s11 + $0x1f8] sm:$0xff]
  %v2607 = vld [vmem:[%s11 + $0x200] sm:$0xff]
  %v2608 = vld [vmem:[%s11 + $0x208] sm:$0xff]
  %v2609 = vld [vmem:[%s11 + $0x210] sm:$0xff]
  %v2610 = vld [vmem:[%s11 + $0x218] sm:$0xff]
  %v2611 = vld [vmem:[%s11 + $0x220] sm:$0xff]
  %v2612 = vld [vmem:[%s11 + $0x228] sm:$0xff]
  %v2613 = vld [vmem:[%s11 + $0x230] sm:$0xff]
  %v2614 = vld [vmem:[%s11 + $0x238] sm:$0xff]
  %v2615 = vld [vmem:[%s11 + $0x240] sm:$0xff]
  %v2616 = vld [vmem:[%s11 + $0x248] sm:$0xff]
  %v2617 = vld [vmem:[%s11 + $0x250] sm:$0xff]
  %v2618 = vld [vmem:[%s11 + $0x258] sm:$0xff]
  %v2619 = vld [vmem:[%s11 + $0x260] sm:$0xff]
  %v2620 = vld [vmem:[%s11 + $0x268] sm:$0xff]
  %v2621 = vld [vmem:[%s11 + $0x270] sm:$0xff]
  %v2622 = vld [vmem:[%s11 + $0x278] sm:$0xff]
  %v2623 = vld [vmem:[%s11 + $0x280] sm:$0xff]
  %v2624 = vld [vmem:[%s11 + $0x288] sm:$0xff]
  %v2625 = vld [vmem:[%s11 + $0x290] sm:$0xff]
  %v2626 = vld [vmem:[%s11 + $0x298] sm:$0xff]
  %v2627 = vld [vmem:[%s11 + $0x2a0] sm:$0xff]
  %v2628 = vld [vmem:[%s11 + $0x2a8] sm:$0xff]
  %v2629 = vld [vmem:[%s11 + $0x2b0] sm:$0xff]
  %v2630 = vld [vmem:[%s11 + $0x2b8] sm:$0xff]
  %v2631 = vld [vmem:[%s11 + $0x2c0] sm:$0xff]
  %v2632 = vld [vmem:[%s11 + $0x2c8] sm:$0xff]
  %v2633 = vld [vmem:[%s11 + $0x2d0] sm:$0xff]
  %v2634 = vld [vmem:[%s11 + $0x2d8] sm:$0xff]
  %v2635 = vld [vmem:[%s11 + $0x2e0] sm:$0xff]
  %v2636 = vld [vmem:[%s11 + $0x2e8] sm:$0xff]
  %v2637 = vld [vmem:[%s11 + $0x2f0] sm:$0xff]
  %v2638 = vld [vmem:[%s11 + $0x2f8] sm:$0xff]
  %v2639 = vld [vmem:[%s11 + $0x300] sm:$0xff]
  %v2640 = vld [vmem:[%s11 + $0x308] sm:$0xff]
  %v2641 = vld [vmem:[%s11 + $0x310] sm:$0xff]
  %v2642 = vld [vmem:[%s11 + $0x318] sm:$0xff]
  %v2643 = vld [vmem:[%s11 + $0x320] sm:$0xff]
  %v2644 = vld [vmem:[%s11 + $0x328] sm:$0xff]
  %v2645 = vld [vmem:[%s11 + $0x330] sm:$0xff]
  %v2646 = vld [vmem:[%s11 + $0x338] sm:$0xff]
  %v2647 = vld [vmem:[%s11 + $0x340] sm:$0xff]
  %v2648 = vld [vmem:[%s11 + $0x348] sm:$0xff]
  %v2649 = vld [vmem:[%s11 + $0x350] sm:$0xff]
  %v2650 = vld [vmem:[%s11 + $0x358] sm:$0xff]
  %v2651 = vld [vmem:[%s11 + $0x360] sm:$0xff]
  %v2652 = vld [vmem:[%s11 + $0x368] sm:$0xff]
  %v2653 = vld [vmem:[%s11 + $0x370] sm:$0xff]
  %v2654 = vld [vmem:[%s11 + $0x378] sm:$0xff]
  %v2655 = vld [vmem:[%s11 + $0x380] sm:$0xff]
  %v2656 = vld [vmem:[%s11 + $0x388] sm:$0xff]
  %v2657 = vld [vmem:[%s11 + $0x390] sm:$0xff]
  %v2658 = vld [vmem:[%s11 + $0x398] sm:$0xff]
  %v2659 = vld [vmem:[%s11 + $0x3a0] sm:$0xff]
  %v2660 = vld [vmem:[%s11 + $0x3a8] sm:$0xff]
  %v2661 = vld [vmem:[%s11 + $0x3b0] sm:$0xff]
  %v2662 = vld [vmem:[%s11 + $0x3b8] sm:$0xff]
  %v2663 = vld [vmem:[%s11 + $0x3c0] sm:$0xff]
  %v2664 = vld [vmem:[%s11 + $0x3c8] sm:$0xff]
  %v2665 = vld [vmem:[%s11 + $0x3d0] sm:$0xff]
  %v2666 = vld [vmem:[%s11 + $0x3d8] sm:$0xff]
  %v2667 = vld [vmem:[%s11 + $0x3e0] sm:$0xff]
  %v2668 = vld [vmem:[%s11 + $0x3e8] sm:$0xff]
  %v2669 = vld [vmem:[%s11 + $0x3f0] sm:$0xff]
  %v2670 = vld [vmem:[%s11 + $0x3f8] sm:$0xff]
  %v2671 = vld [vmem:[%s11 + $0x400] sm:$0xff]
  %v2672 = vld [vmem:[%s11 + $0x408] sm:$0xff]
  %v2673 = vld [vmem:[%s11 + $0x410] sm:$0xff]
  %v2674 = vld [vmem:[%s11 + $0x418] sm:$0xff]
  %v2675 = vld [vmem:[%s11 + $0x420] sm:$0xff]
  %v2676 = vld [vmem:[%s11 + $0x428] sm:$0xff]
  %v2677 = vld [vmem:[%s11 + $0x430] sm:$0xff]
  %v2678 = vld [vmem:[%s11 + $0x438] sm:$0xff]
  %v2679 = vld [vmem:[%s11 + $0x440] sm:$0xff]
  %v2680 = vld [vmem:[%s11 + $0x448] sm:$0xff]
  %v2681 = vld [vmem:[%s11 + $0x450] sm:$0xff]
  %v2682 = vld [vmem:[%s11 + $0x458] sm:$0xff]
  %v2683 = vld [vmem:[%s11 + $0x460] sm:$0xff]
  %v2684 = vld [vmem:[%s11 + $0x468] sm:$0xff]
  %v2685 = vld [vmem:[%s11 + $0x470] sm:$0xff]
  %v2686 = vld [vmem:[%s11 + $0x478] sm:$0xff]
  %v2687 = vld [vmem:[%s11 + $0x480] sm:$0xff]
  %v2688 = vld [vmem:[%s11 + $0x488] sm:$0xff]
  %v2689 = vld [vmem:[%s11 + $0x490] sm:$0xff]
  %v2690 = vld [vmem:[%s11 + $0x498] sm:$0xff]
  %v2691 = vld [vmem:[%s11 + $0x4a0] sm:$0xff]
  %v2692 = vld [vmem:[%s11 + $0x4a8] sm:$0xff]
  %v2693 = vld [vmem:[%s11 + $0x4b0] sm:$0xff]
  %v2694 = vld [vmem:[%s11 + $0x4b8] sm:$0xff]
  %v2695 = vld [vmem:[%s11 + $0x4c0] sm:$0xff]
  %v2696 = vld [vmem:[%s11 + $0x4c8] sm:$0xff]
  %v2697 = vld [vmem:[%s11 + $0x4d0] sm:$0xff]
  %v2698 = vld [vmem:[%s11 + $0x4d8] sm:$0xff]
  %v2699 = vld [vmem:[%s11 + $0x4e0] sm:$0xff]
  %v2700 = vld [vmem:[%s11 + $0x4e8] sm:$0xff]
  %v2701 = vld [vmem:[%s11 + $0x4f0] sm:$0xff]
  %v2702 = vld [vmem:[%s11 + $0x4f8] sm:$0xff]
  %v2703 = vld [vmem:[%s11 + $0x500] sm:$0xff]
  %v2704 = vld [vmem:[%s11 + $0x508] sm:$0xff]
  %v2705 = vld [vmem:[%s11 + $0x510] sm:$0xff]
  %v2706 = vld [vmem:[%s11 + $0x518] sm:$0xff]
  %v2707 = vld [vmem:[%s11 + $0x520] sm:$0xff]
  %v2708 = vld [vmem:[%s11 + $0x528] sm:$0xff]
  %v2709 = vld [vmem:[%s11 + $0x530] sm:$0xff]
  %v2710 = vld [vmem:[%s11 + $0x538] sm:$0xff]
  %v2711 = vld [vmem:[%s11 + $0x540] sm:$0xff]
  %v2712 = vld [vmem:[%s11 + $0x548] sm:$0xff]
  %v2713 = vld [vmem:[%s11 + $0x550] sm:$0xff]
  %v2714 = vld [vmem:[%s11 + $0x558] sm:$0xff]
  %v2715 = vld [vmem:[%s11 + $0x560] sm:$0xff]
  %v2716 = vld [vmem:[%s11 + $0x568] sm:$0xff]
  %v2717 = vld [vmem:[%s11 + $0x570] sm:$0xff]
  %v2718 = vld [vmem:[%s11 + $0x578] sm:$0xff]
  %v2719 = vld [vmem:[%s11 + $0x580] sm:$0xff]
  %v2720 = vld [vmem:[%s11 + $0x588] sm:$0xff]
  %v2721 = vld [vmem:[%s11 + $0x590] sm:$0xff]
  %v2722 = vld [vmem:[%s11 + $0x598] sm:$0xff]
  %v2723 = vld [vmem:[%s11 + $0x5a0] sm:$0xff]
  %v2724 = vld [vmem:[%s11 + $0x5a8] sm:$0xff]
  %v2725 = vld [vmem:[%s11 + $0x5b0] sm:$0xff]
  %v2726 = vld [vmem:[%s11 + $0x5b8] sm:$0xff]
  %v2727 = vld [vmem:[%s11 + $0x5c0] sm:$0xff]
  %v2728 = vld [vmem:[%s11 + $0x5c8] sm:$0xff]
  %v2729 = vld [vmem:[%s11 + $0x5d0] sm:$0xff]
  %v2730 = vld [vmem:[%s11 + $0x5d8] sm:$0xff]
  %v2731 = vld [vmem:[%s11 + $0x5e0] sm:$0xff]
  %v2732 = vld [vmem:[%s11 + $0x5e8] sm:$0xff]
  %v2733 = vld [vmem:[%s11 + $0x5f0] sm:$0xff]
  %v2734 = vld [vmem:[%s11 + $0x5f8] sm:$0xff]
  %v2735 = vld [vmem:[%s11 + $0x600] sm:$0xff]
  %v2736 = vld [vmem:[%s11 + $0x608] sm:$0xff]
  %v2737 = vld [vmem:[%s11 + $0x610] sm:$0xff]
  %v2738 = vld [vmem:[%s11 + $0x618] sm:$0xff]
  %v2739 = vld [vmem:[%s11 + $0x620] sm:$0xff]
  %v2740 = vld [vmem:[%s11 + $0x628] sm:$0xff]
  %v2741 = vld [vmem:[%s11 + $0x630] sm:$0xff]
  %v2742 = vld [vmem:[%s11 + $0x638] sm:$0xff]
  %v2743 = vld [vmem:[%s11 + $0x640] sm:$0xff]
  %v2744 = vld [vmem:[%s11 + $0x648] sm:$0xff]
  %v2745 = vld [vmem:[%s11 + $0x650] sm:$0xff]
  %v2746 = vld [vmem:[%s11 + $0x658] sm:$0xff]
  %v2747 = vld [vmem:[%s11 + $0x660] sm:$0xff]
  %v2748 = vld [vmem:[%s11 + $0x668] sm:$0xff]
  %v2749 = vld [vmem:[%s11 + $0x670] sm:$0xff]
  %v2750 = vld [vmem:[%s11 + $0x678] sm:$0xff]
  %v2751 = vld [vmem:[%s11 + $0x680] sm:$0xff]
  %v2752 = vld [vmem:[%s11 + $0x688] sm:$0xff]
  %v2753 = vld [vmem:[%s11 + $0x690] sm:$0xff]
  %v2754 = vld [vmem:[%s11 + $0x698] sm:$0xff]
  %v2755 = vld [vmem:[%s11 + $0x6a0] sm:$0xff]
  %v2756 = vld [vmem:[%s11 + $0x6a8] sm:$0xff]
  %v2757 = vld [vmem:[%s11 + $0x6b0] sm:$0xff]
  %v2758 = vld [vmem:[%s11 + $0x6b8] sm:$0xff]
  %v2759 = vld [vmem:[%s11 + $0x6c0] sm:$0xff]
  %v2760 = vld [vmem:[%s11 + $0x6c8] sm:$0xff]
  %v2761 = vld [vmem:[%s11 + $0x6d0] sm:$0xff]
  %v2762 = vld [vmem:[%s11 + $0x6d8] sm:$0xff]
  %v2763 = vld [vmem:[%s11 + $0x6e0] sm:$0xff]
  %v2764 = vld [vmem:[%s11 + $0x6e8] sm:$0xff]
  %v2765 = vld [vmem:[%s11 + $0x6f0] sm:$0xff]
  %v2766 = vld [vmem:[%s11 + $0x6f8] sm:$0xff]
  %v2767 = vld [vmem:[%s11 + $0x700] sm:$0xff]
  %v2768 = vld [vmem:[%s11 + $0x708] sm:$0xff]
  %v2769 = vld [vmem:[%s11 + $0x710] sm:$0xff]
  %v2770 = vld [vmem:[%s11 + $0x718] sm:$0xff]
  %v2771 = vld [vmem:[%s11 + $0x720] sm:$0xff]
  %v2772 = vld [vmem:[%s11 + $0x728] sm:$0xff]
  %v2773 = vld [vmem:[%s11 + $0x730] sm:$0xff]
  %v2774 = vld [vmem:[%s11 + $0x738] sm:$0xff]
  %v2775 = vld [vmem:[%s11 + $0x740] sm:$0xff]
  %v2776 = vld [vmem:[%s11 + $0x748] sm:$0xff]
  %v2777 = vld [vmem:[%s11 + $0x750] sm:$0xff]
  %v2778 = vld [vmem:[%s11 + $0x758] sm:$0xff]
  %v2779 = vld [vmem:[%s11 + $0x760] sm:$0xff]
  %v2780 = vld [vmem:[%s11 + $0x768] sm:$0xff]
  %v2781 = vld [vmem:[%s11 + $0x770] sm:$0xff]
  %v2782 = vld [vmem:[%s11 + $0x778] sm:$0xff]
  %v2783 = vld [vmem:[%s11 + $0x780] sm:$0xff]
  %v2784 = vld [vmem:[%s11 + $0x788] sm:$0xff]
  %v2785 = vld [vmem:[%s11 + $0x790] sm:$0xff]
  %v2786 = vld [vmem:[%s11 + $0x798] sm:$0xff]
  %v2787 = vld [vmem:[%s11 + $0x7a0] sm:$0xff]
  %v2788 = vld [vmem:[%s11 + $0x7a8] sm:$0xff]
  %v2789 = vld [vmem:[%s11 + $0x7b0] sm:$0xff]
  %v2790 = vld [vmem:[%s11 + $0x7b8] sm:$0xff]
  %v2791 = vld [vmem:[%s11 + $0x7c0] sm:$0xff]
  %v2792 = vld [vmem:[%s11 + $0x7c8] sm:$0xff]
  %v2793 = vld [vmem:[%s11 + $0x7d0] sm:$0xff]
  %v2794 = vld [vmem:[%s11 + $0x7d8] sm:$0xff]
  %v2795 = vld [vmem:[%s11 + $0x7e0] sm:$0xff]
  %v2796 = vld [vmem:[%s11 + $0x7e8] sm:$0xff]
  %v2797 = vld [vmem:[%s11 + $0x7f0] sm:$0xff]
  %v2798 = vld [vmem:[%s11 + $0x7f8] sm:$0xff]
  %v2799 = vld [vmem:[%s12] sm:$0x1]
  %v2801 = vlaneseq
  %v2802 = vshrl.u32 %v2801, 7
  %v2803 = vsub.s32 0, %v2802
  %v2804 = vrot.slane %v2799, %v2803
  %2806 = vmatprep.subr.mxu0 0.0
  %2807 = vmatpush1.msra.mxu0 %v2543
  %2808 = vmatprep.subr.mxu0 0.0
  %2809 = vmatpush1.msra.mxu0 %v2544
  %2810 = vmatprep.subr.mxu0 0.0
  %2811 = vmatpush1.msra.mxu0 %v2545
  %2812 = vmatprep.subr.mxu0 0.0
  %2813 = vmatpush1.msra.mxu0 %v2546
  %2814 = vmatprep.subr.mxu0 0.0
  %2815 = vmatpush1.msra.mxu0 %v2547
  %2816 = vmatprep.subr.mxu0 0.0
  %2817 = vmatpush1.msra.mxu0 %v2548
  %2818 = vmatprep.subr.mxu0 0.0
  %2819 = vmatpush1.msra.mxu0 %v2549
  %2820 = vmatprep.subr.mxu0 0.0
  %2821 = vmatpush1.msra.mxu0 %v2550
  %2822 = vmatprep.subr.mxu0 0.0
  %2823 = vmatpush1.msra.mxu0 %v2551
  %2824 = vmatprep.subr.mxu0 0.0
  %2825 = vmatpush1.msra.mxu0 %v2552
  %2826 = vmatprep.subr.mxu0 0.0
  %2827 = vmatpush1.msra.mxu0 %v2553
  %2828 = vmatprep.subr.mxu0 0.0
  %2829 = vmatpush1.msra.mxu0 %v2554
  %2830 = vmatprep.subr.mxu0 0.0
  %2831 = vmatpush1.msra.mxu0 %v2555
  %2832 = vmatprep.subr.mxu0 0.0
  %2833 = vmatpush1.msra.mxu0 %v2556
  %2834 = vmatprep.subr.mxu0 0.0
  %2835 = vmatpush1.msra.mxu0 %v2557
  %2836 = vmatprep.subr.mxu0 0.0
  %2837 = vmatpush1.msra.mxu0 %v2558
  %2838 = vmatprep.subr.mxu0 0.0
  %2839 = vmatpush1.msra.mxu0 %v2559
  %2840 = vmatprep.subr.mxu0 0.0
  %2841 = vmatpush1.msra.mxu0 %v2560
  %2842 = vmatprep.subr.mxu0 0.0
  %2843 = vmatpush1.msra.mxu0 %v2561
  %2844 = vmatprep.subr.mxu0 0.0
  %2845 = vmatpush1.msra.mxu0 %v2562
  %2846 = vmatprep.subr.mxu0 0.0
  %2847 = vmatpush1.msra.mxu0 %v2563
  %2848 = vmatprep.subr.mxu0 0.0
  %2849 = vmatpush1.msra.mxu0 %v2564
  %2850 = vmatprep.subr.mxu0 0.0
  %2851 = vmatpush1.msra.mxu0 %v2565
  %2852 = vmatprep.subr.mxu0 0.0
  %2853 = vmatpush1.msra.mxu0 %v2566
  %2854 = vmatprep.subr.mxu0 0.0
  %2855 = vmatpush1.msra.mxu0 %v2567
  %2856 = vmatprep.subr.mxu0 0.0
  %2857 = vmatpush1.msra.mxu0 %v2568
  %2858 = vmatprep.subr.mxu0 0.0
  %2859 = vmatpush1.msra.mxu0 %v2569
  %2860 = vmatprep.subr.mxu0 0.0
  %2861 = vmatpush1.msra.mxu0 %v2570
  %2862 = vmatprep.subr.mxu0 0.0
  %2863 = vmatpush1.msra.mxu0 %v2571
  %2864 = vmatprep.subr.mxu0 0.0
  %2865 = vmatpush1.msra.mxu0 %v2572
  %2866 = vmatprep.subr.mxu0 0.0
  %2867 = vmatpush1.msra.mxu0 %v2573
  %2868 = vmatprep.subr.mxu0 0.0
  %2869 = vmatpush1.msra.mxu0 %v2574
  %2870 = vmatprep.mubr.f32.mxu0 %v2512
  %2871 = vmatmul.mubr.f32.gmra.mrb[0].mxu0 %v2511
  %v2872 = vpop.f32.mrb[0].mxu0
  %v2873 = vadd.f32 %v2804, %v2872
  %v2874 = vpop.f32.mrb[0].mxu0
  %2875 = vmatprep.mubr.f32.mxu0 %v2528
  %2876 = vmatmul.mubr.f32.gmra.mrb[0].mxu0 %v2527
  %v2877 = vpop.f32.mrb[0].mxu0
  %v2878 = vadd.f32 %v2804, %v2877
  %v2879 = vpop.f32.mrb[0].mxu0
  %2880 = vdwg.mxu0
  %2881 = vmatprep.subr.mxu0 0.0
  %2882 = vmatpush1.msra.mxu0 %v2575
  %2883 = vmatprep.subr.mxu0 0.0
  %2884 = vmatpush1.msra.mxu0 %v2576
  %2885 = vmatprep.subr.mxu0 0.0
  %2886 = vmatpush1.msra.mxu0 %v2577
  %2887 = vmatprep.subr.mxu0 0.0
  %2888 = vmatpush1.msra.mxu0 %v2578
  %2889 = vmatprep.subr.mxu0 0.0
  %2890 = vmatpush1.msra.mxu0 %v2579
  %2891 = vmatprep.subr.mxu0 0.0
  %2892 = vmatpush1.msra.mxu0 %v2580
  %2893 = vmatprep.subr.mxu0 0.0
  %2894 = vmatpush1.msra.mxu0 %v2581
  %2895 = vmatprep.subr.mxu0 0.0
  %2896 = vmatpush1.msra.mxu0 %v2582
  %2897 = vmatprep.subr.mxu0 0.0
  %2898 = vmatpush1.msra.mxu0 %v2583
  %2899 = vmatprep.subr.mxu0 0.0
  %2900 = vmatpush1.msra.mxu0 %v2584
  %2901 = vmatprep.subr.mxu0 0.0
  %2902 = vmatpush1.msra.mxu0 %v2585
  %2903 = vmatprep.subr.mxu0 0.0
  %2904 = vmatpush1.msra.mxu0 %v2586
  %2905 = vmatprep.subr.mxu0 0.0
  %2906 = vmatpush1.msra.mxu0 %v2587
  %2907 = vmatprep.subr.mxu0 0.0
  %2908 = vmatpush1.msra.mxu0 %v2588
  %2909 = vmatprep.subr.mxu0 0.0
  %2910 = vmatpush1.msra.mxu0 %v2589
  %2911 = vmatprep.subr.mxu0 0.0
  %2912 = vmatpush1.msra.mxu0 %v2590
  %2913 = vmatprep.subr.mxu0 0.0
  %2914 = vmatpush1.msra.mxu0 %v2591
  %2915 = vmatprep.subr.mxu0 0.0
  %2916 = vmatpush1.msra.mxu0 %v2592
  %2917 = vmatprep.subr.mxu0 0.0
  %2918 = vmatpush1.msra.mxu0 %v2593
  %2919 = vmatprep.subr.mxu0 0.0
  %2920 = vmatpush1.msra.mxu0 %v2594
  %2921 = vmatprep.subr.mxu0 0.0
  %2922 = vmatpush1.msra.mxu0 %v2595
  %2923 = vmatprep.subr.mxu0 0.0
  %2924 = vmatpush1.msra.mxu0 %v2596
  %2925 = vmatprep.subr.mxu0 0.0
  %2926 = vmatpush1.msra.mxu0 %v2597
  %2927 = vmatprep.subr.mxu0 0.0
  %2928 = vmatpush1.msra.mxu0 %v2598
  %2929 = vmatprep.subr.mxu0 0.0
  %2930 = vmatpush1.msra.mxu0 %v2599
  %2931 = vmatprep.subr.mxu0 0.0
  %2932 = vmatpush1.msra.mxu0 %v2600
  %2933 = vmatprep.subr.mxu0 0.0
  %2934 = vmatpush1.msra.mxu0 %v2601
  %2935 = vmatprep.subr.mxu0 0.0
  %2936 = vmatpush1.msra.mxu0 %v2602
  %2937 = vmatprep.subr.mxu0 0.0
  %2938 = vmatpush1.msra.mxu0 %v2603
  %2939 = vmatprep.subr.mxu0 0.0
  %2940 = vmatpush1.msra.mxu0 %v2604
  %2941 = vmatprep.subr.mxu0 0.0
  %2942 = vmatpush1.msra.mxu0 %v2605
  %2943 = vmatprep.subr.mxu0 0.0
  %2944 = vmatpush1.msra.mxu0 %v2606
  %2945 = vmatprep.mubr.f32.mxu0 %v2514
  %2946 = vmatmul.mubr.f32.gmra.mrb[0].mxu0 %v2513
  %v2947 = vpop.f32.mrb[0].mxu0
  %v2948 = vadd.f32 %v2873, %v2947
  %v2949 = vpop.f32.mrb[0].mxu0
  %2950 = vmatprep.mubr.f32.mxu0 %v2530
  %2951 = vmatmul.mubr.f32.gmra.mrb[0].mxu0 %v2529
  %v2952 = vpop.f32.mrb[0].mxu0
  %v2953 = vadd.f32 %v2878, %v2952
  %v2954 = vpop.f32.mrb[0].mxu0
  %2955 = vdwg.mxu0
  %2956 = vmatprep.subr.mxu0 0.0
  %2957 = vmatpush1.msra.mxu0 %v2607
  %2958 = vmatprep.subr.mxu0 0.0
  %2959 = vmatpush1.msra.mxu0 %v2608
  %2960 = vmatprep.subr.mxu0 0.0
  %2961 = vmatpush1.msra.mxu0 %v2609
  %2962 = vmatprep.subr.mxu0 0.0
  %2963 = vmatpush1.msra.mxu0 %v2610
  %2964 = vmatprep.subr.mxu0 0.0
  %2965 = vmatpush1.msra.mxu0 %v2611
  %2966 = vmatprep.subr.mxu0 0.0
  %2967 = vmatpush1.msra.mxu0 %v2612
  %2968 = vmatprep.subr.mxu0 0.0
  %2969 = vmatpush1.msra.mxu0 %v2613
  %2970 = vmatprep.subr.mxu0 0.0
  %2971 = vmatpush1.msra.mxu0 %v2614
  %2972 = vmatprep.subr.mxu0 0.0
  %2973 = vmatpush1.msra.mxu0 %v2615
  %2974 = vmatprep.subr.mxu0 0.0
  %2975 = vmatpush1.msra.mxu0 %v2616
  %2976 = vmatprep.subr.mxu0 0.0
  %2977 = vmatpush1.msra.mxu0 %v2617
  %2978 = vmatprep.subr.mxu0 0.0
  %2979 = vmatpush1.msra.mxu0 %v2618
  %2980 = vmatprep.subr.mxu0 0.0
  %2981 = vmatpush1.msra.mxu0 %v2619
  %2982 = vmatprep.subr.mxu0 0.0
  %2983 = vmatpush1.msra.mxu0 %v2620
  %2984 = vmatprep.subr.mxu0 0.0
  %2985 = vmatpush1.msra.mxu0 %v2621
  %2986 = vmatprep.subr.mxu0 0.0
  %2987 = vmatpush1.msra.mxu0 %v2622
  %2988 = vmatprep.subr.mxu0 0.0
  %2989 = vmatpush1.msra.mxu0 %v2623
  %2990 = vmatprep.subr.mxu0 0.0
  %2991 = vmatpush1.msra.mxu0 %v2624
  %2992 = vmatprep.subr.mxu0 0.0
  %2993 = vmatpush1.msra.mxu0 %v2625
  %2994 = vmatprep.subr.mxu0 0.0
  %2995 = vmatpush1.msra.mxu0 %v2626
  %2996 = vmatprep.subr.mxu0 0.0
  %2997 = vmatpush1.msra.mxu0 %v2627
  %2998 = vmatprep.subr.mxu0 0.0
  %2999 = vmatpush1.msra.mxu0 %v2628
  %3000 = vmatprep.subr.mxu0 0.0
  %3001 = vmatpush1.msra.mxu0 %v2629
  %3002 = vmatprep.subr.mxu0 0.0
  %3003 = vmatpush1.msra.mxu0 %v2630
  %3004 = vmatprep.subr.mxu0 0.0
  %3005 = vmatpush1.msra.mxu0 %v2631
  %3006 = vmatprep.subr.mxu0 0.0
  %3007 = vmatpush1.msra.mxu0 %v2632
  %3008 = vmatprep.subr.mxu0 0.0
  %3009 = vmatpush1.msra.mxu0 %v2633
  %3010 = vmatprep.subr.mxu0 0.0
  %3011 = vmatpush1.msra.mxu0 %v2634
  %3012 = vmatprep.subr.mxu0 0.0
  %3013 = vmatpush1.msra.mxu0 %v2635
  %3014 = vmatprep.subr.mxu0 0.0
  %3015 = vmatpush1.msra.mxu0 %v2636
  %3016 = vmatprep.subr.mxu0 0.0
  %3017 = vmatpush1.msra.mxu0 %v2637
  %3018 = vmatprep.subr.mxu0 0.0
  %3019 = vmatpush1.msra.mxu0 %v2638
  %3020 = vmatprep.mubr.f32.mxu0 %v2516
  %3021 = vmatmul.mubr.f32.gmra.mrb[0].mxu0 %v2515
  %v3022 = vpop.f32.mrb[0].mxu0
  %v3023 = vadd.f32 %v2948, %v3022
  %v3024 = vpop.f32.mrb[0].mxu0
  %3025 = vmatprep.mubr.f32.mxu0 %v2532
  %3026 = vmatmul.mubr.f32.gmra.mrb[0].mxu0 %v2531
  %v3027 = vpop.f32.mrb[0].mxu0
  %v3028 = vadd.f32 %v2953, %v3027
  %v3029 = vpop.f32.mrb[0].mxu0
  %3030 = vdwg.mxu0
  %3031 = vmatprep.subr.mxu0 0.0
  %3032 = vmatpush1.msra.mxu0 %v2639
  %3033 = vmatprep.subr.mxu0 0.0
  %3034 = vmatpush1.msra.mxu0 %v2640
  %3035 = vmatprep.subr.mxu0 0.0
  %3036 = vmatpush1.msra.mxu0 %v2641
  %3037 = vmatprep.subr.mxu0 0.0
  %3038 = vmatpush1.msra.mxu0 %v2642
  %3039 = vmatprep.subr.mxu0 0.0
  %3040 = vmatpush1.msra.mxu0 %v2643
  %3041 = vmatprep.subr.mxu0 0.0
  %3042 = vmatpush1.msra.mxu0 %v2644
  %3043 = vmatprep.subr.mxu0 0.0
  %3044 = vmatpush1.msra.mxu0 %v2645
  %3045 = vmatprep.subr.mxu0 0.0
  %3046 = vmatpush1.msra.mxu0 %v2646
  %3047 = vmatprep.subr.mxu0 0.0
  %3048 = vmatpush1.msra.mxu0 %v2647
  %3049 = vmatprep.subr.mxu0 0.0
  %3050 = vmatpush1.msra.mxu0 %v2648
  %3051 = vmatprep.subr.mxu0 0.0
  %3052 = vmatpush1.msra.mxu0 %v2649
  %3053 = vmatprep.subr.mxu0 0.0
  %3054 = vmatpush1.msra.mxu0 %v2650
  %3055 = vmatprep.subr.mxu0 0.0
  %3056 = vmatpush1.msra.mxu0 %v2651
  %3057 = vmatprep.subr.mxu0 0.0
  %3058 = vmatpush1.msra.mxu0 %v2652
  %3059 = vmatprep.subr.mxu0 0.0
  %3060 = vmatpush1.msra.mxu0 %v2653
  %3061 = vmatprep.subr.mxu0 0.0
  %3062 = vmatpush1.msra.mxu0 %v2654
  %3063 = vmatprep.subr.mxu0 0.0
  %3064 = vmatpush1.msra.mxu0 %v2655
  %3065 = vmatprep.subr.mxu0 0.0
  %3066 = vmatpush1.msra.mxu0 %v2656
  %3067 = vmatprep.subr.mxu0 0.0
  %3068 = vmatpush1.msra.mxu0 %v2657
  %3069 = vmatprep.subr.mxu0 0.0
  %3070 = vmatpush1.msra.mxu0 %v2658
  %3071 = vmatprep.subr.mxu0 0.0
  %3072 = vmatpush1.msra.mxu0 %v2659
  %3073 = vmatprep.subr.mxu0 0.0
  %3074 = vmatpush1.msra.mxu0 %v2660
  %3075 = vmatprep.subr.mxu0 0.0
  %3076 = vmatpush1.msra.mxu0 %v2661
  %3077 = vmatprep.subr.mxu0 0.0
  %3078 = vmatpush1.msra.mxu0 %v2662
  %3079 = vmatprep.subr.mxu0 0.0
  %3080 = vmatpush1.msra.mxu0 %v2663
  %3081 = vmatprep.subr.mxu0 0.0
  %3082 = vmatpush1.msra.mxu0 %v2664
  %3083 = vmatprep.subr.mxu0 0.0
  %3084 = vmatpush1.msra.mxu0 %v2665
  %3085 = vmatprep.subr.mxu0 0.0
  %3086 = vmatpush1.msra.mxu0 %v2666
  %3087 = vmatprep.subr.mxu0 0.0
  %3088 = vmatpush1.msra.mxu0 %v2667
  %3089 = vmatprep.subr.mxu0 0.0
  %3090 = vmatpush1.msra.mxu0 %v2668
  %3091 = vmatprep.subr.mxu0 0.0
  %3092 = vmatpush1.msra.mxu0 %v2669
  %3093 = vmatprep.subr.mxu0 0.0
  %3094 = vmatpush1.msra.mxu0 %v2670
  %3095 = vmatprep.mubr.f32.mxu0 %v2518
  %3096 = vmatmul.mubr.f32.gmra.mrb[0].mxu0 %v2517
  %v3097 = vpop.f32.mrb[0].mxu0
  %v3098 = vadd.f32 %v3023, %v3097
  %v3099 = vpop.f32.mrb[0].mxu0
  %3100 = vmatprep.mubr.f32.mxu0 %v2534
  %3101 = vmatmul.mubr.f32.gmra.mrb[0].mxu0 %v2533
  %v3102 = vpop.f32.mrb[0].mxu0
  %v3103 = vadd.f32 %v3028, %v3102
  %v3104 = vpop.f32.mrb[0].mxu0
  %3105 = vdwg.mxu0
  %3106 = vmatprep.subr.mxu0 0.0
  %3107 = vmatpush1.msra.mxu0 %v2671
  %3108 = vmatprep.subr.mxu0 0.0
  %3109 = vmatpush1.msra.mxu0 %v2672
  %3110 = vmatprep.subr.mxu0 0.0
  %3111 = vmatpush1.msra.mxu0 %v2673
  %3112 = vmatprep.subr.mxu0 0.0
  %3113 = vmatpush1.msra.mxu0 %v2674
  %3114 = vmatprep.subr.mxu0 0.0
  %3115 = vmatpush1.msra.mxu0 %v2675
  %3116 = vmatprep.subr.mxu0 0.0
  %3117 = vmatpush1.msra.mxu0 %v2676
  %3118 = vmatprep.subr.mxu0 0.0
  %3119 = vmatpush1.msra.mxu0 %v2677
  %3120 = vmatprep.subr.mxu0 0.0
  %3121 = vmatpush1.msra.mxu0 %v2678
  %3122 = vmatprep.subr.mxu0 0.0
  %3123 = vmatpush1.msra.mxu0 %v2679
  %3124 = vmatprep.subr.mxu0 0.0
  %3125 = vmatpush1.msra.mxu0 %v2680
  %3126 = vmatprep.subr.mxu0 0.0
  %3127 = vmatpush1.msra.mxu0 %v2681
  %3128 = vmatprep.subr.mxu0 0.0
  %3129 = vmatpush1.msra.mxu0 %v2682
  %3130 = vmatprep.subr.mxu0 0.0
  %3131 = vmatpush1.msra.mxu0 %v2683
  %3132 = vmatprep.subr.mxu0 0.0
  %3133 = vmatpush1.msra.mxu0 %v2684
  %3134 = vmatprep.subr.mxu0 0.0
  %3135 = vmatpush1.msra.mxu0 %v2685
  %3136 = vmatprep.subr.mxu0 0.0
  %3137 = vmatpush1.msra.mxu0 %v2686
  %3138 = vmatprep.subr.mxu0 0.0
  %3139 = vmatpush1.msra.mxu0 %v2687
  %3140 = vmatprep.subr.mxu0 0.0
  %3141 = vmatpush1.msra.mxu0 %v2688
  %3142 = vmatprep.subr.mxu0 0.0
  %3143 = vmatpush1.msra.mxu0 %v2689
  %3144 = vmatprep.subr.mxu0 0.0
  %3145 = vmatpush1.msra.mxu0 %v2690
  %3146 = vmatprep.subr.mxu0 0.0
  %3147 = vmatpush1.msra.mxu0 %v2691
  %3148 = vmatprep.subr.mxu0 0.0
  %3149 = vmatpush1.msra.mxu0 %v2692
  %3150 = vmatprep.subr.mxu0 0.0
  %3151 = vmatpush1.msra.mxu0 %v2693
  %3152 = vmatprep.subr.mxu0 0.0
  %3153 = vmatpush1.msra.mxu0 %v2694
  %3154 = vmatprep.subr.mxu0 0.0
  %3155 = vmatpush1.msra.mxu0 %v2695
  %3156 = vmatprep.subr.mxu0 0.0
  %3157 = vmatpush1.msra.mxu0 %v2696
  %3158 = vmatprep.subr.mxu0 0.0
  %3159 = vmatpush1.msra.mxu0 %v2697
  %3160 = vmatprep.subr.mxu0 0.0
  %3161 = vmatpush1.msra.mxu0 %v2698
  %3162 = vmatprep.subr.mxu0 0.0
  %3163 = vmatpush1.msra.mxu0 %v2699
  %3164 = vmatprep.subr.mxu0 0.0
  %3165 = vmatpush1.msra.mxu0 %v2700
  %3166 = vmatprep.subr.mxu0 0.0
  %3167 = vmatpush1.msra.mxu0 %v2701
  %3168 = vmatprep.subr.mxu0 0.0
  %3169 = vmatpush1.msra.mxu0 %v2702
  %3170 = vmatprep.mubr.f32.mxu0 %v2520
  %3171 = vmatmul.mubr.f32.gmra.mrb[0].mxu0 %v2519
  %v3172 = vpop.f32.mrb[0].mxu0
  %v3173 = vadd.f32 %v3098, %v3172
  %v3174 = vpop.f32.mrb[0].mxu0
  %3175 = vmatprep.mubr.f32.mxu0 %v2536
  %3176 = vmatmul.mubr.f32.gmra.mrb[0].mxu0 %v2535
  %v3177 = vpop.f32.mrb[0].mxu0
  %v3178 = vadd.f32 %v3103, %v3177
  %v3179 = vpop.f32.mrb[0].mxu0
  %3180 = vdwg.mxu0
  %3181 = vmatprep.subr.mxu0 0.0
  %3182 = vmatpush1.msra.mxu0 %v2703
  %3183 = vmatprep.subr.mxu0 0.0
  %3184 = vmatpush1.msra.mxu0 %v2704
  %3185 = vmatprep.subr.mxu0 0.0
  %3186 = vmatpush1.msra.mxu0 %v2705
  %3187 = vmatprep.subr.mxu0 0.0
  %3188 = vmatpush1.msra.mxu0 %v2706
  %3189 = vmatprep.subr.mxu0 0.0
  %3190 = vmatpush1.msra.mxu0 %v2707
  %3191 = vmatprep.subr.mxu0 0.0
  %3192 = vmatpush1.msra.mxu0 %v2708
  %3193 = vmatprep.subr.mxu0 0.0
  %3194 = vmatpush1.msra.mxu0 %v2709
  %3195 = vmatprep.subr.mxu0 0.0
  %3196 = vmatpush1.msra.mxu0 %v2710
  %3197 = vmatprep.subr.mxu0 0.0
  %3198 = vmatpush1.msra.mxu0 %v2711
  %3199 = vmatprep.subr.mxu0 0.0
  %3200 = vmatpush1.msra.mxu0 %v2712
  %3201 = vmatprep.subr.mxu0 0.0
  %3202 = vmatpush1.msra.mxu0 %v2713
  %3203 = vmatprep.subr.mxu0 0.0
  %3204 = vmatpush1.msra.mxu0 %v2714
  %3205 = vmatprep.subr.mxu0 0.0
  %3206 = vmatpush1.msra.mxu0 %v2715
  %3207 = vmatprep.subr.mxu0 0.0
  %3208 = vmatpush1.msra.mxu0 %v2716
  %3209 = vmatprep.subr.mxu0 0.0
  %3210 = vmatpush1.msra.mxu0 %v2717
  %3211 = vmatprep.subr.mxu0 0.0
  %3212 = vmatpush1.msra.mxu0 %v2718
  %3213 = vmatprep.subr.mxu0 0.0
  %3214 = vmatpush1.msra.mxu0 %v2719
  %3215 = vmatprep.subr.mxu0 0.0
  %3216 = vmatpush1.msra.mxu0 %v2720
  %3217 = vmatprep.subr.mxu0 0.0
  %3218 = vmatpush1.msra.mxu0 %v2721
  %3219 = vmatprep.subr.mxu0 0.0
  %3220 = vmatpush1.msra.mxu0 %v2722
  %3221 = vmatprep.subr.mxu0 0.0
  %3222 = vmatpush1.msra.mxu0 %v2723
  %3223 = vmatprep.subr.mxu0 0.0
  %3224 = vmatpush1.msra.mxu0 %v2724
  %3225 = vmatprep.subr.mxu0 0.0
  %3226 = vmatpush1.msra.mxu0 %v2725
  %3227 = vmatprep.subr.mxu0 0.0
  %3228 = vmatpush1.msra.mxu0 %v2726
  %3229 = vmatprep.subr.mxu0 0.0
  %3230 = vmatpush1.msra.mxu0 %v2727
  %3231 = vmatprep.subr.mxu0 0.0
  %3232 = vmatpush1.msra.mxu0 %v2728
  %3233 = vmatprep.subr.mxu0 0.0
  %3234 = vmatpush1.msra.mxu0 %v2729
  %3235 = vmatprep.subr.mxu0 0.0
  %3236 = vmatpush1.msra.mxu0 %v2730
  %3237 = vmatprep.subr.mxu0 0.0
  %3238 = vmatpush1.msra.mxu0 %v2731
  %3239 = vmatprep.subr.mxu0 0.0
  %3240 = vmatpush1.msra.mxu0 %v2732
  %3241 = vmatprep.subr.mxu0 0.0
  %3242 = vmatpush1.msra.mxu0 %v2733
  %3243 = vmatprep.subr.mxu0 0.0
  %3244 = vmatpush1.msra.mxu0 %v2734
  %3245 = vmatprep.mubr.f32.mxu0 %v2522
  %3246 = vmatmul.mubr.f32.gmra.mrb[0].mxu0 %v2521
  %v3247 = vpop.f32.mrb[0].mxu0
  %v3248 = vadd.f32 %v3173, %v3247
  %v3249 = vpop.f32.mrb[0].mxu0
  %3250 = vmatprep.mubr.f32.mxu0 %v2538
  %3251 = vmatmul.mubr.f32.gmra.mrb[0].mxu0 %v2537
  %v3252 = vpop.f32.mrb[0].mxu0
  %v3253 = vadd.f32 %v3178, %v3252
  %v3254 = vpop.f32.mrb[0].mxu0
  %3255 = vdwg.mxu0
  %3256 = vmatprep.subr.mxu0 0.0
  %3257 = vmatpush1.msra.mxu0 %v2735
  %3258 = vmatprep.subr.mxu0 0.0
  %3259 = vmatpush1.msra.mxu0 %v2736
  %3260 = vmatprep.subr.mxu0 0.0
  %3261 = vmatpush1.msra.mxu0 %v2737
  %3262 = vmatprep.subr.mxu0 0.0
  %3263 = vmatpush1.msra.mxu0 %v2738
  %3264 = vmatprep.subr.mxu0 0.0
  %3265 = vmatpush1.msra.mxu0 %v2739
  %3266 = vmatprep.subr.mxu0 0.0
  %3267 = vmatpush1.msra.mxu0 %v2740
  %3268 = vmatprep.subr.mxu0 0.0
  %3269 = vmatpush1.msra.mxu0 %v2741
  %3270 = vmatprep.subr.mxu0 0.0
  %3271 = vmatpush1.msra.mxu0 %v2742
  %3272 = vmatprep.subr.mxu0 0.0
  %3273 = vmatpush1.msra.mxu0 %v2743
  %3274 = vmatprep.subr.mxu0 0.0
  %3275 = vmatpush1.msra.mxu0 %v2744
  %3276 = vmatprep.subr.mxu0 0.0
  %3277 = vmatpush1.msra.mxu0 %v2745
  %3278 = vmatprep.subr.mxu0 0.0
  %3279 = vmatpush1.msra.mxu0 %v2746
  %3280 = vmatprep.subr.mxu0 0.0
  %3281 = vmatpush1.msra.mxu0 %v2747
  %3282 = vmatprep.subr.mxu0 0.0
  %3283 = vmatpush1.msra.mxu0 %v2748
  %3284 = vmatprep.subr.mxu0 0.0
  %3285 = vmatpush1.msra.mxu0 %v2749
  %3286 = vmatprep.subr.mxu0 0.0
  %3287 = vmatpush1.msra.mxu0 %v2750
  %3288 = vmatprep.subr.mxu0 0.0
  %3289 = vmatpush1.msra.mxu0 %v2751
  %3290 = vmatprep.subr.mxu0 0.0
  %3291 = vmatpush1.msra.mxu0 %v2752
  %3292 = vmatprep.subr.mxu0 0.0
  %3293 = vmatpush1.msra.mxu0 %v2753
  %3294 = vmatprep.subr.mxu0 0.0
  %3295 = vmatpush1.msra.mxu0 %v2754
  %3296 = vmatprep.subr.mxu0 0.0
  %3297 = vmatpush1.msra.mxu0 %v2755
  %3298 = vmatprep.subr.mxu0 0.0
  %3299 = vmatpush1.msra.mxu0 %v2756
  %3300 = vmatprep.subr.mxu0 0.0
  %3301 = vmatpush1.msra.mxu0 %v2757
  %3302 = vmatprep.subr.mxu0 0.0
  %3303 = vmatpush1.msra.mxu0 %v2758
  %3304 = vmatprep.subr.mxu0 0.0
  %3305 = vmatpush1.msra.mxu0 %v2759
  %3306 = vmatprep.subr.mxu0 0.0
  %3307 = vmatpush1.msra.mxu0 %v2760
  %3308 = vmatprep.subr.mxu0 0.0
  %3309 = vmatpush1.msra.mxu0 %v2761
  %3310 = vmatprep.subr.mxu0 0.0
  %3311 = vmatpush1.msra.mxu0 %v2762
  %3312 = vmatprep.subr.mxu0 0.0
  %3313 = vmatpush1.msra.mxu0 %v2763
  %3314 = vmatprep.subr.mxu0 0.0
  %3315 = vmatpush1.msra.mxu0 %v2764
  %3316 = vmatprep.subr.mxu0 0.0
  %3317 = vmatpush1.msra.mxu0 %v2765
  %3318 = vmatprep.subr.mxu0 0.0
  %3319 = vmatpush1.msra.mxu0 %v2766
  %3320 = vmatprep.mubr.f32.mxu0 %v2524
  %3321 = vmatmul.mubr.f32.gmra.mrb[0].mxu0 %v2523
  %v3322 = vpop.f32.mrb[0].mxu0
  %v3323 = vadd.f32 %v3248, %v3322
  %v3324 = vpop.f32.mrb[0].mxu0
  %3325 = vmatprep.mubr.f32.mxu0 %v2540
  %3326 = vmatmul.mubr.f32.gmra.mrb[0].mxu0 %v2539
  %v3327 = vpop.f32.mrb[0].mxu0
  %v3328 = vadd.f32 %v3253, %v3327
  %v3329 = vpop.f32.mrb[0].mxu0
  %3330 = vdwg.mxu0
  %3331 = vmatprep.subr.mxu0 0.0
  %3332 = vmatpush1.msra.mxu0 %v2767
  %3333 = vmatprep.subr.mxu0 0.0
  %3334 = vmatpush1.msra.mxu0 %v2768
  %3335 = vmatprep.subr.mxu0 0.0
  %3336 = vmatpush1.msra.mxu0 %v2769
  %3337 = vmatprep.subr.mxu0 0.0
  %3338 = vmatpush1.msra.mxu0 %v2770
  %3339 = vmatprep.subr.mxu0 0.0
  %3340 = vmatpush1.msra.mxu0 %v2771
  %3341 = vmatprep.subr.mxu0 0.0
  %3342 = vmatpush1.msra.mxu0 %v2772
  %3343 = vmatprep.subr.mxu0 0.0
  %3344 = vmatpush1.msra.mxu0 %v2773
  %3345 = vmatprep.subr.mxu0 0.0
  %3346 = vmatpush1.msra.mxu0 %v2774
  %3347 = vmatprep.subr.mxu0 0.0
  %3348 = vmatpush1.msra.mxu0 %v2775
  %3349 = vmatprep.subr.mxu0 0.0
  %3350 = vmatpush1.msra.mxu0 %v2776
  %3351 = vmatprep.subr.mxu0 0.0
  %3352 = vmatpush1.msra.mxu0 %v2777
  %3353 = vmatprep.subr.mxu0 0.0
  %3354 = vmatpush1.msra.mxu0 %v2778
  %3355 = vmatprep.subr.mxu0 0.0
  %3356 = vmatpush1.msra.mxu0 %v2779
  %3357 = vmatprep.subr.mxu0 0.0
  %3358 = vmatpush1.msra.mxu0 %v2780
  %3359 = vmatprep.subr.mxu0 0.0
  %3360 = vmatpush1.msra.mxu0 %v2781
  %3361 = vmatprep.subr.mxu0 0.0
  %3362 = vmatpush1.msra.mxu0 %v2782
  %3363 = vmatprep.subr.mxu0 0.0
  %3364 = vmatpush1.msra.mxu0 %v2783
  %3365 = vmatprep.subr.mxu0 0.0
  %3366 = vmatpush1.msra.mxu0 %v2784
  %3367 = vmatprep.subr.mxu0 0.0
  %3368 = vmatpush1.msra.mxu0 %v2785
  %3369 = vmatprep.subr.mxu0 0.0
  %3370 = vmatpush1.msra.mxu0 %v2786
  %3371 = vmatprep.subr.mxu0 0.0
  %3372 = vmatpush1.msra.mxu0 %v2787
  %3373 = vmatprep.subr.mxu0 0.0
  %3374 = vmatpush1.msra.mxu0 %v2788
  %3375 = vmatprep.subr.mxu0 0.0
  %3376 = vmatpush1.msra.mxu0 %v2789
  %3377 = vmatprep.subr.mxu0 0.0
  %3378 = vmatpush1.msra.mxu0 %v2790
  %3379 = vmatprep.subr.mxu0 0.0
  %3380 = vmatpush1.msra.mxu0 %v2791
  %3381 = vmatprep.subr.mxu0 0.0
  %3382 = vmatpush1.msra.mxu0 %v2792
  %3383 = vmatprep.subr.mxu0 0.0
  %3384 = vmatpush1.msra.mxu0 %v2793
  %3385 = vmatprep.subr.mxu0 0.0
  %3386 = vmatpush1.msra.mxu0 %v2794
  %3387 = vmatprep.subr.mxu0 0.0
  %3388 = vmatpush1.msra.mxu0 %v2795
  %3389 = vmatprep.subr.mxu0 0.0
  %3390 = vmatpush1.msra.mxu0 %v2796
  %3391 = vmatprep.subr.mxu0 0.0
  %3392 = vmatpush1.msra.mxu0 %v2797
  %3393 = vmatprep.subr.mxu0 0.0
  %3394 = vmatpush1.msra.mxu0 %v2798
  %3395 = vmatprep.mubr.f32.mxu0 %v2526
  %3396 = vmatmul.mubr.f32.gmra.mrb[0].mxu0 %v2525
  %v3397 = vpop.f32.mrb[0].mxu0
  %v3398 = vadd.f32 %v3323, %v3397
  %v3399 = vpop.f32.mrb[0].mxu0
  %3400 = vmatprep.mubr.f32.mxu0 %v2542
  %3401 = vmatmul.mubr.f32.gmra.mrb[0].mxu0 %v2541
  %v3402 = vpop.f32.mrb[0].mxu0
  %v3403 = vadd.f32 %v3328, %v3402
  %v3404 = vpop.f32.mrb[0].mxu0
  %3405 = vdwg.mxu0
  %v3406 = vadd.f32 %v1739, %v3398
  %v3407 = vadd.f32 %v1740, %v3403
  %v3408 = vld [vmem:[%s13] sm:$0x1]
  %v3409 = vld [vmem:[%s14] sm:$0x1]
  %v3410 = vsel %vm160, %v3406, 0.0
  %3411 = vadd.xlane.f32.xlu0 %v3410
  %v3412 = vpop.xlane.xlu0 %3411
  %v3413 = vsel %vm160, %v3407, 0.0
  %3414 = vadd.xlane.f32.xlu0 %v3413
  %v3415 = vpop.xlane.xlu0 %3414
  %v3416 = vmul.f32 %v3412, %v1704
  %v3417 = vmul.f32 %v3415, %v1704
  %v3418 = vsub.f32 %v3406, %v3416
  %v3419 = vsub.f32 %v3407, %v3417
  %v3420 = vmul.f32 %v3418, %v3418
  %v3421 = vmul.f32 %v3419, %v3419
  %v3422 = vsel %vm160, %v3420, 0.0
  %3423 = vadd.xlane.f32.xlu0 %v3422
  %v3424 = vpop.xlane.xlu0 %3423
  %v3425 = vsel %vm160, %v3421, 0.0
  %3426 = vadd.xlane.f32.xlu0 %v3425
  %v3427 = vpop.xlane.xlu0 %3426
  %v3428 = vmul.f32 %v3424, %v1704
  %v3429 = vmul.f32 %v3427, %v1704
  %v3430 = vadd.f32 %v3428, 1e-05
  %v3431 = vadd.f32 %v3429, 1e-05
  %v3432 = vrsqrt.pop %v3430
  %v3433 = vrsqrt.pop %v3431
  %v3434 = vmul.f32 %v3418, %v3432
  %v3435 = vmul.f32 %v3419, %v3433
  %v3437 = vlaneseq
  %v3438 = vshrl.u32 %v3437, 7
  %v3439 = vsub.s32 0, %v3438
  %v3440 = vrot.slane %v3408, %v3439
  %v3442 = vmul.f32 %v3434, %v3440
  %v3443 = vmul.f32 %v3435, %v3440
  %v3445 = vlaneseq
  %v3446 = vshrl.u32 %v3445, 7
  %v3447 = vsub.s32 0, %v3446
  %v3448 = vrot.slane %v3409, %v3447
  %v3450 = vadd.f32 %v3442, %v3448
  %v3451 = vadd.f32 %v3443, %v3448
  %s3452 = scalar_lea.vmem %s3, 32
  %v3453 = vld [vmem:[%s3452] sm:$0xff]
  %v3454 = vld [vmem:[%s3452 + $0x8] sm:$0xff]
  %v3455 = vld [vmem:[%s3452 + $0x10] sm:$0xff]
  %v3456 = vld [vmem:[%s3452 + $0x18] sm:$0xff]
  %s3457 = scalar_lea.vmem %s4, 1
  %v3458 = vld [vmem:[%s3457] sm:$0x1]
  %v3460 = vlaneseq
  %v3461 = vshrl.u32 %v3460, 7
  %v3462 = vsub.s32 0, %v3461
  %v3463 = vrot.slane %v3458, %v3462
  %v3466 = vsel %vm160, %v3450, 0
  %v3469 = vsel %vm160, %v3451, 0
  %3471 = vmatprep.subr.mxu0 0.0
  %3472 = vmatpush1.msra.mxu0 %v3453
  %3473 = vmatprep.subr.mxu0 0.0
  %3474 = vmatpush1.msra.mxu0 %v3454
  %3475 = vmatprep.subr.mxu0 0.0
  %3476 = vmatpush1.msra.mxu0 %v3455
  %3477 = vmatprep.subr.mxu0 0.0
  %3478 = vmatpush1.msra.mxu0 %v3456
  %3479 = vmatprep.subr.mxu0 0.0
  %3480 = vmatpush1.msra.mxu0 0.0
  %3481 = vmatprep.subr.mxu0 0.0
  %3482 = vmatpush1.msra.mxu0 0.0
  %3483 = vmatprep.subr.mxu0 0.0
  %3484 = vmatpush1.msra.mxu0 0.0
  %3485 = vmatprep.subr.mxu0 0.0
  %3486 = vmatpush1.msra.mxu0 0.0
  %3487 = vmatprep.subr.mxu0 0.0
  %3488 = vmatpush1.msra.mxu0 0.0
  %3489 = vmatprep.subr.mxu0 0.0
  %3490 = vmatpush1.msra.mxu0 0.0
  %3491 = vmatprep.subr.mxu0 0.0
  %3492 = vmatpush1.msra.mxu0 0.0
  %3493 = vmatprep.subr.mxu0 0.0
  %3494 = vmatpush1.msra.mxu0 0.0
  %3495 = vmatprep.subr.mxu0 0.0
  %3496 = vmatpush1.msra.mxu0 0.0
  %3497 = vmatprep.subr.mxu0 0.0
  %3498 = vmatpush1.msra.mxu0 0.0
  %3499 = vmatprep.subr.mxu0 0.0
  %3500 = vmatpush1.msra.mxu0 0.0
  %3501 = vmatprep.subr.mxu0 0.0
  %3502 = vmatpush1.msra.mxu0 0.0
  %3503 = vmatprep.subr.mxu0 0.0
  %3504 = vmatpush1.msra.mxu0 0.0
  %3505 = vmatprep.subr.mxu0 0.0
  %3506 = vmatpush1.msra.mxu0 0.0
  %3507 = vmatprep.subr.mxu0 0.0
  %3508 = vmatpush1.msra.mxu0 0.0
  %3509 = vmatprep.subr.mxu0 0.0
  %3510 = vmatpush1.msra.mxu0 0.0
  %3511 = vmatprep.subr.mxu0 0.0
  %3512 = vmatpush1.msra.mxu0 0.0
  %3513 = vmatprep.subr.mxu0 0.0
  %3514 = vmatpush1.msra.mxu0 0.0
  %3515 = vmatprep.subr.mxu0 0.0
  %3516 = vmatpush1.msra.mxu0 0.0
  %3517 = vmatprep.subr.mxu0 0.0
  %3518 = vmatpush1.msra.mxu0 0.0
  %3519 = vmatprep.subr.mxu0 0.0
  %3520 = vmatpush1.msra.mxu0 0.0
  %3521 = vmatprep.subr.mxu0 0.0
  %3522 = vmatpush1.msra.mxu0 0.0
  %3523 = vmatprep.subr.mxu0 0.0
  %3524 = vmatpush1.msra.mxu0 0.0
  %3525 = vmatprep.subr.mxu0 0.0
  %3526 = vmatpush1.msra.mxu0 0.0
  %3527 = vmatprep.subr.mxu0 0.0
  %3528 = vmatpush1.msra.mxu0 0.0
  %3529 = vmatprep.subr.mxu0 0.0
  %3530 = vmatpush1.msra.mxu0 0.0
  %3531 = vmatprep.subr.mxu0 0.0
  %3532 = vmatpush1.msra.mxu0 0.0
  %3533 = vmatprep.subr.mxu0 0.0
  %3534 = vmatpush1.msra.mxu0 0.0
  %3535 = vmatprep.mubr.f32.mxu0 0.0
  %3536 = vmatmul.mubr.f32.gmra.mrb[0].mxu0 %v3466
  %v3537 = vpop.f32.mrb[0].mxu0
  %v3538 = vadd.f32 %v3463, %v3537
  %v3539 = vpop.f32.mrb[0].mxu0
  %3540 = vmatprep.mubr.f32.mxu0 0.0
  %3541 = vmatmul.mubr.f32.gmra.mrb[0].mxu0 %v3469
  %v3542 = vpop.f32.mrb[0].mxu0
  %v3543 = vadd.f32 %v3463, %v3542
  %v3544 = vpop.f32.mrb[0].mxu0
  %3545 = vdwg.mxu0
  %v3546 = vmul.f32 %v3538, 0.35355338
  %v3547 = vmul.f32 %v3543, 0.35355338
  %3549 = vrot.lane.b32.xlu0 %v3538, 96
  %v3550 = vpop.permute.xlu0 %3549
  %v3552 = vsel %vm247, %v3546, 0
  %v3554 = vsel %vm247, %v3550, 0
  %3556 = vmatprep.subr.mxu0 0.0
  %3557 = vmatpush1.xpose.msra.mxu0 %v3554
  %3558 = vmatprep.subr.mxu0 0.0
  %3559 = vmatpush1.xpose.msra.mxu0 0.0
  %3560 = vmatprep.subr.mxu0 0.0
  %3561 = vmatpush1.xpose.msra.mxu0 0.0
  %3562 = vmatprep.subr.mxu0 0.0
  %3563 = vmatpush1.xpose.msra.mxu0 0.0
  %3564 = vmatprep.subr.mxu0 0.0
  %3565 = vmatpush1.xpose.msra.mxu0 0.0
  %3566 = vmatprep.subr.mxu0 0.0
  %3567 = vmatpush1.xpose.msra.mxu0 0.0
  %3568 = vmatprep.subr.mxu0 0.0
  %3569 = vmatpush1.xpose.msra.mxu0 0.0
  %3570 = vmatprep.subr.mxu0 0.0
  %3571 = vmatpush1.xpose.msra.mxu0 0.0
  %3572 = vmatprep.subr.mxu0 0.0
  %3573 = vmatpush1.xpose.msra.mxu0 0.0
  %3574 = vmatprep.subr.mxu0 0.0
  %3575 = vmatpush1.xpose.msra.mxu0 0.0
  %3576 = vmatprep.subr.mxu0 0.0
  %3577 = vmatpush1.xpose.msra.mxu0 0.0
  %3578 = vmatprep.subr.mxu0 0.0
  %3579 = vmatpush1.xpose.msra.mxu0 0.0
  %3580 = vmatprep.subr.mxu0 0.0
  %3581 = vmatpush1.xpose.msra.mxu0 0.0
  %3582 = vmatprep.subr.mxu0 0.0
  %3583 = vmatpush1.xpose.msra.mxu0 0.0
  %3584 = vmatprep.subr.mxu0 0.0
  %3585 = vmatpush1.xpose.msra.mxu0 0.0
  %3586 = vmatprep.subr.mxu0 0.0
  %3587 = vmatpush1.xpose.msra.mxu0 0.0
  %3588 = vmatprep.subr.mxu0 0.0
  %3589 = vmatpush1.xpose.msra.mxu0 0.0
  %3590 = vmatprep.subr.mxu0 0.0
  %3591 = vmatpush1.xpose.msra.mxu0 0.0
  %3592 = vmatprep.subr.mxu0 0.0
  %3593 = vmatpush1.xpose.msra.mxu0 0.0
  %3594 = vmatprep.subr.mxu0 0.0
  %3595 = vmatpush1.xpose.msra.mxu0 0.0
  %3596 = vmatprep.subr.mxu0 0.0
  %3597 = vmatpush1.xpose.msra.mxu0 0.0
  %3598 = vmatprep.subr.mxu0 0.0
  %3599 = vmatpush1.xpose.msra.mxu0 0.0
  %3600 = vmatprep.subr.mxu0 0.0
  %3601 = vmatpush1.xpose.msra.mxu0 0.0
  %3602 = vmatprep.subr.mxu0 0.0
  %3603 = vmatpush1.xpose.msra.mxu0 0.0
  %3604 = vmatprep.subr.mxu0 0.0
  %3605 = vmatpush1.xpose.msra.mxu0 0.0
  %3606 = vmatprep.subr.mxu0 0.0
  %3607 = vmatpush1.xpose.msra.mxu0 0.0
  %3608 = vmatprep.subr.mxu0 0.0
  %3609 = vmatpush1.xpose.msra.mxu0 0.0
  %3610 = vmatprep.subr.mxu0 0.0
  %3611 = vmatpush1.xpose.msra.mxu0 0.0
  %3612 = vmatprep.subr.mxu0 0.0
  %3613 = vmatpush1.xpose.msra.mxu0 0.0
  %3614 = vmatprep.subr.mxu0 0.0
  %3615 = vmatpush1.xpose.msra.mxu0 0.0
  %3616 = vmatprep.subr.mxu0 0.0
  %3617 = vmatpush1.xpose.msra.mxu0 0.0
  %3618 = vmatprep.subr.mxu0 0.0
  %3619 = vmatpush1.xpose.msra.mxu0 0.0
  %3620 = vmatprep.mubr.f32.mxu0 0.0
  %3621 = vmatmul.mubr.f32.gmra.mrb[0].mxu0 %v3552
  %v3622 = vpop.f32.mrb[0].mxu0
  %v3623 = vadd.f32 0.0, %v3622
  %v3624 = vpop.f32.mrb[0].mxu0
  %3625 = vdwg.mxu0
  %v3626 = vsel %vm247, %v3623, -inf
  %3627 = vmax.xlane.f32.xlu0 %v3626
  %v3628 = vpop.xlane.xlu0 %3627
  %v3629 = vsub.f32 %v3623, %v3628
  %v3630 = vmul.f32 %v3629, 1.442695
  %v3631 = vpow.pop %v3630
  %v3632 = vsel %vm247, %v3631, 0.0
  %3633 = vadd.xlane.f32.xlu0 %v3632
  %v3634 = vpop.xlane.xlu0 %3633
  %v3635 = vrcp.pop %v3634
  %v3636 = vmul.f32 %v3631, %v3635
  %3637 = vrot.lane.b32.xlu0 %v3538, 64
  %v3638 = vpop.permute.xlu0 %3637
  %v3641 = vsel %vm247, %v3636, 0
  %3643 = vmatprep.subr.mxu0 0.0
  %3644 = vmatpush1.msra.mxu0 %v3638
  %3645 = vmatprep.subr.mxu0 0.0
  %3646 = vmatpush1.msra.mxu0 0.0
  %3647 = vmatprep.subr.mxu0 0.0
  %3648 = vmatpush1.msra.mxu0 0.0
  %3649 = vmatprep.subr.mxu0 0.0
  %3650 = vmatpush1.msra.mxu0 0.0
  %3651 = vmatprep.subr.mxu0 0.0
  %3652 = vmatpush1.msra.mxu0 0.0
  %3653 = vmatprep.subr.mxu0 0.0
  %3654 = vmatpush1.msra.mxu0 0.0
  %3655 = vmatprep.subr.mxu0 0.0
  %3656 = vmatpush1.msra.mxu0 0.0
  %3657 = vmatprep.subr.mxu0 0.0
  %3658 = vmatpush1.msra.mxu0 0.0
  %3659 = vmatprep.subr.mxu0 0.0
  %3660 = vmatpush1.msra.mxu0 0.0
  %3661 = vmatprep.subr.mxu0 0.0
  %3662 = vmatpush1.msra.mxu0 0.0
  %3663 = vmatprep.subr.mxu0 0.0
  %3664 = vmatpush1.msra.mxu0 0.0
  %3665 = vmatprep.subr.mxu0 0.0
  %3666 = vmatpush1.msra.mxu0 0.0
  %3667 = vmatprep.subr.mxu0 0.0
  %3668 = vmatpush1.msra.mxu0 0.0
  %3669 = vmatprep.subr.mxu0 0.0
  %3670 = vmatpush1.msra.mxu0 0.0
  %3671 = vmatprep.subr.mxu0 0.0
  %3672 = vmatpush1.msra.mxu0 0.0
  %3673 = vmatprep.subr.mxu0 0.0
  %3674 = vmatpush1.msra.mxu0 0.0
  %3675 = vmatprep.subr.mxu0 0.0
  %3676 = vmatpush1.msra.mxu0 0.0
  %3677 = vmatprep.subr.mxu0 0.0
  %3678 = vmatpush1.msra.mxu0 0.0
  %3679 = vmatprep.subr.mxu0 0.0
  %3680 = vmatpush1.msra.mxu0 0.0
  %3681 = vmatprep.subr.mxu0 0.0
  %3682 = vmatpush1.msra.mxu0 0.0
  %3683 = vmatprep.subr.mxu0 0.0
  %3684 = vmatpush1.msra.mxu0 0.0
  %3685 = vmatprep.subr.mxu0 0.0
  %3686 = vmatpush1.msra.mxu0 0.0
  %3687 = vmatprep.subr.mxu0 0.0
  %3688 = vmatpush1.msra.mxu0 0.0
  %3689 = vmatprep.subr.mxu0 0.0
  %3690 = vmatpush1.msra.mxu0 0.0
  %3691 = vmatprep.subr.mxu0 0.0
  %3692 = vmatpush1.msra.mxu0 0.0
  %3693 = vmatprep.subr.mxu0 0.0
  %3694 = vmatpush1.msra.mxu0 0.0
  %3695 = vmatprep.subr.mxu0 0.0
  %3696 = vmatpush1.msra.mxu0 0.0
  %3697 = vmatprep.subr.mxu0 0.0
  %3698 = vmatpush1.msra.mxu0 0.0
  %3699 = vmatprep.subr.mxu0 0.0
  %3700 = vmatpush1.msra.mxu0 0.0
  %3701 = vmatprep.subr.mxu0 0.0
  %3702 = vmatpush1.msra.mxu0 0.0
  %3703 = vmatprep.subr.mxu0 0.0
  %3704 = vmatpush1.msra.mxu0 0.0
  %3705 = vmatprep.subr.mxu0 0.0
  %3706 = vmatpush1.msra.mxu0 0.0
  %3707 = vmatprep.mubr.f32.mxu0 0.0
  %3708 = vmatmul.mubr.f32.gmra.mrb[0].mxu0 %v3641
  %v3709 = vpop.f32.mrb[0].mxu0
  %v3710 = vadd.f32 0.0, %v3709
  %v3711 = vpop.f32.mrb[0].mxu0
  %3712 = vdwg.mxu0
  %3713 = vst.msk [vmem:[#allocation2] sm:$0xff] %vm247, %v3710
  %3714 = vrot.lane.b32.xlu0 %v3546, 120
  %v3715 = vpop.permute.xlu0 %3714
  %3716 = vrot.lane.b32.xlu0 %v3538, 88
  %v3717 = vpop.permute.xlu0 %3716
  %v3718 = vsel %vm247, %v3715, 0
  %v3720 = vsel %vm247, %v3717, 0
  %3722 = vmatprep.subr.mxu0 0.0
  %3723 = vmatpush1.xpose.msra.mxu0 %v3720
  %3724 = vmatprep.subr.mxu0 0.0
  %3725 = vmatpush1.xpose.msra.mxu0 0.0
  %3726 = vmatprep.subr.mxu0 0.0
  %3727 = vmatpush1.xpose.msra.mxu0 0.0
  %3728 = vmatprep.subr.mxu0 0.0
  %3729 = vmatpush1.xpose.msra.mxu0 0.0
  %3730 = vmatprep.subr.mxu0 0.0
  %3731 = vmatpush1.xpose.msra.mxu0 0.0
  %3732 = vmatprep.subr.mxu0 0.0
  %3733 = vmatpush1.xpose.msra.mxu0 0.0
  %3734 = vmatprep.subr.mxu0 0.0
  %3735 = vmatpush1.xpose.msra.mxu0 0.0
  %3736 = vmatprep.subr.mxu0 0.0
  %3737 = vmatpush1.xpose.msra.mxu0 0.0
  %3738 = vmatprep.subr.mxu0 0.0
  %3739 = vmatpush1.xpose.msra.mxu0 0.0
  %3740 = vmatprep.subr.mxu0 0.0
  %3741 = vmatpush1.xpose.msra.mxu0 0.0
  %3742 = vmatprep.subr.mxu0 0.0
  %3743 = vmatpush1.xpose.msra.mxu0 0.0
  %3744 = vmatprep.subr.mxu0 0.0
  %3745 = vmatpush1.xpose.msra.mxu0 0.0
  %3746 = vmatprep.subr.mxu0 0.0
  %3747 = vmatpush1.xpose.msra.mxu0 0.0
  %3748 = vmatprep.subr.mxu0 0.0
  %3749 = vmatpush1.xpose.msra.mxu0 0.0
  %3750 = vmatprep.subr.mxu0 0.0
  %3751 = vmatpush1.xpose.msra.mxu0 0.0
  %3752 = vmatprep.subr.mxu0 0.0
  %3753 = vmatpush1.xpose.msra.mxu0 0.0
  %3754 = vmatprep.subr.mxu0 0.0
  %3755 = vmatpush1.xpose.msra.mxu0 0.0
  %3756 = vmatprep.subr.mxu0 0.0
  %3757 = vmatpush1.xpose.msra.mxu0 0.0
  %3758 = vmatprep.subr.mxu0 0.0
  %3759 = vmatpush1.xpose.msra.mxu0 0.0
  %3760 = vmatprep.subr.mxu0 0.0
  %3761 = vmatpush1.xpose.msra.mxu0 0.0
  %3762 = vmatprep.subr.mxu0 0.0
  %3763 = vmatpush1.xpose.msra.mxu0 0.0
  %3764 = vmatprep.subr.mxu0 0.0
  %3765 = vmatpush1.xpose.msra.mxu0 0.0
  %3766 = vmatprep.subr.mxu0 0.0
  %3767 = vmatpush1.xpose.msra.mxu0 0.0
  %3768 = vmatprep.subr.mxu0 0.0
  %3769 = vmatpush1.xpose.msra.mxu0 0.0
  %3770 = vmatprep.subr.mxu0 0.0
  %3771 = vmatpush1.xpose.msra.mxu0 0.0
  %3772 = vmatprep.subr.mxu0 0.0
  %3773 = vmatpush1.xpose.msra.mxu0 0.0
  %3774 = vmatprep.subr.mxu0 0.0
  %3775 = vmatpush1.xpose.msra.mxu0 0.0
  %3776 = vmatprep.subr.mxu0 0.0
  %3777 = vmatpush1.xpose.msra.mxu0 0.0
  %3778 = vmatprep.subr.mxu0 0.0
  %3779 = vmatpush1.xpose.msra.mxu0 0.0
  %3780 = vmatprep.subr.mxu0 0.0
  %3781 = vmatpush1.xpose.msra.mxu0 0.0
  %3782 = vmatprep.subr.mxu0 0.0
  %3783 = vmatpush1.xpose.msra.mxu0 0.0
  %3784 = vmatprep.subr.mxu0 0.0
  %3785 = vmatpush1.xpose.msra.mxu0 0.0
  %3786 = vmatprep.mubr.f32.mxu0 0.0
  %3787 = vmatmul.mubr.f32.gmra.mrb[0].mxu0 %v3718
  %v3788 = vpop.f32.mrb[0].mxu0
  %v3789 = vadd.f32 0.0, %v3788
  %v3790 = vpop.f32.mrb[0].mxu0
  %3791 = vdwg.mxu0
  %v3792 = vsel %vm247, %v3789, -inf
  %3793 = vmax.xlane.f32.xlu0 %v3792
  %v3794 = vpop.xlane.xlu0 %3793
  %v3795 = vsub.f32 %v3789, %v3794
  %v3796 = vmul.f32 %v3795, 1.442695
  %v3797 = vpow.pop %v3796
  %v3798 = vsel %vm247, %v3797, 0.0
  %3799 = vadd.xlane.f32.xlu0 %v3798
  %v3800 = vpop.xlane.xlu0 %3799
  %v3801 = vrcp.pop %v3800
  %v3802 = vmul.f32 %v3797, %v3801
  %3803 = vrot.lane.b32.xlu0 %v3538, 56
  %v3804 = vpop.permute.xlu0 %3803
  %v3807 = vsel %vm247, %v3802, 0
  %3809 = vmatprep.subr.mxu0 0.0
  %3810 = vmatpush1.msra.mxu0 %v3804
  %3811 = vmatprep.subr.mxu0 0.0
  %3812 = vmatpush1.msra.mxu0 0.0
  %3813 = vmatprep.subr.mxu0 0.0
  %3814 = vmatpush1.msra.mxu0 0.0
  %3815 = vmatprep.subr.mxu0 0.0
  %3816 = vmatpush1.msra.mxu0 0.0
  %3817 = vmatprep.subr.mxu0 0.0
  %3818 = vmatpush1.msra.mxu0 0.0
  %3819 = vmatprep.subr.mxu0 0.0
  %3820 = vmatpush1.msra.mxu0 0.0
  %3821 = vmatprep.subr.mxu0 0.0
  %3822 = vmatpush1.msra.mxu0 0.0
  %3823 = vmatprep.subr.mxu0 0.0
  %3824 = vmatpush1.msra.mxu0 0.0
  %3825 = vmatprep.subr.mxu0 0.0
  %3826 = vmatpush1.msra.mxu0 0.0
  %3827 = vmatprep.subr.mxu0 0.0
  %3828 = vmatpush1.msra.mxu0 0.0
  %3829 = vmatprep.subr.mxu0 0.0
  %3830 = vmatpush1.msra.mxu0 0.0
  %3831 = vmatprep.subr.mxu0 0.0
  %3832 = vmatpush1.msra.mxu0 0.0
  %3833 = vmatprep.subr.mxu0 0.0
  %3834 = vmatpush1.msra.mxu0 0.0
  %3835 = vmatprep.subr.mxu0 0.0
  %3836 = vmatpush1.msra.mxu0 0.0
  %3837 = vmatprep.subr.mxu0 0.0
  %3838 = vmatpush1.msra.mxu0 0.0
  %3839 = vmatprep.subr.mxu0 0.0
  %3840 = vmatpush1.msra.mxu0 0.0
  %3841 = vmatprep.subr.mxu0 0.0
  %3842 = vmatpush1.msra.mxu0 0.0
  %3843 = vmatprep.subr.mxu0 0.0
  %3844 = vmatpush1.msra.mxu0 0.0
  %3845 = vmatprep.subr.mxu0 0.0
  %3846 = vmatpush1.msra.mxu0 0.0
  %3847 = vmatprep.subr.mxu0 0.0
  %3848 = vmatpush1.msra.mxu0 0.0
  %3849 = vmatprep.subr.mxu0 0.0
  %3850 = vmatpush1.msra.mxu0 0.0
  %3851 = vmatprep.subr.mxu0 0.0
  %3852 = vmatpush1.msra.mxu0 0.0
  %3853 = vmatprep.subr.mxu0 0.0
  %3854 = vmatpush1.msra.mxu0 0.0
  %3855 = vmatprep.subr.mxu0 0.0
  %3856 = vmatpush1.msra.mxu0 0.0
  %3857 = vmatprep.subr.mxu0 0.0
  %3858 = vmatpush1.msra.mxu0 0.0
  %3859 = vmatprep.subr.mxu0 0.0
  %3860 = vmatpush1.msra.mxu0 0.0
  %3861 = vmatprep.subr.mxu0 0.0
  %3862 = vmatpush1.msra.mxu0 0.0
  %3863 = vmatprep.subr.mxu0 0.0
  %3864 = vmatpush1.msra.mxu0 0.0
  %3865 = vmatprep.subr.mxu0 0.0
  %3866 = vmatpush1.msra.mxu0 0.0
  %3867 = vmatprep.subr.mxu0 0.0
  %3868 = vmatpush1.msra.mxu0 0.0
  %3869 = vmatprep.subr.mxu0 0.0
  %3870 = vmatpush1.msra.mxu0 0.0
  %3871 = vmatprep.subr.mxu0 0.0
  %3872 = vmatpush1.msra.mxu0 0.0
  %3873 = vmatprep.mubr.f32.mxu0 0.0
  %3874 = vmatmul.mubr.f32.gmra.mrb[0].mxu0 %v3807
  %v3875 = vpop.f32.mrb[0].mxu0
  %v3876 = vadd.f32 0.0, %v3875
  %v3877 = vpop.f32.mrb[0].mxu0
  %3878 = vdwg.mxu0
  %3880 = vrot.lane.b32.xlu0 %v3876, 8
  %v3881 = vpop.permute.xlu0 %3880
  %3883 = vst.msk [vmem:[#allocation2] sm:$0xff] %vm580, %v3881
  %3884 = vrot.lane.b32.xlu0 %v3546, 112
  %v3885 = vpop.permute.xlu0 %3884
  %3886 = vrot.lane.b32.xlu0 %v3538, 80
  %v3887 = vpop.permute.xlu0 %3886
  %v3888 = vsel %vm247, %v3885, 0
  %v3890 = vsel %vm247, %v3887, 0
  %3892 = vmatprep.subr.mxu0 0.0
  %3893 = vmatpush1.xpose.msra.mxu0 %v3890
  %3894 = vmatprep.subr.mxu0 0.0
  %3895 = vmatpush1.xpose.msra.mxu0 0.0
  %3896 = vmatprep.subr.mxu0 0.0
  %3897 = vmatpush1.xpose.msra.mxu0 0.0
  %3898 = vmatprep.subr.mxu0 0.0
  %3899 = vmatpush1.xpose.msra.mxu0 0.0
  %3900 = vmatprep.subr.mxu0 0.0
  %3901 = vmatpush1.xpose.msra.mxu0 0.0
  %3902 = vmatprep.subr.mxu0 0.0
  %3903 = vmatpush1.xpose.msra.mxu0 0.0
  %3904 = vmatprep.subr.mxu0 0.0
  %3905 = vmatpush1.xpose.msra.mxu0 0.0
  %3906 = vmatprep.subr.mxu0 0.0
  %3907 = vmatpush1.xpose.msra.mxu0 0.0
  %3908 = vmatprep.subr.mxu0 0.0
  %3909 = vmatpush1.xpose.msra.mxu0 0.0
  %3910 = vmatprep.subr.mxu0 0.0
  %3911 = vmatpush1.xpose.msra.mxu0 0.0
  %3912 = vmatprep.subr.mxu0 0.0
  %3913 = vmatpush1.xpose.msra.mxu0 0.0
  %3914 = vmatprep.subr.mxu0 0.0
  %3915 = vmatpush1.xpose.msra.mxu0 0.0
  %3916 = vmatprep.subr.mxu0 0.0
  %3917 = vmatpush1.xpose.msra.mxu0 0.0
  %3918 = vmatprep.subr.mxu0 0.0
  %3919 = vmatpush1.xpose.msra.mxu0 0.0
  %3920 = vmatprep.subr.mxu0 0.0
  %3921 = vmatpush1.xpose.msra.mxu0 0.0
  %3922 = vmatprep.subr.mxu0 0.0
  %3923 = vmatpush1.xpose.msra.mxu0 0.0
  %3924 = vmatprep.subr.mxu0 0.0
  %3925 = vmatpush1.xpose.msra.mxu0 0.0
  %3926 = vmatprep.subr.mxu0 0.0
  %3927 = vmatpush1.xpose.msra.mxu0 0.0
  %3928 = vmatprep.subr.mxu0 0.0
  %3929 = vmatpush1.xpose.msra.mxu0 0.0
  %3930 = vmatprep.subr.mxu0 0.0
  %3931 = vmatpush1.xpose.msra.mxu0 0.0
  %3932 = vmatprep.subr.mxu0 0.0
  %3933 = vmatpush1.xpose.msra.mxu0 0.0
  %3934 = vmatprep.subr.mxu0 0.0
  %3935 = vmatpush1.xpose.msra.mxu0 0.0
  %3936 = vmatprep.subr.mxu0 0.0
  %3937 = vmatpush1.xpose.msra.mxu0 0.0
  %3938 = vmatprep.subr.mxu0 0.0
  %3939 = vmatpush1.xpose.msra.mxu0 0.0
  %3940 = vmatprep.subr.mxu0 0.0
  %3941 = vmatpush1.xpose.msra.mxu0 0.0
  %3942 = vmatprep.subr.mxu0 0.0
  %3943 = vmatpush1.xpose.msra.mxu0 0.0
  %3944 = vmatprep.subr.mxu0 0.0
  %3945 = vmatpush1.xpose.msra.mxu0 0.0
  %3946 = vmatprep.subr.mxu0 0.0
  %3947 = vmatpush1.xpose.msra.mxu0 0.0
  %3948 = vmatprep.subr.mxu0 0.0
  %3949 = vmatpush1.xpose.msra.mxu0 0.0
  %3950 = vmatprep.subr.mxu0 0.0
  %3951 = vmatpush1.xpose.msra.mxu0 0.0
  %3952 = vmatprep.subr.mxu0 0.0
  %3953 = vmatpush1.xpose.msra.mxu0 0.0
  %3954 = vmatprep.subr.mxu0 0.0
  %3955 = vmatpush1.xpose.msra.mxu0 0.0
  %3956 = vmatprep.mubr.f32.mxu0 0.0
  %3957 = vmatmul.mubr.f32.gmra.mrb[0].mxu0 %v3888
  %v3958 = vpop.f32.mrb[0].mxu0
  %v3959 = vadd.f32 0.0, %v3958
  %v3960 = vpop.f32.mrb[0].mxu0
  %3961 = vdwg.mxu0
  %v3962 = vsel %vm247, %v3959, -inf
  %3963 = vmax.xlane.f32.xlu0 %v3962
  %v3964 = vpop.xlane.xlu0 %3963
  %v3965 = vsub.f32 %v3959, %v3964
  %v3966 = vmul.f32 %v3965, 1.442695
  %v3967 = vpow.pop %v3966
  %v3968 = vsel %vm247, %v3967, 0.0
  %3969 = vadd.xlane.f32.xlu0 %v3968
  %v3970 = vpop.xlane.xlu0 %3969
  %v3971 = vrcp.pop %v3970
  %v3972 = vmul.f32 %v3967, %v3971
  %3973 = vrot.lane.b32.xlu0 %v3538, 48
  %v3974 = vpop.permute.xlu0 %3973
  %v3977 = vsel %vm247, %v3972, 0
  %3979 = vmatprep.subr.mxu0 0.0
  %3980 = vmatpush1.msra.mxu0 %v3974
  %3981 = vmatprep.subr.mxu0 0.0
  %3982 = vmatpush1.msra.mxu0 0.0
  %3983 = vmatprep.subr.mxu0 0.0
  %3984 = vmatpush1.msra.mxu0 0.0
  %3985 = vmatprep.subr.mxu0 0.0
  %3986 = vmatpush1.msra.mxu0 0.0
  %3987 = vmatprep.subr.mxu0 0.0
  %3988 = vmatpush1.msra.mxu0 0.0
  %3989 = vmatprep.subr.mxu0 0.0
  %3990 = vmatpush1.msra.mxu0 0.0
  %3991 = vmatprep.subr.mxu0 0.0
  %3992 = vmatpush1.msra.mxu0 0.0
  %3993 = vmatprep.subr.mxu0 0.0
  %3994 = vmatpush1.msra.mxu0 0.0
  %3995 = vmatprep.subr.mxu0 0.0
  %3996 = vmatpush1.msra.mxu0 0.0
  %3997 = vmatprep.subr.mxu0 0.0
  %3998 = vmatpush1.msra.mxu0 0.0
  %3999 = vmatprep.subr.mxu0 0.0
  %4000 = vmatpush1.msra.mxu0 0.0
  %4001 = vmatprep.subr.mxu0 0.0
  %4002 = vmatpush1.msra.mxu0 0.0
  %4003 = vmatprep.subr.mxu0 0.0
  %4004 = vmatpush1.msra.mxu0 0.0
  %4005 = vmatprep.subr.mxu0 0.0
  %4006 = vmatpush1.msra.mxu0 0.0
  %4007 = vmatprep.subr.mxu0 0.0
  %4008 = vmatpush1.msra.mxu0 0.0
  %4009 = vmatprep.subr.mxu0 0.0
  %4010 = vmatpush1.msra.mxu0 0.0
  %4011 = vmatprep.subr.mxu0 0.0
  %4012 = vmatpush1.msra.mxu0 0.0
  %4013 = vmatprep.subr.mxu0 0.0
  %4014 = vmatpush1.msra.mxu0 0.0
  %4015 = vmatprep.subr.mxu0 0.0
  %4016 = vmatpush1.msra.mxu0 0.0
  %4017 = vmatprep.subr.mxu0 0.0
  %4018 = vmatpush1.msra.mxu0 0.0
  %4019 = vmatprep.subr.mxu0 0.0
  %4020 = vmatpush1.msra.mxu0 0.0
  %4021 = vmatprep.subr.mxu0 0.0
  %4022 = vmatpush1.msra.mxu0 0.0
  %4023 = vmatprep.subr.mxu0 0.0
  %4024 = vmatpush1.msra.mxu0 0.0
  %4025 = vmatprep.subr.mxu0 0.0
  %4026 = vmatpush1.msra.mxu0 0.0
  %4027 = vmatprep.subr.mxu0 0.0
  %4028 = vmatpush1.msra.mxu0 0.0
  %4029 = vmatprep.subr.mxu0 0.0
  %4030 = vmatpush1.msra.mxu0 0.0
  %4031 = vmatprep.subr.mxu0 0.0
  %4032 = vmatpush1.msra.mxu0 0.0
  %4033 = vmatprep.subr.mxu0 0.0
  %4034 = vmatpush1.msra.mxu0 0.0
  %4035 = vmatprep.subr.mxu0 0.0
  %4036 = vmatpush1.msra.mxu0 0.0
  %4037 = vmatprep.subr.mxu0 0.0
  %4038 = vmatpush1.msra.mxu0 0.0
  %4039 = vmatprep.subr.mxu0 0.0
  %4040 = vmatpush1.msra.mxu0 0.0
  %4041 = vmatprep.subr.mxu0 0.0
  %4042 = vmatpush1.msra.mxu0 0.0
  %4043 = vmatprep.mubr.f32.mxu0 0.0
  %4044 = vmatmul.mubr.f32.gmra.mrb[0].mxu0 %v3977
  %v4045 = vpop.f32.mrb[0].mxu0
  %v4046 = vadd.f32 0.0, %v4045
  %v4047 = vpop.f32.mrb[0].mxu0
  %4048 = vdwg.mxu0
  %4050 = vrot.lane.b32.xlu0 %v4046, 16
  %v4051 = vpop.permute.xlu0 %4050
  %4053 = vst.msk [vmem:[#allocation2] sm:$0xff] %vm751, %v4051
  %4054 = vrot.lane.b32.xlu0 %v3546, 104
  %v4055 = vpop.permute.xlu0 %4054
  %4056 = vrot.lane.b32.xlu0 %v3538, 72
  %v4057 = vpop.permute.xlu0 %4056
  %v4058 = vsel %vm247, %v4055, 0
  %v4060 = vsel %vm247, %v4057, 0
  %4062 = vmatprep.subr.mxu0 0.0
  %4063 = vmatpush1.xpose.msra.mxu0 %v4060
  %4064 = vmatprep.subr.mxu0 0.0
  %4065 = vmatpush1.xpose.msra.mxu0 0.0
  %4066 = vmatprep.subr.mxu0 0.0
  %4067 = vmatpush1.xpose.msra.mxu0 0.0
  %4068 = vmatprep.subr.mxu0 0.0
  %4069 = vmatpush1.xpose.msra.mxu0 0.0
  %4070 = vmatprep.subr.mxu0 0.0
  %4071 = vmatpush1.xpose.msra.mxu0 0.0
  %4072 = vmatprep.subr.mxu0 0.0
  %4073 = vmatpush1.xpose.msra.mxu0 0.0
  %4074 = vmatprep.subr.mxu0 0.0
  %4075 = vmatpush1.xpose.msra.mxu0 0.0
  %4076 = vmatprep.subr.mxu0 0.0
  %4077 = vmatpush1.xpose.msra.mxu0 0.0
  %4078 = vmatprep.subr.mxu0 0.0
  %4079 = vmatpush1.xpose.msra.mxu0 0.0
  %4080 = vmatprep.subr.mxu0 0.0
  %4081 = vmatpush1.xpose.msra.mxu0 0.0
  %4082 = vmatprep.subr.mxu0 0.0
  %4083 = vmatpush1.xpose.msra.mxu0 0.0
  %4084 = vmatprep.subr.mxu0 0.0
  %4085 = vmatpush1.xpose.msra.mxu0 0.0
  %4086 = vmatprep.subr.mxu0 0.0
  %4087 = vmatpush1.xpose.msra.mxu0 0.0
  %4088 = vmatprep.subr.mxu0 0.0
  %4089 = vmatpush1.xpose.msra.mxu0 0.0
  %4090 = vmatprep.subr.mxu0 0.0
  %4091 = vmatpush1.xpose.msra.mxu0 0.0
  %4092 = vmatprep.subr.mxu0 0.0
  %4093 = vmatpush1.xpose.msra.mxu0 0.0
  %4094 = vmatprep.subr.mxu0 0.0
  %4095 = vmatpush1.xpose.msra.mxu0 0.0
  %4096 = vmatprep.subr.mxu0 0.0
  %4097 = vmatpush1.xpose.msra.mxu0 0.0
  %4098 = vmatprep.subr.mxu0 0.0
  %4099 = vmatpush1.xpose.msra.mxu0 0.0
  %4100 = vmatprep.subr.mxu0 0.0
  %4101 = vmatpush1.xpose.msra.mxu0 0.0
  %4102 = vmatprep.subr.mxu0 0.0
  %4103 = vmatpush1.xpose.msra.mxu0 0.0
  %4104 = vmatprep.subr.mxu0 0.0
  %4105 = vmatpush1.xpose.msra.mxu0 0.0
  %4106 = vmatprep.subr.mxu0 0.0
  %4107 = vmatpush1.xpose.msra.mxu0 0.0
  %4108 = vmatprep.subr.mxu0 0.0
  %4109 = vmatpush1.xpose.msra.mxu0 0.0
  %4110 = vmatprep.subr.mxu0 0.0
  %4111 = vmatpush1.xpose.msra.mxu0 0.0
  %4112 = vmatprep.subr.mxu0 0.0
  %4113 = vmatpush1.xpose.msra.mxu0 0.0
  %4114 = vmatprep.subr.mxu0 0.0
  %4115 = vmatpush1.xpose.msra.mxu0 0.0
  %4116 = vmatprep.subr.mxu0 0.0
  %4117 = vmatpush1.xpose.msra.mxu0 0.0
  %4118 = vmatprep.subr.mxu0 0.0
  %4119 = vmatpush1.xpose.msra.mxu0 0.0
  %4120 = vmatprep.subr.mxu0 0.0
  %4121 = vmatpush1.xpose.msra.mxu0 0.0
  %4122 = vmatprep.subr.mxu0 0.0
  %4123 = vmatpush1.xpose.msra.mxu0 0.0
  %4124 = vmatprep.subr.mxu0 0.0
  %4125 = vmatpush1.xpose.msra.mxu0 0.0
  %4126 = vmatprep.mubr.f32.mxu0 0.0
  %4127 = vmatmul.mubr.f32.gmra.mrb[0].mxu0 %v4058
  %v4128 = vpop.f32.mrb[0].mxu0
  %v4129 = vadd.f32 0.0, %v4128
  %v4130 = vpop.f32.mrb[0].mxu0
  %4131 = vdwg.mxu0
  %v4132 = vsel %vm247, %v4129, -inf
  %4133 = vmax.xlane.f32.xlu0 %v4132
  %v4134 = vpop.xlane.xlu0 %4133
  %v4135 = vsub.f32 %v4129, %v4134
  %v4136 = vmul.f32 %v4135, 1.442695
  %v4137 = vpow.pop %v4136
  %v4138 = vsel %vm247, %v4137, 0.0
  %4139 = vadd.xlane.f32.xlu0 %v4138
  %v4140 = vpop.xlane.xlu0 %4139
  %v4141 = vrcp.pop %v4140
  %v4142 = vmul.f32 %v4137, %v4141
  %4143 = vrot.lane.b32.xlu0 %v3538, 40
  %v4144 = vpop.permute.xlu0 %4143
  %v4147 = vsel %vm247, %v4142, 0
  %4149 = vmatprep.subr.mxu0 0.0
  %4150 = vmatpush1.msra.mxu0 %v4144
  %4151 = vmatprep.subr.mxu0 0.0
  %4152 = vmatpush1.msra.mxu0 0.0
  %4153 = vmatprep.subr.mxu0 0.0
  %4154 = vmatpush1.msra.mxu0 0.0
  %4155 = vmatprep.subr.mxu0 0.0
  %4156 = vmatpush1.msra.mxu0 0.0
  %4157 = vmatprep.subr.mxu0 0.0
  %4158 = vmatpush1.msra.mxu0 0.0
  %4159 = vmatprep.subr.mxu0 0.0
  %4160 = vmatpush1.msra.mxu0 0.0
  %4161 = vmatprep.subr.mxu0 0.0
  %4162 = vmatpush1.msra.mxu0 0.0
  %4163 = vmatprep.subr.mxu0 0.0
  %4164 = vmatpush1.msra.mxu0 0.0
  %4165 = vmatprep.subr.mxu0 0.0
  %4166 = vmatpush1.msra.mxu0 0.0
  %4167 = vmatprep.subr.mxu0 0.0
  %4168 = vmatpush1.msra.mxu0 0.0
  %4169 = vmatprep.subr.mxu0 0.0
  %4170 = vmatpush1.msra.mxu0 0.0
  %4171 = vmatprep.subr.mxu0 0.0
  %4172 = vmatpush1.msra.mxu0 0.0
  %4173 = vmatprep.subr.mxu0 0.0
  %4174 = vmatpush1.msra.mxu0 0.0
  %4175 = vmatprep.subr.mxu0 0.0
  %4176 = vmatpush1.msra.mxu0 0.0
  %4177 = vmatprep.subr.mxu0 0.0
  %4178 = vmatpush1.msra.mxu0 0.0
  %4179 = vmatprep.subr.mxu0 0.0
  %4180 = vmatpush1.msra.mxu0 0.0
  %4181 = vmatprep.subr.mxu0 0.0
  %4182 = vmatpush1.msra.mxu0 0.0
  %4183 = vmatprep.subr.mxu0 0.0
  %4184 = vmatpush1.msra.mxu0 0.0
  %4185 = vmatprep.subr.mxu0 0.0
  %4186 = vmatpush1.msra.mxu0 0.0
  %4187 = vmatprep.subr.mxu0 0.0
  %4188 = vmatpush1.msra.mxu0 0.0
  %4189 = vmatprep.subr.mxu0 0.0
  %4190 = vmatpush1.msra.mxu0 0.0
  %4191 = vmatprep.subr.mxu0 0.0
  %4192 = vmatpush1.msra.mxu0 0.0
  %4193 = vmatprep.subr.mxu0 0.0
  %4194 = vmatpush1.msra.mxu0 0.0
  %4195 = vmatprep.subr.mxu0 0.0
  %4196 = vmatpush1.msra.mxu0 0.0
  %4197 = vmatprep.subr.mxu0 0.0
  %4198 = vmatpush1.msra.mxu0 0.0
  %4199 = vmatprep.subr.mxu0 0.0
  %4200 = vmatpush1.msra.mxu0 0.0
  %4201 = vmatprep.subr.mxu0 0.0
  %4202 = vmatpush1.msra.mxu0 0.0
  %4203 = vmatprep.subr.mxu0 0.0
  %4204 = vmatpush1.msra.mxu0 0.0
  %4205 = vmatprep.subr.mxu0 0.0
  %4206 = vmatpush1.msra.mxu0 0.0
  %4207 = vmatprep.subr.mxu0 0.0
  %4208 = vmatpush1.msra.mxu0 0.0
  %4209 = vmatprep.subr.mxu0 0.0
  %4210 = vmatpush1.msra.mxu0 0.0
  %4211 = vmatprep.subr.mxu0 0.0
  %4212 = vmatpush1.msra.mxu0 0.0
  %4213 = vmatprep.mubr.f32.mxu0 0.0
  %4214 = vmatmul.mubr.f32.gmra.mrb[0].mxu0 %v4147
  %v4215 = vpop.f32.mrb[0].mxu0
  %v4216 = vadd.f32 0.0, %v4215
  %v4217 = vpop.f32.mrb[0].mxu0
  %4218 = vdwg.mxu0
  %4220 = vrot.lane.b32.xlu0 %v4216, 24
  %v4221 = vpop.permute.xlu0 %4220
  %4223 = vst.msk [vmem:[#allocation2] sm:$0xff] %vm922, %v4221
  %4225 = vrot.lane.b32.xlu0 %v3543, 96
  %v4226 = vpop.permute.xlu0 %4225
  %v4228 = vsel %vm247, %v3547, 0
  %v4230 = vsel %vm247, %v4226, 0
  %4232 = vmatprep.subr.mxu0 0.0
  %4233 = vmatpush1.xpose.msra.mxu0 %v4230
  %4234 = vmatprep.subr.mxu0 0.0
  %4235 = vmatpush1.xpose.msra.mxu0 0.0
  %4236 = vmatprep.subr.mxu0 0.0
  %4237 = vmatpush1.xpose.msra.mxu0 0.0
  %4238 = vmatprep.subr.mxu0 0.0
  %4239 = vmatpush1.xpose.msra.mxu0 0.0
  %4240 = vmatprep.subr.mxu0 0.0
  %4241 = vmatpush1.xpose.msra.mxu0 0.0
  %4242 = vmatprep.subr.mxu0 0.0
  %4243 = vmatpush1.xpose.msra.mxu0 0.0
  %4244 = vmatprep.subr.mxu0 0.0
  %4245 = vmatpush1.xpose.msra.mxu0 0.0
  %4246 = vmatprep.subr.mxu0 0.0
  %4247 = vmatpush1.xpose.msra.mxu0 0.0
  %4248 = vmatprep.subr.mxu0 0.0
  %4249 = vmatpush1.xpose.msra.mxu0 0.0
  %4250 = vmatprep.subr.mxu0 0.0
  %4251 = vmatpush1.xpose.msra.mxu0 0.0
  %4252 = vmatprep.subr.mxu0 0.0
  %4253 = vmatpush1.xpose.msra.mxu0 0.0
  %4254 = vmatprep.subr.mxu0 0.0
  %4255 = vmatpush1.xpose.msra.mxu0 0.0
  %4256 = vmatprep.subr.mxu0 0.0
  %4257 = vmatpush1.xpose.msra.mxu0 0.0
  %4258 = vmatprep.subr.mxu0 0.0
  %4259 = vmatpush1.xpose.msra.mxu0 0.0
  %4260 = vmatprep.subr.mxu0 0.0
  %4261 = vmatpush1.xpose.msra.mxu0 0.0
  %4262 = vmatprep.subr.mxu0 0.0
  %4263 = vmatpush1.xpose.msra.mxu0 0.0
  %4264 = vmatprep.subr.mxu0 0.0
  %4265 = vmatpush1.xpose.msra.mxu0 0.0
  %4266 = vmatprep.subr.mxu0 0.0
  %4267 = vmatpush1.xpose.msra.mxu0 0.0
  %4268 = vmatprep.subr.mxu0 0.0
  %4269 = vmatpush1.xpose.msra.mxu0 0.0
  %4270 = vmatprep.subr.mxu0 0.0
  %4271 = vmatpush1.xpose.msra.mxu0 0.0
  %4272 = vmatprep.subr.mxu0 0.0
  %4273 = vmatpush1.xpose.msra.mxu0 0.0
  %4274 = vmatprep.subr.mxu0 0.0
  %4275 = vmatpush1.xpose.msra.mxu0 0.0
  %4276 = vmatprep.subr.mxu0 0.0
  %4277 = vmatpush1.xpose.msra.mxu0 0.0
  %4278 = vmatprep.subr.mxu0 0.0
  %4279 = vmatpush1.xpose.msra.mxu0 0.0
  %4280 = vmatprep.subr.mxu0 0.0
  %4281 = vmatpush1.xpose.msra.mxu0 0.0
  %4282 = vmatprep.subr.mxu0 0.0
  %4283 = vmatpush1.xpose.msra.mxu0 0.0
  %4284 = vmatprep.subr.mxu0 0.0
  %4285 = vmatpush1.xpose.msra.mxu0 0.0
  %4286 = vmatprep.subr.mxu0 0.0
  %4287 = vmatpush1.xpose.msra.mxu0 0.0
  %4288 = vmatprep.subr.mxu0 0.0
  %4289 = vmatpush1.xpose.msra.mxu0 0.0
  %4290 = vmatprep.subr.mxu0 0.0
  %4291 = vmatpush1.xpose.msra.mxu0 0.0
  %4292 = vmatprep.subr.mxu0 0.0
  %4293 = vmatpush1.xpose.msra.mxu0 0.0
  %4294 = vmatprep.subr.mxu0 0.0
  %4295 = vmatpush1.xpose.msra.mxu0 0.0
  %4296 = vmatprep.mubr.f32.mxu0 0.0
  %4297 = vmatmul.mubr.f32.gmra.mrb[0].mxu0 %v4228
  %v4298 = vpop.f32.mrb[0].mxu0
  %v4299 = vadd.f32 0.0, %v4298
  %v4300 = vpop.f32.mrb[0].mxu0
  %4301 = vdwg.mxu0
  %v4302 = vsel %vm247, %v4299, -inf
  %4303 = vmax.xlane.f32.xlu0 %v4302
  %v4304 = vpop.xlane.xlu0 %4303
  %v4305 = vsub.f32 %v4299, %v4304
  %v4306 = vmul.f32 %v4305, 1.442695
  %v4307 = vpow.pop %v4306
  %v4308 = vsel %vm247, %v4307, 0.0
  %4309 = vadd.xlane.f32.xlu0 %v4308
  %v4310 = vpop.xlane.xlu0 %4309
  %v4311 = vrcp.pop %v4310
  %v4312 = vmul.f32 %v4307, %v4311
  %4313 = vrot.lane.b32.xlu0 %v3543, 64
  %v4314 = vpop.permute.xlu0 %4313
  %v4317 = vsel %vm247, %v4312, 0
  %4319 = vmatprep.subr.mxu0 0.0
  %4320 = vmatpush1.msra.mxu0 %v4314
  %4321 = vmatprep.subr.mxu0 0.0
  %4322 = vmatpush1.msra.mxu0 0.0
  %4323 = vmatprep.subr.mxu0 0.0
  %4324 = vmatpush1.msra.mxu0 0.0
  %4325 = vmatprep.subr.mxu0 0.0
  %4326 = vmatpush1.msra.mxu0 0.0
  %4327 = vmatprep.subr.mxu0 0.0
  %4328 = vmatpush1.msra.mxu0 0.0
  %4329 = vmatprep.subr.mxu0 0.0
  %4330 = vmatpush1.msra.mxu0 0.0
  %4331 = vmatprep.subr.mxu0 0.0
  %4332 = vmatpush1.msra.mxu0 0.0
  %4333 = vmatprep.subr.mxu0 0.0
  %4334 = vmatpush1.msra.mxu0 0.0
  %4335 = vmatprep.subr.mxu0 0.0
  %4336 = vmatpush1.msra.mxu0 0.0
  %4337 = vmatprep.subr.mxu0 0.0
  %4338 = vmatpush1.msra.mxu0 0.0
  %4339 = vmatprep.subr.mxu0 0.0
  %4340 = vmatpush1.msra.mxu0 0.0
  %4341 = vmatprep.subr.mxu0 0.0
  %4342 = vmatpush1.msra.mxu0 0.0
  %4343 = vmatprep.subr.mxu0 0.0
  %4344 = vmatpush1.msra.mxu0 0.0
  %4345 = vmatprep.subr.mxu0 0.0
  %4346 = vmatpush1.msra.mxu0 0.0
  %4347 = vmatprep.subr.mxu0 0.0
  %4348 = vmatpush1.msra.mxu0 0.0
  %4349 = vmatprep.subr.mxu0 0.0
  %4350 = vmatpush1.msra.mxu0 0.0
  %4351 = vmatprep.subr.mxu0 0.0
  %4352 = vmatpush1.msra.mxu0 0.0
  %4353 = vmatprep.subr.mxu0 0.0
  %4354 = vmatpush1.msra.mxu0 0.0
  %4355 = vmatprep.subr.mxu0 0.0
  %4356 = vmatpush1.msra.mxu0 0.0
  %4357 = vmatprep.subr.mxu0 0.0
  %4358 = vmatpush1.msra.mxu0 0.0
  %4359 = vmatprep.subr.mxu0 0.0
  %4360 = vmatpush1.msra.mxu0 0.0
  %4361 = vmatprep.subr.mxu0 0.0
  %4362 = vmatpush1.msra.mxu0 0.0
  %4363 = vmatprep.subr.mxu0 0.0
  %4364 = vmatpush1.msra.mxu0 0.0
  %4365 = vmatprep.subr.mxu0 0.0
  %4366 = vmatpush1.msra.mxu0 0.0
  %4367 = vmatprep.subr.mxu0 0.0
  %4368 = vmatpush1.msra.mxu0 0.0
  %4369 = vmatprep.subr.mxu0 0.0
  %4370 = vmatpush1.msra.mxu0 0.0
  %4371 = vmatprep.subr.mxu0 0.0
  %4372 = vmatpush1.msra.mxu0 0.0
  %4373 = vmatprep.subr.mxu0 0.0
  %4374 = vmatpush1.msra.mxu0 0.0
  %4375 = vmatprep.subr.mxu0 0.0
  %4376 = vmatpush1.msra.mxu0 0.0
  %4377 = vmatprep.subr.mxu0 0.0
  %4378 = vmatpush1.msra.mxu0 0.0
  %4379 = vmatprep.subr.mxu0 0.0
  %4380 = vmatpush1.msra.mxu0 0.0
  %4381 = vmatprep.subr.mxu0 0.0
  %4382 = vmatpush1.msra.mxu0 0.0
  %4383 = vmatprep.mubr.f32.mxu0 0.0
  %4384 = vmatmul.mubr.f32.gmra.mrb[0].mxu0 %v4317
  %v4385 = vpop.f32.mrb[0].mxu0
  %v4386 = vadd.f32 0.0, %v4385
  %v4387 = vpop.f32.mrb[0].mxu0
  %4388 = vdwg.mxu0
  %4389 = vst.msk [vmem:[#allocation2 + $0x8] sm:$0xff] %vm247, %v4386
  %4390 = vrot.lane.b32.xlu0 %v3547, 120
  %v4391 = vpop.permute.xlu0 %4390
  %4392 = vrot.lane.b32.xlu0 %v3543, 88
  %v4393 = vpop.permute.xlu0 %4392
  %v4394 = vsel %vm247, %v4391, 0
  %v4396 = vsel %vm247, %v4393, 0
  %4398 = vmatprep.subr.mxu0 0.0
  %4399 = vmatpush1.xpose.msra.mxu0 %v4396
  %4400 = vmatprep.subr.mxu0 0.0
  %4401 = vmatpush1.xpose.msra.mxu0 0.0
  %4402 = vmatprep.subr.mxu0 0.0
  %4403 = vmatpush1.xpose.msra.mxu0 0.0
  %4404 = vmatprep.subr.mxu0 0.0
  %4405 = vmatpush1.xpose.msra.mxu0 0.0
  %4406 = vmatprep.subr.mxu0 0.0
  %4407 = vmatpush1.xpose.msra.mxu0 0.0
  %4408 = vmatprep.subr.mxu0 0.0
  %4409 = vmatpush1.xpose.msra.mxu0 0.0
  %4410 = vmatprep.subr.mxu0 0.0
  %4411 = vmatpush1.xpose.msra.mxu0 0.0
  %4412 = vmatprep.subr.mxu0 0.0
  %4413 = vmatpush1.xpose.msra.mxu0 0.0
  %4414 = vmatprep.subr.mxu0 0.0
  %4415 = vmatpush1.xpose.msra.mxu0 0.0
  %4416 = vmatprep.subr.mxu0 0.0
  %4417 = vmatpush1.xpose.msra.mxu0 0.0
  %4418 = vmatprep.subr.mxu0 0.0
  %4419 = vmatpush1.xpose.msra.mxu0 0.0
  %4420 = vmatprep.subr.mxu0 0.0
  %4421 = vmatpush1.xpose.msra.mxu0 0.0
  %4422 = vmatprep.subr.mxu0 0.0
  %4423 = vmatpush1.xpose.msra.mxu0 0.0
  %4424 = vmatprep.subr.mxu0 0.0
  %4425 = vmatpush1.xpose.msra.mxu0 0.0
  %4426 = vmatprep.subr.mxu0 0.0
  %4427 = vmatpush1.xpose.msra.mxu0 0.0
  %4428 = vmatprep.subr.mxu0 0.0
  %4429 = vmatpush1.xpose.msra.mxu0 0.0
  %4430 = vmatprep.subr.mxu0 0.0
  %4431 = vmatpush1.xpose.msra.mxu0 0.0
  %4432 = vmatprep.subr.mxu0 0.0
  %4433 = vmatpush1.xpose.msra.mxu0 0.0
  %4434 = vmatprep.subr.mxu0 0.0
  %4435 = vmatpush1.xpose.msra.mxu0 0.0
  %4436 = vmatprep.subr.mxu0 0.0
  %4437 = vmatpush1.xpose.msra.mxu0 0.0
  %4438 = vmatprep.subr.mxu0 0.0
  %4439 = vmatpush1.xpose.msra.mxu0 0.0
  %4440 = vmatprep.subr.mxu0 0.0
  %4441 = vmatpush1.xpose.msra.mxu0 0.0
  %4442 = vmatprep.subr.mxu0 0.0
  %4443 = vmatpush1.xpose.msra.mxu0 0.0
  %4444 = vmatprep.subr.mxu0 0.0
  %4445 = vmatpush1.xpose.msra.mxu0 0.0
  %4446 = vmatprep.subr.mxu0 0.0
  %4447 = vmatpush1.xpose.msra.mxu0 0.0
  %4448 = vmatprep.subr.mxu0 0.0
  %4449 = vmatpush1.xpose.msra.mxu0 0.0
  %4450 = vmatprep.subr.mxu0 0.0
  %4451 = vmatpush1.xpose.msra.mxu0 0.0
  %4452 = vmatprep.subr.mxu0 0.0
  %4453 = vmatpush1.xpose.msra.mxu0 0.0
  %4454 = vmatprep.subr.mxu0 0.0
  %4455 = vmatpush1.xpose.msra.mxu0 0.0
  %4456 = vmatprep.subr.mxu0 0.0
  %4457 = vmatpush1.xpose.msra.mxu0 0.0
  %4458 = vmatprep.subr.mxu0 0.0
  %4459 = vmatpush1.xpose.msra.mxu0 0.0
  %4460 = vmatprep.subr.mxu0 0.0
  %4461 = vmatpush1.xpose.msra.mxu0 0.0
  %4462 = vmatprep.mubr.f32.mxu0 0.0
  %4463 = vmatmul.mubr.f32.gmra.mrb[0].mxu0 %v4394
  %v4464 = vpop.f32.mrb[0].mxu0
  %v4465 = vadd.f32 0.0, %v4464
  %v4466 = vpop.f32.mrb[0].mxu0
  %4467 = vdwg.mxu0
  %v4468 = vsel %vm247, %v4465, -inf
  %4469 = vmax.xlane.f32.xlu0 %v4468
  %v4470 = vpop.xlane.xlu0 %4469
  %v4471 = vsub.f32 %v4465, %v4470
  %v4472 = vmul.f32 %v4471, 1.442695
  %v4473 = vpow.pop %v4472
  %v4474 = vsel %vm247, %v4473, 0.0
  %4475 = vadd.xlane.f32.xlu0 %v4474
  %v4476 = vpop.xlane.xlu0 %4475
  %v4477 = vrcp.pop %v4476
  %v4478 = vmul.f32 %v4473, %v4477
  %4479 = vrot.lane.b32.xlu0 %v3543, 56
  %v4480 = vpop.permute.xlu0 %4479
  %v4483 = vsel %vm247, %v4478, 0
  %4485 = vmatprep.subr.mxu0 0.0
  %4486 = vmatpush1.msra.mxu0 %v4480
  %4487 = vmatprep.subr.mxu0 0.0
  %4488 = vmatpush1.msra.mxu0 0.0
  %4489 = vmatprep.subr.mxu0 0.0
  %4490 = vmatpush1.msra.mxu0 0.0
  %4491 = vmatprep.subr.mxu0 0.0
  %4492 = vmatpush1.msra.mxu0 0.0
  %4493 = vmatprep.subr.mxu0 0.0
  %4494 = vmatpush1.msra.mxu0 0.0
  %4495 = vmatprep.subr.mxu0 0.0
  %4496 = vmatpush1.msra.mxu0 0.0
  %4497 = vmatprep.subr.mxu0 0.0
  %4498 = vmatpush1.msra.mxu0 0.0
  %4499 = vmatprep.subr.mxu0 0.0
  %4500 = vmatpush1.msra.mxu0 0.0
  %4501 = vmatprep.subr.mxu0 0.0
  %4502 = vmatpush1.msra.mxu0 0.0
  %4503 = vmatprep.subr.mxu0 0.0
  %4504 = vmatpush1.msra.mxu0 0.0
  %4505 = vmatprep.subr.mxu0 0.0
  %4506 = vmatpush1.msra.mxu0 0.0
  %4507 = vmatprep.subr.mxu0 0.0
  %4508 = vmatpush1.msra.mxu0 0.0
  %4509 = vmatprep.subr.mxu0 0.0
  %4510 = vmatpush1.msra.mxu0 0.0
  %4511 = vmatprep.subr.mxu0 0.0
  %4512 = vmatpush1.msra.mxu0 0.0
  %4513 = vmatprep.subr.mxu0 0.0
  %4514 = vmatpush1.msra.mxu0 0.0
  %4515 = vmatprep.subr.mxu0 0.0
  %4516 = vmatpush1.msra.mxu0 0.0
  %4517 = vmatprep.subr.mxu0 0.0
  %4518 = vmatpush1.msra.mxu0 0.0
  %4519 = vmatprep.subr.mxu0 0.0
  %4520 = vmatpush1.msra.mxu0 0.0
  %4521 = vmatprep.subr.mxu0 0.0
  %4522 = vmatpush1.msra.mxu0 0.0
  %4523 = vmatprep.subr.mxu0 0.0
  %4524 = vmatpush1.msra.mxu0 0.0
  %4525 = vmatprep.subr.mxu0 0.0
  %4526 = vmatpush1.msra.mxu0 0.0
  %4527 = vmatprep.subr.mxu0 0.0
  %4528 = vmatpush1.msra.mxu0 0.0
  %4529 = vmatprep.subr.mxu0 0.0
  %4530 = vmatpush1.msra.mxu0 0.0
  %4531 = vmatprep.subr.mxu0 0.0
  %4532 = vmatpush1.msra.mxu0 0.0
  %4533 = vmatprep.subr.mxu0 0.0
  %4534 = vmatpush1.msra.mxu0 0.0
  %4535 = vmatprep.subr.mxu0 0.0
  %4536 = vmatpush1.msra.mxu0 0.0
  %4537 = vmatprep.subr.mxu0 0.0
  %4538 = vmatpush1.msra.mxu0 0.0
  %4539 = vmatprep.subr.mxu0 0.0
  %4540 = vmatpush1.msra.mxu0 0.0
  %4541 = vmatprep.subr.mxu0 0.0
  %4542 = vmatpush1.msra.mxu0 0.0
  %4543 = vmatprep.subr.mxu0 0.0
  %4544 = vmatpush1.msra.mxu0 0.0
  %4545 = vmatprep.subr.mxu0 0.0
  %4546 = vmatpush1.msra.mxu0 0.0
  %4547 = vmatprep.subr.mxu0 0.0
  %4548 = vmatpush1.msra.mxu0 0.0
  %4549 = vmatprep.mubr.f32.mxu0 0.0
  %4550 = vmatmul.mubr.f32.gmra.mrb[0].mxu0 %v4483
  %v4551 = vpop.f32.mrb[0].mxu0
  %v4552 = vadd.f32 0.0, %v4551
  %v4553 = vpop.f32.mrb[0].mxu0
  %4554 = vdwg.mxu0
  %4556 = vrot.lane.b32.xlu0 %v4552, 8
  %v4557 = vpop.permute.xlu0 %4556
  %4559 = vst.msk [vmem:[#allocation2 + $0x8] sm:$0xff] %vm580, %v4557
  %4560 = vrot.lane.b32.xlu0 %v3547, 112
  %v4561 = vpop.permute.xlu0 %4560
  %4562 = vrot.lane.b32.xlu0 %v3543, 80
  %v4563 = vpop.permute.xlu0 %4562
  %v4564 = vsel %vm247, %v4561, 0
  %v4566 = vsel %vm247, %v4563, 0
  %4568 = vmatprep.subr.mxu0 0.0
  %4569 = vmatpush1.xpose.msra.mxu0 %v4566
  %4570 = vmatprep.subr.mxu0 0.0
  %4571 = vmatpush1.xpose.msra.mxu0 0.0
  %4572 = vmatprep.subr.mxu0 0.0
  %4573 = vmatpush1.xpose.msra.mxu0 0.0
  %4574 = vmatprep.subr.mxu0 0.0
  %4575 = vmatpush1.xpose.msra.mxu0 0.0
  %4576 = vmatprep.subr.mxu0 0.0
  %4577 = vmatpush1.xpose.msra.mxu0 0.0
  %4578 = vmatprep.subr.mxu0 0.0
  %4579 = vmatpush1.xpose.msra.mxu0 0.0
  %4580 = vmatprep.subr.mxu0 0.0
  %4581 = vmatpush1.xpose.msra.mxu0 0.0
  %4582 = vmatprep.subr.mxu0 0.0
  %4583 = vmatpush1.xpose.msra.mxu0 0.0
  %4584 = vmatprep.subr.mxu0 0.0
  %4585 = vmatpush1.xpose.msra.mxu0 0.0
  %4586 = vmatprep.subr.mxu0 0.0
  %4587 = vmatpush1.xpose.msra.mxu0 0.0
  %4588 = vmatprep.subr.mxu0 0.0
  %4589 = vmatpush1.xpose.msra.mxu0 0.0
  %4590 = vmatprep.subr.mxu0 0.0
  %4591 = vmatpush1.xpose.msra.mxu0 0.0
  %4592 = vmatprep.subr.mxu0 0.0
  %4593 = vmatpush1.xpose.msra.mxu0 0.0
  %4594 = vmatprep.subr.mxu0 0.0
  %4595 = vmatpush1.xpose.msra.mxu0 0.0
  %4596 = vmatprep.subr.mxu0 0.0
  %4597 = vmatpush1.xpose.msra.mxu0 0.0
  %4598 = vmatprep.subr.mxu0 0.0
  %4599 = vmatpush1.xpose.msra.mxu0 0.0
  %4600 = vmatprep.subr.mxu0 0.0
  %4601 = vmatpush1.xpose.msra.mxu0 0.0
  %4602 = vmatprep.subr.mxu0 0.0
  %4603 = vmatpush1.xpose.msra.mxu0 0.0
  %4604 = vmatprep.subr.mxu0 0.0
  %4605 = vmatpush1.xpose.msra.mxu0 0.0
  %4606 = vmatprep.subr.mxu0 0.0
  %4607 = vmatpush1.xpose.msra.mxu0 0.0
  %4608 = vmatprep.subr.mxu0 0.0
  %4609 = vmatpush1.xpose.msra.mxu0 0.0
  %4610 = vmatprep.subr.mxu0 0.0
  %4611 = vmatpush1.xpose.msra.mxu0 0.0
  %4612 = vmatprep.subr.mxu0 0.0
  %4613 = vmatpush1.xpose.msra.mxu0 0.0
  %4614 = vmatprep.subr.mxu0 0.0
  %4615 = vmatpush1.xpose.msra.mxu0 0.0
  %4616 = vmatprep.subr.mxu0 0.0
  %4617 = vmatpush1.xpose.msra.mxu0 0.0
  %4618 = vmatprep.subr.mxu0 0.0
  %4619 = vmatpush1.xpose.msra.mxu0 0.0
  %4620 = vmatprep.subr.mxu0 0.0
  %4621 = vmatpush1.xpose.msra.mxu0 0.0
  %4622 = vmatprep.subr.mxu0 0.0
  %4623 = vmatpush1.xpose.msra.mxu0 0.0
  %4624 = vmatprep.subr.mxu0 0.0
  %4625 = vmatpush1.xpose.msra.mxu0 0.0
  %4626 = vmatprep.subr.mxu0 0.0
  %4627 = vmatpush1.xpose.msra.mxu0 0.0
  %4628 = vmatprep.subr.mxu0 0.0
  %4629 = vmatpush1.xpose.msra.mxu0 0.0
  %4630 = vmatprep.subr.mxu0 0.0
  %4631 = vmatpush1.xpose.msra.mxu0 0.0
  %4632 = vmatprep.mubr.f32.mxu0 0.0
  %4633 = vmatmul.mubr.f32.gmra.mrb[0].mxu0 %v4564
  %v4634 = vpop.f32.mrb[0].mxu0
  %v4635 = vadd.f32 0.0, %v4634
  %v4636 = vpop.f32.mrb[0].mxu0
  %4637 = vdwg.mxu0
  %v4638 = vsel %vm247, %v4635, -inf
  %4639 = vmax.xlane.f32.xlu0 %v4638
  %v4640 = vpop.xlane.xlu0 %4639
  %v4641 = vsub.f32 %v4635, %v4640
  %v4642 = vmul.f32 %v4641, 1.442695
  %v4643 = vpow.pop %v4642
  %v4644 = vsel %vm247, %v4643, 0.0
  %4645 = vadd.xlane.f32.xlu0 %v4644
  %v4646 = vpop.xlane.xlu0 %4645
  %v4647 = vrcp.pop %v4646
  %v4648 = vmul.f32 %v4643, %v4647
  %4649 = vrot.lane.b32.xlu0 %v3543, 48
  %v4650 = vpop.permute.xlu0 %4649
  %v4653 = vsel %vm247, %v4648, 0
  %4655 = vmatprep.subr.mxu0 0.0
  %4656 = vmatpush1.msra.mxu0 %v4650
  %4657 = vmatprep.subr.mxu0 0.0
  %4658 = vmatpush1.msra.mxu0 0.0
  %4659 = vmatprep.subr.mxu0 0.0
  %4660 = vmatpush1.msra.mxu0 0.0
  %4661 = vmatprep.subr.mxu0 0.0
  %4662 = vmatpush1.msra.mxu0 0.0
  %4663 = vmatprep.subr.mxu0 0.0
  %4664 = vmatpush1.msra.mxu0 0.0
  %4665 = vmatprep.subr.mxu0 0.0
  %4666 = vmatpush1.msra.mxu0 0.0
  %4667 = vmatprep.subr.mxu0 0.0
  %4668 = vmatpush1.msra.mxu0 0.0
  %4669 = vmatprep.subr.mxu0 0.0
  %4670 = vmatpush1.msra.mxu0 0.0
  %4671 = vmatprep.subr.mxu0 0.0
  %4672 = vmatpush1.msra.mxu0 0.0
  %4673 = vmatprep.subr.mxu0 0.0
  %4674 = vmatpush1.msra.mxu0 0.0
  %4675 = vmatprep.subr.mxu0 0.0
  %4676 = vmatpush1.msra.mxu0 0.0
  %4677 = vmatprep.subr.mxu0 0.0
  %4678 = vmatpush1.msra.mxu0 0.0
  %4679 = vmatprep.subr.mxu0 0.0
  %4680 = vmatpush1.msra.mxu0 0.0
  %4681 = vmatprep.subr.mxu0 0.0
  %4682 = vmatpush1.msra.mxu0 0.0
  %4683 = vmatprep.subr.mxu0 0.0
  %4684 = vmatpush1.msra.mxu0 0.0
  %4685 = vmatprep.subr.mxu0 0.0
  %4686 = vmatpush1.msra.mxu0 0.0
  %4687 = vmatprep.subr.mxu0 0.0
  %4688 = vmatpush1.msra.mxu0 0.0
  %4689 = vmatprep.subr.mxu0 0.0
  %4690 = vmatpush1.msra.mxu0 0.0
  %4691 = vmatprep.subr.mxu0 0.0
  %4692 = vmatpush1.msra.mxu0 0.0
  %4693 = vmatprep.subr.mxu0 0.0
  %4694 = vmatpush1.msra.mxu0 0.0
  %4695 = vmatprep.subr.mxu0 0.0
  %4696 = vmatpush1.msra.mxu0 0.0
  %4697 = vmatprep.subr.mxu0 0.0
  %4698 = vmatpush1.msra.mxu0 0.0
  %4699 = vmatprep.subr.mxu0 0.0
  %4700 = vmatpush1.msra.mxu0 0.0
  %4701 = vmatprep.subr.mxu0 0.0
  %4702 = vmatpush1.msra.mxu0 0.0
  %4703 = vmatprep.subr.mxu0 0.0
  %4704 = vmatpush1.msra.mxu0 0.0
  %4705 = vmatprep.subr.mxu0 0.0
  %4706 = vmatpush1.msra.mxu0 0.0
  %4707 = vmatprep.subr.mxu0 0.0
  %4708 = vmatpush1.msra.mxu0 0.0
  %4709 = vmatprep.subr.mxu0 0.0
  %4710 = vmatpush1.msra.mxu0 0.0
  %4711 = vmatprep.subr.mxu0 0.0
  %4712 = vmatpush1.msra.mxu0 0.0
  %4713 = vmatprep.subr.mxu0 0.0
  %4714 = vmatpush1.msra.mxu0 0.0
  %4715 = vmatprep.subr.mxu0 0.0
  %4716 = vmatpush1.msra.mxu0 0.0
  %4717 = vmatprep.subr.mxu0 0.0
  %4718 = vmatpush1.msra.mxu0 0.0
  %4719 = vmatprep.mubr.f32.mxu0 0.0
  %4720 = vmatmul.mubr.f32.gmra.mrb[0].mxu0 %v4653
  %v4721 = vpop.f32.mrb[0].mxu0
  %v4722 = vadd.f32 0.0, %v4721
  %v4723 = vpop.f32.mrb[0].mxu0
  %4724 = vdwg.mxu0
  %4726 = vrot.lane.b32.xlu0 %v4722, 16
  %v4727 = vpop.permute.xlu0 %4726
  %4729 = vst.msk [vmem:[#allocation2 + $0x8] sm:$0xff] %vm751, %v4727
  %4730 = vrot.lane.b32.xlu0 %v3547, 104
  %v4731 = vpop.permute.xlu0 %4730
  %4732 = vrot.lane.b32.xlu0 %v3543, 72
  %v4733 = vpop.permute.xlu0 %4732
  %v4734 = vsel %vm247, %v4731, 0
  %v4736 = vsel %vm247, %v4733, 0
  %4738 = vmatprep.subr.mxu0 0.0
  %4739 = vmatpush1.xpose.msra.mxu0 %v4736
  %4740 = vmatprep.subr.mxu0 0.0
  %4741 = vmatpush1.xpose.msra.mxu0 0.0
  %4742 = vmatprep.subr.mxu0 0.0
  %4743 = vmatpush1.xpose.msra.mxu0 0.0
  %4744 = vmatprep.subr.mxu0 0.0
  %4745 = vmatpush1.xpose.msra.mxu0 0.0
  %4746 = vmatprep.subr.mxu0 0.0
  %4747 = vmatpush1.xpose.msra.mxu0 0.0
  %4748 = vmatprep.subr.mxu0 0.0
  %4749 = vmatpush1.xpose.msra.mxu0 0.0
  %4750 = vmatprep.subr.mxu0 0.0
  %4751 = vmatpush1.xpose.msra.mxu0 0.0
  %4752 = vmatprep.subr.mxu0 0.0
  %4753 = vmatpush1.xpose.msra.mxu0 0.0
  %4754 = vmatprep.subr.mxu0 0.0
  %4755 = vmatpush1.xpose.msra.mxu0 0.0
  %4756 = vmatprep.subr.mxu0 0.0
  %4757 = vmatpush1.xpose.msra.mxu0 0.0
  %4758 = vmatprep.subr.mxu0 0.0
  %4759 = vmatpush1.xpose.msra.mxu0 0.0
  %4760 = vmatprep.subr.mxu0 0.0
  %4761 = vmatpush1.xpose.msra.mxu0 0.0
  %4762 = vmatprep.subr.mxu0 0.0
  %4763 = vmatpush1.xpose.msra.mxu0 0.0
  %4764 = vmatprep.subr.mxu0 0.0
  %4765 = vmatpush1.xpose.msra.mxu0 0.0
  %4766 = vmatprep.subr.mxu0 0.0
  %4767 = vmatpush1.xpose.msra.mxu0 0.0
  %4768 = vmatprep.subr.mxu0 0.0
  %4769 = vmatpush1.xpose.msra.mxu0 0.0
  %4770 = vmatprep.subr.mxu0 0.0
  %4771 = vmatpush1.xpose.msra.mxu0 0.0
  %4772 = vmatprep.subr.mxu0 0.0
  %4773 = vmatpush1.xpose.msra.mxu0 0.0
  %4774 = vmatprep.subr.mxu0 0.0
  %4775 = vmatpush1.xpose.msra.mxu0 0.0
  %4776 = vmatprep.subr.mxu0 0.0
  %4777 = vmatpush1.xpose.msra.mxu0 0.0
  %4778 = vmatprep.subr.mxu0 0.0
  %4779 = vmatpush1.xpose.msra.mxu0 0.0
  %4780 = vmatprep.subr.mxu0 0.0
  %4781 = vmatpush1.xpose.msra.mxu0 0.0
  %4782 = vmatprep.subr.mxu0 0.0
  %4783 = vmatpush1.xpose.msra.mxu0 0.0
  %4784 = vmatprep.subr.mxu0 0.0
  %4785 = vmatpush1.xpose.msra.mxu0 0.0
  %4786 = vmatprep.subr.mxu0 0.0
  %4787 = vmatpush1.xpose.msra.mxu0 0.0
  %4788 = vmatprep.subr.mxu0 0.0
  %4789 = vmatpush1.xpose.msra.mxu0 0.0
  %4790 = vmatprep.subr.mxu0 0.0
  %4791 = vmatpush1.xpose.msra.mxu0 0.0
  %4792 = vmatprep.subr.mxu0 0.0
  %4793 = vmatpush1.xpose.msra.mxu0 0.0
  %4794 = vmatprep.subr.mxu0 0.0
  %4795 = vmatpush1.xpose.msra.mxu0 0.0
  %4796 = vmatprep.subr.mxu0 0.0
  %4797 = vmatpush1.xpose.msra.mxu0 0.0
  %4798 = vmatprep.subr.mxu0 0.0
  %4799 = vmatpush1.xpose.msra.mxu0 0.0
  %4800 = vmatprep.subr.mxu0 0.0
  %4801 = vmatpush1.xpose.msra.mxu0 0.0
  %4802 = vmatprep.mubr.f32.mxu0 0.0
  %4803 = vmatmul.mubr.f32.gmra.mrb[0].mxu0 %v4734
  %v4804 = vpop.f32.mrb[0].mxu0
  %v4805 = vadd.f32 0.0, %v4804
  %v4806 = vpop.f32.mrb[0].mxu0
  %4807 = vdwg.mxu0
  %v4808 = vsel %vm247, %v4805, -inf
  %4809 = vmax.xlane.f32.xlu0 %v4808
  %v4810 = vpop.xlane.xlu0 %4809
  %v4811 = vsub.f32 %v4805, %v4810
  %v4812 = vmul.f32 %v4811, 1.442695
  %v4813 = vpow.pop %v4812
  %v4814 = vsel %vm247, %v4813, 0.0
  %4815 = vadd.xlane.f32.xlu0 %v4814
  %v4816 = vpop.xlane.xlu0 %4815
  %v4817 = vrcp.pop %v4816
  %v4818 = vmul.f32 %v4813, %v4817
  %4819 = vrot.lane.b32.xlu0 %v3543, 40
  %v4820 = vpop.permute.xlu0 %4819
  %v4823 = vsel %vm247, %v4818, 0
  %4825 = vmatprep.subr.mxu0 0.0
  %4826 = vmatpush1.msra.mxu0 %v4820
  %4827 = vmatprep.subr.mxu0 0.0
  %4828 = vmatpush1.msra.mxu0 0.0
  %4829 = vmatprep.subr.mxu0 0.0
  %4830 = vmatpush1.msra.mxu0 0.0
  %4831 = vmatprep.subr.mxu0 0.0
  %4832 = vmatpush1.msra.mxu0 0.0
  %4833 = vmatprep.subr.mxu0 0.0
  %4834 = vmatpush1.msra.mxu0 0.0
  %4835 = vmatprep.subr.mxu0 0.0
  %4836 = vmatpush1.msra.mxu0 0.0
  %4837 = vmatprep.subr.mxu0 0.0
  %4838 = vmatpush1.msra.mxu0 0.0
  %4839 = vmatprep.subr.mxu0 0.0
  %4840 = vmatpush1.msra.mxu0 0.0
  %4841 = vmatprep.subr.mxu0 0.0
  %4842 = vmatpush1.msra.mxu0 0.0
  %4843 = vmatprep.subr.mxu0 0.0
  %4844 = vmatpush1.msra.mxu0 0.0
  %4845 = vmatprep.subr.mxu0 0.0
  %4846 = vmatpush1.msra.mxu0 0.0
  %4847 = vmatprep.subr.mxu0 0.0
  %4848 = vmatpush1.msra.mxu0 0.0
  %4849 = vmatprep.subr.mxu0 0.0
  %4850 = vmatpush1.msra.mxu0 0.0
  %4851 = vmatprep.subr.mxu0 0.0
  %4852 = vmatpush1.msra.mxu0 0.0
  %4853 = vmatprep.subr.mxu0 0.0
  %4854 = vmatpush1.msra.mxu0 0.0
  %4855 = vmatprep.subr.mxu0 0.0
  %4856 = vmatpush1.msra.mxu0 0.0
  %4857 = vmatprep.subr.mxu0 0.0
  %4858 = vmatpush1.msra.mxu0 0.0
  %4859 = vmatprep.subr.mxu0 0.0
  %4860 = vmatpush1.msra.mxu0 0.0
  %4861 = vmatprep.subr.mxu0 0.0
  %4862 = vmatpush1.msra.mxu0 0.0
  %4863 = vmatprep.subr.mxu0 0.0
  %4864 = vmatpush1.msra.mxu0 0.0
  %4865 = vmatprep.subr.mxu0 0.0
  %4866 = vmatpush1.msra.mxu0 0.0
  %4867 = vmatprep.subr.mxu0 0.0
  %4868 = vmatpush1.msra.mxu0 0.0
  %4869 = vmatprep.subr.mxu0 0.0
  %4870 = vmatpush1.msra.mxu0 0.0
  %4871 = vmatprep.subr.mxu0 0.0
  %4872 = vmatpush1.msra.mxu0 0.0
  %4873 = vmatprep.subr.mxu0 0.0
  %4874 = vmatpush1.msra.mxu0 0.0
  %4875 = vmatprep.subr.mxu0 0.0
  %4876 = vmatpush1.msra.mxu0 0.0
  %4877 = vmatprep.subr.mxu0 0.0
  %4878 = vmatpush1.msra.mxu0 0.0
  %4879 = vmatprep.subr.mxu0 0.0
  %4880 = vmatpush1.msra.mxu0 0.0
  %4881 = vmatprep.subr.mxu0 0.0
  %4882 = vmatpush1.msra.mxu0 0.0
  %4883 = vmatprep.subr.mxu0 0.0
  %4884 = vmatpush1.msra.mxu0 0.0
  %4885 = vmatprep.subr.mxu0 0.0
  %4886 = vmatpush1.msra.mxu0 0.0
  %4887 = vmatprep.subr.mxu0 0.0
  %4888 = vmatpush1.msra.mxu0 0.0
  %4889 = vmatprep.mubr.f32.mxu0 0.0
  %4890 = vmatmul.mubr.f32.gmra.mrb[0].mxu0 %v4823
  %v4891 = vpop.f32.mrb[0].mxu0
  %v4892 = vadd.f32 0.0, %v4891
  %v4893 = vpop.f32.mrb[0].mxu0
  %4894 = vdwg.mxu0
  %4896 = vrot.lane.b32.xlu0 %v4892, 24
  %v4897 = vpop.permute.xlu0 %4896
  %4899 = vst.msk [vmem:[#allocation2 + $0x8] sm:$0xff] %vm922, %v4897
  %v4900 = vld [vmem:[#allocation2] sm:$0xff]
  %v4901 = vld [vmem:[#allocation2 + $0x8] sm:$0xff]
  %s4902 = scalar_lea.vmem %s5, 32
  %v4903 = vld [vmem:[%s4902] sm:$0xff]
  %v4904 = vld [vmem:[%s4902 + $0x8] sm:$0xff]
  %v4905 = vld [vmem:[%s4902 + $0x10] sm:$0xff]
  %v4906 = vld [vmem:[%s4902 + $0x18] sm:$0xff]
  %s4907 = scalar_lea.vmem %s6, 1
  %v4908 = vld [vmem:[%s4907] sm:$0x1]
  %v4910 = vlaneseq
  %v4911 = vshrl.u32 %v4910, 7
  %v4912 = vsub.s32 0, %v4911
  %v4913 = vrot.slane %v4908, %v4912
  %v4916 = vsel %vm160, %v4900, 0
  %v4919 = vsel %vm160, %v4901, 0
  %4921 = vmatprep.subr.mxu0 0.0
  %4922 = vmatpush1.msra.mxu0 %v4903
  %4923 = vmatprep.subr.mxu0 0.0
  %4924 = vmatpush1.msra.mxu0 %v4904
  %4925 = vmatprep.subr.mxu0 0.0
  %4926 = vmatpush1.msra.mxu0 %v4905
  %4927 = vmatprep.subr.mxu0 0.0
  %4928 = vmatpush1.msra.mxu0 %v4906
  %4929 = vmatprep.subr.mxu0 0.0
  %4930 = vmatpush1.msra.mxu0 0.0
  %4931 = vmatprep.subr.mxu0 0.0
  %4932 = vmatpush1.msra.mxu0 0.0
  %4933 = vmatprep.subr.mxu0 0.0
  %4934 = vmatpush1.msra.mxu0 0.0
  %4935 = vmatprep.subr.mxu0 0.0
  %4936 = vmatpush1.msra.mxu0 0.0
  %4937 = vmatprep.subr.mxu0 0.0
  %4938 = vmatpush1.msra.mxu0 0.0
  %4939 = vmatprep.subr.mxu0 0.0
  %4940 = vmatpush1.msra.mxu0 0.0
  %4941 = vmatprep.subr.mxu0 0.0
  %4942 = vmatpush1.msra.mxu0 0.0
  %4943 = vmatprep.subr.mxu0 0.0
  %4944 = vmatpush1.msra.mxu0 0.0
  %4945 = vmatprep.subr.mxu0 0.0
  %4946 = vmatpush1.msra.mxu0 0.0
  %4947 = vmatprep.subr.mxu0 0.0
  %4948 = vmatpush1.msra.mxu0 0.0
  %4949 = vmatprep.subr.mxu0 0.0
  %4950 = vmatpush1.msra.mxu0 0.0
  %4951 = vmatprep.subr.mxu0 0.0
  %4952 = vmatpush1.msra.mxu0 0.0
  %4953 = vmatprep.subr.mxu0 0.0
  %4954 = vmatpush1.msra.mxu0 0.0
  %4955 = vmatprep.subr.mxu0 0.0
  %4956 = vmatpush1.msra.mxu0 0.0
  %4957 = vmatprep.subr.mxu0 0.0
  %4958 = vmatpush1.msra.mxu0 0.0
  %4959 = vmatprep.subr.mxu0 0.0
  %4960 = vmatpush1.msra.mxu0 0.0
  %4961 = vmatprep.subr.mxu0 0.0
  %4962 = vmatpush1.msra.mxu0 0.0
  %4963 = vmatprep.subr.mxu0 0.0
  %4964 = vmatpush1.msra.mxu0 0.0
  %4965 = vmatprep.subr.mxu0 0.0
  %4966 = vmatpush1.msra.mxu0 0.0
  %4967 = vmatprep.subr.mxu0 0.0
  %4968 = vmatpush1.msra.mxu0 0.0
  %4969 = vmatprep.subr.mxu0 0.0
  %4970 = vmatpush1.msra.mxu0 0.0
  %4971 = vmatprep.subr.mxu0 0.0
  %4972 = vmatpush1.msra.mxu0 0.0
  %4973 = vmatprep.subr.mxu0 0.0
  %4974 = vmatpush1.msra.mxu0 0.0
  %4975 = vmatprep.subr.mxu0 0.0
  %4976 = vmatpush1.msra.mxu0 0.0
  %4977 = vmatprep.subr.mxu0 0.0
  %4978 = vmatpush1.msra.mxu0 0.0
  %4979 = vmatprep.subr.mxu0 0.0
  %4980 = vmatpush1.msra.mxu0 0.0
  %4981 = vmatprep.subr.mxu0 0.0
  %4982 = vmatpush1.msra.mxu0 0.0
  %4983 = vmatprep.subr.mxu0 0.0
  %4984 = vmatpush1.msra.mxu0 0.0
  %4985 = vmatprep.mubr.f32.mxu0 0.0
  %4986 = vmatmul.mubr.f32.gmra.mrb[0].mxu0 %v4916
  %v4987 = vpop.f32.mrb[0].mxu0
  %v4988 = vadd.f32 %v4913, %v4987
  %v4989 = vpop.f32.mrb[0].mxu0
  %4990 = vmatprep.mubr.f32.mxu0 0.0
  %4991 = vmatmul.mubr.f32.gmra.mrb[0].mxu0 %v4919
  %v4992 = vpop.f32.mrb[0].mxu0
  %v4993 = vadd.f32 %v4913, %v4992
  %v4994 = vpop.f32.mrb[0].mxu0
  %4995 = vdwg.mxu0
  %v4996 = vadd.f32 %v3450, %v4988
  %v4997 = vadd.f32 %v3451, %v4993
  %s4998 = scalar_lea.vmem %s7, 1
  %v4999 = vld [vmem:[%s4998] sm:$0x1]
  %s5000 = scalar_lea.vmem %s8, 1
  %v5001 = vld [vmem:[%s5000] sm:$0x1]
  %v5002 = vsel %vm160, %v4996, 0.0
  %5003 = vadd.xlane.f32.xlu0 %v5002
  %v5004 = vpop.xlane.xlu0 %5003
  %v5005 = vsel %vm160, %v4997, 0.0
  %5006 = vadd.xlane.f32.xlu0 %v5005
  %v5007 = vpop.xlane.xlu0 %5006
  %v5008 = vmul.f32 %v5004, %v1704
  %v5009 = vmul.f32 %v5007, %v1704
  %v5010 = vsub.f32 %v4996, %v5008
  %v5011 = vsub.f32 %v4997, %v5009
  %v5012 = vmul.f32 %v5010, %v5010
  %v5013 = vmul.f32 %v5011, %v5011
  %v5014 = vsel %vm160, %v5012, 0.0
  %5015 = vadd.xlane.f32.xlu0 %v5014
  %v5016 = vpop.xlane.xlu0 %5015
  %v5017 = vsel %vm160, %v5013, 0.0
  %5018 = vadd.xlane.f32.xlu0 %v5017
  %v5019 = vpop.xlane.xlu0 %5018
  %v5020 = vmul.f32 %v5016, %v1704
  %v5021 = vmul.f32 %v5019, %v1704
  %v5022 = vadd.f32 %v5020, 1e-05
  %v5023 = vadd.f32 %v5021, 1e-05
  %v5024 = vrsqrt.pop %v5022
  %v5025 = vrsqrt.pop %v5023
  %v5026 = vmul.f32 %v5010, %v5024
  %v5027 = vmul.f32 %v5011, %v5025
  %v5029 = vlaneseq
  %v5030 = vshrl.u32 %v5029, 7
  %v5031 = vsub.s32 0, %v5030
  %v5032 = vrot.slane %v4999, %v5031
  %v5034 = vmul.f32 %v5026, %v5032
  %v5035 = vmul.f32 %v5027, %v5032
  %v5037 = vlaneseq
  %v5038 = vshrl.u32 %v5037, 7
  %v5039 = vsub.s32 0, %v5038
  %v5040 = vrot.slane %v5001, %v5039
  %v5042 = vadd.f32 %v5034, %v5040
  %v5043 = vadd.f32 %v5035, %v5040
  %s5044 = scalar_lea.vmem %s9, 512
  %v5045 = vld [vmem:[%s5044] sm:$0xff]
  %v5046 = vld [vmem:[%s5044 + $0x8] sm:$0xff]
  %v5047 = vld [vmem:[%s5044 + $0x10] sm:$0xff]
  %v5048 = vld [vmem:[%s5044 + $0x18] sm:$0xff]
  %v5049 = vld [vmem:[%s5044 + $0x20] sm:$0xff]
  %v5050 = vld [vmem:[%s5044 + $0x28] sm:$0xff]
  %v5051 = vld [vmem:[%s5044 + $0x30] sm:$0xff]
  %v5052 = vld [vmem:[%s5044 + $0x38] sm:$0xff]
  %v5053 = vld [vmem:[%s5044 + $0x40] sm:$0xff]
  %v5054 = vld [vmem:[%s5044 + $0x48] sm:$0xff]
  %v5055 = vld [vmem:[%s5044 + $0x50] sm:$0xff]
  %v5056 = vld [vmem:[%s5044 + $0x58] sm:$0xff]
  %v5057 = vld [vmem:[%s5044 + $0x60] sm:$0xff]
  %v5058 = vld [vmem:[%s5044 + $0x68] sm:$0xff]
  %v5059 = vld [vmem:[%s5044 + $0x70] sm:$0xff]
  %v5060 = vld [vmem:[%s5044 + $0x78] sm:$0xff]
  %v5061 = vld [vmem:[%s5044 + $0x80] sm:$0xff]
  %v5062 = vld [vmem:[%s5044 + $0x88] sm:$0xff]
  %v5063 = vld [vmem:[%s5044 + $0x90] sm:$0xff]
  %v5064 = vld [vmem:[%s5044 + $0x98] sm:$0xff]
  %v5065 = vld [vmem:[%s5044 + $0xa0] sm:$0xff]
  %v5066 = vld [vmem:[%s5044 + $0xa8] sm:$0xff]
  %v5067 = vld [vmem:[%s5044 + $0xb0] sm:$0xff]
  %v5068 = vld [vmem:[%s5044 + $0xb8] sm:$0xff]
  %v5069 = vld [vmem:[%s5044 + $0xc0] sm:$0xff]
  %v5070 = vld [vmem:[%s5044 + $0xc8] sm:$0xff]
  %v5071 = vld [vmem:[%s5044 + $0xd0] sm:$0xff]
  %v5072 = vld [vmem:[%s5044 + $0xd8] sm:$0xff]
  %v5073 = vld [vmem:[%s5044 + $0xe0] sm:$0xff]
  %v5074 = vld [vmem:[%s5044 + $0xe8] sm:$0xff]
  %v5075 = vld [vmem:[%s5044 + $0xf0] sm:$0xff]
  %v5076 = vld [vmem:[%s5044 + $0xf8] sm:$0xff]
  %v5077 = vld [vmem:[%s5044 + $0x100] sm:$0xff]
  %v5078 = vld [vmem:[%s5044 + $0x108] sm:$0xff]
  %v5079 = vld [vmem:[%s5044 + $0x110] sm:$0xff]
  %v5080 = vld [vmem:[%s5044 + $0x118] sm:$0xff]
  %v5081 = vld [vmem:[%s5044 + $0x120] sm:$0xff]
  %v5082 = vld [vmem:[%s5044 + $0x128] sm:$0xff]
  %v5083 = vld [vmem:[%s5044 + $0x130] sm:$0xff]
  %v5084 = vld [vmem:[%s5044 + $0x138] sm:$0xff]
  %v5085 = vld [vmem:[%s5044 + $0x140] sm:$0xff]
  %v5086 = vld [vmem:[%s5044 + $0x148] sm:$0xff]
  %v5087 = vld [vmem:[%s5044 + $0x150] sm:$0xff]
  %v5088 = vld [vmem:[%s5044 + $0x158] sm:$0xff]
  %v5089 = vld [vmem:[%s5044 + $0x160] sm:$0xff]
  %v5090 = vld [vmem:[%s5044 + $0x168] sm:$0xff]
  %v5091 = vld [vmem:[%s5044 + $0x170] sm:$0xff]
  %v5092 = vld [vmem:[%s5044 + $0x178] sm:$0xff]
  %v5093 = vld [vmem:[%s5044 + $0x180] sm:$0xff]
  %v5094 = vld [vmem:[%s5044 + $0x188] sm:$0xff]
  %v5095 = vld [vmem:[%s5044 + $0x190] sm:$0xff]
  %v5096 = vld [vmem:[%s5044 + $0x198] sm:$0xff]
  %v5097 = vld [vmem:[%s5044 + $0x1a0] sm:$0xff]
  %v5098 = vld [vmem:[%s5044 + $0x1a8] sm:$0xff]
  %v5099 = vld [vmem:[%s5044 + $0x1b0] sm:$0xff]
  %v5100 = vld [vmem:[%s5044 + $0x1b8] sm:$0xff]
  %v5101 = vld [vmem:[%s5044 + $0x1c0] sm:$0xff]
  %v5102 = vld [vmem:[%s5044 + $0x1c8] sm:$0xff]
  %v5103 = vld [vmem:[%s5044 + $0x1d0] sm:$0xff]
  %v5104 = vld [vmem:[%s5044 + $0x1d8] sm:$0xff]
  %v5105 = vld [vmem:[%s5044 + $0x1e0] sm:$0xff]
  %v5106 = vld [vmem:[%s5044 + $0x1e8] sm:$0xff]
  %v5107 = vld [vmem:[%s5044 + $0x1f0] sm:$0xff]
  %v5108 = vld [vmem:[%s5044 + $0x1f8] sm:$0xff]
  %s5109 = scalar_lea.vmem %s10, 16
  %v5110 = vld [vmem:[%s5109] sm:$0xff]
  %v5111 = vld [vmem:[%s5109 + $0x8] sm:$0xff]
  %v5114 = vlaneseq
  %v5115 = vshrl.u32 %v5114, 7
  %v5116 = vsub.s32 0, %v5115
  %v5117 = vrot.slane %v5110, %v5116
  %v5118 = vlaneseq
  %v5119 = vshrl.u32 %v5118, 7
  %v5120 = vsub.s32 1, %v5119
  %v5121 = vrot.slane %v5110, %v5120
  %v5122 = vlaneseq
  %v5123 = vshrl.u32 %v5122, 7
  %v5124 = vsub.s32 2, %v5123
  %v5125 = vrot.slane %v5110, %v5124
  %v5126 = vlaneseq
  %v5127 = vshrl.u32 %v5126, 7
  %v5128 = vsub.s32 3, %v5127
  %v5129 = vrot.slane %v5110, %v5128
  %v5130 = vlaneseq
  %v5131 = vshrl.u32 %v5130, 7
  %v5132 = vsub.s32 4, %v5131
  %v5133 = vrot.slane %v5110, %v5132
  %v5134 = vlaneseq
  %v5135 = vshrl.u32 %v5134, 7
  %v5136 = vsub.s32 5, %v5135
  %v5137 = vrot.slane %v5110, %v5136
  %v5138 = vlaneseq
  %v5139 = vshrl.u32 %v5138, 7
  %v5140 = vsub.s32 6, %v5139
  %v5141 = vrot.slane %v5110, %v5140
  %v5142 = vlaneseq
  %v5143 = vshrl.u32 %v5142, 7
  %v5144 = vsub.s32 7, %v5143
  %v5145 = vrot.slane %v5110, %v5144
  %v5146 = vlaneseq
  %v5147 = vshrl.u32 %v5146, 7
  %v5148 = vsub.s32 0, %v5147
  %v5149 = vrot.slane %v5111, %v5148
  %v5150 = vlaneseq
  %v5151 = vshrl.u32 %v5150, 7
  %v5152 = vsub.s32 1, %v5151
  %v5153 = vrot.slane %v5111, %v5152
  %v5154 = vlaneseq
  %v5155 = vshrl.u32 %v5154, 7
  %v5156 = vsub.s32 2, %v5155
  %v5157 = vrot.slane %v5111, %v5156
  %v5158 = vlaneseq
  %v5159 = vshrl.u32 %v5158, 7
  %v5160 = vsub.s32 3, %v5159
  %v5161 = vrot.slane %v5111, %v5160
  %v5162 = vlaneseq
  %v5163 = vshrl.u32 %v5162, 7
  %v5164 = vsub.s32 4, %v5163
  %v5165 = vrot.slane %v5111, %v5164
  %v5166 = vlaneseq
  %v5167 = vshrl.u32 %v5166, 7
  %v5168 = vsub.s32 5, %v5167
  %v5169 = vrot.slane %v5111, %v5168
  %v5170 = vlaneseq
  %v5171 = vshrl.u32 %v5170, 7
  %v5172 = vsub.s32 6, %v5171
  %v5173 = vrot.slane %v5111, %v5172
  %v5174 = vlaneseq
  %v5175 = vshrl.u32 %v5174, 7
  %v5176 = vsub.s32 7, %v5175
  %v5177 = vrot.slane %v5111, %v5176
  %v5195 = vsel %vm160, %v5042, 0
  %v5198 = vsel %vm160, %v5043, 0
  %5200 = vmatprep.subr.mxu0 %v5046
  %5201 = vmatpush1.msra.mxu0 %v5045
  %5202 = vmatprep.subr.mxu0 %v5062
  %5203 = vmatpush1.msra.mxu0 %v5061
  %5204 = vmatprep.subr.mxu0 %v5078
  %5205 = vmatpush1.msra.mxu0 %v5077
  %5206 = vmatprep.subr.mxu0 %v5094
  %5207 = vmatpush1.msra.mxu0 %v5093
  %5208 = vmatprep.subr.mxu0 0.0
  %5209 = vmatpush1.msra.mxu0 0.0
  %5210 = vmatprep.subr.mxu0 0.0
  %5211 = vmatpush1.msra.mxu0 0.0
  %5212 = vmatprep.subr.mxu0 0.0
  %5213 = vmatpush1.msra.mxu0 0.0
  %5214 = vmatprep.subr.mxu0 0.0
  %5215 = vmatpush1.msra.mxu0 0.0
  %5216 = vmatprep.subr.mxu0 0.0
  %5217 = vmatpush1.msra.mxu0 0.0
  %5218 = vmatprep.subr.mxu0 0.0
  %5219 = vmatpush1.msra.mxu0 0.0
  %5220 = vmatprep.subr.mxu0 0.0
  %5221 = vmatpush1.msra.mxu0 0.0
  %5222 = vmatprep.subr.mxu0 0.0
  %5223 = vmatpush1.msra.mxu0 0.0
  %5224 = vmatprep.subr.mxu0 0.0
  %5225 = vmatpush1.msra.mxu0 0.0
  %5226 = vmatprep.subr.mxu0 0.0
  %5227 = vmatpush1.msra.mxu0 0.0
  %5228 = vmatprep.subr.mxu0 0.0
  %5229 = vmatpush1.msra.mxu0 0.0
  %5230 = vmatprep.subr.mxu0 0.0
  %5231 = vmatpush1.msra.mxu0 0.0
  %5232 = vmatprep.subr.mxu0 0.0
  %5233 = vmatpush1.msra.mxu0 0.0
  %5234 = vmatprep.subr.mxu0 0.0
  %5235 = vmatpush1.msra.mxu0 0.0
  %5236 = vmatprep.subr.mxu0 0.0
  %5237 = vmatpush1.msra.mxu0 0.0
  %5238 = vmatprep.subr.mxu0 0.0
  %5239 = vmatpush1.msra.mxu0 0.0
  %5240 = vmatprep.subr.mxu0 0.0
  %5241 = vmatpush1.msra.mxu0 0.0
  %5242 = vmatprep.subr.mxu0 0.0
  %5243 = vmatpush1.msra.mxu0 0.0
  %5244 = vmatprep.subr.mxu0 0.0
  %5245 = vmatpush1.msra.mxu0 0.0
  %5246 = vmatprep.subr.mxu0 0.0
  %5247 = vmatpush1.msra.mxu0 0.0
  %5248 = vmatprep.subr.mxu0 0.0
  %5249 = vmatpush1.msra.mxu0 0.0
  %5250 = vmatprep.subr.mxu0 0.0
  %5251 = vmatpush1.msra.mxu0 0.0
  %5252 = vmatprep.subr.mxu0 0.0
  %5253 = vmatpush1.msra.mxu0 0.0
  %5254 = vmatprep.subr.mxu0 0.0
  %5255 = vmatpush1.msra.mxu0 0.0
  %5256 = vmatprep.subr.mxu0 0.0
  %5257 = vmatpush1.msra.mxu0 0.0
  %5258 = vmatprep.subr.mxu0 0.0
  %5259 = vmatpush1.msra.mxu0 0.0
  %5260 = vmatprep.subr.mxu0 0.0
  %5261 = vmatpush1.msra.mxu0 0.0
  %5262 = vmatprep.subr.mxu0 0.0
  %5263 = vmatpush1.msra.mxu0 0.0
  %5264 = vmatprep.mubr.f32.mxu0 0.0
  %5265 = vmatmul.mubr.f32.gmra.mrb[0].mxu0 %v5195
  %v5266 = vpop.f32.mrb[0].mxu0
  %v5267 = vadd.f32 %v5117, %v5266
  %v5268 = vpop.f32.mrb[0].mxu0
  %v5269 = vadd.f32 %v5121, %v5268
  %5270 = vmatprep.mubr.f32.mxu0 0.0
  %5271 = vmatmul.mubr.f32.gmra.mrb[0].mxu0 %v5198
  %v5272 = vpop.f32.mrb[0].mxu0
  %v5273 = vadd.f32 %v5117, %v5272
  %v5274 = vpop.f32.mrb[0].mxu0
  %v5275 = vadd.f32 %v5121, %v5274
  %5276 = vdwg.mxu0
  %5277 = vmatprep.subr.mxu0 %v5048
  %5278 = vmatpush1.msra.mxu0 %v5047
  %5279 = vmatprep.subr.mxu0 %v5064
  %5280 = vmatpush1.msra.mxu0 %v5063
  %5281 = vmatprep.subr.mxu0 %v5080
  %5282 = vmatpush1.msra.mxu0 %v5079
  %5283 = vmatprep.subr.mxu0 %v5096
  %5284 = vmatpush1.msra.mxu0 %v5095
  %5285 = vmatprep.subr.mxu0 0.0
  %5286 = vmatpush1.msra.mxu0 0.0
  %5287 = vmatprep.subr.mxu0 0.0
  %5288 = vmatpush1.msra.mxu0 0.0
  %5289 = vmatprep.subr.mxu0 0.0
  %5290 = vmatpush1.msra.mxu0 0.0
  %5291 = vmatprep.subr.mxu0 0.0
  %5292 = vmatpush1.msra.mxu0 0.0
  %5293 = vmatprep.subr.mxu0 0.0
  %5294 = vmatpush1.msra.mxu0 0.0
  %5295 = vmatprep.subr.mxu0 0.0
  %5296 = vmatpush1.msra.mxu0 0.0
  %5297 = vmatprep.subr.mxu0 0.0
  %5298 = vmatpush1.msra.mxu0 0.0
  %5299 = vmatprep.subr.mxu0 0.0
  %5300 = vmatpush1.msra.mxu0 0.0
  %5301 = vmatprep.subr.mxu0 0.0
  %5302 = vmatpush1.msra.mxu0 0.0
  %5303 = vmatprep.subr.mxu0 0.0
  %5304 = vmatpush1.msra.mxu0 0.0
  %5305 = vmatprep.subr.mxu0 0.0
  %5306 = vmatpush1.msra.mxu0 0.0
  %5307 = vmatprep.subr.mxu0 0.0
  %5308 = vmatpush1.msra.mxu0 0.0
  %5309 = vmatprep.subr.mxu0 0.0
  %5310 = vmatpush1.msra.mxu0 0.0
  %5311 = vmatprep.subr.mxu0 0.0
  %5312 = vmatpush1.msra.mxu0 0.0
  %5313 = vmatprep.subr.mxu0 0.0
  %5314 = vmatpush1.msra.mxu0 0.0
  %5315 = vmatprep.subr.mxu0 0.0
  %5316 = vmatpush1.msra.mxu0 0.0
  %5317 = vmatprep.subr.mxu0 0.0
  %5318 = vmatpush1.msra.mxu0 0.0
  %5319 = vmatprep.subr.mxu0 0.0
  %5320 = vmatpush1.msra.mxu0 0.0
  %5321 = vmatprep.subr.mxu0 0.0
  %5322 = vmatpush1.msra.mxu0 0.0
  %5323 = vmatprep.subr.mxu0 0.0
  %5324 = vmatpush1.msra.mxu0 0.0
  %5325 = vmatprep.subr.mxu0 0.0
  %5326 = vmatpush1.msra.mxu0 0.0
  %5327 = vmatprep.subr.mxu0 0.0
  %5328 = vmatpush1.msra.mxu0 0.0
  %5329 = vmatprep.subr.mxu0 0.0
  %5330 = vmatpush1.msra.mxu0 0.0
  %5331 = vmatprep.subr.mxu0 0.0
  %5332 = vmatpush1.msra.mxu0 0.0
  %5333 = vmatprep.subr.mxu0 0.0
  %5334 = vmatpush1.msra.mxu0 0.0
  %5335 = vmatprep.subr.mxu0 0.0
  %5336 = vmatpush1.msra.mxu0 0.0
  %5337 = vmatprep.subr.mxu0 0.0
  %5338 = vmatpush1.msra.mxu0 0.0
  %5339 = vmatprep.subr.mxu0 0.0
  %5340 = vmatpush1.msra.mxu0 0.0
  %5341 = vmatprep.mubr.f32.mxu0 0.0
  %5342 = vmatmul.mubr.f32.gmra.mrb[0].mxu0 %v5195
  %v5343 = vpop.f32.mrb[0].mxu0
  %v5344 = vadd.f32 %v5125, %v5343
  %v5345 = vpop.f32.mrb[0].mxu0
  %v5346 = vadd.f32 %v5129, %v5345
  %5347 = vmatprep.mubr.f32.mxu0 0.0
  %5348 = vmatmul.mubr.f32.gmra.mrb[0].mxu0 %v5198
  %v5349 = vpop.f32.mrb[0].mxu0
  %v5350 = vadd.f32 %v5125, %v5349
  %v5351 = vpop.f32.mrb[0].mxu0
  %v5352 = vadd.f32 %v5129, %v5351
  %5353 = vdwg.mxu0
  %5354 = vmatprep.subr.mxu0 %v5050
  %5355 = vmatpush1.msra.mxu0 %v5049
  %5356 = vmatprep.subr.mxu0 %v5066
  %5357 = vmatpush1.msra.mxu0 %v5065
  %5358 = vmatprep.subr.mxu0 %v5082
  %5359 = vmatpush1.msra.mxu0 %v5081
  %5360 = vmatprep.subr.mxu0 %v5098
  %5361 = vmatpush1.msra.mxu0 %v5097
  %5362 = vmatprep.subr.mxu0 0.0
  %5363 = vmatpush1.msra.mxu0 0.0
  %5364 = vmatprep.subr.mxu0 0.0
  %5365 = vmatpush1.msra.mxu0 0.0
  %5366 = vmatprep.subr.mxu0 0.0
  %5367 = vmatpush1.msra.mxu0 0.0
  %5368 = vmatprep.subr.mxu0 0.0
  %5369 = vmatpush1.msra.mxu0 0.0
  %5370 = vmatprep.subr.mxu0 0.0
  %5371 = vmatpush1.msra.mxu0 0.0
  %5372 = vmatprep.subr.mxu0 0.0
  %5373 = vmatpush1.msra.mxu0 0.0
  %5374 = vmatprep.subr.mxu0 0.0
  %5375 = vmatpush1.msra.mxu0 0.0
  %5376 = vmatprep.subr.mxu0 0.0
  %5377 = vmatpush1.msra.mxu0 0.0
  %5378 = vmatprep.subr.mxu0 0.0
  %5379 = vmatpush1.msra.mxu0 0.0
  %5380 = vmatprep.subr.mxu0 0.0
  %5381 = vmatpush1.msra.mxu0 0.0
  %5382 = vmatprep.subr.mxu0 0.0
  %5383 = vmatpush1.msra.mxu0 0.0
  %5384 = vmatprep.subr.mxu0 0.0
  %5385 = vmatpush1.msra.mxu0 0.0
  %5386 = vmatprep.subr.mxu0 0.0
  %5387 = vmatpush1.msra.mxu0 0.0
  %5388 = vmatprep.subr.mxu0 0.0
  %5389 = vmatpush1.msra.mxu0 0.0
  %5390 = vmatprep.subr.mxu0 0.0
  %5391 = vmatpush1.msra.mxu0 0.0
  %5392 = vmatprep.subr.mxu0 0.0
  %5393 = vmatpush1.msra.mxu0 0.0
  %5394 = vmatprep.subr.mxu0 0.0
  %5395 = vmatpush1.msra.mxu0 0.0
  %5396 = vmatprep.subr.mxu0 0.0
  %5397 = vmatpush1.msra.mxu0 0.0
  %5398 = vmatprep.subr.mxu0 0.0
  %5399 = vmatpush1.msra.mxu0 0.0
  %5400 = vmatprep.subr.mxu0 0.0
  %5401 = vmatpush1.msra.mxu0 0.0
  %5402 = vmatprep.subr.mxu0 0.0
  %5403 = vmatpush1.msra.mxu0 0.0
  %5404 = vmatprep.subr.mxu0 0.0
  %5405 = vmatpush1.msra.mxu0 0.0
  %5406 = vmatprep.subr.mxu0 0.0
  %5407 = vmatpush1.msra.mxu0 0.0
  %5408 = vmatprep.subr.mxu0 0.0
  %5409 = vmatpush1.msra.mxu0 0.0
  %5410 = vmatprep.subr.mxu0 0.0
  %5411 = vmatpush1.msra.mxu0 0.0
  %5412 = vmatprep.subr.mxu0 0.0
  %5413 = vmatpush1.msra.mxu0 0.0
  %5414 = vmatprep.subr.mxu0 0.0
  %5415 = vmatpush1.msra.mxu0 0.0
  %5416 = vmatprep.subr.mxu0 0.0
  %5417 = vmatpush1.msra.mxu0 0.0
  %5418 = vmatprep.mubr.f32.mxu0 0.0
  %5419 = vmatmul.mubr.f32.gmra.mrb[0].mxu0 %v5195
  %v5420 = vpop.f32.mrb[0].mxu0
  %v5421 = vadd.f32 %v5133, %v5420
  %v5422 = vpop.f32.mrb[0].mxu0
  %v5423 = vadd.f32 %v5137, %v5422
  %5424 = vmatprep.mubr.f32.mxu0 0.0
  %5425 = vmatmul.mubr.f32.gmra.mrb[0].mxu0 %v5198
  %v5426 = vpop.f32.mrb[0].mxu0
  %v5427 = vadd.f32 %v5133, %v5426
  %v5428 = vpop.f32.mrb[0].mxu0
  %v5429 = vadd.f32 %v5137, %v5428
  %5430 = vdwg.mxu0
  %5431 = vmatprep.subr.mxu0 %v5052
  %5432 = vmatpush1.msra.mxu0 %v5051
  %5433 = vmatprep.subr.mxu0 %v5068
  %5434 = vmatpush1.msra.mxu0 %v5067
  %5435 = vmatprep.subr.mxu0 %v5084
  %5436 = vmatpush1.msra.mxu0 %v5083
  %5437 = vmatprep.subr.mxu0 %v5100
  %5438 = vmatpush1.msra.mxu0 %v5099
  %5439 = vmatprep.subr.mxu0 0.0
  %5440 = vmatpush1.msra.mxu0 0.0
  %5441 = vmatprep.subr.mxu0 0.0
  %5442 = vmatpush1.msra.mxu0 0.0
  %5443 = vmatprep.subr.mxu0 0.0
  %5444 = vmatpush1.msra.mxu0 0.0
  %5445 = vmatprep.subr.mxu0 0.0
  %5446 = vmatpush1.msra.mxu0 0.0
  %5447 = vmatprep.subr.mxu0 0.0
  %5448 = vmatpush1.msra.mxu0 0.0
  %5449 = vmatprep.subr.mxu0 0.0
  %5450 = vmatpush1.msra.mxu0 0.0
  %5451 = vmatprep.subr.mxu0 0.0
  %5452 = vmatpush1.msra.mxu0 0.0
  %5453 = vmatprep.subr.mxu0 0.0
  %5454 = vmatpush1.msra.mxu0 0.0
  %5455 = vmatprep.subr.mxu0 0.0
  %5456 = vmatpush1.msra.mxu0 0.0
  %5457 = vmatprep.subr.mxu0 0.0
  %5458 = vmatpush1.msra.mxu0 0.0
  %5459 = vmatprep.subr.mxu0 0.0
  %5460 = vmatpush1.msra.mxu0 0.0
  %5461 = vmatprep.subr.mxu0 0.0
  %5462 = vmatpush1.msra.mxu0 0.0
  %5463 = vmatprep.subr.mxu0 0.0
  %5464 = vmatpush1.msra.mxu0 0.0
  %5465 = vmatprep.subr.mxu0 0.0
  %5466 = vmatpush1.msra.mxu0 0.0
  %5467 = vmatprep.subr.mxu0 0.0
  %5468 = vmatpush1.msra.mxu0 0.0
  %5469 = vmatprep.subr.mxu0 0.0
  %5470 = vmatpush1.msra.mxu0 0.0
  %5471 = vmatprep.subr.mxu0 0.0
  %5472 = vmatpush1.msra.mxu0 0.0
  %5473 = vmatprep.subr.mxu0 0.0
  %5474 = vmatpush1.msra.mxu0 0.0
  %5475 = vmatprep.subr.mxu0 0.0
  %5476 = vmatpush1.msra.mxu0 0.0
  %5477 = vmatprep.subr.mxu0 0.0
  %5478 = vmatpush1.msra.mxu0 0.0
  %5479 = vmatprep.subr.mxu0 0.0
  %5480 = vmatpush1.msra.mxu0 0.0
  %5481 = vmatprep.subr.mxu0 0.0
  %5482 = vmatpush1.msra.mxu0 0.0
  %5483 = vmatprep.subr.mxu0 0.0
  %5484 = vmatpush1.msra.mxu0 0.0
  %5485 = vmatprep.subr.mxu0 0.0
  %5486 = vmatpush1.msra.mxu0 0.0
  %5487 = vmatprep.subr.mxu0 0.0
  %5488 = vmatpush1.msra.mxu0 0.0
  %5489 = vmatprep.subr.mxu0 0.0
  %5490 = vmatpush1.msra.mxu0 0.0
  %5491 = vmatprep.subr.mxu0 0.0
  %5492 = vmatpush1.msra.mxu0 0.0
  %5493 = vmatprep.subr.mxu0 0.0
  %5494 = vmatpush1.msra.mxu0 0.0
  %5495 = vmatprep.mubr.f32.mxu0 0.0
  %5496 = vmatmul.mubr.f32.gmra.mrb[0].mxu0 %v5195
  %v5497 = vpop.f32.mrb[0].mxu0
  %v5498 = vadd.f32 %v5141, %v5497
  %v5499 = vpop.f32.mrb[0].mxu0
  %v5500 = vadd.f32 %v5145, %v5499
  %5501 = vmatprep.mubr.f32.mxu0 0.0
  %5502 = vmatmul.mubr.f32.gmra.mrb[0].mxu0 %v5198
  %v5503 = vpop.f32.mrb[0].mxu0
  %v5504 = vadd.f32 %v5141, %v5503
  %v5505 = vpop.f32.mrb[0].mxu0
  %v5506 = vadd.f32 %v5145, %v5505
  %5507 = vdwg.mxu0
  %5508 = vmatprep.subr.mxu0 %v5054
  %5509 = vmatpush1.msra.mxu0 %v5053
  %5510 = vmatprep.subr.mxu0 %v5070
  %5511 = vmatpush1.msra.mxu0 %v5069
  %5512 = vmatprep.subr.mxu0 %v5086
  %5513 = vmatpush1.msra.mxu0 %v5085
  %5514 = vmatprep.subr.mxu0 %v5102
  %5515 = vmatpush1.msra.mxu0 %v5101
  %5516 = vmatprep.subr.mxu0 0.0
  %5517 = vmatpush1.msra.mxu0 0.0
  %5518 = vmatprep.subr.mxu0 0.0
  %5519 = vmatpush1.msra.mxu0 0.0
  %5520 = vmatprep.subr.mxu0 0.0
  %5521 = vmatpush1.msra.mxu0 0.0
  %5522 = vmatprep.subr.mxu0 0.0
  %5523 = vmatpush1.msra.mxu0 0.0
  %5524 = vmatprep.subr.mxu0 0.0
  %5525 = vmatpush1.msra.mxu0 0.0
  %5526 = vmatprep.subr.mxu0 0.0
  %5527 = vmatpush1.msra.mxu0 0.0
  %5528 = vmatprep.subr.mxu0 0.0
  %5529 = vmatpush1.msra.mxu0 0.0
  %5530 = vmatprep.subr.mxu0 0.0
  %5531 = vmatpush1.msra.mxu0 0.0
  %5532 = vmatprep.subr.mxu0 0.0
  %5533 = vmatpush1.msra.mxu0 0.0
  %5534 = vmatprep.subr.mxu0 0.0
  %5535 = vmatpush1.msra.mxu0 0.0
  %5536 = vmatprep.subr.mxu0 0.0
  %5537 = vmatpush1.msra.mxu0 0.0
  %5538 = vmatprep.subr.mxu0 0.0
  %5539 = vmatpush1.msra.mxu0 0.0
  %5540 = vmatprep.subr.mxu0 0.0
  %5541 = vmatpush1.msra.mxu0 0.0
  %5542 = vmatprep.subr.mxu0 0.0
  %5543 = vmatpush1.msra.mxu0 0.0
  %5544 = vmatprep.subr.mxu0 0.0
  %5545 = vmatpush1.msra.mxu0 0.0
  %5546 = vmatprep.subr.mxu0 0.0
  %5547 = vmatpush1.msra.mxu0 0.0
  %5548 = vmatprep.subr.mxu0 0.0
  %5549 = vmatpush1.msra.mxu0 0.0
  %5550 = vmatprep.subr.mxu0 0.0
  %5551 = vmatpush1.msra.mxu0 0.0
  %5552 = vmatprep.subr.mxu0 0.0
  %5553 = vmatpush1.msra.mxu0 0.0
  %5554 = vmatprep.subr.mxu0 0.0
  %5555 = vmatpush1.msra.mxu0 0.0
  %5556 = vmatprep.subr.mxu0 0.0
  %5557 = vmatpush1.msra.mxu0 0.0
  %5558 = vmatprep.subr.mxu0 0.0
  %5559 = vmatpush1.msra.mxu0 0.0
  %5560 = vmatprep.subr.mxu0 0.0
  %5561 = vmatpush1.msra.mxu0 0.0
  %5562 = vmatprep.subr.mxu0 0.0
  %5563 = vmatpush1.msra.mxu0 0.0
  %5564 = vmatprep.subr.mxu0 0.0
  %5565 = vmatpush1.msra.mxu0 0.0
  %5566 = vmatprep.subr.mxu0 0.0
  %5567 = vmatpush1.msra.mxu0 0.0
  %5568 = vmatprep.subr.mxu0 0.0
  %5569 = vmatpush1.msra.mxu0 0.0
  %5570 = vmatprep.subr.mxu0 0.0
  %5571 = vmatpush1.msra.mxu0 0.0
  %5572 = vmatprep.mubr.f32.mxu0 0.0
  %5573 = vmatmul.mubr.f32.gmra.mrb[0].mxu0 %v5195
  %v5574 = vpop.f32.mrb[0].mxu0
  %v5575 = vadd.f32 %v5149, %v5574
  %v5576 = vpop.f32.mrb[0].mxu0
  %v5577 = vadd.f32 %v5153, %v5576
  %5578 = vmatprep.mubr.f32.mxu0 0.0
  %5579 = vmatmul.mubr.f32.gmra.mrb[0].mxu0 %v5198
  %v5580 = vpop.f32.mrb[0].mxu0
  %v5581 = vadd.f32 %v5149, %v5580
  %v5582 = vpop.f32.mrb[0].mxu0
  %v5583 = vadd.f32 %v5153, %v5582
  %5584 = vdwg.mxu0
  %5585 = vmatprep.subr.mxu0 %v5056
  %5586 = vmatpush1.msra.mxu0 %v5055
  %5587 = vmatprep.subr.mxu0 %v5072
  %5588 = vmatpush1.msra.mxu0 %v5071
  %5589 = vmatprep.subr.mxu0 %v5088
  %5590 = vmatpush1.msra.mxu0 %v5087
  %5591 = vmatprep.subr.mxu0 %v5104
  %5592 = vmatpush1.msra.mxu0 %v5103
  %5593 = vmatprep.subr.mxu0 0.0
  %5594 = vmatpush1.msra.mxu0 0.0
  %5595 = vmatprep.subr.mxu0 0.0
  %5596 = vmatpush1.msra.mxu0 0.0
  %5597 = vmatprep.subr.mxu0 0.0
  %5598 = vmatpush1.msra.mxu0 0.0
  %5599 = vmatprep.subr.mxu0 0.0
  %5600 = vmatpush1.msra.mxu0 0.0
  %5601 = vmatprep.subr.mxu0 0.0
  %5602 = vmatpush1.msra.mxu0 0.0
  %5603 = vmatprep.subr.mxu0 0.0
  %5604 = vmatpush1.msra.mxu0 0.0
  %5605 = vmatprep.subr.mxu0 0.0
  %5606 = vmatpush1.msra.mxu0 0.0
  %5607 = vmatprep.subr.mxu0 0.0
  %5608 = vmatpush1.msra.mxu0 0.0
  %5609 = vmatprep.subr.mxu0 0.0
  %5610 = vmatpush1.msra.mxu0 0.0
  %5611 = vmatprep.subr.mxu0 0.0
  %5612 = vmatpush1.msra.mxu0 0.0
  %5613 = vmatprep.subr.mxu0 0.0
  %5614 = vmatpush1.msra.mxu0 0.0
  %5615 = vmatprep.subr.mxu0 0.0
  %5616 = vmatpush1.msra.mxu0 0.0
  %5617 = vmatprep.subr.mxu0 0.0
  %5618 = vmatpush1.msra.mxu0 0.0
  %5619 = vmatprep.subr.mxu0 0.0
  %5620 = vmatpush1.msra.mxu0 0.0
  %5621 = vmatprep.subr.mxu0 0.0
  %5622 = vmatpush1.msra.mxu0 0.0
  %5623 = vmatprep.subr.mxu0 0.0
  %5624 = vmatpush1.msra.mxu0 0.0
  %5625 = vmatprep.subr.mxu0 0.0
  %5626 = vmatpush1.msra.mxu0 0.0
  %5627 = vmatprep.subr.mxu0 0.0
  %5628 = vmatpush1.msra.mxu0 0.0
  %5629 = vmatprep.subr.mxu0 0.0
  %5630 = vmatpush1.msra.mxu0 0.0
  %5631 = vmatprep.subr.mxu0 0.0
  %5632 = vmatpush1.msra.mxu0 0.0
  %5633 = vmatprep.subr.mxu0 0.0
  %5634 = vmatpush1.msra.mxu0 0.0
  %5635 = vmatprep.subr.mxu0 0.0
  %5636 = vmatpush1.msra.mxu0 0.0
  %5637 = vmatprep.subr.mxu0 0.0
  %5638 = vmatpush1.msra.mxu0 0.0
  %5639 = vmatprep.subr.mxu0 0.0
  %5640 = vmatpush1.msra.mxu0 0.0
  %5641 = vmatprep.subr.mxu0 0.0
  %5642 = vmatpush1.msra.mxu0 0.0
  %5643 = vmatprep.subr.mxu0 0.0
  %5644 = vmatpush1.msra.mxu0 0.0
  %5645 = vmatprep.subr.mxu0 0.0
  %5646 = vmatpush1.msra.mxu0 0.0
  %5647 = vmatprep.subr.mxu0 0.0
  %5648 = vmatpush1.msra.mxu0 0.0
  %5649 = vmatprep.mubr.f32.mxu0 0.0
  %5650 = vmatmul.mubr.f32.gmra.mrb[0].mxu0 %v5195
  %v5651 = vpop.f32.mrb[0].mxu0
  %v5652 = vadd.f32 %v5157, %v5651
  %v5653 = vpop.f32.mrb[0].mxu0
  %v5654 = vadd.f32 %v5161, %v5653
  %5655 = vmatprep.mubr.f32.mxu0 0.0
  %5656 = vmatmul.mubr.f32.gmra.mrb[0].mxu0 %v5198
  %v5657 = vpop.f32.mrb[0].mxu0
  %v5658 = vadd.f32 %v5157, %v5657
  %v5659 = vpop.f32.mrb[0].mxu0
  %v5660 = vadd.f32 %v5161, %v5659
  %5661 = vdwg.mxu0
  %5662 = vmatprep.subr.mxu0 %v5058
  %5663 = vmatpush1.msra.mxu0 %v5057
  %5664 = vmatprep.subr.mxu0 %v5074
  %5665 = vmatpush1.msra.mxu0 %v5073
  %5666 = vmatprep.subr.mxu0 %v5090
  %5667 = vmatpush1.msra.mxu0 %v5089
  %5668 = vmatprep.subr.mxu0 %v5106
  %5669 = vmatpush1.msra.mxu0 %v5105
  %5670 = vmatprep.subr.mxu0 0.0
  %5671 = vmatpush1.msra.mxu0 0.0
  %5672 = vmatprep.subr.mxu0 0.0
  %5673 = vmatpush1.msra.mxu0 0.0
  %5674 = vmatprep.subr.mxu0 0.0
  %5675 = vmatpush1.msra.mxu0 0.0
  %5676 = vmatprep.subr.mxu0 0.0
  %5677 = vmatpush1.msra.mxu0 0.0
  %5678 = vmatprep.subr.mxu0 0.0
  %5679 = vmatpush1.msra.mxu0 0.0
  %5680 = vmatprep.subr.mxu0 0.0
  %5681 = vmatpush1.msra.mxu0 0.0
  %5682 = vmatprep.subr.mxu0 0.0
  %5683 = vmatpush1.msra.mxu0 0.0
  %5684 = vmatprep.subr.mxu0 0.0
  %5685 = vmatpush1.msra.mxu0 0.0
  %5686 = vmatprep.subr.mxu0 0.0
  %5687 = vmatpush1.msra.mxu0 0.0
  %5688 = vmatprep.subr.mxu0 0.0
  %5689 = vmatpush1.msra.mxu0 0.0
  %5690 = vmatprep.subr.mxu0 0.0
  %5691 = vmatpush1.msra.mxu0 0.0
  %5692 = vmatprep.subr.mxu0 0.0
  %5693 = vmatpush1.msra.mxu0 0.0
  %5694 = vmatprep.subr.mxu0 0.0
  %5695 = vmatpush1.msra.mxu0 0.0
  %5696 = vmatprep.subr.mxu0 0.0
  %5697 = vmatpush1.msra.mxu0 0.0
  %5698 = vmatprep.subr.mxu0 0.0
  %5699 = vmatpush1.msra.mxu0 0.0
  %5700 = vmatprep.subr.mxu0 0.0
  %5701 = vmatpush1.msra.mxu0 0.0
  %5702 = vmatprep.subr.mxu0 0.0
  %5703 = vmatpush1.msra.mxu0 0.0
  %5704 = vmatprep.subr.mxu0 0.0
  %5705 = vmatpush1.msra.mxu0 0.0
  %5706 = vmatprep.subr.mxu0 0.0
  %5707 = vmatpush1.msra.mxu0 0.0
  %5708 = vmatprep.subr.mxu0 0.0
  %5709 = vmatpush1.msra.mxu0 0.0
  %5710 = vmatprep.subr.mxu0 0.0
  %5711 = vmatpush1.msra.mxu0 0.0
  %5712 = vmatprep.subr.mxu0 0.0
  %5713 = vmatpush1.msra.mxu0 0.0
  %5714 = vmatprep.subr.mxu0 0.0
  %5715 = vmatpush1.msra.mxu0 0.0
  %5716 = vmatprep.subr.mxu0 0.0
  %5717 = vmatpush1.msra.mxu0 0.0
  %5718 = vmatprep.subr.mxu0 0.0
  %5719 = vmatpush1.msra.mxu0 0.0
  %5720 = vmatprep.subr.mxu0 0.0
  %5721 = vmatpush1.msra.mxu0 0.0
  %5722 = vmatprep.subr.mxu0 0.0
  %5723 = vmatpush1.msra.mxu0 0.0
  %5724 = vmatprep.subr.mxu0 0.0
  %5725 = vmatpush1.msra.mxu0 0.0
  %5726 = vmatprep.mubr.f32.mxu0 0.0
  %5727 = vmatmul.mubr.f32.gmra.mrb[0].mxu0 %v5195
  %v5728 = vpop.f32.mrb[0].mxu0
  %v5729 = vadd.f32 %v5165, %v5728
  %v5730 = vpop.f32.mrb[0].mxu0
  %v5731 = vadd.f32 %v5169, %v5730
  %5732 = vmatprep.mubr.f32.mxu0 0.0
  %5733 = vmatmul.mubr.f32.gmra.mrb[0].mxu0 %v5198
  %v5734 = vpop.f32.mrb[0].mxu0
  %v5735 = vadd.f32 %v5165, %v5734
  %v5736 = vpop.f32.mrb[0].mxu0
  %v5737 = vadd.f32 %v5169, %v5736
  %5738 = vdwg.mxu0
  %5739 = vmatprep.subr.mxu0 %v5060
  %5740 = vmatpush1.msra.mxu0 %v5059
  %5741 = vmatprep.subr.mxu0 %v5076
  %5742 = vmatpush1.msra.mxu0 %v5075
  %5743 = vmatprep.subr.mxu0 %v5092
  %5744 = vmatpush1.msra.mxu0 %v5091
  %5745 = vmatprep.subr.mxu0 %v5108
  %5746 = vmatpush1.msra.mxu0 %v5107
  %5747 = vmatprep.subr.mxu0 0.0
  %5748 = vmatpush1.msra.mxu0 0.0
  %5749 = vmatprep.subr.mxu0 0.0
  %5750 = vmatpush1.msra.mxu0 0.0
  %5751 = vmatprep.subr.mxu0 0.0
  %5752 = vmatpush1.msra.mxu0 0.0
  %5753 = vmatprep.subr.mxu0 0.0
  %5754 = vmatpush1.msra.mxu0 0.0
  %5755 = vmatprep.subr.mxu0 0.0
  %5756 = vmatpush1.msra.mxu0 0.0
  %5757 = vmatprep.subr.mxu0 0.0
  %5758 = vmatpush1.msra.mxu0 0.0
  %5759 = vmatprep.subr.mxu0 0.0
  %5760 = vmatpush1.msra.mxu0 0.0
  %5761 = vmatprep.subr.mxu0 0.0
  %5762 = vmatpush1.msra.mxu0 0.0
  %5763 = vmatprep.subr.mxu0 0.0
  %5764 = vmatpush1.msra.mxu0 0.0
  %5765 = vmatprep.subr.mxu0 0.0
  %5766 = vmatpush1.msra.mxu0 0.0
  %5767 = vmatprep.subr.mxu0 0.0
  %5768 = vmatpush1.msra.mxu0 0.0
  %5769 = vmatprep.subr.mxu0 0.0
  %5770 = vmatpush1.msra.mxu0 0.0
  %5771 = vmatprep.subr.mxu0 0.0
  %5772 = vmatpush1.msra.mxu0 0.0
  %5773 = vmatprep.subr.mxu0 0.0
  %5774 = vmatpush1.msra.mxu0 0.0
  %5775 = vmatprep.subr.mxu0 0.0
  %5776 = vmatpush1.msra.mxu0 0.0
  %5777 = vmatprep.subr.mxu0 0.0
  %5778 = vmatpush1.msra.mxu0 0.0
  %5779 = vmatprep.subr.mxu0 0.0
  %5780 = vmatpush1.msra.mxu0 0.0
  %5781 = vmatprep.subr.mxu0 0.0
  %5782 = vmatpush1.msra.mxu0 0.0
  %5783 = vmatprep.subr.mxu0 0.0
  %5784 = vmatpush1.msra.mxu0 0.0
  %5785 = vmatprep.subr.mxu0 0.0
  %5786 = vmatpush1.msra.mxu0 0.0
  %5787 = vmatprep.subr.mxu0 0.0
  %5788 = vmatpush1.msra.mxu0 0.0
  %5789 = vmatprep.subr.mxu0 0.0
  %5790 = vmatpush1.msra.mxu0 0.0
  %5791 = vmatprep.subr.mxu0 0.0
  %5792 = vmatpush1.msra.mxu0 0.0
  %5793 = vmatprep.subr.mxu0 0.0
  %5794 = vmatpush1.msra.mxu0 0.0
  %5795 = vmatprep.subr.mxu0 0.0
  %5796 = vmatpush1.msra.mxu0 0.0
  %5797 = vmatprep.subr.mxu0 0.0
  %5798 = vmatpush1.msra.mxu0 0.0
  %5799 = vmatprep.subr.mxu0 0.0
  %5800 = vmatpush1.msra.mxu0 0.0
  %5801 = vmatprep.subr.mxu0 0.0
  %5802 = vmatpush1.msra.mxu0 0.0
  %5803 = vmatprep.mubr.f32.mxu0 0.0
  %5804 = vmatmul.mubr.f32.gmra.mrb[0].mxu0 %v5195
  %v5805 = vpop.f32.mrb[0].mxu0
  %v5806 = vadd.f32 %v5173, %v5805
  %v5807 = vpop.f32.mrb[0].mxu0
  %v5808 = vadd.f32 %v5177, %v5807
  %5809 = vmatprep.mubr.f32.mxu0 0.0
  %5810 = vmatmul.mubr.f32.gmra.mrb[0].mxu0 %v5198
  %v5811 = vpop.f32.mrb[0].mxu0
  %v5812 = vadd.f32 %v5173, %v5811
  %v5813 = vpop.f32.mrb[0].mxu0
  %v5814 = vadd.f32 %v5177, %v5813
  %5815 = vdwg.mxu0
  %v5816 = vmax.f32 %v5267, 0.0
  %v5817 = vmax.f32 %v5269, 0.0
  %v5818 = vmax.f32 %v5344, 0.0
  %v5819 = vmax.f32 %v5346, 0.0
  %v5820 = vmax.f32 %v5421, 0.0
  %v5821 = vmax.f32 %v5423, 0.0
  %v5822 = vmax.f32 %v5498, 0.0
  %v5823 = vmax.f32 %v5500, 0.0
  %v5824 = vmax.f32 %v5575, 0.0
  %v5825 = vmax.f32 %v5577, 0.0
  %v5826 = vmax.f32 %v5652, 0.0
  %v5827 = vmax.f32 %v5654, 0.0
  %v5828 = vmax.f32 %v5729, 0.0
  %v5829 = vmax.f32 %v5731, 0.0
  %v5830 = vmax.f32 %v5806, 0.0
  %v5831 = vmax.f32 %v5808, 0.0
  %v5832 = vmax.f32 %v5273, 0.0
  %v5833 = vmax.f32 %v5275, 0.0
  %v5834 = vmax.f32 %v5350, 0.0
  %v5835 = vmax.f32 %v5352, 0.0
  %v5836 = vmax.f32 %v5427, 0.0
  %v5837 = vmax.f32 %v5429, 0.0
  %v5838 = vmax.f32 %v5504, 0.0
  %v5839 = vmax.f32 %v5506, 0.0
  %v5840 = vmax.f32 %v5581, 0.0
  %v5841 = vmax.f32 %v5583, 0.0
  %v5842 = vmax.f32 %v5658, 0.0
  %v5843 = vmax.f32 %v5660, 0.0
  %v5844 = vmax.f32 %v5735, 0.0
  %v5845 = vmax.f32 %v5737, 0.0
  %v5846 = vmax.f32 %v5812, 0.0
  %v5847 = vmax.f32 %v5814, 0.0
  %s5848 = scalar_lea.vmem %s11, 2048
  %v5849 = vld [vmem:[%s5848] sm:$0xff]
  %v5850 = vld [vmem:[%s5848 + $0x8] sm:$0xff]
  %v5851 = vld [vmem:[%s5848 + $0x10] sm:$0xff]
  %v5852 = vld [vmem:[%s5848 + $0x18] sm:$0xff]
  %v5853 = vld [vmem:[%s5848 + $0x20] sm:$0xff]
  %v5854 = vld [vmem:[%s5848 + $0x28] sm:$0xff]
  %v5855 = vld [vmem:[%s5848 + $0x30] sm:$0xff]
  %v5856 = vld [vmem:[%s5848 + $0x38] sm:$0xff]
  %v5857 = vld [vmem:[%s5848 + $0x40] sm:$0xff]
  %v5858 = vld [vmem:[%s5848 + $0x48] sm:$0xff]
  %v5859 = vld [vmem:[%s5848 + $0x50] sm:$0xff]
  %v5860 = vld [vmem:[%s5848 + $0x58] sm:$0xff]
  %v5861 = vld [vmem:[%s5848 + $0x60] sm:$0xff]
  %v5862 = vld [vmem:[%s5848 + $0x68] sm:$0xff]
  %v5863 = vld [vmem:[%s5848 + $0x70] sm:$0xff]
  %v5864 = vld [vmem:[%s5848 + $0x78] sm:$0xff]
  %v5865 = vld [vmem:[%s5848 + $0x80] sm:$0xff]
  %v5866 = vld [vmem:[%s5848 + $0x88] sm:$0xff]
  %v5867 = vld [vmem:[%s5848 + $0x90] sm:$0xff]
  %v5868 = vld [vmem:[%s5848 + $0x98] sm:$0xff]
  %v5869 = vld [vmem:[%s5848 + $0xa0] sm:$0xff]
  %v5870 = vld [vmem:[%s5848 + $0xa8] sm:$0xff]
  %v5871 = vld [vmem:[%s5848 + $0xb0] sm:$0xff]
  %v5872 = vld [vmem:[%s5848 + $0xb8] sm:$0xff]
  %v5873 = vld [vmem:[%s5848 + $0xc0] sm:$0xff]
  %v5874 = vld [vmem:[%s5848 + $0xc8] sm:$0xff]
  %v5875 = vld [vmem:[%s5848 + $0xd0] sm:$0xff]
  %v5876 = vld [vmem:[%s5848 + $0xd8] sm:$0xff]
  %v5877 = vld [vmem:[%s5848 + $0xe0] sm:$0xff]
  %v5878 = vld [vmem:[%s5848 + $0xe8] sm:$0xff]
  %v5879 = vld [vmem:[%s5848 + $0xf0] sm:$0xff]
  %v5880 = vld [vmem:[%s5848 + $0xf8] sm:$0xff]
  %v5881 = vld [vmem:[%s5848 + $0x100] sm:$0xff]
  %v5882 = vld [vmem:[%s5848 + $0x108] sm:$0xff]
  %v5883 = vld [vmem:[%s5848 + $0x110] sm:$0xff]
  %v5884 = vld [vmem:[%s5848 + $0x118] sm:$0xff]
  %v5885 = vld [vmem:[%s5848 + $0x120] sm:$0xff]
  %v5886 = vld [vmem:[%s5848 + $0x128] sm:$0xff]
  %v5887 = vld [vmem:[%s5848 + $0x130] sm:$0xff]
  %v5888 = vld [vmem:[%s5848 + $0x138] sm:$0xff]
  %v5889 = vld [vmem:[%s5848 + $0x140] sm:$0xff]
  %v5890 = vld [vmem:[%s5848 + $0x148] sm:$0xff]
  %v5891 = vld [vmem:[%s5848 + $0x150] sm:$0xff]
  %v5892 = vld [vmem:[%s5848 + $0x158] sm:$0xff]
  %v5893 = vld [vmem:[%s5848 + $0x160] sm:$0xff]
  %v5894 = vld [vmem:[%s5848 + $0x168] sm:$0xff]
  %v5895 = vld [vmem:[%s5848 + $0x170] sm:$0xff]
  %v5896 = vld [vmem:[%s5848 + $0x178] sm:$0xff]
  %v5897 = vld [vmem:[%s5848 + $0x180] sm:$0xff]
  %v5898 = vld [vmem:[%s5848 + $0x188] sm:$0xff]
  %v5899 = vld [vmem:[%s5848 + $0x190] sm:$0xff]
  %v5900 = vld [vmem:[%s5848 + $0x198] sm:$0xff]
  %v5901 = vld [vmem:[%s5848 + $0x1a0] sm:$0xff]
  %v5902 = vld [vmem:[%s5848 + $0x1a8] sm:$0xff]
  %v5903 = vld [vmem:[%s5848 + $0x1b0] sm:$0xff]
  %v5904 = vld [vmem:[%s5848 + $0x1b8] sm:$0xff]
  %v5905 = vld [vmem:[%s5848 + $0x1c0] sm:$0xff]
  %v5906 = vld [vmem:[%s5848 + $0x1c8] sm:$0xff]
  %v5907 = vld [vmem:[%s5848 + $0x1d0] sm:$0xff]
  %v5908 = vld [vmem:[%s5848 + $0x1d8] sm:$0xff]
  %v5909 = vld [vmem:[%s5848 + $0x1e0] sm:$0xff]
  %v5910 = vld [vmem:[%s5848 + $0x1e8] sm:$0xff]
  %v5911 = vld [vmem:[%s5848 + $0x1f0] sm:$0xff]
  %v5912 = vld [vmem:[%s5848 + $0x1f8] sm:$0xff]
  %v5913 = vld [vmem:[%s5848 + $0x200] sm:$0xff]
  %v5914 = vld [vmem:[%s5848 + $0x208] sm:$0xff]
  %v5915 = vld [vmem:[%s5848 + $0x210] sm:$0xff]
  %v5916 = vld [vmem:[%s5848 + $0x218] sm:$0xff]
  %v5917 = vld [vmem:[%s5848 + $0x220] sm:$0xff]
  %v5918 = vld [vmem:[%s5848 + $0x228] sm:$0xff]
  %v5919 = vld [vmem:[%s5848 + $0x230] sm:$0xff]
  %v5920 = vld [vmem:[%s5848 + $0x238] sm:$0xff]
  %v5921 = vld [vmem:[%s5848 + $0x240] sm:$0xff]
  %v5922 = vld [vmem:[%s5848 + $0x248] sm:$0xff]
  %v5923 = vld [vmem:[%s5848 + $0x250] sm:$0xff]
  %v5924 = vld [vmem:[%s5848 + $0x258] sm:$0xff]
  %v5925 = vld [vmem:[%s5848 + $0x260] sm:$0xff]
  %v5926 = vld [vmem:[%s5848 + $0x268] sm:$0xff]
  %v5927 = vld [vmem:[%s5848 + $0x270] sm:$0xff]
  %v5928 = vld [vmem:[%s5848 + $0x278] sm:$0xff]
  %v5929 = vld [vmem:[%s5848 + $0x280] sm:$0xff]
  %v5930 = vld [vmem:[%s5848 + $0x288] sm:$0xff]
  %v5931 = vld [vmem:[%s5848 + $0x290] sm:$0xff]
  %v5932 = vld [vmem:[%s5848 + $0x298] sm:$0xff]
  %v5933 = vld [vmem:[%s5848 + $0x2a0] sm:$0xff]
  %v5934 = vld [vmem:[%s5848 + $0x2a8] sm:$0xff]
  %v5935 = vld [vmem:[%s5848 + $0x2b0] sm:$0xff]
  %v5936 = vld [vmem:[%s5848 + $0x2b8] sm:$0xff]
  %v5937 = vld [vmem:[%s5848 + $0x2c0] sm:$0xff]
  %v5938 = vld [vmem:[%s5848 + $0x2c8] sm:$0xff]
  %v5939 = vld [vmem:[%s5848 + $0x2d0] sm:$0xff]
  %v5940 = vld [vmem:[%s5848 + $0x2d8] sm:$0xff]
  %v5941 = vld [vmem:[%s5848 + $0x2e0] sm:$0xff]
  %v5942 = vld [vmem:[%s5848 + $0x2e8] sm:$0xff]
  %v5943 = vld [vmem:[%s5848 + $0x2f0] sm:$0xff]
  %v5944 = vld [vmem:[%s5848 + $0x2f8] sm:$0xff]
  %v5945 = vld [vmem:[%s5848 + $0x300] sm:$0xff]
  %v5946 = vld [vmem:[%s5848 + $0x308] sm:$0xff]
  %v5947 = vld [vmem:[%s5848 + $0x310] sm:$0xff]
  %v5948 = vld [vmem:[%s5848 + $0x318] sm:$0xff]
  %v5949 = vld [vmem:[%s5848 + $0x320] sm:$0xff]
  %v5950 = vld [vmem:[%s5848 + $0x328] sm:$0xff]
  %v5951 = vld [vmem:[%s5848 + $0x330] sm:$0xff]
  %v5952 = vld [vmem:[%s5848 + $0x338] sm:$0xff]
  %v5953 = vld [vmem:[%s5848 + $0x340] sm:$0xff]
  %v5954 = vld [vmem:[%s5848 + $0x348] sm:$0xff]
  %v5955 = vld [vmem:[%s5848 + $0x350] sm:$0xff]
  %v5956 = vld [vmem:[%s5848 + $0x358] sm:$0xff]
  %v5957 = vld [vmem:[%s5848 + $0x360] sm:$0xff]
  %v5958 = vld [vmem:[%s5848 + $0x368] sm:$0xff]
  %v5959 = vld [vmem:[%s5848 + $0x370] sm:$0xff]
  %v5960 = vld [vmem:[%s5848 + $0x378] sm:$0xff]
  %v5961 = vld [vmem:[%s5848 + $0x380] sm:$0xff]
  %v5962 = vld [vmem:[%s5848 + $0x388] sm:$0xff]
  %v5963 = vld [vmem:[%s5848 + $0x390] sm:$0xff]
  %v5964 = vld [vmem:[%s5848 + $0x398] sm:$0xff]
  %v5965 = vld [vmem:[%s5848 + $0x3a0] sm:$0xff]
  %v5966 = vld [vmem:[%s5848 + $0x3a8] sm:$0xff]
  %v5967 = vld [vmem:[%s5848 + $0x3b0] sm:$0xff]
  %v5968 = vld [vmem:[%s5848 + $0x3b8] sm:$0xff]
  %v5969 = vld [vmem:[%s5848 + $0x3c0] sm:$0xff]
  %v5970 = vld [vmem:[%s5848 + $0x3c8] sm:$0xff]
  %v5971 = vld [vmem:[%s5848 + $0x3d0] sm:$0xff]
  %v5972 = vld [vmem:[%s5848 + $0x3d8] sm:$0xff]
  %v5973 = vld [vmem:[%s5848 + $0x3e0] sm:$0xff]
  %v5974 = vld [vmem:[%s5848 + $0x3e8] sm:$0xff]
  %v5975 = vld [vmem:[%s5848 + $0x3f0] sm:$0xff]
  %v5976 = vld [vmem:[%s5848 + $0x3f8] sm:$0xff]
  %v5977 = vld [vmem:[%s5848 + $0x400] sm:$0xff]
  %v5978 = vld [vmem:[%s5848 + $0x408] sm:$0xff]
  %v5979 = vld [vmem:[%s5848 + $0x410] sm:$0xff]
  %v5980 = vld [vmem:[%s5848 + $0x418] sm:$0xff]
  %v5981 = vld [vmem:[%s5848 + $0x420] sm:$0xff]
  %v5982 = vld [vmem:[%s5848 + $0x428] sm:$0xff]
  %v5983 = vld [vmem:[%s5848 + $0x430] sm:$0xff]
  %v5984 = vld [vmem:[%s5848 + $0x438] sm:$0xff]
  %v5985 = vld [vmem:[%s5848 + $0x440] sm:$0xff]
  %v5986 = vld [vmem:[%s5848 + $0x448] sm:$0xff]
  %v5987 = vld [vmem:[%s5848 + $0x450] sm:$0xff]
  %v5988 = vld [vmem:[%s5848 + $0x458] sm:$0xff]
  %v5989 = vld [vmem:[%s5848 + $0x460] sm:$0xff]
  %v5990 = vld [vmem:[%s5848 + $0x468] sm:$0xff]
  %v5991 = vld [vmem:[%s5848 + $0x470] sm:$0xff]
  %v5992 = vld [vmem:[%s5848 + $0x478] sm:$0xff]
  %v5993 = vld [vmem:[%s5848 + $0x480] sm:$0xff]
  %v5994 = vld [vmem:[%s5848 + $0x488] sm:$0xff]
  %v5995 = vld [vmem:[%s5848 + $0x490] sm:$0xff]
  %v5996 = vld [vmem:[%s5848 + $0x498] sm:$0xff]
  %v5997 = vld [vmem:[%s5848 + $0x4a0] sm:$0xff]
  %v5998 = vld [vmem:[%s5848 + $0x4a8] sm:$0xff]
  %v5999 = vld [vmem:[%s5848 + $0x4b0] sm:$0xff]
  %v6000 = vld [vmem:[%s5848 + $0x4b8] sm:$0xff]
  %v6001 = vld [vmem:[%s5848 + $0x4c0] sm:$0xff]
  %v6002 = vld [vmem:[%s5848 + $0x4c8] sm:$0xff]
  %v6003 = vld [vmem:[%s5848 + $0x4d0] sm:$0xff]
  %v6004 = vld [vmem:[%s5848 + $0x4d8] sm:$0xff]
  %v6005 = vld [vmem:[%s5848 + $0x4e0] sm:$0xff]
  %v6006 = vld [vmem:[%s5848 + $0x4e8] sm:$0xff]
  %v6007 = vld [vmem:[%s5848 + $0x4f0] sm:$0xff]
  %v6008 = vld [vmem:[%s5848 + $0x4f8] sm:$0xff]
  %v6009 = vld [vmem:[%s5848 + $0x500] sm:$0xff]
  %v6010 = vld [vmem:[%s5848 + $0x508] sm:$0xff]
  %v6011 = vld [vmem:[%s5848 + $0x510] sm:$0xff]
  %v6012 = vld [vmem:[%s5848 + $0x518] sm:$0xff]
  %v6013 = vld [vmem:[%s5848 + $0x520] sm:$0xff]
  %v6014 = vld [vmem:[%s5848 + $0x528] sm:$0xff]
  %v6015 = vld [vmem:[%s5848 + $0x530] sm:$0xff]
  %v6016 = vld [vmem:[%s5848 + $0x538] sm:$0xff]
  %v6017 = vld [vmem:[%s5848 + $0x540] sm:$0xff]
  %v6018 = vld [vmem:[%s5848 + $0x548] sm:$0xff]
  %v6019 = vld [vmem:[%s5848 + $0x550] sm:$0xff]
  %v6020 = vld [vmem:[%s5848 + $0x558] sm:$0xff]
  %v6021 = vld [vmem:[%s5848 + $0x560] sm:$0xff]
  %v6022 = vld [vmem:[%s5848 + $0x568] sm:$0xff]
  %v6023 = vld [vmem:[%s5848 + $0x570] sm:$0xff]
  %v6024 = vld [vmem:[%s5848 + $0x578] sm:$0xff]
  %v6025 = vld [vmem:[%s5848 + $0x580] sm:$0xff]
  %v6026 = vld [vmem:[%s5848 + $0x588] sm:$0xff]
  %v6027 = vld [vmem:[%s5848 + $0x590] sm:$0xff]
  %v6028 = vld [vmem:[%s5848 + $0x598] sm:$0xff]
  %v6029 = vld [vmem:[%s5848 + $0x5a0] sm:$0xff]
  %v6030 = vld [vmem:[%s5848 + $0x5a8] sm:$0xff]
  %v6031 = vld [vmem:[%s5848 + $0x5b0] sm:$0xff]
  %v6032 = vld [vmem:[%s5848 + $0x5b8] sm:$0xff]
  %v6033 = vld [vmem:[%s5848 + $0x5c0] sm:$0xff]
  %v6034 = vld [vmem:[%s5848 + $0x5c8] sm:$0xff]
  %v6035 = vld [vmem:[%s5848 + $0x5d0] sm:$0xff]
  %v6036 = vld [vmem:[%s5848 + $0x5d8] sm:$0xff]
  %v6037 = vld [vmem:[%s5848 + $0x5e0] sm:$0xff]
  %v6038 = vld [vmem:[%s5848 + $0x5e8] sm:$0xff]
  %v6039 = vld [vmem:[%s5848 + $0x5f0] sm:$0xff]
  %v6040 = vld [vmem:[%s5848 + $0x5f8] sm:$0xff]
  %v6041 = vld [vmem:[%s5848 + $0x600] sm:$0xff]
  %v6042 = vld [vmem:[%s5848 + $0x608] sm:$0xff]
  %v6043 = vld [vmem:[%s5848 + $0x610] sm:$0xff]
  %v6044 = vld [vmem:[%s5848 + $0x618] sm:$0xff]
  %v6045 = vld [vmem:[%s5848 + $0x620] sm:$0xff]
  %v6046 = vld [vmem:[%s5848 + $0x628] sm:$0xff]
  %v6047 = vld [vmem:[%s5848 + $0x630] sm:$0xff]
  %v6048 = vld [vmem:[%s5848 + $0x638] sm:$0xff]
  %v6049 = vld [vmem:[%s5848 + $0x640] sm:$0xff]
  %v6050 = vld [vmem:[%s5848 + $0x648] sm:$0xff]
  %v6051 = vld [vmem:[%s5848 + $0x650] sm:$0xff]
  %v6052 = vld [vmem:[%s5848 + $0x658] sm:$0xff]
  %v6053 = vld [vmem:[%s5848 + $0x660] sm:$0xff]
  %v6054 = vld [vmem:[%s5848 + $0x668] sm:$0xff]
  %v6055 = vld [vmem:[%s5848 + $0x670] sm:$0xff]
  %v6056 = vld [vmem:[%s5848 + $0x678] sm:$0xff]
  %v6057 = vld [vmem:[%s5848 + $0x680] sm:$0xff]
  %v6058 = vld [vmem:[%s5848 + $0x688] sm:$0xff]
  %v6059 = vld [vmem:[%s5848 + $0x690] sm:$0xff]
  %v6060 = vld [vmem:[%s5848 + $0x698] sm:$0xff]
  %v6061 = vld [vmem:[%s5848 + $0x6a0] sm:$0xff]
  %v6062 = vld [vmem:[%s5848 + $0x6a8] sm:$0xff]
  %v6063 = vld [vmem:[%s5848 + $0x6b0] sm:$0xff]
  %v6064 = vld [vmem:[%s5848 + $0x6b8] sm:$0xff]
  %v6065 = vld [vmem:[%s5848 + $0x6c0] sm:$0xff]
  %v6066 = vld [vmem:[%s5848 + $0x6c8] sm:$0xff]
  %v6067 = vld [vmem:[%s5848 + $0x6d0] sm:$0xff]
  %v6068 = vld [vmem:[%s5848 + $0x6d8] sm:$0xff]
  %v6069 = vld [vmem:[%s5848 + $0x6e0] sm:$0xff]
  %v6070 = vld [vmem:[%s5848 + $0x6e8] sm:$0xff]
  %v6071 = vld [vmem:[%s5848 + $0x6f0] sm:$0xff]
  %v6072 = vld [vmem:[%s5848 + $0x6f8] sm:$0xff]
  %v6073 = vld [vmem:[%s5848 + $0x700] sm:$0xff]
  %v6074 = vld [vmem:[%s5848 + $0x708] sm:$0xff]
  %v6075 = vld [vmem:[%s5848 + $0x710] sm:$0xff]
  %v6076 = vld [vmem:[%s5848 + $0x718] sm:$0xff]
  %v6077 = vld [vmem:[%s5848 + $0x720] sm:$0xff]
  %v6078 = vld [vmem:[%s5848 + $0x728] sm:$0xff]
  %v6079 = vld [vmem:[%s5848 + $0x730] sm:$0xff]
  %v6080 = vld [vmem:[%s5848 + $0x738] sm:$0xff]
  %v6081 = vld [vmem:[%s5848 + $0x740] sm:$0xff]
  %v6082 = vld [vmem:[%s5848 + $0x748] sm:$0xff]
  %v6083 = vld [vmem:[%s5848 + $0x750] sm:$0xff]
  %v6084 = vld [vmem:[%s5848 + $0x758] sm:$0xff]
  %v6085 = vld [vmem:[%s5848 + $0x760] sm:$0xff]
  %v6086 = vld [vmem:[%s5848 + $0x768] sm:$0xff]
  %v6087 = vld [vmem:[%s5848 + $0x770] sm:$0xff]
  %v6088 = vld [vmem:[%s5848 + $0x778] sm:$0xff]
  %v6089 = vld [vmem:[%s5848 + $0x780] sm:$0xff]
  %v6090 = vld [vmem:[%s5848 + $0x788] sm:$0xff]
  %v6091 = vld [vmem:[%s5848 + $0x790] sm:$0xff]
  %v6092 = vld [vmem:[%s5848 + $0x798] sm:$0xff]
  %v6093 = vld [vmem:[%s5848 + $0x7a0] sm:$0xff]
  %v6094 = vld [vmem:[%s5848 + $0x7a8] sm:$0xff]
  %v6095 = vld [vmem:[%s5848 + $0x7b0] sm:$0xff]
  %v6096 = vld [vmem:[%s5848 + $0x7b8] sm:$0xff]
  %v6097 = vld [vmem:[%s5848 + $0x7c0] sm:$0xff]
  %v6098 = vld [vmem:[%s5848 + $0x7c8] sm:$0xff]
  %v6099 = vld [vmem:[%s5848 + $0x7d0] sm:$0xff]
  %v6100 = vld [vmem:[%s5848 + $0x7d8] sm:$0xff]
  %v6101 = vld [vmem:[%s5848 + $0x7e0] sm:$0xff]
  %v6102 = vld [vmem:[%s5848 + $0x7e8] sm:$0xff]
  %v6103 = vld [vmem:[%s5848 + $0x7f0] sm:$0xff]
  %v6104 = vld [vmem:[%s5848 + $0x7f8] sm:$0xff]
  %s6105 = scalar_lea.vmem %s12, 1
  %v6106 = vld [vmem:[%s6105] sm:$0x1]
  %v6108 = vlaneseq
  %v6109 = vshrl.u32 %v6108, 7
  %v6110 = vsub.s32 0, %v6109
  %v6111 = vrot.slane %v6106, %v6110
  %6113 = vmatprep.subr.mxu0 0.0
  %6114 = vmatpush1.msra.mxu0 %v5849
  %6115 = vmatprep.subr.mxu0 0.0
  %6116 = vmatpush1.msra.mxu0 %v5850
  %6117 = vmatprep.subr.mxu0 0.0
  %6118 = vmatpush1.msra.mxu0 %v5851
  %6119 = vmatprep.subr.mxu0 0.0
  %6120 = vmatpush1.msra.mxu0 %v5852
  %6121 = vmatprep.subr.mxu0 0.0
  %6122 = vmatpush1.msra.mxu0 %v5853
  %6123 = vmatprep.subr.mxu0 0.0
  %6124 = vmatpush1.msra.mxu0 %v5854
  %6125 = vmatprep.subr.mxu0 0.0
  %6126 = vmatpush1.msra.mxu0 %v5855
  %6127 = vmatprep.subr.mxu0 0.0
  %6128 = vmatpush1.msra.mxu0 %v5856
  %6129 = vmatprep.subr.mxu0 0.0
  %6130 = vmatpush1.msra.mxu0 %v5857
  %6131 = vmatprep.subr.mxu0 0.0
  %6132 = vmatpush1.msra.mxu0 %v5858
  %6133 = vmatprep.subr.mxu0 0.0
  %6134 = vmatpush1.msra.mxu0 %v5859
  %6135 = vmatprep.subr.mxu0 0.0
  %6136 = vmatpush1.msra.mxu0 %v5860
  %6137 = vmatprep.subr.mxu0 0.0
  %6138 = vmatpush1.msra.mxu0 %v5861
  %6139 = vmatprep.subr.mxu0 0.0
  %6140 = vmatpush1.msra.mxu0 %v5862
  %6141 = vmatprep.subr.mxu0 0.0
  %6142 = vmatpush1.msra.mxu0 %v5863
  %6143 = vmatprep.subr.mxu0 0.0
  %6144 = vmatpush1.msra.mxu0 %v5864
  %6145 = vmatprep.subr.mxu0 0.0
  %6146 = vmatpush1.msra.mxu0 %v5865
  %6147 = vmatprep.subr.mxu0 0.0
  %6148 = vmatpush1.msra.mxu0 %v5866
  %6149 = vmatprep.subr.mxu0 0.0
  %6150 = vmatpush1.msra.mxu0 %v5867
  %6151 = vmatprep.subr.mxu0 0.0
  %6152 = vmatpush1.msra.mxu0 %v5868
  %6153 = vmatprep.subr.mxu0 0.0
  %6154 = vmatpush1.msra.mxu0 %v5869
  %6155 = vmatprep.subr.mxu0 0.0
  %6156 = vmatpush1.msra.mxu0 %v5870
  %6157 = vmatprep.subr.mxu0 0.0
  %6158 = vmatpush1.msra.mxu0 %v5871
  %6159 = vmatprep.subr.mxu0 0.0
  %6160 = vmatpush1.msra.mxu0 %v5872
  %6161 = vmatprep.subr.mxu0 0.0
  %6162 = vmatpush1.msra.mxu0 %v5873
  %6163 = vmatprep.subr.mxu0 0.0
  %6164 = vmatpush1.msra.mxu0 %v5874
  %6165 = vmatprep.subr.mxu0 0.0
  %6166 = vmatpush1.msra.mxu0 %v5875
  %6167 = vmatprep.subr.mxu0 0.0
  %6168 = vmatpush1.msra.mxu0 %v5876
  %6169 = vmatprep.subr.mxu0 0.0
  %6170 = vmatpush1.msra.mxu0 %v5877
  %6171 = vmatprep.subr.mxu0 0.0
  %6172 = vmatpush1.msra.mxu0 %v5878
  %6173 = vmatprep.subr.mxu0 0.0
  %6174 = vmatpush1.msra.mxu0 %v5879
  %6175 = vmatprep.subr.mxu0 0.0
  %6176 = vmatpush1.msra.mxu0 %v5880
  %6177 = vmatprep.mubr.f32.mxu0 %v5817
  %6178 = vmatmul.mubr.f32.gmra.mrb[0].mxu0 %v5816
  %v6179 = vpop.f32.mrb[0].mxu0
  %v6180 = vadd.f32 %v6111, %v6179
  %v6181 = vpop.f32.mrb[0].mxu0
  %6182 = vmatprep.mubr.f32.mxu0 %v5833
  %6183 = vmatmul.mubr.f32.gmra.mrb[0].mxu0 %v5832
  %v6184 = vpop.f32.mrb[0].mxu0
  %v6185 = vadd.f32 %v6111, %v6184
  %v6186 = vpop.f32.mrb[0].mxu0
  %6187 = vdwg.mxu0
  %6188 = vmatprep.subr.mxu0 0.0
  %6189 = vmatpush1.msra.mxu0 %v5881
  %6190 = vmatprep.subr.mxu0 0.0
  %6191 = vmatpush1.msra.mxu0 %v5882
  %6192 = vmatprep.subr.mxu0 0.0
  %6193 = vmatpush1.msra.mxu0 %v5883
  %6194 = vmatprep.subr.mxu0 0.0
  %6195 = vmatpush1.msra.mxu0 %v5884
  %6196 = vmatprep.subr.mxu0 0.0
  %6197 = vmatpush1.msra.mxu0 %v5885
  %6198 = vmatprep.subr.mxu0 0.0
  %6199 = vmatpush1.msra.mxu0 %v5886
  %6200 = vmatprep.subr.mxu0 0.0
  %6201 = vmatpush1.msra.mxu0 %v5887
  %6202 = vmatprep.subr.mxu0 0.0
  %6203 = vmatpush1.msra.mxu0 %v5888
  %6204 = vmatprep.subr.mxu0 0.0
  %6205 = vmatpush1.msra.mxu0 %v5889
  %6206 = vmatprep.subr.mxu0 0.0
  %6207 = vmatpush1.msra.mxu0 %v5890
  %6208 = vmatprep.subr.mxu0 0.0
  %6209 = vmatpush1.msra.mxu0 %v5891
  %6210 = vmatprep.subr.mxu0 0.0
  %6211 = vmatpush1.msra.mxu0 %v5892
  %6212 = vmatprep.subr.mxu0 0.0
  %6213 = vmatpush1.msra.mxu0 %v5893
  %6214 = vmatprep.subr.mxu0 0.0
  %6215 = vmatpush1.msra.mxu0 %v5894
  %6216 = vmatprep.subr.mxu0 0.0
  %6217 = vmatpush1.msra.mxu0 %v5895
  %6218 = vmatprep.subr.mxu0 0.0
  %6219 = vmatpush1.msra.mxu0 %v5896
  %6220 = vmatprep.subr.mxu0 0.0
  %6221 = vmatpush1.msra.mxu0 %v5897
  %6222 = vmatprep.subr.mxu0 0.0
  %6223 = vmatpush1.msra.mxu0 %v5898
  %6224 = vmatprep.subr.mxu0 0.0
  %6225 = vmatpush1.msra.mxu0 %v5899
  %6226 = vmatprep.subr.mxu0 0.0
  %6227 = vmatpush1.msra.mxu0 %v5900
  %6228 = vmatprep.subr.mxu0 0.0
  %6229 = vmatpush1.msra.mxu0 %v5901
  %6230 = vmatprep.subr.mxu0 0.0
  %6231 = vmatpush1.msra.mxu0 %v5902
  %6232 = vmatprep.subr.mxu0 0.0
  %6233 = vmatpush1.msra.mxu0 %v5903
  %6234 = vmatprep.subr.mxu0 0.0
  %6235 = vmatpush1.msra.mxu0 %v5904
  %6236 = vmatprep.subr.mxu0 0.0
  %6237 = vmatpush1.msra.mxu0 %v5905
  %6238 = vmatprep.subr.mxu0 0.0
  %6239 = vmatpush1.msra.mxu0 %v5906
  %6240 = vmatprep.subr.mxu0 0.0
  %6241 = vmatpush1.msra.mxu0 %v5907
  %6242 = vmatprep.subr.mxu0 0.0
  %6243 = vmatpush1.msra.mxu0 %v5908
  %6244 = vmatprep.subr.mxu0 0.0
  %6245 = vmatpush1.msra.mxu0 %v5909
  %6246 = vmatprep.subr.mxu0 0.0
  %6247 = vmatpush1.msra.mxu0 %v5910
  %6248 = vmatprep.subr.mxu0 0.0
  %6249 = vmatpush1.msra.mxu0 %v5911
  %6250 = vmatprep.subr.mxu0 0.0
  %6251 = vmatpush1.msra.mxu0 %v5912
  %6252 = vmatprep.mubr.f32.mxu0 %v5819
  %6253 = vmatmul.mubr.f32.gmra.mrb[0].mxu0 %v5818
  %v6254 = vpop.f32.mrb[0].mxu0
  %v6255 = vadd.f32 %v6180, %v6254
  %v6256 = vpop.f32.mrb[0].mxu0
  %6257 = vmatprep.mubr.f32.mxu0 %v5835
  %6258 = vmatmul.mubr.f32.gmra.mrb[0].mxu0 %v5834
  %v6259 = vpop.f32.mrb[0].mxu0
  %v6260 = vadd.f32 %v6185, %v6259
  %v6261 = vpop.f32.mrb[0].mxu0
  %6262 = vdwg.mxu0
  %6263 = vmatprep.subr.mxu0 0.0
  %6264 = vmatpush1.msra.mxu0 %v5913
  %6265 = vmatprep.subr.mxu0 0.0
  %6266 = vmatpush1.msra.mxu0 %v5914
  %6267 = vmatprep.subr.mxu0 0.0
  %6268 = vmatpush1.msra.mxu0 %v5915
  %6269 = vmatprep.subr.mxu0 0.0
  %6270 = vmatpush1.msra.mxu0 %v5916
  %6271 = vmatprep.subr.mxu0 0.0
  %6272 = vmatpush1.msra.mxu0 %v5917
  %6273 = vmatprep.subr.mxu0 0.0
  %6274 = vmatpush1.msra.mxu0 %v5918
  %6275 = vmatprep.subr.mxu0 0.0
  %6276 = vmatpush1.msra.mxu0 %v5919
  %6277 = vmatprep.subr.mxu0 0.0
  %6278 = vmatpush1.msra.mxu0 %v5920
  %6279 = vmatprep.subr.mxu0 0.0
  %6280 = vmatpush1.msra.mxu0 %v5921
  %6281 = vmatprep.subr.mxu0 0.0
  %6282 = vmatpush1.msra.mxu0 %v5922
  %6283 = vmatprep.subr.mxu0 0.0
  %6284 = vmatpush1.msra.mxu0 %v5923
  %6285 = vmatprep.subr.mxu0 0.0
  %6286 = vmatpush1.msra.mxu0 %v5924
  %6287 = vmatprep.subr.mxu0 0.0
  %6288 = vmatpush1.msra.mxu0 %v5925
  %6289 = vmatprep.subr.mxu0 0.0
  %6290 = vmatpush1.msra.mxu0 %v5926
  %6291 = vmatprep.subr.mxu0 0.0
  %6292 = vmatpush1.msra.mxu0 %v5927
  %6293 = vmatprep.subr.mxu0 0.0
  %6294 = vmatpush1.msra.mxu0 %v5928
  %6295 = vmatprep.subr.mxu0 0.0
  %6296 = vmatpush1.msra.mxu0 %v5929
  %6297 = vmatprep.subr.mxu0 0.0
  %6298 = vmatpush1.msra.mxu0 %v5930
  %6299 = vmatprep.subr.mxu0 0.0
  %6300 = vmatpush1.msra.mxu0 %v5931
  %6301 = vmatprep.subr.mxu0 0.0
  %6302 = vmatpush1.msra.mxu0 %v5932
  %6303 = vmatprep.subr.mxu0 0.0
  %6304 = vmatpush1.msra.mxu0 %v5933
  %6305 = vmatprep.subr.mxu0 0.0
  %6306 = vmatpush1.msra.mxu0 %v5934
  %6307 = vmatprep.subr.mxu0 0.0
  %6308 = vmatpush1.msra.mxu0 %v5935
  %6309 = vmatprep.subr.mxu0 0.0
  %6310 = vmatpush1.msra.mxu0 %v5936
  %6311 = vmatprep.subr.mxu0 0.0
  %6312 = vmatpush1.msra.mxu0 %v5937
  %6313 = vmatprep.subr.mxu0 0.0
  %6314 = vmatpush1.msra.mxu0 %v5938
  %6315 = vmatprep.subr.mxu0 0.0
  %6316 = vmatpush1.msra.mxu0 %v5939
  %6317 = vmatprep.subr.mxu0 0.0
  %6318 = vmatpush1.msra.mxu0 %v5940
  %6319 = vmatprep.subr.mxu0 0.0
  %6320 = vmatpush1.msra.mxu0 %v5941
  %6321 = vmatprep.subr.mxu0 0.0
  %6322 = vmatpush1.msra.mxu0 %v5942
  %6323 = vmatprep.subr.mxu0 0.0
  %6324 = vmatpush1.msra.mxu0 %v5943
  %6325 = vmatprep.subr.mxu0 0.0
  %6326 = vmatpush1.msra.mxu0 %v5944
  %6327 = vmatprep.mubr.f32.mxu0 %v5821
  %6328 = vmatmul.mubr.f32.gmra.mrb[0].mxu0 %v5820
  %v6329 = vpop.f32.mrb[0].mxu0
  %v6330 = vadd.f32 %v6255, %v6329
  %v6331 = vpop.f32.mrb[0].mxu0
  %6332 = vmatprep.mubr.f32.mxu0 %v5837
  %6333 = vmatmul.mubr.f32.gmra.mrb[0].mxu0 %v5836
  %v6334 = vpop.f32.mrb[0].mxu0
  %v6335 = vadd.f32 %v6260, %v6334
  %v6336 = vpop.f32.mrb[0].mxu0
  %6337 = vdwg.mxu0
  %6338 = vmatprep.subr.mxu0 0.0
  %6339 = vmatpush1.msra.mxu0 %v5945
  %6340 = vmatprep.subr.mxu0 0.0
  %6341 = vmatpush1.msra.mxu0 %v5946
  %6342 = vmatprep.subr.mxu0 0.0
  %6343 = vmatpush1.msra.mxu0 %v5947
  %6344 = vmatprep.subr.mxu0 0.0
  %6345 = vmatpush1.msra.mxu0 %v5948
  %6346 = vmatprep.subr.mxu0 0.0
  %6347 = vmatpush1.msra.mxu0 %v5949
  %6348 = vmatprep.subr.mxu0 0.0
  %6349 = vmatpush1.msra.mxu0 %v5950
  %6350 = vmatprep.subr.mxu0 0.0
  %6351 = vmatpush1.msra.mxu0 %v5951
  %6352 = vmatprep.subr.mxu0 0.0
  %6353 = vmatpush1.msra.mxu0 %v5952
  %6354 = vmatprep.subr.mxu0 0.0
  %6355 = vmatpush1.msra.mxu0 %v5953
  %6356 = vmatprep.subr.mxu0 0.0
  %6357 = vmatpush1.msra.mxu0 %v5954
  %6358 = vmatprep.subr.mxu0 0.0
  %6359 = vmatpush1.msra.mxu0 %v5955
  %6360 = vmatprep.subr.mxu0 0.0
  %6361 = vmatpush1.msra.mxu0 %v5956
  %6362 = vmatprep.subr.mxu0 0.0
  %6363 = vmatpush1.msra.mxu0 %v5957
  %6364 = vmatprep.subr.mxu0 0.0
  %6365 = vmatpush1.msra.mxu0 %v5958
  %6366 = vmatprep.subr.mxu0 0.0
  %6367 = vmatpush1.msra.mxu0 %v5959
  %6368 = vmatprep.subr.mxu0 0.0
  %6369 = vmatpush1.msra.mxu0 %v5960
  %6370 = vmatprep.subr.mxu0 0.0
  %6371 = vmatpush1.msra.mxu0 %v5961
  %6372 = vmatprep.subr.mxu0 0.0
  %6373 = vmatpush1.msra.mxu0 %v5962
  %6374 = vmatprep.subr.mxu0 0.0
  %6375 = vmatpush1.msra.mxu0 %v5963
  %6376 = vmatprep.subr.mxu0 0.0
  %6377 = vmatpush1.msra.mxu0 %v5964
  %6378 = vmatprep.subr.mxu0 0.0
  %6379 = vmatpush1.msra.mxu0 %v5965
  %6380 = vmatprep.subr.mxu0 0.0
  %6381 = vmatpush1.msra.mxu0 %v5966
  %6382 = vmatprep.subr.mxu0 0.0
  %6383 = vmatpush1.msra.mxu0 %v5967
  %6384 = vmatprep.subr.mxu0 0.0
  %6385 = vmatpush1.msra.mxu0 %v5968
  %6386 = vmatprep.subr.mxu0 0.0
  %6387 = vmatpush1.msra.mxu0 %v5969
  %6388 = vmatprep.subr.mxu0 0.0
  %6389 = vmatpush1.msra.mxu0 %v5970
  %6390 = vmatprep.subr.mxu0 0.0
  %6391 = vmatpush1.msra.mxu0 %v5971
  %6392 = vmatprep.subr.mxu0 0.0
  %6393 = vmatpush1.msra.mxu0 %v5972
  %6394 = vmatprep.subr.mxu0 0.0
  %6395 = vmatpush1.msra.mxu0 %v5973
  %6396 = vmatprep.subr.mxu0 0.0
  %6397 = vmatpush1.msra.mxu0 %v5974
  %6398 = vmatprep.subr.mxu0 0.0
  %6399 = vmatpush1.msra.mxu0 %v5975
  %6400 = vmatprep.subr.mxu0 0.0
  %6401 = vmatpush1.msra.mxu0 %v5976
  %6402 = vmatprep.mubr.f32.mxu0 %v5823
  %6403 = vmatmul.mubr.f32.gmra.mrb[0].mxu0 %v5822
  %v6404 = vpop.f32.mrb[0].mxu0
  %v6405 = vadd.f32 %v6330, %v6404
  %v6406 = vpop.f32.mrb[0].mxu0
  %6407 = vmatprep.mubr.f32.mxu0 %v5839
  %6408 = vmatmul.mubr.f32.gmra.mrb[0].mxu0 %v5838
  %v6409 = vpop.f32.mrb[0].mxu0
  %v6410 = vadd.f32 %v6335, %v6409
  %v6411 = vpop.f32.mrb[0].mxu0
  %6412 = vdwg.mxu0
  %6413 = vmatprep.subr.mxu0 0.0
  %6414 = vmatpush1.msra.mxu0 %v5977
  %6415 = vmatprep.subr.mxu0 0.0
  %6416 = vmatpush1.msra.mxu0 %v5978
  %6417 = vmatprep.subr.mxu0 0.0
  %6418 = vmatpush1.msra.mxu0 %v5979
  %6419 = vmatprep.subr.mxu0 0.0
  %6420 = vmatpush1.msra.mxu0 %v5980
  %6421 = vmatprep.subr.mxu0 0.0
  %6422 = vmatpush1.msra.mxu0 %v5981
  %6423 = vmatprep.subr.mxu0 0.0
  %6424 = vmatpush1.msra.mxu0 %v5982
  %6425 = vmatprep.subr.mxu0 0.0
  %6426 = vmatpush1.msra.mxu0 %v5983
  %6427 = vmatprep.subr.mxu0 0.0
  %6428 = vmatpush1.msra.mxu0 %v5984
  %6429 = vmatprep.subr.mxu0 0.0
  %6430 = vmatpush1.msra.mxu0 %v5985
  %6431 = vmatprep.subr.mxu0 0.0
  %6432 = vmatpush1.msra.mxu0 %v5986
  %6433 = vmatprep.subr.mxu0 0.0
  %6434 = vmatpush1.msra.mxu0 %v5987
  %6435 = vmatprep.subr.mxu0 0.0
  %6436 = vmatpush1.msra.mxu0 %v5988
  %6437 = vmatprep.subr.mxu0 0.0
  %6438 = vmatpush1.msra.mxu0 %v5989
  %6439 = vmatprep.subr.mxu0 0.0
  %6440 = vmatpush1.msra.mxu0 %v5990
  %6441 = vmatprep.subr.mxu0 0.0
  %6442 = vmatpush1.msra.mxu0 %v5991
  %6443 = vmatprep.subr.mxu0 0.0
  %6444 = vmatpush1.msra.mxu0 %v5992
  %6445 = vmatprep.subr.mxu0 0.0
  %6446 = vmatpush1.msra.mxu0 %v5993
  %6447 = vmatprep.subr.mxu0 0.0
  %6448 = vmatpush1.msra.mxu0 %v5994
  %6449 = vmatprep.subr.mxu0 0.0
  %6450 = vmatpush1.msra.mxu0 %v5995
  %6451 = vmatprep.subr.mxu0 0.0
  %6452 = vmatpush1.msra.mxu0 %v5996
  %6453 = vmatprep.subr.mxu0 0.0
  %6454 = vmatpush1.msra.mxu0 %v5997
  %6455 = vmatprep.subr.mxu0 0.0
  %6456 = vmatpush1.msra.mxu0 %v5998
  %6457 = vmatprep.subr.mxu0 0.0
  %6458 = vmatpush1.msra.mxu0 %v5999
  %6459 = vmatprep.subr.mxu0 0.0
  %6460 = vmatpush1.msra.mxu0 %v6000
  %6461 = vmatprep.subr.mxu0 0.0
  %6462 = vmatpush1.msra.mxu0 %v6001
  %6463 = vmatprep.subr.mxu0 0.0
  %6464 = vmatpush1.msra.mxu0 %v6002
  %6465 = vmatprep.subr.mxu0 0.0
  %6466 = vmatpush1.msra.mxu0 %v6003
  %6467 = vmatprep.subr.mxu0 0.0
  %6468 = vmatpush1.msra.mxu0 %v6004
  %6469 = vmatprep.subr.mxu0 0.0
  %6470 = vmatpush1.msra.mxu0 %v6005
  %6471 = vmatprep.subr.mxu0 0.0
  %6472 = vmatpush1.msra.mxu0 %v6006
  %6473 = vmatprep.subr.mxu0 0.0
  %6474 = vmatpush1.msra.mxu0 %v6007
  %6475 = vmatprep.subr.mxu0 0.0
  %6476 = vmatpush1.msra.mxu0 %v6008
  %6477 = vmatprep.mubr.f32.mxu0 %v5825
  %6478 = vmatmul.mubr.f32.gmra.mrb[0].mxu0 %v5824
  %v6479 = vpop.f32.mrb[0].mxu0
  %v6480 = vadd.f32 %v6405, %v6479
  %v6481 = vpop.f32.mrb[0].mxu0
  %6482 = vmatprep.mubr.f32.mxu0 %v5841
  %6483 = vmatmul.mubr.f32.gmra.mrb[0].mxu0 %v5840
  %v6484 = vpop.f32.mrb[0].mxu0
  %v6485 = vadd.f32 %v6410, %v6484
  %v6486 = vpop.f32.mrb[0].mxu0
  %6487 = vdwg.mxu0
  %6488 = vmatprep.subr.mxu0 0.0
  %6489 = vmatpush1.msra.mxu0 %v6009
  %6490 = vmatprep.subr.mxu0 0.0
  %6491 = vmatpush1.msra.mxu0 %v6010
  %6492 = vmatprep.subr.mxu0 0.0
  %6493 = vmatpush1.msra.mxu0 %v6011
  %6494 = vmatprep.subr.mxu0 0.0
  %6495 = vmatpush1.msra.mxu0 %v6012
  %6496 = vmatprep.subr.mxu0 0.0
  %6497 = vmatpush1.msra.mxu0 %v6013
  %6498 = vmatprep.subr.mxu0 0.0
  %6499 = vmatpush1.msra.mxu0 %v6014
  %6500 = vmatprep.subr.mxu0 0.0
  %6501 = vmatpush1.msra.mxu0 %v6015
  %6502 = vmatprep.subr.mxu0 0.0
  %6503 = vmatpush1.msra.mxu0 %v6016
  %6504 = vmatprep.subr.mxu0 0.0
  %6505 = vmatpush1.msra.mxu0 %v6017
  %6506 = vmatprep.subr.mxu0 0.0
  %6507 = vmatpush1.msra.mxu0 %v6018
  %6508 = vmatprep.subr.mxu0 0.0
  %6509 = vmatpush1.msra.mxu0 %v6019
  %6510 = vmatprep.subr.mxu0 0.0
  %6511 = vmatpush1.msra.mxu0 %v6020
  %6512 = vmatprep.subr.mxu0 0.0
  %6513 = vmatpush1.msra.mxu0 %v6021
  %6514 = vmatprep.subr.mxu0 0.0
  %6515 = vmatpush1.msra.mxu0 %v6022
  %6516 = vmatprep.subr.mxu0 0.0
  %6517 = vmatpush1.msra.mxu0 %v6023
  %6518 = vmatprep.subr.mxu0 0.0
  %6519 = vmatpush1.msra.mxu0 %v6024
  %6520 = vmatprep.subr.mxu0 0.0
  %6521 = vmatpush1.msra.mxu0 %v6025
  %6522 = vmatprep.subr.mxu0 0.0
  %6523 = vmatpush1.msra.mxu0 %v6026
  %6524 = vmatprep.subr.mxu0 0.0
  %6525 = vmatpush1.msra.mxu0 %v6027
  %6526 = vmatprep.subr.mxu0 0.0
  %6527 = vmatpush1.msra.mxu0 %v6028
  %6528 = vmatprep.subr.mxu0 0.0
  %6529 = vmatpush1.msra.mxu0 %v6029
  %6530 = vmatprep.subr.mxu0 0.0
  %6531 = vmatpush1.msra.mxu0 %v6030
  %6532 = vmatprep.subr.mxu0 0.0
  %6533 = vmatpush1.msra.mxu0 %v6031
  %6534 = vmatprep.subr.mxu0 0.0
  %6535 = vmatpush1.msra.mxu0 %v6032
  %6536 = vmatprep.subr.mxu0 0.0
  %6537 = vmatpush1.msra.mxu0 %v6033
  %6538 = vmatprep.subr.mxu0 0.0
  %6539 = vmatpush1.msra.mxu0 %v6034
  %6540 = vmatprep.subr.mxu0 0.0
  %6541 = vmatpush1.msra.mxu0 %v6035
  %6542 = vmatprep.subr.mxu0 0.0
  %6543 = vmatpush1.msra.mxu0 %v6036
  %6544 = vmatprep.subr.mxu0 0.0
  %6545 = vmatpush1.msra.mxu0 %v6037
  %6546 = vmatprep.subr.mxu0 0.0
  %6547 = vmatpush1.msra.mxu0 %v6038
  %6548 = vmatprep.subr.mxu0 0.0
  %6549 = vmatpush1.msra.mxu0 %v6039
  %6550 = vmatprep.subr.mxu0 0.0
  %6551 = vmatpush1.msra.mxu0 %v6040
  %6552 = vmatprep.mubr.f32.mxu0 %v5827
  %6553 = vmatmul.mubr.f32.gmra.mrb[0].mxu0 %v5826
  %v6554 = vpop.f32.mrb[0].mxu0
  %v6555 = vadd.f32 %v6480, %v6554
  %v6556 = vpop.f32.mrb[0].mxu0
  %6557 = vmatprep.mubr.f32.mxu0 %v5843
  %6558 = vmatmul.mubr.f32.gmra.mrb[0].mxu0 %v5842
  %v6559 = vpop.f32.mrb[0].mxu0
  %v6560 = vadd.f32 %v6485, %v6559
  %v6561 = vpop.f32.mrb[0].mxu0
  %6562 = vdwg.mxu0
  %6563 = vmatprep.subr.mxu0 0.0
  %6564 = vmatpush1.msra.mxu0 %v6041
  %6565 = vmatprep.subr.mxu0 0.0
  %6566 = vmatpush1.msra.mxu0 %v6042
  %6567 = vmatprep.subr.mxu0 0.0
  %6568 = vmatpush1.msra.mxu0 %v6043
  %6569 = vmatprep.subr.mxu0 0.0
  %6570 = vmatpush1.msra.mxu0 %v6044
  %6571 = vmatprep.subr.mxu0 0.0
  %6572 = vmatpush1.msra.mxu0 %v6045
  %6573 = vmatprep.subr.mxu0 0.0
  %6574 = vmatpush1.msra.mxu0 %v6046
  %6575 = vmatprep.subr.mxu0 0.0
  %6576 = vmatpush1.msra.mxu0 %v6047
  %6577 = vmatprep.subr.mxu0 0.0
  %6578 = vmatpush1.msra.mxu0 %v6048
  %6579 = vmatprep.subr.mxu0 0.0
  %6580 = vmatpush1.msra.mxu0 %v6049
  %6581 = vmatprep.subr.mxu0 0.0
  %6582 = vmatpush1.msra.mxu0 %v6050
  %6583 = vmatprep.subr.mxu0 0.0
  %6584 = vmatpush1.msra.mxu0 %v6051
  %6585 = vmatprep.subr.mxu0 0.0
  %6586 = vmatpush1.msra.mxu0 %v6052
  %6587 = vmatprep.subr.mxu0 0.0
  %6588 = vmatpush1.msra.mxu0 %v6053
  %6589 = vmatprep.subr.mxu0 0.0
  %6590 = vmatpush1.msra.mxu0 %v6054
  %6591 = vmatprep.subr.mxu0 0.0
  %6592 = vmatpush1.msra.mxu0 %v6055
  %6593 = vmatprep.subr.mxu0 0.0
  %6594 = vmatpush1.msra.mxu0 %v6056
  %6595 = vmatprep.subr.mxu0 0.0
  %6596 = vmatpush1.msra.mxu0 %v6057
  %6597 = vmatprep.subr.mxu0 0.0
  %6598 = vmatpush1.msra.mxu0 %v6058
  %6599 = vmatprep.subr.mxu0 0.0
  %6600 = vmatpush1.msra.mxu0 %v6059
  %6601 = vmatprep.subr.mxu0 0.0
  %6602 = vmatpush1.msra.mxu0 %v6060
  %6603 = vmatprep.subr.mxu0 0.0
  %6604 = vmatpush1.msra.mxu0 %v6061
  %6605 = vmatprep.subr.mxu0 0.0
  %6606 = vmatpush1.msra.mxu0 %v6062
  %6607 = vmatprep.subr.mxu0 0.0
  %6608 = vmatpush1.msra.mxu0 %v6063
  %6609 = vmatprep.subr.mxu0 0.0
  %6610 = vmatpush1.msra.mxu0 %v6064
  %6611 = vmatprep.subr.mxu0 0.0
  %6612 = vmatpush1.msra.mxu0 %v6065
  %6613 = vmatprep.subr.mxu0 0.0
  %6614 = vmatpush1.msra.mxu0 %v6066
  %6615 = vmatprep.subr.mxu0 0.0
  %6616 = vmatpush1.msra.mxu0 %v6067
  %6617 = vmatprep.subr.mxu0 0.0
  %6618 = vmatpush1.msra.mxu0 %v6068
  %6619 = vmatprep.subr.mxu0 0.0
  %6620 = vmatpush1.msra.mxu0 %v6069
  %6621 = vmatprep.subr.mxu0 0.0
  %6622 = vmatpush1.msra.mxu0 %v6070
  %6623 = vmatprep.subr.mxu0 0.0
  %6624 = vmatpush1.msra.mxu0 %v6071
  %6625 = vmatprep.subr.mxu0 0.0
  %6626 = vmatpush1.msra.mxu0 %v6072
  %6627 = vmatprep.mubr.f32.mxu0 %v5829
  %6628 = vmatmul.mubr.f32.gmra.mrb[0].mxu0 %v5828
  %v6629 = vpop.f32.mrb[0].mxu0
  %v6630 = vadd.f32 %v6555, %v6629
  %v6631 = vpop.f32.mrb[0].mxu0
  %6632 = vmatprep.mubr.f32.mxu0 %v5845
  %6633 = vmatmul.mubr.f32.gmra.mrb[0].mxu0 %v5844
  %v6634 = vpop.f32.mrb[0].mxu0
  %v6635 = vadd.f32 %v6560, %v6634
  %v6636 = vpop.f32.mrb[0].mxu0
  %6637 = vdwg.mxu0
  %6638 = vmatprep.subr.mxu0 0.0
  %6639 = vmatpush1.msra.mxu0 %v6073
  %6640 = vmatprep.subr.mxu0 0.0
  %6641 = vmatpush1.msra.mxu0 %v6074
  %6642 = vmatprep.subr.mxu0 0.0
  %6643 = vmatpush1.msra.mxu0 %v6075
  %6644 = vmatprep.subr.mxu0 0.0
  %6645 = vmatpush1.msra.mxu0 %v6076
  %6646 = vmatprep.subr.mxu0 0.0
  %6647 = vmatpush1.msra.mxu0 %v6077
  %6648 = vmatprep.subr.mxu0 0.0
  %6649 = vmatpush1.msra.mxu0 %v6078
  %6650 = vmatprep.subr.mxu0 0.0
  %6651 = vmatpush1.msra.mxu0 %v6079
  %6652 = vmatprep.subr.mxu0 0.0
  %6653 = vmatpush1.msra.mxu0 %v6080
  %6654 = vmatprep.subr.mxu0 0.0
  %6655 = vmatpush1.msra.mxu0 %v6081
  %6656 = vmatprep.subr.mxu0 0.0
  %6657 = vmatpush1.msra.mxu0 %v6082
  %6658 = vmatprep.subr.mxu0 0.0
  %6659 = vmatpush1.msra.mxu0 %v6083
  %6660 = vmatprep.subr.mxu0 0.0
  %6661 = vmatpush1.msra.mxu0 %v6084
  %6662 = vmatprep.subr.mxu0 0.0
  %6663 = vmatpush1.msra.mxu0 %v6085
  %6664 = vmatprep.subr.mxu0 0.0
  %6665 = vmatpush1.msra.mxu0 %v6086
  %6666 = vmatprep.subr.mxu0 0.0
  %6667 = vmatpush1.msra.mxu0 %v6087
  %6668 = vmatprep.subr.mxu0 0.0
  %6669 = vmatpush1.msra.mxu0 %v6088
  %6670 = vmatprep.subr.mxu0 0.0
  %6671 = vmatpush1.msra.mxu0 %v6089
  %6672 = vmatprep.subr.mxu0 0.0
  %6673 = vmatpush1.msra.mxu0 %v6090
  %6674 = vmatprep.subr.mxu0 0.0
  %6675 = vmatpush1.msra.mxu0 %v6091
  %6676 = vmatprep.subr.mxu0 0.0
  %6677 = vmatpush1.msra.mxu0 %v6092
  %6678 = vmatprep.subr.mxu0 0.0
  %6679 = vmatpush1.msra.mxu0 %v6093
  %6680 = vmatprep.subr.mxu0 0.0
  %6681 = vmatpush1.msra.mxu0 %v6094
  %6682 = vmatprep.subr.mxu0 0.0
  %6683 = vmatpush1.msra.mxu0 %v6095
  %6684 = vmatprep.subr.mxu0 0.0
  %6685 = vmatpush1.msra.mxu0 %v6096
  %6686 = vmatprep.subr.mxu0 0.0
  %6687 = vmatpush1.msra.mxu0 %v6097
  %6688 = vmatprep.subr.mxu0 0.0
  %6689 = vmatpush1.msra.mxu0 %v6098
  %6690 = vmatprep.subr.mxu0 0.0
  %6691 = vmatpush1.msra.mxu0 %v6099
  %6692 = vmatprep.subr.mxu0 0.0
  %6693 = vmatpush1.msra.mxu0 %v6100
  %6694 = vmatprep.subr.mxu0 0.0
  %6695 = vmatpush1.msra.mxu0 %v6101
  %6696 = vmatprep.subr.mxu0 0.0
  %6697 = vmatpush1.msra.mxu0 %v6102
  %6698 = vmatprep.subr.mxu0 0.0
  %6699 = vmatpush1.msra.mxu0 %v6103
  %6700 = vmatprep.subr.mxu0 0.0
  %6701 = vmatpush1.msra.mxu0 %v6104
  %6702 = vmatprep.mubr.f32.mxu0 %v5831
  %6703 = vmatmul.mubr.f32.gmra.mrb[0].mxu0 %v5830
  %v6704 = vpop.f32.mrb[0].mxu0
  %v6705 = vadd.f32 %v6630, %v6704
  %v6706 = vpop.f32.mrb[0].mxu0
  %6707 = vmatprep.mubr.f32.mxu0 %v5847
  %6708 = vmatmul.mubr.f32.gmra.mrb[0].mxu0 %v5846
  %v6709 = vpop.f32.mrb[0].mxu0
  %v6710 = vadd.f32 %v6635, %v6709
  %v6711 = vpop.f32.mrb[0].mxu0
  %6712 = vdwg.mxu0
  %v6713 = vadd.f32 %v5042, %v6705
  %v6714 = vadd.f32 %v5043, %v6710
  %s6715 = scalar_lea.vmem %s13, 1
  %v6716 = vld [vmem:[%s6715] sm:$0x1]
  %s6717 = scalar_lea.vmem %s14, 1
  %v6718 = vld [vmem:[%s6717] sm:$0x1]
  %v6719 = vsel %vm160, %v6713, 0.0
  %6720 = vadd.xlane.f32.xlu0 %v6719
  %v6721 = vpop.xlane.xlu0 %6720
  %v6722 = vsel %vm160, %v6714, 0.0
  %6723 = vadd.xlane.f32.xlu0 %v6722
  %v6724 = vpop.xlane.xlu0 %6723
  %v6725 = vmul.f32 %v6721, %v1704
  %v6726 = vmul.f32 %v6724, %v1704
  %v6727 = vsub.f32 %v6713, %v6725
  %v6728 = vsub.f32 %v6714, %v6726
  %v6729 = vmul.f32 %v6727, %v6727
  %v6730 = vmul.f32 %v6728, %v6728
  %v6731 = vsel %vm160, %v6729, 0.0
  %6732 = vadd.xlane.f32.xlu0 %v6731
  %v6733 = vpop.xlane.xlu0 %6732
  %v6734 = vsel %vm160, %v6730, 0.0
  %6735 = vadd.xlane.f32.xlu0 %v6734
  %v6736 = vpop.xlane.xlu0 %6735
  %v6737 = vmul.f32 %v6733, %v1704
  %v6738 = vmul.f32 %v6736, %v1704
  %v6739 = vadd.f32 %v6737, 1e-05
  %v6740 = vadd.f32 %v6738, 1e-05
  %v6741 = vrsqrt.pop %v6739
  %v6742 = vrsqrt.pop %v6740
  %v6743 = vmul.f32 %v6727, %v6741
  %v6744 = vmul.f32 %v6728, %v6742
  %v6746 = vlaneseq
  %v6747 = vshrl.u32 %v6746, 7
  %v6748 = vsub.s32 0, %v6747
  %v6749 = vrot.slane %v6716, %v6748
  %v6751 = vmul.f32 %v6743, %v6749
  %v6752 = vmul.f32 %v6744, %v6749
  %v6754 = vlaneseq
  %v6755 = vshrl.u32 %v6754, 7
  %v6756 = vsub.s32 0, %v6755
  %v6757 = vrot.slane %v6718, %v6756
  %v6759 = vadd.f32 %v6751, %v6757
  %v6760 = vadd.f32 %v6752, %v6757
  %v6761 = vld [vmem:[%s15] sm:$0xff]
  %v6762 = vld [vmem:[%s15 + $0x8] sm:$0xff]
  %v6763 = vld [vmem:[%s15 + $0x10] sm:$0xff]
  %v6764 = vld [vmem:[%s15 + $0x18] sm:$0xff]
  %v6765 = vld [vmem:[%s16] sm:$0x1]
  %v6767 = vlaneseq
  %v6768 = vshrl.u32 %v6767, 7
  %v6769 = vsub.s32 0, %v6768
  %v6770 = vrot.slane %v6765, %v6769
  %v6773 = vsel %vm160, %v6759, 0
  %v6776 = vsel %vm160, %v6760, 0
  %6778 = vmatprep.subr.mxu0 0.0
  %6779 = vmatpush1.msra.mxu0 %v6761
  %6780 = vmatprep.subr.mxu0 0.0
  %6781 = vmatpush1.msra.mxu0 %v6762
  %6782 = vmatprep.subr.mxu0 0.0
  %6783 = vmatpush1.msra.mxu0 %v6763
  %6784 = vmatprep.subr.mxu0 0.0
  %6785 = vmatpush1.msra.mxu0 %v6764
  %6786 = vmatprep.subr.mxu0 0.0
  %6787 = vmatpush1.msra.mxu0 0.0
  %6788 = vmatprep.subr.mxu0 0.0
  %6789 = vmatpush1.msra.mxu0 0.0
  %6790 = vmatprep.subr.mxu0 0.0
  %6791 = vmatpush1.msra.mxu0 0.0
  %6792 = vmatprep.subr.mxu0 0.0
  %6793 = vmatpush1.msra.mxu0 0.0
  %6794 = vmatprep.subr.mxu0 0.0
  %6795 = vmatpush1.msra.mxu0 0.0
  %6796 = vmatprep.subr.mxu0 0.0
  %6797 = vmatpush1.msra.mxu0 0.0
  %6798 = vmatprep.subr.mxu0 0.0
  %6799 = vmatpush1.msra.mxu0 0.0
  %6800 = vmatprep.subr.mxu0 0.0
  %6801 = vmatpush1.msra.mxu0 0.0
  %6802 = vmatprep.subr.mxu0 0.0
  %6803 = vmatpush1.msra.mxu0 0.0
  %6804 = vmatprep.subr.mxu0 0.0
  %6805 = vmatpush1.msra.mxu0 0.0
  %6806 = vmatprep.subr.mxu0 0.0
  %6807 = vmatpush1.msra.mxu0 0.0
  %6808 = vmatprep.subr.mxu0 0.0
  %6809 = vmatpush1.msra.mxu0 0.0
  %6810 = vmatprep.subr.mxu0 0.0
  %6811 = vmatpush1.msra.mxu0 0.0
  %6812 = vmatprep.subr.mxu0 0.0
  %6813 = vmatpush1.msra.mxu0 0.0
  %6814 = vmatprep.subr.mxu0 0.0
  %6815 = vmatpush1.msra.mxu0 0.0
  %6816 = vmatprep.subr.mxu0 0.0
  %6817 = vmatpush1.msra.mxu0 0.0
  %6818 = vmatprep.subr.mxu0 0.0
  %6819 = vmatpush1.msra.mxu0 0.0
  %6820 = vmatprep.subr.mxu0 0.0
  %6821 = vmatpush1.msra.mxu0 0.0
  %6822 = vmatprep.subr.mxu0 0.0
  %6823 = vmatpush1.msra.mxu0 0.0
  %6824 = vmatprep.subr.mxu0 0.0
  %6825 = vmatpush1.msra.mxu0 0.0
  %6826 = vmatprep.subr.mxu0 0.0
  %6827 = vmatpush1.msra.mxu0 0.0
  %6828 = vmatprep.subr.mxu0 0.0
  %6829 = vmatpush1.msra.mxu0 0.0
  %6830 = vmatprep.subr.mxu0 0.0
  %6831 = vmatpush1.msra.mxu0 0.0
  %6832 = vmatprep.subr.mxu0 0.0
  %6833 = vmatpush1.msra.mxu0 0.0
  %6834 = vmatprep.subr.mxu0 0.0
  %6835 = vmatpush1.msra.mxu0 0.0
  %6836 = vmatprep.subr.mxu0 0.0
  %6837 = vmatpush1.msra.mxu0 0.0
  %6838 = vmatprep.subr.mxu0 0.0
  %6839 = vmatpush1.msra.mxu0 0.0
  %6840 = vmatprep.subr.mxu0 0.0
  %6841 = vmatpush1.msra.mxu0 0.0
  %6842 = vmatprep.mubr.f32.mxu0 0.0
  %6843 = vmatmul.mubr.f32.gmra.mrb[0].mxu0 %v6773
  %v6844 = vpop.f32.mrb[0].mxu0
  %v6845 = vadd.f32 %v6770, %v6844
  %v6846 = vpop.f32.mrb[0].mxu0
  %6847 = vmatprep.mubr.f32.mxu0 0.0
  %6848 = vmatmul.mubr.f32.gmra.mrb[0].mxu0 %v6776
  %v6849 = vpop.f32.mrb[0].mxu0
  %v6850 = vadd.f32 %v6770, %v6849
  %v6851 = vpop.f32.mrb[0].mxu0
  %6852 = vdwg.mxu0
  %v6853 = vsub.f32 0.0, %v6845
  %v6854 = vsub.f32 0.0, %v6850
  %v6855 = vmul.f32 %v6853, 1.442695
  %v6856 = vpow.pop %v6855
  %v6857 = vmul.f32 %v6854, 1.442695
  %v6858 = vpow.pop %v6857
  %v6859 = vadd.f32 %v6856, 1.0
  %v6860 = vadd.f32 %v6858, 1.0
  %v6861 = vrcp.pop %v6859
  %v6862 = vmul.f32 1.0, %v6861
  %v6863 = vrcp.pop %v6860
  %v6864 = vmul.f32 1.0, %v6863
  %6865 = vst [vmem:[%s17] sm:$0xff] %v6862
  %6866 = vst [vmem:[%s17 + $0x8] sm:$0xff] %v6864
  // Predicated region
  $region70: #{transformer_forward.1} parent=0 // pred_check
    _
  $region71: #{transformer_forward.1} parent=0 // pred_check_branch
    %6868 = sbr.rel (0) target = $region73
  $region72: #{transformer_forward.1} parent=0 // pred_region
    _
  $region73: #{transformer_forward.1} parent=0 // pred_fallthru
    _
  // Predicated region
  $region74: #{transformer_forward.1} parent=0 // pred_check
    _
  $region75: #{transformer_forward.1} parent=0 // pred_check_branch
    %6870 = sbr.rel (0) target = $region77
  $region76: #{transformer_forward.1} parent=0 // pred_region
    _
  $region77: #{transformer_forward.1} parent=0 // pred_fallthru
    _

</llo_original>
